<compile_context>
chip_gen: v5e
topology: v5e:2x2
jax: 0.10.0
libtpu: 0.0.40
codegen_flags: <defaults>
</compile_context>

<pallas_src>
import functools

import jax
import jax.numpy as jnp
from jax import lax
from jax.experimental import pallas as pl
from jax.experimental.pallas import tpu as pltpu

LANE = 128
K1_PAD = 128      # conv1 im2col contraction: 5*5*3 = 75 -> 128
C1_PAD = 8        # conv1 output channels: 6 -> 8 (stays small: it is conv2's K)
C2 = 16           # conv2 output channels (kept exact: it is fc1's per-tap K)


# ---------------------------------------------------------------------------
# The fused whole-network kernel.  One grid step processes B images.
#   p1_ref : (B*784, 128)   conv1 im2col patches (28*28 positions, K padded)
#   w1_ref : (128, 8)       conv1 weights (taps folded into K), b1_ref: (1, 8)
#   w2_ref : (25, 8, 16)    conv2 per-tap weights,              b2_ref: (1, 16)
#   wf1_ref: (25, 16, 128)  fc1 per-spatial-tap weights,        bf1_ref: (1, 128)
#   wf2_ref: (128, 128)     fc2,                                 bf2_ref: (1, 128)
#   wf3_ref: (128, 128)     fc3,                                 bf3_ref: (1, 128)
#   o_ref  : (1, B, 128)    padded logits for the B images of this step
# Scratch: c1 (B*784, 8), h1p (196, 8), acc2 (136, 16), h2p (25, 16), f1 (B, 128)
# ---------------------------------------------------------------------------
def _net_kernel(p1_ref, w1_ref, b1_ref, w2_ref, b2_ref,
                wf1_ref, bf1_ref, wf2_ref, bf2_ref, wf3_ref, bf3_ref,
                o_ref, c1_ref, h1p_ref, acc2_ref, h2p_ref, f1_ref, *, B):
    # conv1 (+bias+ReLU) for all B images: a single K=128 matmul (taps folded
    # into the contraction dim by the wrapper-side im2col).
    c1_ref[...] = jnp.maximum(
        jnp.dot(p1_ref[...], w1_ref[...], preferred_element_type=jnp.float32)
        + b1_ref[...], 0.0)

    for b in range(B):
        base = b * 784
        # 2x2/2 max-pool 28x28 -> 14x14 (bias/ReLU already applied; both
        # commute with max, so no per-row broadcasts here).
        for ph in range(14):
            r0 = base + (2 * ph) * 28
            r1 = r0 + 28
            top = jnp.maximum(c1_ref[pl.ds(r0, 14, stride=2), :],
                              c1_ref[pl.ds(r0 + 1, 14, stride=2), :])
            bot = jnp.maximum(c1_ref[pl.ds(r1, 14, stride=2), :],
                              c1_ref[pl.ds(r1 + 1, 14, stride=2), :])
            h1p_ref[pl.ds(ph * 14, 14), :] = jnp.maximum(top, bot)

        # conv2: 25 accumulated matmuls (K = 8 real-channel lanes, OC = 16)
        # over statically shifted row windows of the 14x14 pooled map.
        # Accumulator rows r = oh*14 + ow; columns ow >= 10 are wrap-around
        # garbage and are never read by the pooling below.
        acc2_ref[...] = jnp.zeros_like(acc2_ref)
        for kh in range(5):
            for kw in range(5):
                acc2_ref[...] += jnp.dot(
                    h1p_ref[pl.ds(kh * 14 + kw, 136), :],
                    w2_ref[kh * 5 + kw],
                    preferred_element_type=jnp.float32)
        acc2_ref[...] = jnp.maximum(acc2_ref[...] + b2_ref[...], 0.0)

        # 2x2/2 max-pool 10x10 -> 5x5, stored per spatial tap for fc1.
        for ph in range(5):
            r0 = (2 * ph) * 14
            r1 = r0 + 14
            top = jnp.maximum(acc2_ref[pl.ds(r0, 5, stride=2), :],
                              acc2_ref[pl.ds(r0 + 1, 5, stride=2), :])
            bot = jnp.maximum(acc2_ref[pl.ds(r1, 5, stride=2), :],
                              acc2_ref[pl.ds(r1 + 1, 5, stride=2), :])
            h2p_ref[pl.ds(ph * 5, 5), :] = jnp.maximum(top, bot)

        # fc1 contraction for this image, expressed as 25 (1,16)x(16,128)
        # taps directly on the pooled map (no flatten / lane relayout).
        accb = jnp.zeros((1, LANE), jnp.float32)
        for t in range(25):
            accb = accb + jnp.dot(h2p_ref[pl.ds(t, 1), :], wf1_ref[t],
                                  preferred_element_type=jnp.float32)
        f1_ref[pl.ds(b, 1), :] = accb

    # fc1 ReLU + fc2 + ReLU + fc3, batched across the B images of this step.
    h = jnp.maximum(f1_ref[...] + bf1_ref[...], 0.0)
    h = jnp.maximum(
        jnp.dot(h, wf2_ref[...], preferred_element_type=jnp.float32)
        + bf2_ref[...], 0.0)
    o_ref[0] = (jnp.dot(h, wf3_ref[...], preferred_element_type=jnp.float32)
                + bf3_ref[...]).astype(o_ref.dtype)


def _pick_images_per_step(n):
    """Largest B dividing n with at least 2 grid steps (keeps both v7x TCs busy)."""
    for b in (8, 4, 2):
        if n % b == 0 and n // b >= 2:
            return b
    return 1


# ------------------------------ parameters ---------------------------------
def init_params(key):
    ks = jax.random.split(key, 10)

    def u(k, shape, fan_in):
        bound = 1.0 / jnp.sqrt(jnp.float32(fan_in))
        return jax.random.uniform(k, shape, jnp.float32, -bound, bound)

    return {
        "conv1_w": u(ks[0], (6, 3, 5, 5), 3 * 25),
        "conv1_b": u(ks[1], (6,), 3 * 25),
        "conv2_w": u(ks[2], (16, 6, 5, 5), 6 * 25),
        "conv2_b": u(ks[3], (16,), 6 * 25),
        "fc1_w": u(ks[4], (120, 400), 400),
        "fc1_b": u(ks[5], (120,), 400),
        "fc2_w": u(ks[6], (84, 120), 120),
        "fc2_b": u(ks[7], (84,), 120),
        "fc3_w": u(ks[8], (10, 84), 84),
        "fc3_b": u(ks[9], (10,), 84),
    }


def prepare_params(p):
    """One-time repack of torch-layout params into compact, kernel-side layouts."""
    def pad_to(a, shape):
        return jnp.pad(a, [(0, s - d) for d, s in zip(a.shape, shape)])

    out = {}
    # conv1 (6,3,5,5)=(O,I,KH,KW) -> im2col weight ordered (kh,kw,c) -> (128, 8)
    w = jnp.transpose(p["conv1_w"], (2, 3, 1, 0)).reshape(75, 6)
    out["conv1_w"] = pad_to(w, (K1_PAD, C1_PAD))
    out["conv1_b"] = pad_to(p["conv1_b"].reshape(1, 6), (1, C1_PAD))
    # conv2 (16,6,5,5) -> per-tap (25, 8, 16); real input channels in lanes 0..5
    w = jnp.transpose(p["conv2_w"], (2, 3, 1, 0)).reshape(25, 6, 16)
    out["conv2_w"] = pad_to(w, (25, C1_PAD, C2))
    out["conv2_b"] = p["conv2_b"].reshape(1, C2)
    # fc1 (120, 400) over torch flatten order (c,h,w) -> per-spatial-tap (25,16,128)
    w = p["fc1_w"].reshape(120, 16, 5, 5)
    w = jnp.transpose(w, (2, 3, 1, 0)).reshape(25, 16, 120)   # tap=(h*5+w), (c, out)
    out["fc1_w"] = pad_to(w, (25, C2, LANE))
    out["fc1_b"] = pad_to(p["fc1_b"].reshape(1, 120), (1, LANE))
    out["fc2_w"] = pad_to(p["fc2_w"].T, (LANE, LANE))
    out["fc2_b"] = pad_to(p["fc2_b"].reshape(1, 84), (1, LANE))
    out["fc3_w"] = pad_to(p["fc3_w"].T, (LANE, LANE))
    out["fc3_b"] = pad_to(p["fc3_b"].reshape(1, 10), (1, LANE))
    return out


# ------------------------------- the model ---------------------------------
def net_forward(kp, x):
    # x: (N, 3, 32, 32) NCHW float32 -> logits (N, 10)
    N = x.shape[0]
    B = _pick_images_per_step(N)
    G = N // B

    # Wrapper-side im2col for conv1: (N,3,32,32) -> (N*784, 75) ordered
    # (kh, kw, c) per row, lane-padded to 128 so conv1 is one K=128 matmul.
    xn = jnp.transpose(x, (0, 2, 3, 1))                          # (N,32,32,3)
    pats = [xn[:, kh:kh + 28, kw:kw + 28, :]
            for kh in range(5) for kw in range(5)]
    p = jnp.stack(pats, axis=3).reshape(N * 784, 75)
    p = jnp.pad(p, ((0, 0), (0, K1_PAD - 75)))                   # (N*784, 128)

    weights = (kp["conv1_w"], kp["conv1_b"], kp["conv2_w"], kp["conv2_b"],
               kp["fc1_w"], kp["fc1_b"], kp["fc2_w"], kp["fc2_b"],
               kp["fc3_w"], kp["fc3_b"])

    flops = N * (2 * 784 * K1_PAD * C1_PAD + 25 * 2 * 136 * C1_PAD * C2
                 + 25 * 2 * C2 * LANE + 2 * 2 * LANE * LANE)
    bytes_accessed = 4 * (p.size + sum(w.size for w in weights) + N * LANE)

    out = pl.pallas_call(
        functools.partial(_net_kernel, B=B),
        out_shape=jax.ShapeDtypeStruct((G, B, LANE), jnp.float32),
        grid_spec=pltpu.PrefetchScalarGridSpec(
            num_scalar_prefetch=0,
            grid=(G,),
            in_specs=[
                pl.BlockSpec((B * 784, K1_PAD), lambda i: (i, 0)),
                pl.BlockSpec((K1_PAD, C1_PAD), lambda i: (0, 0)),
                pl.BlockSpec((1, C1_PAD), lambda i: (0, 0)),
                pl.BlockSpec((25, C1_PAD, C2), lambda i: (0, 0, 0)),
                pl.BlockSpec((1, C2), lambda i: (0, 0)),
                pl.BlockSpec((25, C2, LANE), lambda i: (0, 0, 0)),
                pl.BlockSpec((1, LANE), lambda i: (0, 0)),
                pl.BlockSpec((LANE, LANE), lambda i: (0, 0)),
                pl.BlockSpec((1, LANE), lambda i: (0, 0)),
                pl.BlockSpec((LANE, LANE), lambda i: (0, 0)),
                pl.BlockSpec((1, LANE), lambda i: (0, 0)),
            ],
            out_specs=pl.BlockSpec((1, B, LANE), lambda i: (i, 0, 0)),
            scratch_shapes=[
                pltpu.VMEM((B * 784, C1_PAD), jnp.float32),   # conv1 output
                pltpu.VMEM((196, C1_PAD), jnp.float32),       # pooled conv1 (14x14)
                pltpu.VMEM((136, C2), jnp.float32),           # conv2 accumulator
                pltpu.VMEM((25, C2), jnp.float32),            # pooled conv2 (5x5)
                pltpu.VMEM((B, LANE), jnp.float32),           # fc1 pre-activation
            ],
        ),
        compiler_params=pltpu.CompilerParams(
            dimension_semantics=("parallel",)),
        cost_estimate=pl.CostEstimate(flops=flops, transcendentals=0,
                                      bytes_accessed=bytes_accessed),
    )(p, *weights)

    return out.reshape(N, LANE)[:, :10]


# pure-JAX reference (same semantics as the PyTorch forward)
def net_forward_ref(params, x):
    def conv(x, w, b):
        y = lax.conv_general_dilated(x, w, (1, 1), "VALID",
                                     dimension_numbers=("NCHW", "OIHW", "NCHW"))
        return jax.nn.relu(y + b.reshape(1, -1, 1, 1))

    def pool(x):
        return lax.reduce_window(x, -jnp.inf, lax.max,
                                 (1, 1, 2, 2), (1, 1, 2, 2), "VALID")

    x = pool(conv(x, params["conv1_w"], params["conv1_b"]))
    x = pool(conv(x, params["conv2_w"], params["conv2_b"]))
    x = x.reshape(x.shape[0], 16 * 5 * 5)
    x = jax.nn.relu(x @ params["fc1_w"].T + params["fc1_b"])
    x = jax.nn.relu(x @ params["fc2_w"].T + params["fc2_b"])
    return x @ params["fc3_w"].T + params["fc3_b"]


if __name__ == "__main__":
    key = jax.random.PRNGKey(0)
    pkey, xkey = jax.random.split(key)
    params = init_params(pkey)
    kparams = prepare_params(params)
    x = jax.random.normal(xkey, (2, 3, 32, 32), dtype=jnp.float32)

    fwd = jax.jit(net_forward)
    out = jax.block_until_ready(fwd(kparams, x))
    ref = jax.block_until_ready(net_forward_ref(params, x))

    assert out.shape == (2, 10), out.shape
    assert jnp.allclose(out, ref, atol=2e-3, rtol=2e-3), (out, ref)
    print("KERNEL_OK")
</pallas_src>

<mosaic_0001>
module attributes {stable_mosaic.version = 11 : i64} {
  func.func @_net_kernel(%arg0: i32, %arg1: memref<784x128xf32, #tpu.memory_space<vmem>>, %arg2: memref<128x8xf32, #tpu.memory_space<vmem>>, %arg3: memref<1x8xf32, #tpu.memory_space<vmem>>, %arg4: memref<25x8x16xf32, #tpu.memory_space<vmem>>, %arg5: memref<1x16xf32, #tpu.memory_space<vmem>>, %arg6: memref<25x16x128xf32, #tpu.memory_space<vmem>>, %arg7: memref<1x128xf32, #tpu.memory_space<vmem>>, %arg8: memref<128x128xf32, #tpu.memory_space<vmem>>, %arg9: memref<1x128xf32, #tpu.memory_space<vmem>>, %arg10: memref<128x128xf32, #tpu.memory_space<vmem>>, %arg11: memref<1x128xf32, #tpu.memory_space<vmem>>, %arg12: memref<1x1x128xf32, #tpu.memory_space<vmem>>, %arg13: memref<784x8xf32, #tpu.memory_space<vmem>>, %arg14: memref<196x8xf32, #tpu.memory_space<vmem>>, %arg15: memref<136x16xf32, #tpu.memory_space<vmem>>, %arg16: memref<25x16xf32, #tpu.memory_space<vmem>>, %arg17: memref<1x128xf32, #tpu.memory_space<vmem>>) attributes {dimension_semantics = [#tpu.dimension_semantics<parallel>], iteration_bounds = array<i64: 2>, scalar_prefetch = 0 : i64, scratch_operands = 5 : i64, tpu.core_type = #tpu.core_type<tc>, window_params = [{transform_indices = @transform_0, window_bounds = array<i64: 784, 128>}, {pipeline_mode = #tpu.pipeline_mode<synchronous>, transform_indices = @transform_1, window_bounds = array<i64: 128, 8>}, {pipeline_mode = #tpu.pipeline_mode<synchronous>, transform_indices = @transform_2, window_bounds = array<i64: 1, 8>}, {pipeline_mode = #tpu.pipeline_mode<synchronous>, transform_indices = @transform_3, window_bounds = array<i64: 25, 8, 16>}, {pipeline_mode = #tpu.pipeline_mode<synchronous>, transform_indices = @transform_4, window_bounds = array<i64: 1, 16>}, {pipeline_mode = #tpu.pipeline_mode<synchronous>, transform_indices = @transform_5, window_bounds = array<i64: 25, 16, 128>}, {pipeline_mode = #tpu.pipeline_mode<synchronous>, transform_indices = @transform_6, window_bounds = array<i64: 1, 128>}, {pipeline_mode = #tpu.pipeline_mode<synchronous>, transform_indices = @transform_7, window_bounds = array<i64: 128, 128>}, {pipeline_mode = #tpu.pipeline_mode<synchronous>, transform_indices = @transform_8, window_bounds = array<i64: 1, 128>}, {pipeline_mode = #tpu.pipeline_mode<synchronous>, transform_indices = @transform_9, window_bounds = array<i64: 128, 128>}, {pipeline_mode = #tpu.pipeline_mode<synchronous>, transform_indices = @transform_10, window_bounds = array<i64: 1, 128>}, {transform_indices = @transform_11, window_bounds = array<i64: 1, 1, 128>}]} {
    %c0 = arith.constant 0 : index
    %c0_0 = arith.constant 0 : index
    %0 = vector.load %arg1[%c0, %c0_0] : memref<784x128xf32, #tpu.memory_space<vmem>>, vector<784x128xf32>
    %c0_1 = arith.constant 0 : index
    %c0_2 = arith.constant 0 : index
    %1 = vector.load %arg2[%c0_1, %c0_2] : memref<128x8xf32, #tpu.memory_space<vmem>>, vector<128x8xf32>
    %cst = arith.constant dense<0.000000e+00> : vector<784x8xf32>
    %2 = tpu.matmul %0, %1, %cst {dimension_numbers = #tpu.dot_dimension_numbers<[1], [0], [0], [1], [0, 0, 1, 1], [], []>} : vector<784x128xf32>, vector<128x8xf32>, vector<784x8xf32> -> vector<784x8xf32>
    %c0_3 = arith.constant 0 : index
    %c0_4 = arith.constant 0 : index
    %3 = vector.load %arg3[%c0_3, %c0_4] : memref<1x8xf32, #tpu.memory_space<vmem>>, vector<1x8xf32>
    %4 = vector.broadcast %3 : vector<1x8xf32> to vector<784x8xf32>
    %5 = arith.addf %2, %4 : vector<784x8xf32>
    %cst_5 = arith.constant 0.000000e+00 : f32
    %6 = vector.broadcast %cst_5 : f32 to vector<784x8xf32>
    %7 = arith.maximumf %5, %6 : vector<784x8xf32>
    %c0_6 = arith.constant 0 : index
    %c0_7 = arith.constant 0 : index
    %8 = vector.load %arg13[%c0_6, %c0_7] : memref<784x8xf32, #tpu.memory_space<vmem>>, vector<784x8xf32>
    tpu.vector_store %arg13[%c0_6, %c0_7], %7 {strides = array<i32>} : memref<784x8xf32, #tpu.memory_space<vmem>>, vector<784x8xf32>,
    %c0_8 = arith.constant 0 : index
    %c0_9 = arith.constant 0 : index
    %9 = tpu.strided_load %arg13[%c0_8, %c0_9] {strides = array<i32: 2, 1>} : memref<784x8xf32, #tpu.memory_space<vmem>>, vector<14x8xf32>
    %c1 = arith.constant 1 : index
    %c0_10 = arith.constant 0 : index
    %10 = tpu.strided_load %arg13[%c1, %c0_10] {strides = array<i32: 2, 1>} : memref<784x8xf32, #tpu.memory_space<vmem>>, vector<14x8xf32>
    %11 = arith.maximumf %9, %10 : vector<14x8xf32>
    %c28 = arith.constant 28 : index
    %c0_11 = arith.constant 0 : index
    %12 = tpu.strided_load %arg13[%c28, %c0_11] {strides = array<i32: 2, 1>} : memref<784x8xf32, #tpu.memory_space<vmem>>, vector<14x8xf32>
    %c29 = arith.constant 29 : index
    %c0_12 = arith.constant 0 : index
    %13 = tpu.strided_load %arg13[%c29, %c0_12] {strides = array<i32: 2, 1>} : memref<784x8xf32, #tpu.memory_space<vmem>>, vector<14x8xf32>
    %14 = arith.maximumf %12, %13 : vector<14x8xf32>
    %15 = arith.maximumf %11, %14 : vector<14x8xf32>
    %c0_13 = arith.constant 0 : index
    %c0_14 = arith.constant 0 : index
    %16 = vector.load %arg14[%c0_13, %c0_14] : memref<196x8xf32, #tpu.memory_space<vmem>>, vector<14x8xf32>
    tpu.vector_store %arg14[%c0_13, %c0_14], %15 {strides = array<i32>} : memref<196x8xf32, #tpu.memory_space<vmem>>, vector<14x8xf32>,
    %c56 = arith.constant 56 : index
    %c0_15 = arith.constant 0 : index
    %17 = tpu.strided_load %arg13[%c56, %c0_15] {strides = array<i32: 2, 1>} : memref<784x8xf32, #tpu.memory_space<vmem>>, vector<14x8xf32>
    %c57 = arith.constant 57 : index
    %c0_16 = arith.constant 0 : index
    %18 = tpu.strided_load %arg13[%c57, %c0_16] {strides = array<i32: 2, 1>} : memref<784x8xf32, #tpu.memory_space<vmem>>, vector<14x8xf32>
    %19 = arith.maximumf %17, %18 : vector<14x8xf32>
    %c84 = arith.constant 84 : index
    %c0_17 = arith.constant 0 : index
    %20 = tpu.strided_load %arg13[%c84, %c0_17] {strides = array<i32: 2, 1>} : memref<784x8xf32, #tpu.memory_space<vmem>>, vector<14x8xf32>
    %c85 = arith.constant 85 : index
    %c0_18 = arith.constant 0 : index
    %21 = tpu.strided_load %arg13[%c85, %c0_18] {strides = array<i32: 2, 1>} : memref<784x8xf32, #tpu.memory_space<vmem>>, vector<14x8xf32>
    %22 = arith.maximumf %20, %21 : vector<14x8xf32>
    %23 = arith.maximumf %19, %22 : vector<14x8xf32>
    %c14 = arith.constant 14 : index
    %c0_19 = arith.constant 0 : index
    %24 = vector.load %arg14[%c14, %c0_19] : memref<196x8xf32, #tpu.memory_space<vmem>>, vector<14x8xf32>
    tpu.vector_store %arg14[%c14, %c0_19], %23 {strides = array<i32>} : memref<196x8xf32, #tpu.memory_space<vmem>>, vector<14x8xf32>,
    %c112 = arith.constant 112 : index
    %c0_20 = arith.constant 0 : index
    %25 = tpu.strided_load %arg13[%c112, %c0_20] {strides = array<i32: 2, 1>} : memref<784x8xf32, #tpu.memory_space<vmem>>, vector<14x8xf32>
    %c113 = arith.constant 113 : index
    %c0_21 = arith.constant 0 : index
    %26 = tpu.strided_load %arg13[%c113, %c0_21] {strides = array<i32: 2, 1>} : memref<784x8xf32, #tpu.memory_space<vmem>>, vector<14x8xf32>
    %27 = arith.maximumf %25, %26 : vector<14x8xf32>
    %c140 = arith.constant 140 : index
    %c0_22 = arith.constant 0 : index
    %28 = tpu.strided_load %arg13[%c140, %c0_22] {strides = array<i32: 2, 1>} : memref<784x8xf32, #tpu.memory_space<vmem>>, vector<14x8xf32>
    %c141 = arith.constant 141 : index
    %c0_23 = arith.constant 0 : index
    %29 = tpu.strided_load %arg13[%c141, %c0_23] {strides = array<i32: 2, 1>} : memref<784x8xf32, #tpu.memory_space<vmem>>, vector<14x8xf32>
    %30 = arith.maximumf %28, %29 : vector<14x8xf32>
    %31 = arith.maximumf %27, %30 : vector<14x8xf32>
    %c28_24 = arith.constant 28 : index
    %c0_25 = arith.constant 0 : index
    %32 = vector.load %arg14[%c28_24, %c0_25] : memref<196x8xf32, #tpu.memory_space<vmem>>, vector<14x8xf32>
    tpu.vector_store %arg14[%c28_24, %c0_25], %31 {strides = array<i32>} : memref<196x8xf32, #tpu.memory_space<vmem>>, vector<14x8xf32>,
    %c168 = arith.constant 168 : index
    %c0_26 = arith.constant 0 : index
    %33 = tpu.strided_load %arg13[%c168, %c0_26] {strides = array<i32: 2, 1>} : memref<784x8xf32, #tpu.memory_space<vmem>>, vector<14x8xf32>
    %c169 = arith.constant 169 : index
    %c0_27 = arith.constant 0 : index
    %34 = tpu.strided_load %arg13[%c169, %c0_27] {strides = array<i32: 2, 1>} : memref<784x8xf32, #tpu.memory_space<vmem>>, vector<14x8xf32>
    %35 = arith.maximumf %33, %34 : vector<14x8xf32>
    %c196 = arith.constant 196 : index
    %c0_28 = arith.constant 0 : index
    %36 = tpu.strided_load %arg13[%c196, %c0_28] {strides = array<i32: 2, 1>} : memref<784x8xf32, #tpu.memory_space<vmem>>, vector<14x8xf32>
    %c197 = arith.constant 197 : index
    %c0_29 = arith.constant 0 : index
    %37 = tpu.strided_load %arg13[%c197, %c0_29] {strides = array<i32: 2, 1>} : memref<784x8xf32, #tpu.memory_space<vmem>>, vector<14x8xf32>
    %38 = arith.maximumf %36, %37 : vector<14x8xf32>
    %39 = arith.maximumf %35, %38 : vector<14x8xf32>
    %c42 = arith.constant 42 : index
    %c0_30 = arith.constant 0 : index
    %40 = vector.load %arg14[%c42, %c0_30] : memref<196x8xf32, #tpu.memory_space<vmem>>, vector<14x8xf32>
    tpu.vector_store %arg14[%c42, %c0_30], %39 {strides = array<i32>} : memref<196x8xf32, #tpu.memory_space<vmem>>, vector<14x8xf32>,
    %c224 = arith.constant 224 : index
    %c0_31 = arith.constant 0 : index
    %41 = tpu.strided_load %arg13[%c224, %c0_31] {strides = array<i32: 2, 1>} : memref<784x8xf32, #tpu.memory_space<vmem>>, vector<14x8xf32>
    %c225 = arith.constant 225 : index
    %c0_32 = arith.constant 0 : index
    %42 = tpu.strided_load %arg13[%c225, %c0_32] {strides = array<i32: 2, 1>} : memref<784x8xf32, #tpu.memory_space<vmem>>, vector<14x8xf32>
    %43 = arith.maximumf %41, %42 : vector<14x8xf32>
    %c252 = arith.constant 252 : index
    %c0_33 = arith.constant 0 : index
    %44 = tpu.strided_load %arg13[%c252, %c0_33] {strides = array<i32: 2, 1>} : memref<784x8xf32, #tpu.memory_space<vmem>>, vector<14x8xf32>
    %c253 = arith.constant 253 : index
    %c0_34 = arith.constant 0 : index
    %45 = tpu.strided_load %arg13[%c253, %c0_34] {strides = array<i32: 2, 1>} : memref<784x8xf32, #tpu.memory_space<vmem>>, vector<14x8xf32>
    %46 = arith.maximumf %44, %45 : vector<14x8xf32>
    %47 = arith.maximumf %43, %46 : vector<14x8xf32>
    %c56_35 = arith.constant 56 : index
    %c0_36 = arith.constant 0 : index
    %48 = vector.load %arg14[%c56_35, %c0_36] : memref<196x8xf32, #tpu.memory_space<vmem>>, vector<14x8xf32>
    tpu.vector_store %arg14[%c56_35, %c0_36], %47 {strides = array<i32>} : memref<196x8xf32, #tpu.memory_space<vmem>>, vector<14x8xf32>,
    %c280 = arith.constant 280 : index
    %c0_37 = arith.constant 0 : index
    %49 = tpu.strided_load %arg13[%c280, %c0_37] {strides = array<i32: 2, 1>} : memref<784x8xf32, #tpu.memory_space<vmem>>, vector<14x8xf32>
    %c281 = arith.constant 281 : index
    %c0_38 = arith.constant 0 : index
    %50 = tpu.strided_load %arg13[%c281, %c0_38] {strides = array<i32: 2, 1>} : memref<784x8xf32, #tpu.memory_space<vmem>>, vector<14x8xf32>
    %51 = arith.maximumf %49, %50 : vector<14x8xf32>
    %c308 = arith.constant 308 : index
    %c0_39 = arith.constant 0 : index
    %52 = tpu.strided_load %arg13[%c308, %c0_39] {strides = array<i32: 2, 1>} : memref<784x8xf32, #tpu.memory_space<vmem>>, vector<14x8xf32>
    %c309 = arith.constant 309 : index
    %c0_40 = arith.constant 0 : index
    %53 = tpu.strided_load %arg13[%c309, %c0_40] {strides = array<i32: 2, 1>} : memref<784x8xf32, #tpu.memory_space<vmem>>, vector<14x8xf32>
    %54 = arith.maximumf %52, %53 : vector<14x8xf32>
    %55 = arith.maximumf %51, %54 : vector<14x8xf32>
    %c70 = arith.constant 70 : index
    %c0_41 = arith.constant 0 : index
    %56 = vector.load %arg14[%c70, %c0_41] : memref<196x8xf32, #tpu.memory_space<vmem>>, vector<14x8xf32>
    tpu.vector_store %arg14[%c70, %c0_41], %55 {strides = array<i32>} : memref<196x8xf32, #tpu.memory_space<vmem>>, vector<14x8xf32>,
    %c336 = arith.constant 336 : index
    %c0_42 = arith.constant 0 : index
    %57 = tpu.strided_load %arg13[%c336, %c0_42] {strides = array<i32: 2, 1>} : memref<784x8xf32, #tpu.memory_space<vmem>>, vector<14x8xf32>
    %c337 = arith.constant 337 : index
    %c0_43 = arith.constant 0 : index
    %58 = tpu.strided_load %arg13[%c337, %c0_43] {strides = array<i32: 2, 1>} : memref<784x8xf32, #tpu.memory_space<vmem>>, vector<14x8xf32>
    %59 = arith.maximumf %57, %58 : vector<14x8xf32>
    %c364 = arith.constant 364 : index
    %c0_44 = arith.constant 0 : index
    %60 = tpu.strided_load %arg13[%c364, %c0_44] {strides = array<i32: 2, 1>} : memref<784x8xf32, #tpu.memory_space<vmem>>, vector<14x8xf32>
    %c365 = arith.constant 365 : index
    %c0_45 = arith.constant 0 : index
    %61 = tpu.strided_load %arg13[%c365, %c0_45] {strides = array<i32: 2, 1>} : memref<784x8xf32, #tpu.memory_space<vmem>>, vector<14x8xf32>
    %62 = arith.maximumf %60, %61 : vector<14x8xf32>
    %63 = arith.maximumf %59, %62 : vector<14x8xf32>
    %c84_46 = arith.constant 84 : index
    %c0_47 = arith.constant 0 : index
    %64 = vector.load %arg14[%c84_46, %c0_47] : memref<196x8xf32, #tpu.memory_space<vmem>>, vector<14x8xf32>
    tpu.vector_store %arg14[%c84_46, %c0_47], %63 {strides = array<i32>} : memref<196x8xf32, #tpu.memory_space<vmem>>, vector<14x8xf32>,
    %c392 = arith.constant 392 : index
    %c0_48 = arith.constant 0 : index
    %65 = tpu.strided_load %arg13[%c392, %c0_48] {strides = array<i32: 2, 1>} : memref<784x8xf32, #tpu.memory_space<vmem>>, vector<14x8xf32>
    %c393 = arith.constant 393 : index
    %c0_49 = arith.constant 0 : index
    %66 = tpu.strided_load %arg13[%c393, %c0_49] {strides = array<i32: 2, 1>} : memref<784x8xf32, #tpu.memory_space<vmem>>, vector<14x8xf32>
    %67 = arith.maximumf %65, %66 : vector<14x8xf32>
    %c420 = arith.constant 420 : index
    %c0_50 = arith.constant 0 : index
    %68 = tpu.strided_load %arg13[%c420, %c0_50] {strides = array<i32: 2, 1>} : memref<784x8xf32, #tpu.memory_space<vmem>>, vector<14x8xf32>
    %c421 = arith.constant 421 : index
    %c0_51 = arith.constant 0 : index
    %69 = tpu.strided_load %arg13[%c421, %c0_51] {strides = array<i32: 2, 1>} : memref<784x8xf32, #tpu.memory_space<vmem>>, vector<14x8xf32>
    %70 = arith.maximumf %68, %69 : vector<14x8xf32>
    %71 = arith.maximumf %67, %70 : vector<14x8xf32>
    %c98 = arith.constant 98 : index
    %c0_52 = arith.constant 0 : index
    %72 = vector.load %arg14[%c98, %c0_52] : memref<196x8xf32, #tpu.memory_space<vmem>>, vector<14x8xf32>
    tpu.vector_store %arg14[%c98, %c0_52], %71 {strides = array<i32>} : memref<196x8xf32, #tpu.memory_space<vmem>>, vector<14x8xf32>,
    %c448 = arith.constant 448 : index
    %c0_53 = arith.constant 0 : index
    %73 = tpu.strided_load %arg13[%c448, %c0_53] {strides = array<i32: 2, 1>} : memref<784x8xf32, #tpu.memory_space<vmem>>, vector<14x8xf32>
    %c449 = arith.constant 449 : index
    %c0_54 = arith.constant 0 : index
    %74 = tpu.strided_load %arg13[%c449, %c0_54] {strides = array<i32: 2, 1>} : memref<784x8xf32, #tpu.memory_space<vmem>>, vector<14x8xf32>
    %75 = arith.maximumf %73, %74 : vector<14x8xf32>
    %c476 = arith.constant 476 : index
    %c0_55 = arith.constant 0 : index
    %76 = tpu.strided_load %arg13[%c476, %c0_55] {strides = array<i32: 2, 1>} : memref<784x8xf32, #tpu.memory_space<vmem>>, vector<14x8xf32>
    %c477 = arith.constant 477 : index
    %c0_56 = arith.constant 0 : index
    %77 = tpu.strided_load %arg13[%c477, %c0_56] {strides = array<i32: 2, 1>} : memref<784x8xf32, #tpu.memory_space<vmem>>, vector<14x8xf32>
    %78 = arith.maximumf %76, %77 : vector<14x8xf32>
    %79 = arith.maximumf %75, %78 : vector<14x8xf32>
    %c112_57 = arith.constant 112 : index
    %c0_58 = arith.constant 0 : index
    %80 = vector.load %arg14[%c112_57, %c0_58] : memref<196x8xf32, #tpu.memory_space<vmem>>, vector<14x8xf32>
    tpu.vector_store %arg14[%c112_57, %c0_58], %79 {strides = array<i32>} : memref<196x8xf32, #tpu.memory_space<vmem>>, vector<14x8xf32>,
    %c504 = arith.constant 504 : index
    %c0_59 = arith.constant 0 : index
    %81 = tpu.strided_load %arg13[%c504, %c0_59] {strides = array<i32: 2, 1>} : memref<784x8xf32, #tpu.memory_space<vmem>>, vector<14x8xf32>
    %c505 = arith.constant 505 : index
    %c0_60 = arith.constant 0 : index
    %82 = tpu.strided_load %arg13[%c505, %c0_60] {strides = array<i32: 2, 1>} : memref<784x8xf32, #tpu.memory_space<vmem>>, vector<14x8xf32>
    %83 = arith.maximumf %81, %82 : vector<14x8xf32>
    %c532 = arith.constant 532 : index
    %c0_61 = arith.constant 0 : index
    %84 = tpu.strided_load %arg13[%c532, %c0_61] {strides = array<i32: 2, 1>} : memref<784x8xf32, #tpu.memory_space<vmem>>, vector<14x8xf32>
    %c533 = arith.constant 533 : index
    %c0_62 = arith.constant 0 : index
    %85 = tpu.strided_load %arg13[%c533, %c0_62] {strides = array<i32: 2, 1>} : memref<784x8xf32, #tpu.memory_space<vmem>>, vector<14x8xf32>
    %86 = arith.maximumf %84, %85 : vector<14x8xf32>
    %87 = arith.maximumf %83, %86 : vector<14x8xf32>
    %c126 = arith.constant 126 : index
    %c0_63 = arith.constant 0 : index
    %88 = vector.load %arg14[%c126, %c0_63] : memref<196x8xf32, #tpu.memory_space<vmem>>, vector<14x8xf32>
    tpu.vector_store %arg14[%c126, %c0_63], %87 {strides = array<i32>} : memref<196x8xf32, #tpu.memory_space<vmem>>, vector<14x8xf32>,
    %c560 = arith.constant 560 : index
    %c0_64 = arith.constant 0 : index
    %89 = tpu.strided_load %arg13[%c560, %c0_64] {strides = array<i32: 2, 1>} : memref<784x8xf32, #tpu.memory_space<vmem>>, vector<14x8xf32>
    %c561 = arith.constant 561 : index
    %c0_65 = arith.constant 0 : index
    %90 = tpu.strided_load %arg13[%c561, %c0_65] {strides = array<i32: 2, 1>} : memref<784x8xf32, #tpu.memory_space<vmem>>, vector<14x8xf32>
    %91 = arith.maximumf %89, %90 : vector<14x8xf32>
    %c588 = arith.constant 588 : index
    %c0_66 = arith.constant 0 : index
    %92 = tpu.strided_load %arg13[%c588, %c0_66] {strides = array<i32: 2, 1>} : memref<784x8xf32, #tpu.memory_space<vmem>>, vector<14x8xf32>
    %c589 = arith.constant 589 : index
    %c0_67 = arith.constant 0 : index
    %93 = tpu.strided_load %arg13[%c589, %c0_67] {strides = array<i32: 2, 1>} : memref<784x8xf32, #tpu.memory_space<vmem>>, vector<14x8xf32>
    %94 = arith.maximumf %92, %93 : vector<14x8xf32>
    %95 = arith.maximumf %91, %94 : vector<14x8xf32>
    %c140_68 = arith.constant 140 : index
    %c0_69 = arith.constant 0 : index
    %96 = vector.load %arg14[%c140_68, %c0_69] : memref<196x8xf32, #tpu.memory_space<vmem>>, vector<14x8xf32>
    tpu.vector_store %arg14[%c140_68, %c0_69], %95 {strides = array<i32>} : memref<196x8xf32, #tpu.memory_space<vmem>>, vector<14x8xf32>,
    %c616 = arith.constant 616 : index
    %c0_70 = arith.constant 0 : index
    %97 = tpu.strided_load %arg13[%c616, %c0_70] {strides = array<i32: 2, 1>} : memref<784x8xf32, #tpu.memory_space<vmem>>, vector<14x8xf32>
    %c617 = arith.constant 617 : index
    %c0_71 = arith.constant 0 : index
    %98 = tpu.strided_load %arg13[%c617, %c0_71] {strides = array<i32: 2, 1>} : memref<784x8xf32, #tpu.memory_space<vmem>>, vector<14x8xf32>
    %99 = arith.maximumf %97, %98 : vector<14x8xf32>
    %c644 = arith.constant 644 : index
    %c0_72 = arith.constant 0 : index
    %100 = tpu.strided_load %arg13[%c644, %c0_72] {strides = array<i32: 2, 1>} : memref<784x8xf32, #tpu.memory_space<vmem>>, vector<14x8xf32>
    %c645 = arith.constant 645 : index
    %c0_73 = arith.constant 0 : index
    %101 = tpu.strided_load %arg13[%c645, %c0_73] {strides = array<i32: 2, 1>} : memref<784x8xf32, #tpu.memory_space<vmem>>, vector<14x8xf32>
    %102 = arith.maximumf %100, %101 : vector<14x8xf32>
    %103 = arith.maximumf %99, %102 : vector<14x8xf32>
    %c154 = arith.constant 154 : index
    %c0_74 = arith.constant 0 : index
    %104 = vector.load %arg14[%c154, %c0_74] : memref<196x8xf32, #tpu.memory_space<vmem>>, vector<14x8xf32>
    tpu.vector_store %arg14[%c154, %c0_74], %103 {strides = array<i32>} : memref<196x8xf32, #tpu.memory_space<vmem>>, vector<14x8xf32>,
    %c672 = arith.constant 672 : index
    %c0_75 = arith.constant 0 : index
    %105 = tpu.strided_load %arg13[%c672, %c0_75] {strides = array<i32: 2, 1>} : memref<784x8xf32, #tpu.memory_space<vmem>>, vector<14x8xf32>
    %c673 = arith.constant 673 : index
    %c0_76 = arith.constant 0 : index
    %106 = tpu.strided_load %arg13[%c673, %c0_76] {strides = array<i32: 2, 1>} : memref<784x8xf32, #tpu.memory_space<vmem>>, vector<14x8xf32>
    %107 = arith.maximumf %105, %106 : vector<14x8xf32>
    %c700 = arith.constant 700 : index
    %c0_77 = arith.constant 0 : index
    %108 = tpu.strided_load %arg13[%c700, %c0_77] {strides = array<i32: 2, 1>} : memref<784x8xf32, #tpu.memory_space<vmem>>, vector<14x8xf32>
    %c701 = arith.constant 701 : index
    %c0_78 = arith.constant 0 : index
    %109 = tpu.strided_load %arg13[%c701, %c0_78] {strides = array<i32: 2, 1>} : memref<784x8xf32, #tpu.memory_space<vmem>>, vector<14x8xf32>
    %110 = arith.maximumf %108, %109 : vector<14x8xf32>
    %111 = arith.maximumf %107, %110 : vector<14x8xf32>
    %c168_79 = arith.constant 168 : index
    %c0_80 = arith.constant 0 : index
    %112 = vector.load %arg14[%c168_79, %c0_80] : memref<196x8xf32, #tpu.memory_space<vmem>>, vector<14x8xf32>
    tpu.vector_store %arg14[%c168_79, %c0_80], %111 {strides = array<i32>} : memref<196x8xf32, #tpu.memory_space<vmem>>, vector<14x8xf32>,
    %c728 = arith.constant 728 : index
    %c0_81 = arith.constant 0 : index
    %113 = tpu.strided_load %arg13[%c728, %c0_81] {strides = array<i32: 2, 1>} : memref<784x8xf32, #tpu.memory_space<vmem>>, vector<14x8xf32>
    %c729 = arith.constant 729 : index
    %c0_82 = arith.constant 0 : index
    %114 = tpu.strided_load %arg13[%c729, %c0_82] {strides = array<i32: 2, 1>} : memref<784x8xf32, #tpu.memory_space<vmem>>, vector<14x8xf32>
    %115 = arith.maximumf %113, %114 : vector<14x8xf32>
    %c756 = arith.constant 756 : index
    %c0_83 = arith.constant 0 : index
    %116 = tpu.strided_load %arg13[%c756, %c0_83] {strides = array<i32: 2, 1>} : memref<784x8xf32, #tpu.memory_space<vmem>>, vector<14x8xf32>
    %c757 = arith.constant 757 : index
    %c0_84 = arith.constant 0 : index
    %117 = tpu.strided_load %arg13[%c757, %c0_84] {strides = array<i32: 2, 1>} : memref<784x8xf32, #tpu.memory_space<vmem>>, vector<14x8xf32>
    %118 = arith.maximumf %116, %117 : vector<14x8xf32>
    %119 = arith.maximumf %115, %118 : vector<14x8xf32>
    %c182 = arith.constant 182 : index
    %c0_85 = arith.constant 0 : index
    %120 = vector.load %arg14[%c182, %c0_85] : memref<196x8xf32, #tpu.memory_space<vmem>>, vector<14x8xf32>
    tpu.vector_store %arg14[%c182, %c0_85], %119 {strides = array<i32>} : memref<196x8xf32, #tpu.memory_space<vmem>>, vector<14x8xf32>,
    %cst_86 = arith.constant 0.000000e+00 : f32
    %121 = vector.broadcast %cst_86 : f32 to vector<136x16xf32>
    %c0_87 = arith.constant 0 : index
    %c0_88 = arith.constant 0 : index
    %122 = vector.load %arg15[%c0_87, %c0_88] : memref<136x16xf32, #tpu.memory_space<vmem>>, vector<136x16xf32>
    tpu.vector_store %arg15[%c0_87, %c0_88], %121 {strides = array<i32>} : memref<136x16xf32, #tpu.memory_space<vmem>>, vector<136x16xf32>,
    %c0_89 = arith.constant 0 : index
    %c0_90 = arith.constant 0 : index
    %123 = vector.load %arg15[%c0_89, %c0_90] : memref<136x16xf32, #tpu.memory_space<vmem>>, vector<136x16xf32>
    %c0_91 = arith.constant 0 : index
    %c0_92 = arith.constant 0 : index
    %124 = vector.load %arg14[%c0_91, %c0_92] : memref<196x8xf32, #tpu.memory_space<vmem>>, vector<136x8xf32>
    %c0_93 = arith.constant 0 : index
    %c0_94 = arith.constant 0 : index
    %c0_95 = arith.constant 0 : index
    %125 = vector.load %arg4[%c0_93, %c0_94, %c0_95] : memref<25x8x16xf32, #tpu.memory_space<vmem>>, vector<1x8x16xf32>
    %126 = vector.shape_cast %125 : vector<1x8x16xf32> to vector<8x16xf32>
    %cst_96 = arith.constant dense<0.000000e+00> : vector<136x16xf32>
    %127 = tpu.matmul %124, %126, %cst_96 {dimension_numbers = #tpu.dot_dimension_numbers<[1], [0], [0], [1], [0, 0, 1, 1], [], []>} : vector<136x8xf32>, vector<8x16xf32>, vector<136x16xf32> -> vector<136x16xf32>
    %128 = arith.addf %123, %127 : vector<136x16xf32>
    %c0_97 = arith.constant 0 : index
    %c0_98 = arith.constant 0 : index
    %129 = vector.load %arg15[%c0_97, %c0_98] : memref<136x16xf32, #tpu.memory_space<vmem>>, vector<136x16xf32>
    tpu.vector_store %arg15[%c0_97, %c0_98], %128 {strides = array<i32>} : memref<136x16xf32, #tpu.memory_space<vmem>>, vector<136x16xf32>,
    %c0_99 = arith.constant 0 : index
    %c0_100 = arith.constant 0 : index
    %130 = vector.load %arg15[%c0_99, %c0_100] : memref<136x16xf32, #tpu.memory_space<vmem>>, vector<136x16xf32>
    %c1_101 = arith.constant 1 : index
    %c0_102 = arith.constant 0 : index
    %131 = vector.load %arg14[%c1_101, %c0_102] : memref<196x8xf32, #tpu.memory_space<vmem>>, vector<136x8xf32>
    %c1_103 = arith.constant 1 : index
    %c0_104 = arith.constant 0 : index
    %c0_105 = arith.constant 0 : index
    %132 = vector.load %arg4[%c1_103, %c0_104, %c0_105] : memref<25x8x16xf32, #tpu.memory_space<vmem>>, vector<1x8x16xf32>
    %133 = vector.shape_cast %132 : vector<1x8x16xf32> to vector<8x16xf32>
    %cst_106 = arith.constant dense<0.000000e+00> : vector<136x16xf32>
    %134 = tpu.matmul %131, %133, %cst_106 {dimension_numbers = #tpu.dot_dimension_numbers<[1], [0], [0], [1], [0, 0, 1, 1], [], []>} : vector<136x8xf32>, vector<8x16xf32>, vector<136x16xf32> -> vector<136x16xf32>
    %135 = arith.addf %130, %134 : vector<136x16xf32>
    %c0_107 = arith.constant 0 : index
    %c0_108 = arith.constant 0 : index
    %136 = vector.load %arg15[%c0_107, %c0_108] : memref<136x16xf32, #tpu.memory_space<vmem>>, vector<136x16xf32>
    tpu.vector_store %arg15[%c0_107, %c0_108], %135 {strides = array<i32>} : memref<136x16xf32, #tpu.memory_space<vmem>>, vector<136x16xf32>,
    %c0_109 = arith.constant 0 : index
    %c0_110 = arith.constant 0 : index
    %137 = vector.load %arg15[%c0_109, %c0_110] : memref<136x16xf32, #tpu.memory_space<vmem>>, vector<136x16xf32>
    %c2 = arith.constant 2 : index
    %c0_111 = arith.constant 0 : index
    %138 = vector.load %arg14[%c2, %c0_111] : memref<196x8xf32, #tpu.memory_space<vmem>>, vector<136x8xf32>
    %c2_112 = arith.constant 2 : index
    %c0_113 = arith.constant 0 : index
    %c0_114 = arith.constant 0 : index
    %139 = vector.load %arg4[%c2_112, %c0_113, %c0_114] : memref<25x8x16xf32, #tpu.memory_space<vmem>>, vector<1x8x16xf32>
    %140 = vector.shape_cast %139 : vector<1x8x16xf32> to vector<8x16xf32>
    %cst_115 = arith.constant dense<0.000000e+00> : vector<136x16xf32>
    %141 = tpu.matmul %138, %140, %cst_115 {dimension_numbers = #tpu.dot_dimension_numbers<[1], [0], [0], [1], [0, 0, 1, 1], [], []>} : vector<136x8xf32>, vector<8x16xf32>, vector<136x16xf32> -> vector<136x16xf32>
    %142 = arith.addf %137, %141 : vector<136x16xf32>
    %c0_116 = arith.constant 0 : index
    %c0_117 = arith.constant 0 : index
    %143 = vector.load %arg15[%c0_116, %c0_117] : memref<136x16xf32, #tpu.memory_space<vmem>>, vector<136x16xf32>
    tpu.vector_store %arg15[%c0_116, %c0_117], %142 {strides = array<i32>} : memref<136x16xf32, #tpu.memory_space<vmem>>, vector<136x16xf32>,
    %c0_118 = arith.constant 0 : index
    %c0_119 = arith.constant 0 : index
    %144 = vector.load %arg15[%c0_118, %c0_119] : memref<136x16xf32, #tpu.memory_space<vmem>>, vector<136x16xf32>
    %c3 = arith.constant 3 : index
    %c0_120 = arith.constant 0 : index
    %145 = vector.load %arg14[%c3, %c0_120] : memref<196x8xf32, #tpu.memory_space<vmem>>, vector<136x8xf32>
    %c3_121 = arith.constant 3 : index
    %c0_122 = arith.constant 0 : index
    %c0_123 = arith.constant 0 : index
    %146 = vector.load %arg4[%c3_121, %c0_122, %c0_123] : memref<25x8x16xf32, #tpu.memory_space<vmem>>, vector<1x8x16xf32>
    %147 = vector.shape_cast %146 : vector<1x8x16xf32> to vector<8x16xf32>
    %cst_124 = arith.constant dense<0.000000e+00> : vector<136x16xf32>
    %148 = tpu.matmul %145, %147, %cst_124 {dimension_numbers = #tpu.dot_dimension_numbers<[1], [0], [0], [1], [0, 0, 1, 1], [], []>} : vector<136x8xf32>, vector<8x16xf32>, vector<136x16xf32> -> vector<136x16xf32>
    %149 = arith.addf %144, %148 : vector<136x16xf32>
    %c0_125 = arith.constant 0 : index
    %c0_126 = arith.constant 0 : index
    %150 = vector.load %arg15[%c0_125, %c0_126] : memref<136x16xf32, #tpu.memory_space<vmem>>, vector<136x16xf32>
    tpu.vector_store %arg15[%c0_125, %c0_126], %149 {strides = array<i32>} : memref<136x16xf32, #tpu.memory_space<vmem>>, vector<136x16xf32>,
    %c0_127 = arith.constant 0 : index
    %c0_128 = arith.constant 0 : index
    %151 = vector.load %arg15[%c0_127, %c0_128] : memref<136x16xf32, #tpu.memory_space<vmem>>, vector<136x16xf32>
    %c4 = arith.constant 4 : index
    %c0_129 = arith.constant 0 : index
    %152 = vector.load %arg14[%c4, %c0_129] : memref<196x8xf32, #tpu.memory_space<vmem>>, vector<136x8xf32>
    %c4_130 = arith.constant 4 : index
    %c0_131 = arith.constant 0 : index
    %c0_132 = arith.constant 0 : index
    %153 = vector.load %arg4[%c4_130, %c0_131, %c0_132] : memref<25x8x16xf32, #tpu.memory_space<vmem>>, vector<1x8x16xf32>
    %154 = vector.shape_cast %153 : vector<1x8x16xf32> to vector<8x16xf32>
    %cst_133 = arith.constant dense<0.000000e+00> : vector<136x16xf32>
    %155 = tpu.matmul %152, %154, %cst_133 {dimension_numbers = #tpu.dot_dimension_numbers<[1], [0], [0], [1], [0, 0, 1, 1], [], []>} : vector<136x8xf32>, vector<8x16xf32>, vector<136x16xf32> -> vector<136x16xf32>
    %156 = arith.addf %151, %155 : vector<136x16xf32>
    %c0_134 = arith.constant 0 : index
    %c0_135 = arith.constant 0 : index
    %157 = vector.load %arg15[%c0_134, %c0_135] : memref<136x16xf32, #tpu.memory_space<vmem>>, vector<136x16xf32>
    tpu.vector_store %arg15[%c0_134, %c0_135], %156 {strides = array<i32>} : memref<136x16xf32, #tpu.memory_space<vmem>>, vector<136x16xf32>,
    %c0_136 = arith.constant 0 : index
    %c0_137 = arith.constant 0 : index
    %158 = vector.load %arg15[%c0_136, %c0_137] : memref<136x16xf32, #tpu.memory_space<vmem>>, vector<136x16xf32>
    %c14_138 = arith.constant 14 : index
    %c0_139 = arith.constant 0 : index
    %159 = vector.load %arg14[%c14_138, %c0_139] : memref<196x8xf32, #tpu.memory_space<vmem>>, vector<136x8xf32>
    %c5 = arith.constant 5 : index
    %c0_140 = arith.constant 0 : index
    %c0_141 = arith.constant 0 : index
    %160 = vector.load %arg4[%c5, %c0_140, %c0_141] : memref<25x8x16xf32, #tpu.memory_space<vmem>>, vector<1x8x16xf32>
    %161 = vector.shape_cast %160 : vector<1x8x16xf32> to vector<8x16xf32>
    %cst_142 = arith.constant dense<0.000000e+00> : vector<136x16xf32>
    %162 = tpu.matmul %159, %161, %cst_142 {dimension_numbers = #tpu.dot_dimension_numbers<[1], [0], [0], [1], [0, 0, 1, 1], [], []>} : vector<136x8xf32>, vector<8x16xf32>, vector<136x16xf32> -> vector<136x16xf32>
    %163 = arith.addf %158, %162 : vector<136x16xf32>
    %c0_143 = arith.constant 0 : index
    %c0_144 = arith.constant 0 : index
    %164 = vector.load %arg15[%c0_143, %c0_144] : memref<136x16xf32, #tpu.memory_space<vmem>>, vector<136x16xf32>
    tpu.vector_store %arg15[%c0_143, %c0_144], %163 {strides = array<i32>} : memref<136x16xf32, #tpu.memory_space<vmem>>, vector<136x16xf32>,
    %c0_145 = arith.constant 0 : index
    %c0_146 = arith.constant 0 : index
    %165 = vector.load %arg15[%c0_145, %c0_146] : memref<136x16xf32, #tpu.memory_space<vmem>>, vector<136x16xf32>
    %c15 = arith.constant 15 : index
    %c0_147 = arith.constant 0 : index
    %166 = vector.load %arg14[%c15, %c0_147] : memref<196x8xf32, #tpu.memory_space<vmem>>, vector<136x8xf32>
    %c6 = arith.constant 6 : index
    %c0_148 = arith.constant 0 : index
    %c0_149 = arith.constant 0 : index
    %167 = vector.load %arg4[%c6, %c0_148, %c0_149] : memref<25x8x16xf32, #tpu.memory_space<vmem>>, vector<1x8x16xf32>
    %168 = vector.shape_cast %167 : vector<1x8x16xf32> to vector<8x16xf32>
    %cst_150 = arith.constant dense<0.000000e+00> : vector<136x16xf32>
    %169 = tpu.matmul %166, %168, %cst_150 {dimension_numbers = #tpu.dot_dimension_numbers<[1], [0], [0], [1], [0, 0, 1, 1], [], []>} : vector<136x8xf32>, vector<8x16xf32>, vector<136x16xf32> -> vector<136x16xf32>
    %170 = arith.addf %165, %169 : vector<136x16xf32>
    %c0_151 = arith.constant 0 : index
    %c0_152 = arith.constant 0 : index
    %171 = vector.load %arg15[%c0_151, %c0_152] : memref<136x16xf32, #tpu.memory_space<vmem>>, vector<136x16xf32>
    tpu.vector_store %arg15[%c0_151, %c0_152], %170 {strides = array<i32>} : memref<136x16xf32, #tpu.memory_space<vmem>>, vector<136x16xf32>,
    %c0_153 = arith.constant 0 : index
    %c0_154 = arith.constant 0 : index
    %172 = vector.load %arg15[%c0_153, %c0_154] : memref<136x16xf32, #tpu.memory_space<vmem>>, vector<136x16xf32>
    %c16 = arith.constant 16 : index
    %c0_155 = arith.constant 0 : index
    %173 = vector.load %arg14[%c16, %c0_155] : memref<196x8xf32, #tpu.memory_space<vmem>>, vector<136x8xf32>
    %c7 = arith.constant 7 : index
    %c0_156 = arith.constant 0 : index
    %c0_157 = arith.constant 0 : index
    %174 = vector.load %arg4[%c7, %c0_156, %c0_157] : memref<25x8x16xf32, #tpu.memory_space<vmem>>, vector<1x8x16xf32>
    %175 = vector.shape_cast %174 : vector<1x8x16xf32> to vector<8x16xf32>
    %cst_158 = arith.constant dense<0.000000e+00> : vector<136x16xf32>
    %176 = tpu.matmul %173, %175, %cst_158 {dimension_numbers = #tpu.dot_dimension_numbers<[1], [0], [0], [1], [0, 0, 1, 1], [], []>} : vector<136x8xf32>, vector<8x16xf32>, vector<136x16xf32> -> vector<136x16xf32>
    %177 = arith.addf %172, %176 : vector<136x16xf32>
    %c0_159 = arith.constant 0 : index
    %c0_160 = arith.constant 0 : index
    %178 = vector.load %arg15[%c0_159, %c0_160] : memref<136x16xf32, #tpu.memory_space<vmem>>, vector<136x16xf32>
    tpu.vector_store %arg15[%c0_159, %c0_160], %177 {strides = array<i32>} : memref<136x16xf32, #tpu.memory_space<vmem>>, vector<136x16xf32>,
    %c0_161 = arith.constant 0 : index
    %c0_162 = arith.constant 0 : index
    %179 = vector.load %arg15[%c0_161, %c0_162] : memref<136x16xf32, #tpu.memory_space<vmem>>, vector<136x16xf32>
    %c17 = arith.constant 17 : index
    %c0_163 = arith.constant 0 : index
    %180 = vector.load %arg14[%c17, %c0_163] : memref<196x8xf32, #tpu.memory_space<vmem>>, vector<136x8xf32>
    %c8 = arith.constant 8 : index
    %c0_164 = arith.constant 0 : index
    %c0_165 = arith.constant 0 : index
    %181 = vector.load %arg4[%c8, %c0_164, %c0_165] : memref<25x8x16xf32, #tpu.memory_space<vmem>>, vector<1x8x16xf32>
    %182 = vector.shape_cast %181 : vector<1x8x16xf32> to vector<8x16xf32>
    %cst_166 = arith.constant dense<0.000000e+00> : vector<136x16xf32>
    %183 = tpu.matmul %180, %182, %cst_166 {dimension_numbers = #tpu.dot_dimension_numbers<[1], [0], [0], [1], [0, 0, 1, 1], [], []>} : vector<136x8xf32>, vector<8x16xf32>, vector<136x16xf32> -> vector<136x16xf32>
    %184 = arith.addf %179, %183 : vector<136x16xf32>
    %c0_167 = arith.constant 0 : index
    %c0_168 = arith.constant 0 : index
    %185 = vector.load %arg15[%c0_167, %c0_168] : memref<136x16xf32, #tpu.memory_space<vmem>>, vector<136x16xf32>
    tpu.vector_store %arg15[%c0_167, %c0_168], %184 {strides = array<i32>} : memref<136x16xf32, #tpu.memory_space<vmem>>, vector<136x16xf32>,
    %c0_169 = arith.constant 0 : index
    %c0_170 = arith.constant 0 : index
    %186 = vector.load %arg15[%c0_169, %c0_170] : memref<136x16xf32, #tpu.memory_space<vmem>>, vector<136x16xf32>
    %c18 = arith.constant 18 : index
    %c0_171 = arith.constant 0 : index
    %187 = vector.load %arg14[%c18, %c0_171] : memref<196x8xf32, #tpu.memory_space<vmem>>, vector<136x8xf32>
    %c9 = arith.constant 9 : index
    %c0_172 = arith.constant 0 : index
    %c0_173 = arith.constant 0 : index
    %188 = vector.load %arg4[%c9, %c0_172, %c0_173] : memref<25x8x16xf32, #tpu.memory_space<vmem>>, vector<1x8x16xf32>
    %189 = vector.shape_cast %188 : vector<1x8x16xf32> to vector<8x16xf32>
    %cst_174 = arith.constant dense<0.000000e+00> : vector<136x16xf32>
    %190 = tpu.matmul %187, %189, %cst_174 {dimension_numbers = #tpu.dot_dimension_numbers<[1], [0], [0], [1], [0, 0, 1, 1], [], []>} : vector<136x8xf32>, vector<8x16xf32>, vector<136x16xf32> -> vector<136x16xf32>
    %191 = arith.addf %186, %190 : vector<136x16xf32>
    %c0_175 = arith.constant 0 : index
    %c0_176 = arith.constant 0 : index
    %192 = vector.load %arg15[%c0_175, %c0_176] : memref<136x16xf32, #tpu.memory_space<vmem>>, vector<136x16xf32>
    tpu.vector_store %arg15[%c0_175, %c0_176], %191 {strides = array<i32>} : memref<136x16xf32, #tpu.memory_space<vmem>>, vector<136x16xf32>,
    %c0_177 = arith.constant 0 : index
    %c0_178 = arith.constant 0 : index
    %193 = vector.load %arg15[%c0_177, %c0_178] : memref<136x16xf32, #tpu.memory_space<vmem>>, vector<136x16xf32>
    %c28_179 = arith.constant 28 : index
    %c0_180 = arith.constant 0 : index
    %194 = vector.load %arg14[%c28_179, %c0_180] : memref<196x8xf32, #tpu.memory_space<vmem>>, vector<136x8xf32>
    %c10 = arith.constant 10 : index
    %c0_181 = arith.constant 0 : index
    %c0_182 = arith.constant 0 : index
    %195 = vector.load %arg4[%c10, %c0_181, %c0_182] : memref<25x8x16xf32, #tpu.memory_space<vmem>>, vector<1x8x16xf32>
    %196 = vector.shape_cast %195 : vector<1x8x16xf32> to vector<8x16xf32>
    %cst_183 = arith.constant dense<0.000000e+00> : vector<136x16xf32>
    %197 = tpu.matmul %194, %196, %cst_183 {dimension_numbers = #tpu.dot_dimension_numbers<[1], [0], [0], [1], [0, 0, 1, 1], [], []>} : vector<136x8xf32>, vector<8x16xf32>, vector<136x16xf32> -> vector<136x16xf32>
    %198 = arith.addf %193, %197 : vector<136x16xf32>
    %c0_184 = arith.constant 0 : index
    %c0_185 = arith.constant 0 : index
    %199 = vector.load %arg15[%c0_184, %c0_185] : memref<136x16xf32, #tpu.memory_space<vmem>>, vector<136x16xf32>
    tpu.vector_store %arg15[%c0_184, %c0_185], %198 {strides = array<i32>} : memref<136x16xf32, #tpu.memory_space<vmem>>, vector<136x16xf32>,
    %c0_186 = arith.constant 0 : index
    %c0_187 = arith.constant 0 : index
    %200 = vector.load %arg15[%c0_186, %c0_187] : memref<136x16xf32, #tpu.memory_space<vmem>>, vector<136x16xf32>
    %c29_188 = arith.constant 29 : index
    %c0_189 = arith.constant 0 : index
    %201 = vector.load %arg14[%c29_188, %c0_189] : memref<196x8xf32, #tpu.memory_space<vmem>>, vector<136x8xf32>
    %c11 = arith.constant 11 : index
    %c0_190 = arith.constant 0 : index
    %c0_191 = arith.constant 0 : index
    %202 = vector.load %arg4[%c11, %c0_190, %c0_191] : memref<25x8x16xf32, #tpu.memory_space<vmem>>, vector<1x8x16xf32>
    %203 = vector.shape_cast %202 : vector<1x8x16xf32> to vector<8x16xf32>
    %cst_192 = arith.constant dense<0.000000e+00> : vector<136x16xf32>
    %204 = tpu.matmul %201, %203, %cst_192 {dimension_numbers = #tpu.dot_dimension_numbers<[1], [0], [0], [1], [0, 0, 1, 1], [], []>} : vector<136x8xf32>, vector<8x16xf32>, vector<136x16xf32> -> vector<136x16xf32>
    %205 = arith.addf %200, %204 : vector<136x16xf32>
    %c0_193 = arith.constant 0 : index
    %c0_194 = arith.constant 0 : index
    %206 = vector.load %arg15[%c0_193, %c0_194] : memref<136x16xf32, #tpu.memory_space<vmem>>, vector<136x16xf32>
    tpu.vector_store %arg15[%c0_193, %c0_194], %205 {strides = array<i32>} : memref<136x16xf32, #tpu.memory_space<vmem>>, vector<136x16xf32>,
    %c0_195 = arith.constant 0 : index
    %c0_196 = arith.constant 0 : index
    %207 = vector.load %arg15[%c0_195, %c0_196] : memref<136x16xf32, #tpu.memory_space<vmem>>, vector<136x16xf32>
    %c30 = arith.constant 30 : index
    %c0_197 = arith.constant 0 : index
    %208 = vector.load %arg14[%c30, %c0_197] : memref<196x8xf32, #tpu.memory_space<vmem>>, vector<136x8xf32>
    %c12 = arith.constant 12 : index
    %c0_198 = arith.constant 0 : index
    %c0_199 = arith.constant 0 : index
    %209 = vector.load %arg4[%c12, %c0_198, %c0_199] : memref<25x8x16xf32, #tpu.memory_space<vmem>>, vector<1x8x16xf32>
    %210 = vector.shape_cast %209 : vector<1x8x16xf32> to vector<8x16xf32>
    %cst_200 = arith.constant dense<0.000000e+00> : vector<136x16xf32>
    %211 = tpu.matmul %208, %210, %cst_200 {dimension_numbers = #tpu.dot_dimension_numbers<[1], [0], [0], [1], [0, 0, 1, 1], [], []>} : vector<136x8xf32>, vector<8x16xf32>, vector<136x16xf32> -> vector<136x16xf32>
    %212 = arith.addf %207, %211 : vector<136x16xf32>
    %c0_201 = arith.constant 0 : index
    %c0_202 = arith.constant 0 : index
    %213 = vector.load %arg15[%c0_201, %c0_202] : memref<136x16xf32, #tpu.memory_space<vmem>>, vector<136x16xf32>
    tpu.vector_store %arg15[%c0_201, %c0_202], %212 {strides = array<i32>} : memref<136x16xf32, #tpu.memory_space<vmem>>, vector<136x16xf32>,
    %c0_203 = arith.constant 0 : index
    %c0_204 = arith.constant 0 : index
    %214 = vector.load %arg15[%c0_203, %c0_204] : memref<136x16xf32, #tpu.memory_space<vmem>>, vector<136x16xf32>
    %c31 = arith.constant 31 : index
    %c0_205 = arith.constant 0 : index
    %215 = vector.load %arg14[%c31, %c0_205] : memref<196x8xf32, #tpu.memory_space<vmem>>, vector<136x8xf32>
    %c13 = arith.constant 13 : index
    %c0_206 = arith.constant 0 : index
    %c0_207 = arith.constant 0 : index
    %216 = vector.load %arg4[%c13, %c0_206, %c0_207] : memref<25x8x16xf32, #tpu.memory_space<vmem>>, vector<1x8x16xf32>
    %217 = vector.shape_cast %216 : vector<1x8x16xf32> to vector<8x16xf32>
    %cst_208 = arith.constant dense<0.000000e+00> : vector<136x16xf32>
    %218 = tpu.matmul %215, %217, %cst_208 {dimension_numbers = #tpu.dot_dimension_numbers<[1], [0], [0], [1], [0, 0, 1, 1], [], []>} : vector<136x8xf32>, vector<8x16xf32>, vector<136x16xf32> -> vector<136x16xf32>
    %219 = arith.addf %214, %218 : vector<136x16xf32>
    %c0_209 = arith.constant 0 : index
    %c0_210 = arith.constant 0 : index
    %220 = vector.load %arg15[%c0_209, %c0_210] : memref<136x16xf32, #tpu.memory_space<vmem>>, vector<136x16xf32>
    tpu.vector_store %arg15[%c0_209, %c0_210], %219 {strides = array<i32>} : memref<136x16xf32, #tpu.memory_space<vmem>>, vector<136x16xf32>,
    %c0_211 = arith.constant 0 : index
    %c0_212 = arith.constant 0 : index
    %221 = vector.load %arg15[%c0_211, %c0_212] : memref<136x16xf32, #tpu.memory_space<vmem>>, vector<136x16xf32>
    %c32 = arith.constant 32 : index
    %c0_213 = arith.constant 0 : index
    %222 = vector.load %arg14[%c32, %c0_213] : memref<196x8xf32, #tpu.memory_space<vmem>>, vector<136x8xf32>
    %c14_214 = arith.constant 14 : index
    %c0_215 = arith.constant 0 : index
    %c0_216 = arith.constant 0 : index
    %223 = vector.load %arg4[%c14_214, %c0_215, %c0_216] : memref<25x8x16xf32, #tpu.memory_space<vmem>>, vector<1x8x16xf32>
    %224 = vector.shape_cast %223 : vector<1x8x16xf32> to vector<8x16xf32>
    %cst_217 = arith.constant dense<0.000000e+00> : vector<136x16xf32>
    %225 = tpu.matmul %222, %224, %cst_217 {dimension_numbers = #tpu.dot_dimension_numbers<[1], [0], [0], [1], [0, 0, 1, 1], [], []>} : vector<136x8xf32>, vector<8x16xf32>, vector<136x16xf32> -> vector<136x16xf32>
    %226 = arith.addf %221, %225 : vector<136x16xf32>
    %c0_218 = arith.constant 0 : index
    %c0_219 = arith.constant 0 : index
    %227 = vector.load %arg15[%c0_218, %c0_219] : memref<136x16xf32, #tpu.memory_space<vmem>>, vector<136x16xf32>
    tpu.vector_store %arg15[%c0_218, %c0_219], %226 {strides = array<i32>} : memref<136x16xf32, #tpu.memory_space<vmem>>, vector<136x16xf32>,
    %c0_220 = arith.constant 0 : index
    %c0_221 = arith.constant 0 : index
    %228 = vector.load %arg15[%c0_220, %c0_221] : memref<136x16xf32, #tpu.memory_space<vmem>>, vector<136x16xf32>
    %c42_222 = arith.constant 42 : index
    %c0_223 = arith.constant 0 : index
    %229 = vector.load %arg14[%c42_222, %c0_223] : memref<196x8xf32, #tpu.memory_space<vmem>>, vector<136x8xf32>
    %c15_224 = arith.constant 15 : index
    %c0_225 = arith.constant 0 : index
    %c0_226 = arith.constant 0 : index
    %230 = vector.load %arg4[%c15_224, %c0_225, %c0_226] : memref<25x8x16xf32, #tpu.memory_space<vmem>>, vector<1x8x16xf32>
    %231 = vector.shape_cast %230 : vector<1x8x16xf32> to vector<8x16xf32>
    %cst_227 = arith.constant dense<0.000000e+00> : vector<136x16xf32>
    %232 = tpu.matmul %229, %231, %cst_227 {dimension_numbers = #tpu.dot_dimension_numbers<[1], [0], [0], [1], [0, 0, 1, 1], [], []>} : vector<136x8xf32>, vector<8x16xf32>, vector<136x16xf32> -> vector<136x16xf32>
    %233 = arith.addf %228, %232 : vector<136x16xf32>
    %c0_228 = arith.constant 0 : index
    %c0_229 = arith.constant 0 : index
    %234 = vector.load %arg15[%c0_228, %c0_229] : memref<136x16xf32, #tpu.memory_space<vmem>>, vector<136x16xf32>
    tpu.vector_store %arg15[%c0_228, %c0_229], %233 {strides = array<i32>} : memref<136x16xf32, #tpu.memory_space<vmem>>, vector<136x16xf32>,
    %c0_230 = arith.constant 0 : index
    %c0_231 = arith.constant 0 : index
    %235 = vector.load %arg15[%c0_230, %c0_231] : memref<136x16xf32, #tpu.memory_space<vmem>>, vector<136x16xf32>
    %c43 = arith.constant 43 : index
    %c0_232 = arith.constant 0 : index
    %236 = vector.load %arg14[%c43, %c0_232] : memref<196x8xf32, #tpu.memory_space<vmem>>, vector<136x8xf32>
    %c16_233 = arith.constant 16 : index
    %c0_234 = arith.constant 0 : index
    %c0_235 = arith.constant 0 : index
    %237 = vector.load %arg4[%c16_233, %c0_234, %c0_235] : memref<25x8x16xf32, #tpu.memory_space<vmem>>, vector<1x8x16xf32>
    %238 = vector.shape_cast %237 : vector<1x8x16xf32> to vector<8x16xf32>
    %cst_236 = arith.constant dense<0.000000e+00> : vector<136x16xf32>
    %239 = tpu.matmul %236, %238, %cst_236 {dimension_numbers = #tpu.dot_dimension_numbers<[1], [0], [0], [1], [0, 0, 1, 1], [], []>} : vector<136x8xf32>, vector<8x16xf32>, vector<136x16xf32> -> vector<136x16xf32>
    %240 = arith.addf %235, %239 : vector<136x16xf32>
    %c0_237 = arith.constant 0 : index
    %c0_238 = arith.constant 0 : index
    %241 = vector.load %arg15[%c0_237, %c0_238] : memref<136x16xf32, #tpu.memory_space<vmem>>, vector<136x16xf32>
    tpu.vector_store %arg15[%c0_237, %c0_238], %240 {strides = array<i32>} : memref<136x16xf32, #tpu.memory_space<vmem>>, vector<136x16xf32>,
    %c0_239 = arith.constant 0 : index
    %c0_240 = arith.constant 0 : index
    %242 = vector.load %arg15[%c0_239, %c0_240] : memref<136x16xf32, #tpu.memory_space<vmem>>, vector<136x16xf32>
    %c44 = arith.constant 44 : index
    %c0_241 = arith.constant 0 : index
    %243 = vector.load %arg14[%c44, %c0_241] : memref<196x8xf32, #tpu.memory_space<vmem>>, vector<136x8xf32>
    %c17_242 = arith.constant 17 : index
    %c0_243 = arith.constant 0 : index
    %c0_244 = arith.constant 0 : index
    %244 = vector.load %arg4[%c17_242, %c0_243, %c0_244] : memref<25x8x16xf32, #tpu.memory_space<vmem>>, vector<1x8x16xf32>
    %245 = vector.shape_cast %244 : vector<1x8x16xf32> to vector<8x16xf32>
    %cst_245 = arith.constant dense<0.000000e+00> : vector<136x16xf32>
    %246 = tpu.matmul %243, %245, %cst_245 {dimension_numbers = #tpu.dot_dimension_numbers<[1], [0], [0], [1], [0, 0, 1, 1], [], []>} : vector<136x8xf32>, vector<8x16xf32>, vector<136x16xf32> -> vector<136x16xf32>
    %247 = arith.addf %242, %246 : vector<136x16xf32>
    %c0_246 = arith.constant 0 : index
    %c0_247 = arith.constant 0 : index
    %248 = vector.load %arg15[%c0_246, %c0_247] : memref<136x16xf32, #tpu.memory_space<vmem>>, vector<136x16xf32>
    tpu.vector_store %arg15[%c0_246, %c0_247], %247 {strides = array<i32>} : memref<136x16xf32, #tpu.memory_space<vmem>>, vector<136x16xf32>,
    %c0_248 = arith.constant 0 : index
    %c0_249 = arith.constant 0 : index
    %249 = vector.load %arg15[%c0_248, %c0_249] : memref<136x16xf32, #tpu.memory_space<vmem>>, vector<136x16xf32>
    %c45 = arith.constant 45 : index
    %c0_250 = arith.constant 0 : index
    %250 = vector.load %arg14[%c45, %c0_250] : memref<196x8xf32, #tpu.memory_space<vmem>>, vector<136x8xf32>
    %c18_251 = arith.constant 18 : index
    %c0_252 = arith.constant 0 : index
    %c0_253 = arith.constant 0 : index
    %251 = vector.load %arg4[%c18_251, %c0_252, %c0_253] : memref<25x8x16xf32, #tpu.memory_space<vmem>>, vector<1x8x16xf32>
    %252 = vector.shape_cast %251 : vector<1x8x16xf32> to vector<8x16xf32>
    %cst_254 = arith.constant dense<0.000000e+00> : vector<136x16xf32>
    %253 = tpu.matmul %250, %252, %cst_254 {dimension_numbers = #tpu.dot_dimension_numbers<[1], [0], [0], [1], [0, 0, 1, 1], [], []>} : vector<136x8xf32>, vector<8x16xf32>, vector<136x16xf32> -> vector<136x16xf32>
    %254 = arith.addf %249, %253 : vector<136x16xf32>
    %c0_255 = arith.constant 0 : index
    %c0_256 = arith.constant 0 : index
    %255 = vector.load %arg15[%c0_255, %c0_256] : memref<136x16xf32, #tpu.memory_space<vmem>>, vector<136x16xf32>
    tpu.vector_store %arg15[%c0_255, %c0_256], %254 {strides = array<i32>} : memref<136x16xf32, #tpu.memory_space<vmem>>, vector<136x16xf32>,
    %c0_257 = arith.constant 0 : index
    %c0_258 = arith.constant 0 : index
    %256 = vector.load %arg15[%c0_257, %c0_258] : memref<136x16xf32, #tpu.memory_space<vmem>>, vector<136x16xf32>
    %c46 = arith.constant 46 : index
    %c0_259 = arith.constant 0 : index
    %257 = vector.load %arg14[%c46, %c0_259] : memref<196x8xf32, #tpu.memory_space<vmem>>, vector<136x8xf32>
    %c19 = arith.constant 19 : index
    %c0_260 = arith.constant 0 : index
    %c0_261 = arith.constant 0 : index
    %258 = vector.load %arg4[%c19, %c0_260, %c0_261] : memref<25x8x16xf32, #tpu.memory_space<vmem>>, vector<1x8x16xf32>
    %259 = vector.shape_cast %258 : vector<1x8x16xf32> to vector<8x16xf32>
    %cst_262 = arith.constant dense<0.000000e+00> : vector<136x16xf32>
    %260 = tpu.matmul %257, %259, %cst_262 {dimension_numbers = #tpu.dot_dimension_numbers<[1], [0], [0], [1], [0, 0, 1, 1], [], []>} : vector<136x8xf32>, vector<8x16xf32>, vector<136x16xf32> -> vector<136x16xf32>
    %261 = arith.addf %256, %260 : vector<136x16xf32>
    %c0_263 = arith.constant 0 : index
    %c0_264 = arith.constant 0 : index
    %262 = vector.load %arg15[%c0_263, %c0_264] : memref<136x16xf32, #tpu.memory_space<vmem>>, vector<136x16xf32>
    tpu.vector_store %arg15[%c0_263, %c0_264], %261 {strides = array<i32>} : memref<136x16xf32, #tpu.memory_space<vmem>>, vector<136x16xf32>,
    %c0_265 = arith.constant 0 : index
    %c0_266 = arith.constant 0 : index
    %263 = vector.load %arg15[%c0_265, %c0_266] : memref<136x16xf32, #tpu.memory_space<vmem>>, vector<136x16xf32>
    %c56_267 = arith.constant 56 : index
    %c0_268 = arith.constant 0 : index
    %264 = vector.load %arg14[%c56_267, %c0_268] : memref<196x8xf32, #tpu.memory_space<vmem>>, vector<136x8xf32>
    %c20 = arith.constant 20 : index
    %c0_269 = arith.constant 0 : index
    %c0_270 = arith.constant 0 : index
    %265 = vector.load %arg4[%c20, %c0_269, %c0_270] : memref<25x8x16xf32, #tpu.memory_space<vmem>>, vector<1x8x16xf32>
    %266 = vector.shape_cast %265 : vector<1x8x16xf32> to vector<8x16xf32>
    %cst_271 = arith.constant dense<0.000000e+00> : vector<136x16xf32>
    %267 = tpu.matmul %264, %266, %cst_271 {dimension_numbers = #tpu.dot_dimension_numbers<[1], [0], [0], [1], [0, 0, 1, 1], [], []>} : vector<136x8xf32>, vector<8x16xf32>, vector<136x16xf32> -> vector<136x16xf32>
    %268 = arith.addf %263, %267 : vector<136x16xf32>
    %c0_272 = arith.constant 0 : index
    %c0_273 = arith.constant 0 : index
    %269 = vector.load %arg15[%c0_272, %c0_273] : memref<136x16xf32, #tpu.memory_space<vmem>>, vector<136x16xf32>
    tpu.vector_store %arg15[%c0_272, %c0_273], %268 {strides = array<i32>} : memref<136x16xf32, #tpu.memory_space<vmem>>, vector<136x16xf32>,
    %c0_274 = arith.constant 0 : index
    %c0_275 = arith.constant 0 : index
    %270 = vector.load %arg15[%c0_274, %c0_275] : memref<136x16xf32, #tpu.memory_space<vmem>>, vector<136x16xf32>
    %c57_276 = arith.constant 57 : index
    %c0_277 = arith.constant 0 : index
    %271 = vector.load %arg14[%c57_276, %c0_277] : memref<196x8xf32, #tpu.memory_space<vmem>>, vector<136x8xf32>
    %c21 = arith.constant 21 : index
    %c0_278 = arith.constant 0 : index
    %c0_279 = arith.constant 0 : index
    %272 = vector.load %arg4[%c21, %c0_278, %c0_279] : memref<25x8x16xf32, #tpu.memory_space<vmem>>, vector<1x8x16xf32>
    %273 = vector.shape_cast %272 : vector<1x8x16xf32> to vector<8x16xf32>
    %cst_280 = arith.constant dense<0.000000e+00> : vector<136x16xf32>
    %274 = tpu.matmul %271, %273, %cst_280 {dimension_numbers = #tpu.dot_dimension_numbers<[1], [0], [0], [1], [0, 0, 1, 1], [], []>} : vector<136x8xf32>, vector<8x16xf32>, vector<136x16xf32> -> vector<136x16xf32>
    %275 = arith.addf %270, %274 : vector<136x16xf32>
    %c0_281 = arith.constant 0 : index
    %c0_282 = arith.constant 0 : index
    %276 = vector.load %arg15[%c0_281, %c0_282] : memref<136x16xf32, #tpu.memory_space<vmem>>, vector<136x16xf32>
    tpu.vector_store %arg15[%c0_281, %c0_282], %275 {strides = array<i32>} : memref<136x16xf32, #tpu.memory_space<vmem>>, vector<136x16xf32>,
    %c0_283 = arith.constant 0 : index
    %c0_284 = arith.constant 0 : index
    %277 = vector.load %arg15[%c0_283, %c0_284] : memref<136x16xf32, #tpu.memory_space<vmem>>, vector<136x16xf32>
    %c58 = arith.constant 58 : index
    %c0_285 = arith.constant 0 : index
    %278 = vector.load %arg14[%c58, %c0_285] : memref<196x8xf32, #tpu.memory_space<vmem>>, vector<136x8xf32>
    %c22 = arith.constant 22 : index
    %c0_286 = arith.constant 0 : index
    %c0_287 = arith.constant 0 : index
    %279 = vector.load %arg4[%c22, %c0_286, %c0_287] : memref<25x8x16xf32, #tpu.memory_space<vmem>>, vector<1x8x16xf32>
    %280 = vector.shape_cast %279 : vector<1x8x16xf32> to vector<8x16xf32>
    %cst_288 = arith.constant dense<0.000000e+00> : vector<136x16xf32>
    %281 = tpu.matmul %278, %280, %cst_288 {dimension_numbers = #tpu.dot_dimension_numbers<[1], [0], [0], [1], [0, 0, 1, 1], [], []>} : vector<136x8xf32>, vector<8x16xf32>, vector<136x16xf32> -> vector<136x16xf32>
    %282 = arith.addf %277, %281 : vector<136x16xf32>
    %c0_289 = arith.constant 0 : index
    %c0_290 = arith.constant 0 : index
    %283 = vector.load %arg15[%c0_289, %c0_290] : memref<136x16xf32, #tpu.memory_space<vmem>>, vector<136x16xf32>
    tpu.vector_store %arg15[%c0_289, %c0_290], %282 {strides = array<i32>} : memref<136x16xf32, #tpu.memory_space<vmem>>, vector<136x16xf32>,
    %c0_291 = arith.constant 0 : index
    %c0_292 = arith.constant 0 : index
    %284 = vector.load %arg15[%c0_291, %c0_292] : memref<136x16xf32, #tpu.memory_space<vmem>>, vector<136x16xf32>
    %c59 = arith.constant 59 : index
    %c0_293 = arith.constant 0 : index
    %285 = vector.load %arg14[%c59, %c0_293] : memref<196x8xf32, #tpu.memory_space<vmem>>, vector<136x8xf32>
    %c23 = arith.constant 23 : index
    %c0_294 = arith.constant 0 : index
    %c0_295 = arith.constant 0 : index
    %286 = vector.load %arg4[%c23, %c0_294, %c0_295] : memref<25x8x16xf32, #tpu.memory_space<vmem>>, vector<1x8x16xf32>
    %287 = vector.shape_cast %286 : vector<1x8x16xf32> to vector<8x16xf32>
    %cst_296 = arith.constant dense<0.000000e+00> : vector<136x16xf32>
    %288 = tpu.matmul %285, %287, %cst_296 {dimension_numbers = #tpu.dot_dimension_numbers<[1], [0], [0], [1], [0, 0, 1, 1], [], []>} : vector<136x8xf32>, vector<8x16xf32>, vector<136x16xf32> -> vector<136x16xf32>
    %289 = arith.addf %284, %288 : vector<136x16xf32>
    %c0_297 = arith.constant 0 : index
    %c0_298 = arith.constant 0 : index
    %290 = vector.load %arg15[%c0_297, %c0_298] : memref<136x16xf32, #tpu.memory_space<vmem>>, vector<136x16xf32>
    tpu.vector_store %arg15[%c0_297, %c0_298], %289 {strides = array<i32>} : memref<136x16xf32, #tpu.memory_space<vmem>>, vector<136x16xf32>,
    %c0_299 = arith.constant 0 : index
    %c0_300 = arith.constant 0 : index
    %291 = vector.load %arg15[%c0_299, %c0_300] : memref<136x16xf32, #tpu.memory_space<vmem>>, vector<136x16xf32>
    %c60 = arith.constant 60 : index
    %c0_301 = arith.constant 0 : index
    %292 = vector.load %arg14[%c60, %c0_301] : memref<196x8xf32, #tpu.memory_space<vmem>>, vector<136x8xf32>
    %c24 = arith.constant 24 : index
    %c0_302 = arith.constant 0 : index
    %c0_303 = arith.constant 0 : index
    %293 = vector.load %arg4[%c24, %c0_302, %c0_303] : memref<25x8x16xf32, #tpu.memory_space<vmem>>, vector<1x8x16xf32>
    %294 = vector.shape_cast %293 : vector<1x8x16xf32> to vector<8x16xf32>
    %cst_304 = arith.constant dense<0.000000e+00> : vector<136x16xf32>
    %295 = tpu.matmul %292, %294, %cst_304 {dimension_numbers = #tpu.dot_dimension_numbers<[1], [0], [0], [1], [0, 0, 1, 1], [], []>} : vector<136x8xf32>, vector<8x16xf32>, vector<136x16xf32> -> vector<136x16xf32>
    %296 = arith.addf %291, %295 : vector<136x16xf32>
    %c0_305 = arith.constant 0 : index
    %c0_306 = arith.constant 0 : index
    %297 = vector.load %arg15[%c0_305, %c0_306] : memref<136x16xf32, #tpu.memory_space<vmem>>, vector<136x16xf32>
    tpu.vector_store %arg15[%c0_305, %c0_306], %296 {strides = array<i32>} : memref<136x16xf32, #tpu.memory_space<vmem>>, vector<136x16xf32>,
    %c0_307 = arith.constant 0 : index
    %c0_308 = arith.constant 0 : index
    %298 = vector.load %arg15[%c0_307, %c0_308] : memref<136x16xf32, #tpu.memory_space<vmem>>, vector<136x16xf32>
    %c0_309 = arith.constant 0 : index
    %c0_310 = arith.constant 0 : index
    %299 = vector.load %arg5[%c0_309, %c0_310] : memref<1x16xf32, #tpu.memory_space<vmem>>, vector<1x16xf32>
    %300 = vector.broadcast %299 : vector<1x16xf32> to vector<136x16xf32>
    %301 = arith.addf %298, %300 : vector<136x16xf32>
    %cst_311 = arith.constant 0.000000e+00 : f32
    %302 = vector.broadcast %cst_311 : f32 to vector<136x16xf32>
    %303 = arith.maximumf %301, %302 : vector<136x16xf32>
    %c0_312 = arith.constant 0 : index
    %c0_313 = arith.constant 0 : index
    %304 = vector.load %arg15[%c0_312, %c0_313] : memref<136x16xf32, #tpu.memory_space<vmem>>, vector<136x16xf32>
    tpu.vector_store %arg15[%c0_312, %c0_313], %303 {strides = array<i32>} : memref<136x16xf32, #tpu.memory_space<vmem>>, vector<136x16xf32>,
    %c0_314 = arith.constant 0 : index
    %c0_315 = arith.constant 0 : index
    %305 = tpu.strided_load %arg15[%c0_314, %c0_315] {strides = array<i32: 2, 1>} : memref<136x16xf32, #tpu.memory_space<vmem>>, vector<5x16xf32>
    %c1_316 = arith.constant 1 : index
    %c0_317 = arith.constant 0 : index
    %306 = tpu.strided_load %arg15[%c1_316, %c0_317] {strides = array<i32: 2, 1>} : memref<136x16xf32, #tpu.memory_space<vmem>>, vector<5x16xf32>
    %307 = arith.maximumf %305, %306 : vector<5x16xf32>
    %c14_318 = arith.constant 14 : index
    %c0_319 = arith.constant 0 : index
    %308 = tpu.strided_load %arg15[%c14_318, %c0_319] {strides = array<i32: 2, 1>} : memref<136x16xf32, #tpu.memory_space<vmem>>, vector<5x16xf32>
    %c15_320 = arith.constant 15 : index
    %c0_321 = arith.constant 0 : index
    %309 = tpu.strided_load %arg15[%c15_320, %c0_321] {strides = array<i32: 2, 1>} : memref<136x16xf32, #tpu.memory_space<vmem>>, vector<5x16xf32>
    %310 = arith.maximumf %308, %309 : vector<5x16xf32>
    %311 = arith.maximumf %307, %310 : vector<5x16xf32>
    %c0_322 = arith.constant 0 : index
    %c0_323 = arith.constant 0 : index
    %312 = vector.load %arg16[%c0_322, %c0_323] : memref<25x16xf32, #tpu.memory_space<vmem>>, vector<5x16xf32>
    tpu.vector_store %arg16[%c0_322, %c0_323], %311 {strides = array<i32>} : memref<25x16xf32, #tpu.memory_space<vmem>>, vector<5x16xf32>,
    %c28_324 = arith.constant 28 : index
    %c0_325 = arith.constant 0 : index
    %313 = tpu.strided_load %arg15[%c28_324, %c0_325] {strides = array<i32: 2, 1>} : memref<136x16xf32, #tpu.memory_space<vmem>>, vector<5x16xf32>
    %c29_326 = arith.constant 29 : index
    %c0_327 = arith.constant 0 : index
    %314 = tpu.strided_load %arg15[%c29_326, %c0_327] {strides = array<i32: 2, 1>} : memref<136x16xf32, #tpu.memory_space<vmem>>, vector<5x16xf32>
    %315 = arith.maximumf %313, %314 : vector<5x16xf32>
    %c42_328 = arith.constant 42 : index
    %c0_329 = arith.constant 0 : index
    %316 = tpu.strided_load %arg15[%c42_328, %c0_329] {strides = array<i32: 2, 1>} : memref<136x16xf32, #tpu.memory_space<vmem>>, vector<5x16xf32>
    %c43_330 = arith.constant 43 : index
    %c0_331 = arith.constant 0 : index
    %317 = tpu.strided_load %arg15[%c43_330, %c0_331] {strides = array<i32: 2, 1>} : memref<136x16xf32, #tpu.memory_space<vmem>>, vector<5x16xf32>
    %318 = arith.maximumf %316, %317 : vector<5x16xf32>
    %319 = arith.maximumf %315, %318 : vector<5x16xf32>
    %c5_332 = arith.constant 5 : index
    %c0_333 = arith.constant 0 : index
    %320 = vector.load %arg16[%c5_332, %c0_333] : memref<25x16xf32, #tpu.memory_space<vmem>>, vector<5x16xf32>
    tpu.vector_store %arg16[%c5_332, %c0_333], %319 {strides = array<i32>} : memref<25x16xf32, #tpu.memory_space<vmem>>, vector<5x16xf32>,
    %c56_334 = arith.constant 56 : index
    %c0_335 = arith.constant 0 : index
    %321 = tpu.strided_load %arg15[%c56_334, %c0_335] {strides = array<i32: 2, 1>} : memref<136x16xf32, #tpu.memory_space<vmem>>, vector<5x16xf32>
    %c57_336 = arith.constant 57 : index
    %c0_337 = arith.constant 0 : index
    %322 = tpu.strided_load %arg15[%c57_336, %c0_337] {strides = array<i32: 2, 1>} : memref<136x16xf32, #tpu.memory_space<vmem>>, vector<5x16xf32>
    %323 = arith.maximumf %321, %322 : vector<5x16xf32>
    %c70_338 = arith.constant 70 : index
    %c0_339 = arith.constant 0 : index
    %324 = tpu.strided_load %arg15[%c70_338, %c0_339] {strides = array<i32: 2, 1>} : memref<136x16xf32, #tpu.memory_space<vmem>>, vector<5x16xf32>
    %c71 = arith.constant 71 : index
    %c0_340 = arith.constant 0 : index
    %325 = tpu.strided_load %arg15[%c71, %c0_340] {strides = array<i32: 2, 1>} : memref<136x16xf32, #tpu.memory_space<vmem>>, vector<5x16xf32>
    %326 = arith.maximumf %324, %325 : vector<5x16xf32>
    %327 = arith.maximumf %323, %326 : vector<5x16xf32>
    %c10_341 = arith.constant 10 : index
    %c0_342 = arith.constant 0 : index
    %328 = vector.load %arg16[%c10_341, %c0_342] : memref<25x16xf32, #tpu.memory_space<vmem>>, vector<5x16xf32>
    tpu.vector_store %arg16[%c10_341, %c0_342], %327 {strides = array<i32>} : memref<25x16xf32, #tpu.memory_space<vmem>>, vector<5x16xf32>,
    %c84_343 = arith.constant 84 : index
    %c0_344 = arith.constant 0 : index
    %329 = tpu.strided_load %arg15[%c84_343, %c0_344] {strides = array<i32: 2, 1>} : memref<136x16xf32, #tpu.memory_space<vmem>>, vector<5x16xf32>
    %c85_345 = arith.constant 85 : index
    %c0_346 = arith.constant 0 : index
    %330 = tpu.strided_load %arg15[%c85_345, %c0_346] {strides = array<i32: 2, 1>} : memref<136x16xf32, #tpu.memory_space<vmem>>, vector<5x16xf32>
    %331 = arith.maximumf %329, %330 : vector<5x16xf32>
    %c98_347 = arith.constant 98 : index
    %c0_348 = arith.constant 0 : index
    %332 = tpu.strided_load %arg15[%c98_347, %c0_348] {strides = array<i32: 2, 1>} : memref<136x16xf32, #tpu.memory_space<vmem>>, vector<5x16xf32>
    %c99 = arith.constant 99 : index
    %c0_349 = arith.constant 0 : index
    %333 = tpu.strided_load %arg15[%c99, %c0_349] {strides = array<i32: 2, 1>} : memref<136x16xf32, #tpu.memory_space<vmem>>, vector<5x16xf32>
    %334 = arith.maximumf %332, %333 : vector<5x16xf32>
    %335 = arith.maximumf %331, %334 : vector<5x16xf32>
    %c15_350 = arith.constant 15 : index
    %c0_351 = arith.constant 0 : index
    %336 = vector.load %arg16[%c15_350, %c0_351] : memref<25x16xf32, #tpu.memory_space<vmem>>, vector<5x16xf32>
    tpu.vector_store %arg16[%c15_350, %c0_351], %335 {strides = array<i32>} : memref<25x16xf32, #tpu.memory_space<vmem>>, vector<5x16xf32>,
    %c112_352 = arith.constant 112 : index
    %c0_353 = arith.constant 0 : index
    %337 = tpu.strided_load %arg15[%c112_352, %c0_353] {strides = array<i32: 2, 1>} : memref<136x16xf32, #tpu.memory_space<vmem>>, vector<5x16xf32>
    %c113_354 = arith.constant 113 : index
    %c0_355 = arith.constant 0 : index
    %338 = tpu.strided_load %arg15[%c113_354, %c0_355] {strides = array<i32: 2, 1>} : memref<136x16xf32, #tpu.memory_space<vmem>>, vector<5x16xf32>
    %339 = arith.maximumf %337, %338 : vector<5x16xf32>
    %c126_356 = arith.constant 126 : index
    %c0_357 = arith.constant 0 : index
    %340 = tpu.strided_load %arg15[%c126_356, %c0_357] {strides = array<i32: 2, 1>} : memref<136x16xf32, #tpu.memory_space<vmem>>, vector<5x16xf32>
    %c127 = arith.constant 127 : index
    %c0_358 = arith.constant 0 : index
    %341 = tpu.strided_load %arg15[%c127, %c0_358] {strides = array<i32: 2, 1>} : memref<136x16xf32, #tpu.memory_space<vmem>>, vector<5x16xf32>
    %342 = arith.maximumf %340, %341 : vector<5x16xf32>
    %343 = arith.maximumf %339, %342 : vector<5x16xf32>
    %c20_359 = arith.constant 20 : index
    %c0_360 = arith.constant 0 : index
    %344 = vector.load %arg16[%c20_359, %c0_360] : memref<25x16xf32, #tpu.memory_space<vmem>>, vector<5x16xf32>
    tpu.vector_store %arg16[%c20_359, %c0_360], %343 {strides = array<i32>} : memref<25x16xf32, #tpu.memory_space<vmem>>, vector<5x16xf32>,
    %cst_361 = arith.constant 0.000000e+00 : f32
    %345 = vector.broadcast %cst_361 : f32 to vector<1x128xf32>
    %c0_362 = arith.constant 0 : index
    %c0_363 = arith.constant 0 : index
    %346 = vector.load %arg16[%c0_362, %c0_363] : memref<25x16xf32, #tpu.memory_space<vmem>>, vector<1x16xf32>
    %c0_364 = arith.constant 0 : index
    %c0_365 = arith.constant 0 : index
    %c0_366 = arith.constant 0 : index
    %347 = vector.load %arg6[%c0_364, %c0_365, %c0_366] : memref<25x16x128xf32, #tpu.memory_space<vmem>>, vector<1x16x128xf32>
    %348 = vector.shape_cast %347 : vector<1x16x128xf32> to vector<16x128xf32>
    %cst_367 = arith.constant dense<0.000000e+00> : vector<1x128xf32>
    %349 = tpu.matmul %346, %348, %cst_367 {dimension_numbers = #tpu.dot_dimension_numbers<[1], [0], [0], [1], [0, 0, 1, 1], [], []>} : vector<1x16xf32>, vector<16x128xf32>, vector<1x128xf32> -> vector<1x128xf32>
    %350 = arith.addf %345, %349 : vector<1x128xf32>
    %c1_368 = arith.constant 1 : index
    %c0_369 = arith.constant 0 : index
    %351 = vector.load %arg16[%c1_368, %c0_369] : memref<25x16xf32, #tpu.memory_space<vmem>>, vector<1x16xf32>
    %c1_370 = arith.constant 1 : index
    %c0_371 = arith.constant 0 : index
    %c0_372 = arith.constant 0 : index
    %352 = vector.load %arg6[%c1_370, %c0_371, %c0_372] : memref<25x16x128xf32, #tpu.memory_space<vmem>>, vector<1x16x128xf32>
    %353 = vector.shape_cast %352 : vector<1x16x128xf32> to vector<16x128xf32>
    %cst_373 = arith.constant dense<0.000000e+00> : vector<1x128xf32>
    %354 = tpu.matmul %351, %353, %cst_373 {dimension_numbers = #tpu.dot_dimension_numbers<[1], [0], [0], [1], [0, 0, 1, 1], [], []>} : vector<1x16xf32>, vector<16x128xf32>, vector<1x128xf32> -> vector<1x128xf32>
    %355 = arith.addf %350, %354 : vector<1x128xf32>
    %c2_374 = arith.constant 2 : index
    %c0_375 = arith.constant 0 : index
    %356 = vector.load %arg16[%c2_374, %c0_375] : memref<25x16xf32, #tpu.memory_space<vmem>>, vector<1x16xf32>
    %c2_376 = arith.constant 2 : index
    %c0_377 = arith.constant 0 : index
    %c0_378 = arith.constant 0 : index
    %357 = vector.load %arg6[%c2_376, %c0_377, %c0_378] : memref<25x16x128xf32, #tpu.memory_space<vmem>>, vector<1x16x128xf32>
    %358 = vector.shape_cast %357 : vector<1x16x128xf32> to vector<16x128xf32>
    %cst_379 = arith.constant dense<0.000000e+00> : vector<1x128xf32>
    %359 = tpu.matmul %356, %358, %cst_379 {dimension_numbers = #tpu.dot_dimension_numbers<[1], [0], [0], [1], [0, 0, 1, 1], [], []>} : vector<1x16xf32>, vector<16x128xf32>, vector<1x128xf32> -> vector<1x128xf32>
    %360 = arith.addf %355, %359 : vector<1x128xf32>
    %c3_380 = arith.constant 3 : index
    %c0_381 = arith.constant 0 : index
    %361 = vector.load %arg16[%c3_380, %c0_381] : memref<25x16xf32, #tpu.memory_space<vmem>>, vector<1x16xf32>
    %c3_382 = arith.constant 3 : index
    %c0_383 = arith.constant 0 : index
    %c0_384 = arith.constant 0 : index
    %362 = vector.load %arg6[%c3_382, %c0_383, %c0_384] : memref<25x16x128xf32, #tpu.memory_space<vmem>>, vector<1x16x128xf32>
    %363 = vector.shape_cast %362 : vector<1x16x128xf32> to vector<16x128xf32>
    %cst_385 = arith.constant dense<0.000000e+00> : vector<1x128xf32>
    %364 = tpu.matmul %361, %363, %cst_385 {dimension_numbers = #tpu.dot_dimension_numbers<[1], [0], [0], [1], [0, 0, 1, 1], [], []>} : vector<1x16xf32>, vector<16x128xf32>, vector<1x128xf32> -> vector<1x128xf32>
    %365 = arith.addf %360, %364 : vector<1x128xf32>
    %c4_386 = arith.constant 4 : index
    %c0_387 = arith.constant 0 : index
    %366 = vector.load %arg16[%c4_386, %c0_387] : memref<25x16xf32, #tpu.memory_space<vmem>>, vector<1x16xf32>
    %c4_388 = arith.constant 4 : index
    %c0_389 = arith.constant 0 : index
    %c0_390 = arith.constant 0 : index
    %367 = vector.load %arg6[%c4_388, %c0_389, %c0_390] : memref<25x16x128xf32, #tpu.memory_space<vmem>>, vector<1x16x128xf32>
    %368 = vector.shape_cast %367 : vector<1x16x128xf32> to vector<16x128xf32>
    %cst_391 = arith.constant dense<0.000000e+00> : vector<1x128xf32>
    %369 = tpu.matmul %366, %368, %cst_391 {dimension_numbers = #tpu.dot_dimension_numbers<[1], [0], [0], [1], [0, 0, 1, 1], [], []>} : vector<1x16xf32>, vector<16x128xf32>, vector<1x128xf32> -> vector<1x128xf32>
    %370 = arith.addf %365, %369 : vector<1x128xf32>
    %c5_392 = arith.constant 5 : index
    %c0_393 = arith.constant 0 : index
    %371 = vector.load %arg16[%c5_392, %c0_393] : memref<25x16xf32, #tpu.memory_space<vmem>>, vector<1x16xf32>
    %c5_394 = arith.constant 5 : index
    %c0_395 = arith.constant 0 : index
    %c0_396 = arith.constant 0 : index
    %372 = vector.load %arg6[%c5_394, %c0_395, %c0_396] : memref<25x16x128xf32, #tpu.memory_space<vmem>>, vector<1x16x128xf32>
    %373 = vector.shape_cast %372 : vector<1x16x128xf32> to vector<16x128xf32>
    %cst_397 = arith.constant dense<0.000000e+00> : vector<1x128xf32>
    %374 = tpu.matmul %371, %373, %cst_397 {dimension_numbers = #tpu.dot_dimension_numbers<[1], [0], [0], [1], [0, 0, 1, 1], [], []>} : vector<1x16xf32>, vector<16x128xf32>, vector<1x128xf32> -> vector<1x128xf32>
    %375 = arith.addf %370, %374 : vector<1x128xf32>
    %c6_398 = arith.constant 6 : index
    %c0_399 = arith.constant 0 : index
    %376 = vector.load %arg16[%c6_398, %c0_399] : memref<25x16xf32, #tpu.memory_space<vmem>>, vector<1x16xf32>
    %c6_400 = arith.constant 6 : index
    %c0_401 = arith.constant 0 : index
    %c0_402 = arith.constant 0 : index
    %377 = vector.load %arg6[%c6_400, %c0_401, %c0_402] : memref<25x16x128xf32, #tpu.memory_space<vmem>>, vector<1x16x128xf32>
    %378 = vector.shape_cast %377 : vector<1x16x128xf32> to vector<16x128xf32>
    %cst_403 = arith.constant dense<0.000000e+00> : vector<1x128xf32>
    %379 = tpu.matmul %376, %378, %cst_403 {dimension_numbers = #tpu.dot_dimension_numbers<[1], [0], [0], [1], [0, 0, 1, 1], [], []>} : vector<1x16xf32>, vector<16x128xf32>, vector<1x128xf32> -> vector<1x128xf32>
    %380 = arith.addf %375, %379 : vector<1x128xf32>
    %c7_404 = arith.constant 7 : index
    %c0_405 = arith.constant 0 : index
    %381 = vector.load %arg16[%c7_404, %c0_405] : memref<25x16xf32, #tpu.memory_space<vmem>>, vector<1x16xf32>
    %c7_406 = arith.constant 7 : index
    %c0_407 = arith.constant 0 : index
    %c0_408 = arith.constant 0 : index
    %382 = vector.load %arg6[%c7_406, %c0_407, %c0_408] : memref<25x16x128xf32, #tpu.memory_space<vmem>>, vector<1x16x128xf32>
    %383 = vector.shape_cast %382 : vector<1x16x128xf32> to vector<16x128xf32>
    %cst_409 = arith.constant dense<0.000000e+00> : vector<1x128xf32>
    %384 = tpu.matmul %381, %383, %cst_409 {dimension_numbers = #tpu.dot_dimension_numbers<[1], [0], [0], [1], [0, 0, 1, 1], [], []>} : vector<1x16xf32>, vector<16x128xf32>, vector<1x128xf32> -> vector<1x128xf32>
    %385 = arith.addf %380, %384 : vector<1x128xf32>
    %c8_410 = arith.constant 8 : index
    %c0_411 = arith.constant 0 : index
    %386 = vector.load %arg16[%c8_410, %c0_411] : memref<25x16xf32, #tpu.memory_space<vmem>>, vector<1x16xf32>
    %c8_412 = arith.constant 8 : index
    %c0_413 = arith.constant 0 : index
    %c0_414 = arith.constant 0 : index
    %387 = vector.load %arg6[%c8_412, %c0_413, %c0_414] : memref<25x16x128xf32, #tpu.memory_space<vmem>>, vector<1x16x128xf32>
    %388 = vector.shape_cast %387 : vector<1x16x128xf32> to vector<16x128xf32>
    %cst_415 = arith.constant dense<0.000000e+00> : vector<1x128xf32>
    %389 = tpu.matmul %386, %388, %cst_415 {dimension_numbers = #tpu.dot_dimension_numbers<[1], [0], [0], [1], [0, 0, 1, 1], [], []>} : vector<1x16xf32>, vector<16x128xf32>, vector<1x128xf32> -> vector<1x128xf32>
    %390 = arith.addf %385, %389 : vector<1x128xf32>
    %c9_416 = arith.constant 9 : index
    %c0_417 = arith.constant 0 : index
    %391 = vector.load %arg16[%c9_416, %c0_417] : memref<25x16xf32, #tpu.memory_space<vmem>>, vector<1x16xf32>
    %c9_418 = arith.constant 9 : index
    %c0_419 = arith.constant 0 : index
    %c0_420 = arith.constant 0 : index
    %392 = vector.load %arg6[%c9_418, %c0_419, %c0_420] : memref<25x16x128xf32, #tpu.memory_space<vmem>>, vector<1x16x128xf32>
    %393 = vector.shape_cast %392 : vector<1x16x128xf32> to vector<16x128xf32>
    %cst_421 = arith.constant dense<0.000000e+00> : vector<1x128xf32>
    %394 = tpu.matmul %391, %393, %cst_421 {dimension_numbers = #tpu.dot_dimension_numbers<[1], [0], [0], [1], [0, 0, 1, 1], [], []>} : vector<1x16xf32>, vector<16x128xf32>, vector<1x128xf32> -> vector<1x128xf32>
    %395 = arith.addf %390, %394 : vector<1x128xf32>
    %c10_422 = arith.constant 10 : index
    %c0_423 = arith.constant 0 : index
    %396 = vector.load %arg16[%c10_422, %c0_423] : memref<25x16xf32, #tpu.memory_space<vmem>>, vector<1x16xf32>
    %c10_424 = arith.constant 10 : index
    %c0_425 = arith.constant 0 : index
    %c0_426 = arith.constant 0 : index
    %397 = vector.load %arg6[%c10_424, %c0_425, %c0_426] : memref<25x16x128xf32, #tpu.memory_space<vmem>>, vector<1x16x128xf32>
    %398 = vector.shape_cast %397 : vector<1x16x128xf32> to vector<16x128xf32>
    %cst_427 = arith.constant dense<0.000000e+00> : vector<1x128xf32>
    %399 = tpu.matmul %396, %398, %cst_427 {dimension_numbers = #tpu.dot_dimension_numbers<[1], [0], [0], [1], [0, 0, 1, 1], [], []>} : vector<1x16xf32>, vector<16x128xf32>, vector<1x128xf32> -> vector<1x128xf32>
    %400 = arith.addf %395, %399 : vector<1x128xf32>
    %c11_428 = arith.constant 11 : index
    %c0_429 = arith.constant 0 : index
    %401 = vector.load %arg16[%c11_428, %c0_429] : memref<25x16xf32, #tpu.memory_space<vmem>>, vector<1x16xf32>
    %c11_430 = arith.constant 11 : index
    %c0_431 = arith.constant 0 : index
    %c0_432 = arith.constant 0 : index
    %402 = vector.load %arg6[%c11_430, %c0_431, %c0_432] : memref<25x16x128xf32, #tpu.memory_space<vmem>>, vector<1x16x128xf32>
    %403 = vector.shape_cast %402 : vector<1x16x128xf32> to vector<16x128xf32>
    %cst_433 = arith.constant dense<0.000000e+00> : vector<1x128xf32>
    %404 = tpu.matmul %401, %403, %cst_433 {dimension_numbers = #tpu.dot_dimension_numbers<[1], [0], [0], [1], [0, 0, 1, 1], [], []>} : vector<1x16xf32>, vector<16x128xf32>, vector<1x128xf32> -> vector<1x128xf32>
    %405 = arith.addf %400, %404 : vector<1x128xf32>
    %c12_434 = arith.constant 12 : index
    %c0_435 = arith.constant 0 : index
    %406 = vector.load %arg16[%c12_434, %c0_435] : memref<25x16xf32, #tpu.memory_space<vmem>>, vector<1x16xf32>
    %c12_436 = arith.constant 12 : index
    %c0_437 = arith.constant 0 : index
    %c0_438 = arith.constant 0 : index
    %407 = vector.load %arg6[%c12_436, %c0_437, %c0_438] : memref<25x16x128xf32, #tpu.memory_space<vmem>>, vector<1x16x128xf32>
    %408 = vector.shape_cast %407 : vector<1x16x128xf32> to vector<16x128xf32>
    %cst_439 = arith.constant dense<0.000000e+00> : vector<1x128xf32>
    %409 = tpu.matmul %406, %408, %cst_439 {dimension_numbers = #tpu.dot_dimension_numbers<[1], [0], [0], [1], [0, 0, 1, 1], [], []>} : vector<1x16xf32>, vector<16x128xf32>, vector<1x128xf32> -> vector<1x128xf32>
    %410 = arith.addf %405, %409 : vector<1x128xf32>
    %c13_440 = arith.constant 13 : index
    %c0_441 = arith.constant 0 : index
    %411 = vector.load %arg16[%c13_440, %c0_441] : memref<25x16xf32, #tpu.memory_space<vmem>>, vector<1x16xf32>
    %c13_442 = arith.constant 13 : index
    %c0_443 = arith.constant 0 : index
    %c0_444 = arith.constant 0 : index
    %412 = vector.load %arg6[%c13_442, %c0_443, %c0_444] : memref<25x16x128xf32, #tpu.memory_space<vmem>>, vector<1x16x128xf32>
    %413 = vector.shape_cast %412 : vector<1x16x128xf32> to vector<16x128xf32>
    %cst_445 = arith.constant dense<0.000000e+00> : vector<1x128xf32>
    %414 = tpu.matmul %411, %413, %cst_445 {dimension_numbers = #tpu.dot_dimension_numbers<[1], [0], [0], [1], [0, 0, 1, 1], [], []>} : vector<1x16xf32>, vector<16x128xf32>, vector<1x128xf32> -> vector<1x128xf32>
    %415 = arith.addf %410, %414 : vector<1x128xf32>
    %c14_446 = arith.constant 14 : index
    %c0_447 = arith.constant 0 : index
    %416 = vector.load %arg16[%c14_446, %c0_447] : memref<25x16xf32, #tpu.memory_space<vmem>>, vector<1x16xf32>
    %c14_448 = arith.constant 14 : index
    %c0_449 = arith.constant 0 : index
    %c0_450 = arith.constant 0 : index
    %417 = vector.load %arg6[%c14_448, %c0_449, %c0_450] : memref<25x16x128xf32, #tpu.memory_space<vmem>>, vector<1x16x128xf32>
    %418 = vector.shape_cast %417 : vector<1x16x128xf32> to vector<16x128xf32>
    %cst_451 = arith.constant dense<0.000000e+00> : vector<1x128xf32>
    %419 = tpu.matmul %416, %418, %cst_451 {dimension_numbers = #tpu.dot_dimension_numbers<[1], [0], [0], [1], [0, 0, 1, 1], [], []>} : vector<1x16xf32>, vector<16x128xf32>, vector<1x128xf32> -> vector<1x128xf32>
    %420 = arith.addf %415, %419 : vector<1x128xf32>
    %c15_452 = arith.constant 15 : index
    %c0_453 = arith.constant 0 : index
    %421 = vector.load %arg16[%c15_452, %c0_453] : memref<25x16xf32, #tpu.memory_space<vmem>>, vector<1x16xf32>
    %c15_454 = arith.constant 15 : index
    %c0_455 = arith.constant 0 : index
    %c0_456 = arith.constant 0 : index
    %422 = vector.load %arg6[%c15_454, %c0_455, %c0_456] : memref<25x16x128xf32, #tpu.memory_space<vmem>>, vector<1x16x128xf32>
    %423 = vector.shape_cast %422 : vector<1x16x128xf32> to vector<16x128xf32>
    %cst_457 = arith.constant dense<0.000000e+00> : vector<1x128xf32>
    %424 = tpu.matmul %421, %423, %cst_457 {dimension_numbers = #tpu.dot_dimension_numbers<[1], [0], [0], [1], [0, 0, 1, 1], [], []>} : vector<1x16xf32>, vector<16x128xf32>, vector<1x128xf32> -> vector<1x128xf32>
    %425 = arith.addf %420, %424 : vector<1x128xf32>
    %c16_458 = arith.constant 16 : index
    %c0_459 = arith.constant 0 : index
    %426 = vector.load %arg16[%c16_458, %c0_459] : memref<25x16xf32, #tpu.memory_space<vmem>>, vector<1x16xf32>
    %c16_460 = arith.constant 16 : index
    %c0_461 = arith.constant 0 : index
    %c0_462 = arith.constant 0 : index
    %427 = vector.load %arg6[%c16_460, %c0_461, %c0_462] : memref<25x16x128xf32, #tpu.memory_space<vmem>>, vector<1x16x128xf32>
    %428 = vector.shape_cast %427 : vector<1x16x128xf32> to vector<16x128xf32>
    %cst_463 = arith.constant dense<0.000000e+00> : vector<1x128xf32>
    %429 = tpu.matmul %426, %428, %cst_463 {dimension_numbers = #tpu.dot_dimension_numbers<[1], [0], [0], [1], [0, 0, 1, 1], [], []>} : vector<1x16xf32>, vector<16x128xf32>, vector<1x128xf32> -> vector<1x128xf32>
    %430 = arith.addf %425, %429 : vector<1x128xf32>
    %c17_464 = arith.constant 17 : index
    %c0_465 = arith.constant 0 : index
    %431 = vector.load %arg16[%c17_464, %c0_465] : memref<25x16xf32, #tpu.memory_space<vmem>>, vector<1x16xf32>
    %c17_466 = arith.constant 17 : index
    %c0_467 = arith.constant 0 : index
    %c0_468 = arith.constant 0 : index
    %432 = vector.load %arg6[%c17_466, %c0_467, %c0_468] : memref<25x16x128xf32, #tpu.memory_space<vmem>>, vector<1x16x128xf32>
    %433 = vector.shape_cast %432 : vector<1x16x128xf32> to vector<16x128xf32>
    %cst_469 = arith.constant dense<0.000000e+00> : vector<1x128xf32>
    %434 = tpu.matmul %431, %433, %cst_469 {dimension_numbers = #tpu.dot_dimension_numbers<[1], [0], [0], [1], [0, 0, 1, 1], [], []>} : vector<1x16xf32>, vector<16x128xf32>, vector<1x128xf32> -> vector<1x128xf32>
    %435 = arith.addf %430, %434 : vector<1x128xf32>
    %c18_470 = arith.constant 18 : index
    %c0_471 = arith.constant 0 : index
    %436 = vector.load %arg16[%c18_470, %c0_471] : memref<25x16xf32, #tpu.memory_space<vmem>>, vector<1x16xf32>
    %c18_472 = arith.constant 18 : index
    %c0_473 = arith.constant 0 : index
    %c0_474 = arith.constant 0 : index
    %437 = vector.load %arg6[%c18_472, %c0_473, %c0_474] : memref<25x16x128xf32, #tpu.memory_space<vmem>>, vector<1x16x128xf32>
    %438 = vector.shape_cast %437 : vector<1x16x128xf32> to vector<16x128xf32>
    %cst_475 = arith.constant dense<0.000000e+00> : vector<1x128xf32>
    %439 = tpu.matmul %436, %438, %cst_475 {dimension_numbers = #tpu.dot_dimension_numbers<[1], [0], [0], [1], [0, 0, 1, 1], [], []>} : vector<1x16xf32>, vector<16x128xf32>, vector<1x128xf32> -> vector<1x128xf32>
    %440 = arith.addf %435, %439 : vector<1x128xf32>
    %c19_476 = arith.constant 19 : index
    %c0_477 = arith.constant 0 : index
    %441 = vector.load %arg16[%c19_476, %c0_477] : memref<25x16xf32, #tpu.memory_space<vmem>>, vector<1x16xf32>
    %c19_478 = arith.constant 19 : index
    %c0_479 = arith.constant 0 : index
    %c0_480 = arith.constant 0 : index
    %442 = vector.load %arg6[%c19_478, %c0_479, %c0_480] : memref<25x16x128xf32, #tpu.memory_space<vmem>>, vector<1x16x128xf32>
    %443 = vector.shape_cast %442 : vector<1x16x128xf32> to vector<16x128xf32>
    %cst_481 = arith.constant dense<0.000000e+00> : vector<1x128xf32>
    %444 = tpu.matmul %441, %443, %cst_481 {dimension_numbers = #tpu.dot_dimension_numbers<[1], [0], [0], [1], [0, 0, 1, 1], [], []>} : vector<1x16xf32>, vector<16x128xf32>, vector<1x128xf32> -> vector<1x128xf32>
    %445 = arith.addf %440, %444 : vector<1x128xf32>
    %c20_482 = arith.constant 20 : index
    %c0_483 = arith.constant 0 : index
    %446 = vector.load %arg16[%c20_482, %c0_483] : memref<25x16xf32, #tpu.memory_space<vmem>>, vector<1x16xf32>
    %c20_484 = arith.constant 20 : index
    %c0_485 = arith.constant 0 : index
    %c0_486 = arith.constant 0 : index
    %447 = vector.load %arg6[%c20_484, %c0_485, %c0_486] : memref<25x16x128xf32, #tpu.memory_space<vmem>>, vector<1x16x128xf32>
    %448 = vector.shape_cast %447 : vector<1x16x128xf32> to vector<16x128xf32>
    %cst_487 = arith.constant dense<0.000000e+00> : vector<1x128xf32>
    %449 = tpu.matmul %446, %448, %cst_487 {dimension_numbers = #tpu.dot_dimension_numbers<[1], [0], [0], [1], [0, 0, 1, 1], [], []>} : vector<1x16xf32>, vector<16x128xf32>, vector<1x128xf32> -> vector<1x128xf32>
    %450 = arith.addf %445, %449 : vector<1x128xf32>
    %c21_488 = arith.constant 21 : index
    %c0_489 = arith.constant 0 : index
    %451 = vector.load %arg16[%c21_488, %c0_489] : memref<25x16xf32, #tpu.memory_space<vmem>>, vector<1x16xf32>
    %c21_490 = arith.constant 21 : index
    %c0_491 = arith.constant 0 : index
    %c0_492 = arith.constant 0 : index
    %452 = vector.load %arg6[%c21_490, %c0_491, %c0_492] : memref<25x16x128xf32, #tpu.memory_space<vmem>>, vector<1x16x128xf32>
    %453 = vector.shape_cast %452 : vector<1x16x128xf32> to vector<16x128xf32>
    %cst_493 = arith.constant dense<0.000000e+00> : vector<1x128xf32>
    %454 = tpu.matmul %451, %453, %cst_493 {dimension_numbers = #tpu.dot_dimension_numbers<[1], [0], [0], [1], [0, 0, 1, 1], [], []>} : vector<1x16xf32>, vector<16x128xf32>, vector<1x128xf32> -> vector<1x128xf32>
    %455 = arith.addf %450, %454 : vector<1x128xf32>
    %c22_494 = arith.constant 22 : index
    %c0_495 = arith.constant 0 : index
    %456 = vector.load %arg16[%c22_494, %c0_495] : memref<25x16xf32, #tpu.memory_space<vmem>>, vector<1x16xf32>
    %c22_496 = arith.constant 22 : index
    %c0_497 = arith.constant 0 : index
    %c0_498 = arith.constant 0 : index
    %457 = vector.load %arg6[%c22_496, %c0_497, %c0_498] : memref<25x16x128xf32, #tpu.memory_space<vmem>>, vector<1x16x128xf32>
    %458 = vector.shape_cast %457 : vector<1x16x128xf32> to vector<16x128xf32>
    %cst_499 = arith.constant dense<0.000000e+00> : vector<1x128xf32>
    %459 = tpu.matmul %456, %458, %cst_499 {dimension_numbers = #tpu.dot_dimension_numbers<[1], [0], [0], [1], [0, 0, 1, 1], [], []>} : vector<1x16xf32>, vector<16x128xf32>, vector<1x128xf32> -> vector<1x128xf32>
    %460 = arith.addf %455, %459 : vector<1x128xf32>
    %c23_500 = arith.constant 23 : index
    %c0_501 = arith.constant 0 : index
    %461 = vector.load %arg16[%c23_500, %c0_501] : memref<25x16xf32, #tpu.memory_space<vmem>>, vector<1x16xf32>
    %c23_502 = arith.constant 23 : index
    %c0_503 = arith.constant 0 : index
    %c0_504 = arith.constant 0 : index
    %462 = vector.load %arg6[%c23_502, %c0_503, %c0_504] : memref<25x16x128xf32, #tpu.memory_space<vmem>>, vector<1x16x128xf32>
    %463 = vector.shape_cast %462 : vector<1x16x128xf32> to vector<16x128xf32>
    %cst_505 = arith.constant dense<0.000000e+00> : vector<1x128xf32>
    %464 = tpu.matmul %461, %463, %cst_505 {dimension_numbers = #tpu.dot_dimension_numbers<[1], [0], [0], [1], [0, 0, 1, 1], [], []>} : vector<1x16xf32>, vector<16x128xf32>, vector<1x128xf32> -> vector<1x128xf32>
    %465 = arith.addf %460, %464 : vector<1x128xf32>
    %c24_506 = arith.constant 24 : index
    %c0_507 = arith.constant 0 : index
    %466 = vector.load %arg16[%c24_506, %c0_507] : memref<25x16xf32, #tpu.memory_space<vmem>>, vector<1x16xf32>
    %c24_508 = arith.constant 24 : index
    %c0_509 = arith.constant 0 : index
    %c0_510 = arith.constant 0 : index
    %467 = vector.load %arg6[%c24_508, %c0_509, %c0_510] : memref<25x16x128xf32, #tpu.memory_space<vmem>>, vector<1x16x128xf32>
    %468 = vector.shape_cast %467 : vector<1x16x128xf32> to vector<16x128xf32>
    %cst_511 = arith.constant dense<0.000000e+00> : vector<1x128xf32>
    %469 = tpu.matmul %466, %468, %cst_511 {dimension_numbers = #tpu.dot_dimension_numbers<[1], [0], [0], [1], [0, 0, 1, 1], [], []>} : vector<1x16xf32>, vector<16x128xf32>, vector<1x128xf32> -> vector<1x128xf32>
    %470 = arith.addf %465, %469 : vector<1x128xf32>
    %c0_512 = arith.constant 0 : index
    %c0_513 = arith.constant 0 : index
    %471 = vector.load %arg17[%c0_512, %c0_513] : memref<1x128xf32, #tpu.memory_space<vmem>>, vector<1x128xf32>
    tpu.vector_store %arg17[%c0_512, %c0_513], %470 {strides = array<i32>} : memref<1x128xf32, #tpu.memory_space<vmem>>, vector<1x128xf32>,
    %c0_514 = arith.constant 0 : index
    %c0_515 = arith.constant 0 : index
    %472 = vector.load %arg17[%c0_514, %c0_515] : memref<1x128xf32, #tpu.memory_space<vmem>>, vector<1x128xf32>
    %c0_516 = arith.constant 0 : index
    %c0_517 = arith.constant 0 : index
    %473 = vector.load %arg7[%c0_516, %c0_517] : memref<1x128xf32, #tpu.memory_space<vmem>>, vector<1x128xf32>
    %474 = arith.addf %472, %473 : vector<1x128xf32>
    %cst_518 = arith.constant 0.000000e+00 : f32
    %475 = vector.broadcast %cst_518 : f32 to vector<1x128xf32>
    %476 = arith.maximumf %474, %475 : vector<1x128xf32>
    %c0_519 = arith.constant 0 : index
    %c0_520 = arith.constant 0 : index
    %477 = vector.load %arg8[%c0_519, %c0_520] : memref<128x128xf32, #tpu.memory_space<vmem>>, vector<128x128xf32>
    %cst_521 = arith.constant dense<0.000000e+00> : vector<1x128xf32>
    %478 = tpu.matmul %476, %477, %cst_521 {dimension_numbers = #tpu.dot_dimension_numbers<[1], [0], [0], [1], [0, 0, 1, 1], [], []>} : vector<1x128xf32>, vector<128x128xf32>, vector<1x128xf32> -> vector<1x128xf32>
    %c0_522 = arith.constant 0 : index
    %c0_523 = arith.constant 0 : index
    %479 = vector.load %arg9[%c0_522, %c0_523] : memref<1x128xf32, #tpu.memory_space<vmem>>, vector<1x128xf32>
    %480 = arith.addf %478, %479 : vector<1x128xf32>
    %cst_524 = arith.constant 0.000000e+00 : f32
    %481 = vector.broadcast %cst_524 : f32 to vector<1x128xf32>
    %482 = arith.maximumf %480, %481 : vector<1x128xf32>
    %c0_525 = arith.constant 0 : index
    %c0_526 = arith.constant 0 : index
    %483 = vector.load %arg10[%c0_525, %c0_526] : memref<128x128xf32, #tpu.memory_space<vmem>>, vector<128x128xf32>
    %cst_527 = arith.constant dense<0.000000e+00> : vector<1x128xf32>
    %484 = tpu.matmul %482, %483, %cst_527 {dimension_numbers = #tpu.dot_dimension_numbers<[1], [0], [0], [1], [0, 0, 1, 1], [], []>} : vector<1x128xf32>, vector<128x128xf32>, vector<1x128xf32> -> vector<1x128xf32>
    %c0_528 = arith.constant 0 : index
    %c0_529 = arith.constant 0 : index
    %485 = vector.load %arg11[%c0_528, %c0_529] : memref<1x128xf32, #tpu.memory_space<vmem>>, vector<1x128xf32>
    %486 = arith.addf %484, %485 : vector<1x128xf32>
    %c0_530 = arith.constant 0 : index
    %c0_531 = arith.constant 0 : index
    %c0_532 = arith.constant 0 : index
    %487 = vector.load %arg12[%c0_530, %c0_531, %c0_532] : memref<1x1x128xf32, #tpu.memory_space<vmem>>, vector<1x1x128xf32>
    %488 = vector.shape_cast %487 : vector<1x1x128xf32> to vector<1x128xf32>
    %489 = vector.shape_cast %486 : vector<1x128xf32> to vector<1x1x128xf32>
    tpu.vector_store %arg12[%c0_530, %c0_531, %c0_532], %489 {strides = array<i32>} : memref<1x1x128xf32, #tpu.memory_space<vmem>>, vector<1x1x128xf32>,
    return
  }
  func.func @transform_0(%arg0: i32) -> (i32, i32) {
    %c0_i32 = arith.constant 0 : i32
    %c0_i32_0 = arith.constant 0 : i32
    return %arg0, %c0_i32 : i32, i32
  }
  func.func @transform_1(%arg0: i32) -> (i32, i32) {
    %c0_i32 = arith.constant 0 : i32
    %c0_i32_0 = arith.constant 0 : i32
    %c0_i32_1 = arith.constant 0 : i32
    return %c0_i32, %c0_i32_0 : i32, i32
  }
  func.func @transform_2(%arg0: i32) -> (i32, i32) {
    %c0_i32 = arith.constant 0 : i32
    %c0_i32_0 = arith.constant 0 : i32
    %c0_i32_1 = arith.constant 0 : i32
    return %c0_i32, %c0_i32_0 : i32, i32
  }
  func.func @transform_3(%arg0: i32) -> (i32, i32, i32) {
    %c0_i32 = arith.constant 0 : i32
    %c0_i32_0 = arith.constant 0 : i32
    %c0_i32_1 = arith.constant 0 : i32
    %c0_i32_2 = arith.constant 0 : i32
    return %c0_i32, %c0_i32_0, %c0_i32_1 : i32, i32, i32
  }
  func.func @transform_4(%arg0: i32) -> (i32, i32) {
    %c0_i32 = arith.constant 0 : i32
    %c0_i32_0 = arith.constant 0 : i32
    %c0_i32_1 = arith.constant 0 : i32
    return %c0_i32, %c0_i32_0 : i32, i32
  }
  func.func @transform_5(%arg0: i32) -> (i32, i32, i32) {
    %c0_i32 = arith.constant 0 : i32
    %c0_i32_0 = arith.constant 0 : i32
    %c0_i32_1 = arith.constant 0 : i32
    %c0_i32_2 = arith.constant 0 : i32
    return %c0_i32, %c0_i32_0, %c0_i32_1 : i32, i32, i32
  }
  func.func @transform_6(%arg0: i32) -> (i32, i32) {
    %c0_i32 = arith.constant 0 : i32
    %c0_i32_0 = arith.constant 0 : i32
    %c0_i32_1 = arith.constant 0 : i32
    return %c0_i32, %c0_i32_0 : i32, i32
  }
  func.func @transform_7(%arg0: i32) -> (i32, i32) {
    %c0_i32 = arith.constant 0 : i32
    %c0_i32_0 = arith.constant 0 : i32
    %c0_i32_1 = arith.constant 0 : i32
    return %c0_i32, %c0_i32_0 : i32, i32
  }
  func.func @transform_8(%arg0: i32) -> (i32, i32) {
    %c0_i32 = arith.constant 0 : i32
    %c0_i32_0 = arith.constant 0 : i32
    %c0_i32_1 = arith.constant 0 : i32
    return %c0_i32, %c0_i32_0 : i32, i32
  }
  func.func @transform_9(%arg0: i32) -> (i32, i32) {
    %c0_i32 = arith.constant 0 : i32
    %c0_i32_0 = arith.constant 0 : i32
    %c0_i32_1 = arith.constant 0 : i32
    return %c0_i32, %c0_i32_0 : i32, i32
  }
  func.func @transform_10(%arg0: i32) -> (i32, i32) {
    %c0_i32 = arith.constant 0 : i32
    %c0_i32_0 = arith.constant 0 : i32
    %c0_i32_1 = arith.constant 0 : i32
    return %c0_i32, %c0_i32_0 : i32, i32
  }
  func.func @transform_11(%arg0: i32) -> (i32, i32, i32) {
    %c0_i32 = arith.constant 0 : i32
    %c0_i32_0 = arith.constant 0 : i32
    %c0_i32_1 = arith.constant 0 : i32
    return %arg0, %c0_i32, %c0_i32_0 : i32, i32, i32
  }
}

</mosaic_0001>

<llo_original>
// kernel: net_forward.1
$region0: #{net_forward.1}
  #allocation0 [shape = 'u32[]', space=smem, size = 0x4, offset = 0x4, fixed_abs, tag = 'smem constant byte address 0x4 - core index']
  #allocation1 [shape = 'u32[72,128]{1,0:T(1,128)}', space=vmem, size = 0x9000, scoped, tag = 'internal scratch']
  #allocation2 [shape = 'f32[784,8]{1,0:T(8,128)}', space=vmem, size = 0x62000, scoped, tag = 'scratch operand']
  #allocation3 [shape = 'f32[196,8]{1,0:T(8,128)}', space=vmem, size = 0x19000, scoped, tag = 'scratch operand']
  #allocation4 [shape = 'f32[136,16]{1,0:T(8,128)}', space=vmem, size = 0x11000, scoped, tag = 'scratch operand']
  #allocation5 [shape = 'f32[25,16]{1,0:T(8,128)}', space=vmem, size = 0x4000, scoped, tag = 'scratch operand']
  #allocation6 [shape = 'f32[1,128]{1,0:T(1,128)}', space=vmem, size = 0x200, scoped, tag = 'scratch operand']
  %s0 = inlined_call_operand.vmem [shape: f32[1568,128], index: 0, kind: input, shape index: {}]
  %s1 = inlined_call_operand.vmem [shape: f32[128,8], index: 1, kind: input, shape index: {}]
  %s2 = inlined_call_operand.vmem [shape: f32[1,8], index: 2, kind: input, shape index: {}]
  %s3 = inlined_call_operand.vmem [shape: f32[25,8,16], index: 3, kind: input, shape index: {}]
  %s4 = inlined_call_operand.vmem [shape: f32[1,16], index: 4, kind: input, shape index: {}]
  %s5 = inlined_call_operand.vmem [shape: f32[25,16,128], index: 5, kind: input, shape index: {}]
  %s6 = inlined_call_operand.vmem [shape: f32[1,128], index: 6, kind: input, shape index: {}]
  %s7 = inlined_call_operand.vmem [shape: f32[128,128], index: 7, kind: input, shape index: {}]
  %s8 = inlined_call_operand.vmem [shape: f32[1,128], index: 8, kind: input, shape index: {}]
  %s9 = inlined_call_operand.vmem [shape: f32[128,128], index: 9, kind: input, shape index: {}]
  %s10 = inlined_call_operand.vmem [shape: f32[1,128], index: 10, kind: input, shape index: {}]
  %s11 = inlined_call_operand.hbm [shape: f32[2,1,128], index: 11, kind: output, shape index: {}]
  %s12 = sld [smem:[#allocation0]]
  $region77: #{net_forward.1} parent=0
    _
  %s14 = ssub.s32 1, %s12
  %s15 = scalar_select 0, %s14, %s12
  $region1: #{net_forward.1} parent=0
    #allocation7 [shape = 'u8[1024]{0}', space=vmem, size = 0x400, scoped, tag = 'output window, operand 0']
    #allocation8 [shape = 's32[2]{0}', space=sflag, size = 0x8, scoped, tag = 'scoped memory for net_forward.1']
    %16 = vsyncpa [#allocation8], 0
    %s17 = scalar_lea.sflag [#allocation8], 1
    %18 = vsyncpa %s17, 0
    loop: start=0, step=1, limit=4
    $region2: #{net_forward.1} parent=1 // loop_pre_header
      _
    $region3: #{net_forward.1} parent=1 // loop_header
      %s20 = sphi 0, %s24
      %p21 = scmp.ge.s32.totalorder %s20, 4
      %s30 = sphi 0, %s32
      %s33 = sphi 0, %s30
      %s34 = sphi 0, %s33
      %s50 = sphi 0, %s34
      %s54 = sphi 0, %s54
      %s56 = sphi 0, %s54
      %s57 = sphi 0, %s56
      %s71 = sphi 0, %s57
      %s75 = sphi 0, %s75
      %s77 = sphi 0, %s75
      %s78 = sphi 0, %s77
      %s92 = sphi 0, %s78
      %s96 = sphi 0, %s96
      %s98 = sphi 0, %s96
      %s99 = sphi 0, %s98
      %s113 = sphi 0, %s99
      %s117 = sphi 0, %s117
      %s119 = sphi 0, %s117
      %s120 = sphi 0, %s119
      %s134 = sphi 0, %s120
      %s138 = sphi 0, %s138
      %s140 = sphi 0, %s138
      %s141 = sphi 0, %s140
      %s155 = sphi 0, %s141
      %s159 = sphi 0, %s159
      %s161 = sphi 0, %s159
      %s162 = sphi 0, %s161
      %s176 = sphi 0, %s162
      %s180 = sphi 0, %s180
      %s182 = sphi 0, %s180
      %s183 = sphi 0, %s182
      %s197 = sphi 0, %s183
      %s201 = sphi 0, %s201
      %s203 = sphi 0, %s201
      %s204 = sphi 0, %s203
      %s218 = sphi 0, %s204
      %s222 = sphi 0, %s222
      %s224 = sphi 0, %s222
      %s225 = sphi 0, %s224
      %s239 = sphi 0, %s225
      %s243 = sphi 0, %s243
      %s245 = sphi 0, %s243
      %s246 = sphi 0, %s245
      %s260 = sphi 0, %s246
      %s266 = sphi 0, %s268
      %s269 = sphi 0, %s266
      %s270 = sphi 0, %s269
      %s286 = sphi 0, %s270
    $region4: #{net_forward.1} parent=1 // loop_header_branch
      %23 = sbr.rel (%p21) target = $region8
    $region5: #{net_forward.1} parent=1 // loop_body
      %s25 = ssub.s32 %s20, 1
      %s26 = ssub.s32 %s20, 2
      %s27 = sadd.s32 %s20, 1
      %s28 = ssub.s32 %s20, %s27
      %p29 = scmp.eq.s32.totalorder %s28, 0
      %s31 = sadd.s32 %s30, 1
      %s32 = scalar_select %p29, %s30, %s31
      %p35 = pneg %p29
      %p36 = scmp.eq.s32.totalorder %s20, 1
      %p37 = por %p35, %p36
      %p38 = scmp.ne.s32.totalorder %s30, %s33
      %p39 = scmp.eq.s32.totalorder %s20, 0
      %p40 = por %p38, %p39
      %p41 = scmp.ne.s32.totalorder %s30, %s33
      %p42 = scmp.eq.s32.totalorder %s25, 1
      %p43 = por %p41, %p42
      %p44 = scmp.ne.s32.totalorder %s33, %s34
      %p45 = scmp.eq.s32.totalorder %s25, 0
      %p46 = por %p44, %p45
      %p47 = scmp.ne.s32.totalorder %s33, %s34
      %p48 = scmp.eq.s32.totalorder %s26, 1
      %p49 = por %p47, %p48
      %p51 = scmp.ne.s32.totalorder %s34, %s50
      %p52 = scmp.eq.s32.totalorder %s26, 0
      %p53 = por %p51, %p52
      %s55 = sadd.s32 %s54, 1
      %p58 = scmp.eq.s32.totalorder %s20, 1
      %p59 = scmp.ne.s32.totalorder %s54, %s56
      %p60 = scmp.eq.s32.totalorder %s20, 0
      %p61 = por %p59, %p60
      %p62 = scmp.ne.s32.totalorder %s54, %s56
      %p63 = scmp.eq.s32.totalorder %s25, 1
      %p64 = por %p62, %p63
      %p65 = scmp.ne.s32.totalorder %s56, %s57
      %p66 = scmp.eq.s32.totalorder %s25, 0
      %p67 = por %p65, %p66
      %p68 = scmp.ne.s32.totalorder %s56, %s57
      %p69 = scmp.eq.s32.totalorder %s26, 1
      %p70 = por %p68, %p69
      %p72 = scmp.ne.s32.totalorder %s57, %s71
      %p73 = scmp.eq.s32.totalorder %s26, 0
      %p74 = por %p72, %p73
      %s76 = sadd.s32 %s75, 1
      %p79 = scmp.eq.s32.totalorder %s20, 1
      %p80 = scmp.ne.s32.totalorder %s75, %s77
      %p81 = scmp.eq.s32.totalorder %s20, 0
      %p82 = por %p80, %p81
      %p83 = scmp.ne.s32.totalorder %s75, %s77
      %p84 = scmp.eq.s32.totalorder %s25, 1
      %p85 = por %p83, %p84
      %p86 = scmp.ne.s32.totalorder %s77, %s78
      %p87 = scmp.eq.s32.totalorder %s25, 0
      %p88 = por %p86, %p87
      %p89 = scmp.ne.s32.totalorder %s77, %s78
      %p90 = scmp.eq.s32.totalorder %s26, 1
      %p91 = por %p89, %p90
      %p93 = scmp.ne.s32.totalorder %s78, %s92
      %p94 = scmp.eq.s32.totalorder %s26, 0
      %p95 = por %p93, %p94
      %s97 = sadd.s32 %s96, 1
      %p100 = scmp.eq.s32.totalorder %s20, 1
      %p101 = scmp.ne.s32.totalorder %s96, %s98
      %p102 = scmp.eq.s32.totalorder %s20, 0
      %p103 = por %p101, %p102
      %p104 = scmp.ne.s32.totalorder %s96, %s98
      %p105 = scmp.eq.s32.totalorder %s25, 1
      %p106 = por %p104, %p105
      %p107 = scmp.ne.s32.totalorder %s98, %s99
      %p108 = scmp.eq.s32.totalorder %s25, 0
      %p109 = por %p107, %p108
      %p110 = scmp.ne.s32.totalorder %s98, %s99
      %p111 = scmp.eq.s32.totalorder %s26, 1
      %p112 = por %p110, %p111
      %p114 = scmp.ne.s32.totalorder %s99, %s113
      %p115 = scmp.eq.s32.totalorder %s26, 0
      %p116 = por %p114, %p115
      %s118 = sadd.s32 %s117, 1
      %p121 = scmp.eq.s32.totalorder %s20, 1
      %p122 = scmp.ne.s32.totalorder %s117, %s119
      %p123 = scmp.eq.s32.totalorder %s20, 0
      %p124 = por %p122, %p123
      %p125 = scmp.ne.s32.totalorder %s117, %s119
      %p126 = scmp.eq.s32.totalorder %s25, 1
      %p127 = por %p125, %p126
      %p128 = scmp.ne.s32.totalorder %s119, %s120
      %p129 = scmp.eq.s32.totalorder %s25, 0
      %p130 = por %p128, %p129
      %p131 = scmp.ne.s32.totalorder %s119, %s120
      %p132 = scmp.eq.s32.totalorder %s26, 1
      %p133 = por %p131, %p132
      %p135 = scmp.ne.s32.totalorder %s120, %s134
      %p136 = scmp.eq.s32.totalorder %s26, 0
      %p137 = por %p135, %p136
      %s139 = sadd.s32 %s138, 1
      %p142 = scmp.eq.s32.totalorder %s20, 1
      %p143 = scmp.ne.s32.totalorder %s138, %s140
      %p144 = scmp.eq.s32.totalorder %s20, 0
      %p145 = por %p143, %p144
      %p146 = scmp.ne.s32.totalorder %s138, %s140
      %p147 = scmp.eq.s32.totalorder %s25, 1
      %p148 = por %p146, %p147
      %p149 = scmp.ne.s32.totalorder %s140, %s141
      %p150 = scmp.eq.s32.totalorder %s25, 0
      %p151 = por %p149, %p150
      %p152 = scmp.ne.s32.totalorder %s140, %s141
      %p153 = scmp.eq.s32.totalorder %s26, 1
      %p154 = por %p152, %p153
      %p156 = scmp.ne.s32.totalorder %s141, %s155
      %p157 = scmp.eq.s32.totalorder %s26, 0
      %p158 = por %p156, %p157
      %s160 = sadd.s32 %s159, 1
      %p163 = scmp.eq.s32.totalorder %s20, 1
      %p164 = scmp.ne.s32.totalorder %s159, %s161
      %p165 = scmp.eq.s32.totalorder %s20, 0
      %p166 = por %p164, %p165
      %p167 = scmp.ne.s32.totalorder %s159, %s161
      %p168 = scmp.eq.s32.totalorder %s25, 1
      %p169 = por %p167, %p168
      %p170 = scmp.ne.s32.totalorder %s161, %s162
      %p171 = scmp.eq.s32.totalorder %s25, 0
      %p172 = por %p170, %p171
      %p173 = scmp.ne.s32.totalorder %s161, %s162
      %p174 = scmp.eq.s32.totalorder %s26, 1
      %p175 = por %p173, %p174
      %p177 = scmp.ne.s32.totalorder %s162, %s176
      %p178 = scmp.eq.s32.totalorder %s26, 0
      %p179 = por %p177, %p178
      %s181 = sadd.s32 %s180, 1
      %p184 = scmp.eq.s32.totalorder %s20, 1
      %p185 = scmp.ne.s32.totalorder %s180, %s182
      %p186 = scmp.eq.s32.totalorder %s20, 0
      %p187 = por %p185, %p186
      %p188 = scmp.ne.s32.totalorder %s180, %s182
      %p189 = scmp.eq.s32.totalorder %s25, 1
      %p190 = por %p188, %p189
      %p191 = scmp.ne.s32.totalorder %s182, %s183
      %p192 = scmp.eq.s32.totalorder %s25, 0
      %p193 = por %p191, %p192
      %p194 = scmp.ne.s32.totalorder %s182, %s183
      %p195 = scmp.eq.s32.totalorder %s26, 1
      %p196 = por %p194, %p195
      %p198 = scmp.ne.s32.totalorder %s183, %s197
      %p199 = scmp.eq.s32.totalorder %s26, 0
      %p200 = por %p198, %p199
      %s202 = sadd.s32 %s201, 1
      %p205 = scmp.eq.s32.totalorder %s20, 1
      %p206 = scmp.ne.s32.totalorder %s201, %s203
      %p207 = scmp.eq.s32.totalorder %s20, 0
      %p208 = por %p206, %p207
      %p209 = scmp.ne.s32.totalorder %s201, %s203
      %p210 = scmp.eq.s32.totalorder %s25, 1
      %p211 = por %p209, %p210
      %p212 = scmp.ne.s32.totalorder %s203, %s204
      %p213 = scmp.eq.s32.totalorder %s25, 0
      %p214 = por %p212, %p213
      %p215 = scmp.ne.s32.totalorder %s203, %s204
      %p216 = scmp.eq.s32.totalorder %s26, 1
      %p217 = por %p215, %p216
      %p219 = scmp.ne.s32.totalorder %s204, %s218
      %p220 = scmp.eq.s32.totalorder %s26, 0
      %p221 = por %p219, %p220
      %s223 = sadd.s32 %s222, 1
      %p226 = scmp.eq.s32.totalorder %s20, 1
      %p227 = scmp.ne.s32.totalorder %s222, %s224
      %p228 = scmp.eq.s32.totalorder %s20, 0
      %p229 = por %p227, %p228
      %p230 = scmp.ne.s32.totalorder %s222, %s224
      %p231 = scmp.eq.s32.totalorder %s25, 1
      %p232 = por %p230, %p231
      %p233 = scmp.ne.s32.totalorder %s224, %s225
      %p234 = scmp.eq.s32.totalorder %s25, 0
      %p235 = por %p233, %p234
      %p236 = scmp.ne.s32.totalorder %s224, %s225
      %p237 = scmp.eq.s32.totalorder %s26, 1
      %p238 = por %p236, %p237
      %p240 = scmp.ne.s32.totalorder %s225, %s239
      %p241 = scmp.eq.s32.totalorder %s26, 0
      %p242 = por %p240, %p241
      %s244 = sadd.s32 %s243, 1
      %p247 = scmp.eq.s32.totalorder %s20, 1
      %p248 = scmp.ne.s32.totalorder %s243, %s245
      %p249 = scmp.eq.s32.totalorder %s20, 0
      %p250 = por %p248, %p249
      %p251 = scmp.ne.s32.totalorder %s243, %s245
      %p252 = scmp.eq.s32.totalorder %s25, 1
      %p253 = por %p251, %p252
      %p254 = scmp.ne.s32.totalorder %s245, %s246
      %p255 = scmp.eq.s32.totalorder %s25, 0
      %p256 = por %p254, %p255
      %p257 = scmp.ne.s32.totalorder %s245, %s246
      %p258 = scmp.eq.s32.totalorder %s26, 1
      %p259 = por %p257, %p258
      %p261 = scmp.ne.s32.totalorder %s246, %s260
      %p262 = scmp.eq.s32.totalorder %s26, 0
      %p263 = por %p261, %p262
      %s264 = ssub.s32 %s20, %s27
      %p265 = scmp.eq.s32.totalorder %s264, 0
      %s267 = sadd.s32 %s266, 1
      %s268 = scalar_select %p265, %s266, %s267
      %p271 = pneg %p265
      %p272 = scmp.eq.s32.totalorder %s20, 1
      %p273 = por %p271, %p272
      %p274 = scmp.ne.s32.totalorder %s266, %s269
      %p275 = scmp.eq.s32.totalorder %s20, 0
      %p276 = por %p274, %p275
      %p277 = scmp.ne.s32.totalorder %s266, %s269
      %p278 = scmp.eq.s32.totalorder %s25, 1
      %p279 = por %p277, %p278
      %p280 = scmp.ne.s32.totalorder %s269, %s270
      %p281 = scmp.eq.s32.totalorder %s25, 0
      %p282 = por %p280, %p281
      %p283 = scmp.ne.s32.totalorder %s269, %s270
      %p284 = scmp.eq.s32.totalorder %s26, 1
      %p285 = por %p283, %p284
      %p287 = scmp.ne.s32.totalorder %s270, %s286
      %p288 = scmp.eq.s32.totalorder %s26, 0
      %p289 = por %p287, %p288
      %p290 = scmp.le.s32.totalorder 1, %s20
      %p291 = scmp.lt.s32.totalorder %s20, 3
      %p292 = pnand %p290, %p291
      %p293 = pneg %p292
      // Predicated region
      $region9: #{net_forward.1} parent=5 // pred_check
        _
      $region10: #{net_forward.1} parent=5 // pred_check_branch
        %295 = sbr.rel (%p292) target = $region12
      $region11: #{net_forward.1} parent=5 // pred_region
        %s296 = ssub.s32 %s20, 1
        // Predicated region
        $region13: #{net_forward.1} parent=11 // pred_check
          %p297 = pneg %p67
        $region14: #{net_forward.1} parent=11 // pred_check_branch
          %299 = sbr.rel (%p297) target = $region16
        $region15: #{net_forward.1} parent=11 // pred_region
          _
        $region16: #{net_forward.1} parent=11 // pred_fallthru
          _
        // Predicated region
        $region17: #{net_forward.1} parent=11 // pred_check
          %p300 = pneg %p88
        $region18: #{net_forward.1} parent=11 // pred_check_branch
          %302 = sbr.rel (%p300) target = $region20
        $region19: #{net_forward.1} parent=11 // pred_region
          _
        $region20: #{net_forward.1} parent=11 // pred_fallthru
          _
        // Predicated region
        $region21: #{net_forward.1} parent=11 // pred_check
          %p303 = pneg %p109
        $region22: #{net_forward.1} parent=11 // pred_check_branch
          %305 = sbr.rel (%p303) target = $region24
        $region23: #{net_forward.1} parent=11 // pred_region
          _
        $region24: #{net_forward.1} parent=11 // pred_fallthru
          _
        // Predicated region
        $region25: #{net_forward.1} parent=11 // pred_check
          %p306 = pneg %p130
        $region26: #{net_forward.1} parent=11 // pred_check_branch
          %308 = sbr.rel (%p306) target = $region28
        $region27: #{net_forward.1} parent=11 // pred_region
          _
        $region28: #{net_forward.1} parent=11 // pred_fallthru
          _
        // Predicated region
        $region29: #{net_forward.1} parent=11 // pred_check
          %p309 = pneg %p151
        $region30: #{net_forward.1} parent=11 // pred_check_branch
          %311 = sbr.rel (%p309) target = $region32
        $region31: #{net_forward.1} parent=11 // pred_region
          _
        $region32: #{net_forward.1} parent=11 // pred_fallthru
          _
        // Predicated region
        $region33: #{net_forward.1} parent=11 // pred_check
          %p312 = pneg %p172
        $region34: #{net_forward.1} parent=11 // pred_check_branch
          %314 = sbr.rel (%p312) target = $region36
        $region35: #{net_forward.1} parent=11 // pred_region
          _
        $region36: #{net_forward.1} parent=11 // pred_fallthru
          _
        // Predicated region
        $region37: #{net_forward.1} parent=11 // pred_check
          %p315 = pneg %p193
        $region38: #{net_forward.1} parent=11 // pred_check_branch
          %317 = sbr.rel (%p315) target = $region40
        $region39: #{net_forward.1} parent=11 // pred_region
          _
        $region40: #{net_forward.1} parent=11 // pred_fallthru
          _
        // Predicated region
        $region41: #{net_forward.1} parent=11 // pred_check
          %p318 = pneg %p214
        $region42: #{net_forward.1} parent=11 // pred_check_branch
          %320 = sbr.rel (%p318) target = $region44
        $region43: #{net_forward.1} parent=11 // pred_region
          _
        $region44: #{net_forward.1} parent=11 // pred_fallthru
          _
        // Predicated region
        $region45: #{net_forward.1} parent=11 // pred_check
          %p321 = pneg %p235
        $region46: #{net_forward.1} parent=11 // pred_check_branch
          %323 = sbr.rel (%p321) target = $region48
        $region47: #{net_forward.1} parent=11 // pred_region
          _
        $region48: #{net_forward.1} parent=11 // pred_fallthru
          _
        // Predicated region
        $region49: #{net_forward.1} parent=11 // pred_check
          %p324 = pneg %p256
        $region50: #{net_forward.1} parent=11 // pred_check_branch
          %326 = sbr.rel (%p324) target = $region52
        $region51: #{net_forward.1} parent=11 // pred_region
          _
        $region52: #{net_forward.1} parent=11 // pred_fallthru
          _
      $region12: #{net_forward.1} parent=5 // pred_fallthru
        _
      %p327 = scmp.lt.s32.totalorder %s20, 2
      // Predicated region
      $region53: #{net_forward.1} parent=5 // pred_check
        %p328 = pneg %p327
      $region54: #{net_forward.1} parent=5 // pred_check_branch
        %330 = sbr.rel (%p328) target = $region56
      $region55: #{net_forward.1} parent=5 // pred_region
        // Predicated region
        $region57: #{net_forward.1} parent=55 // pred_check
          %p331 = pneg %p40
        $region58: #{net_forward.1} parent=55 // pred_check_branch
          %333 = sbr.rel (%p331) target = $region60
        $region59: #{net_forward.1} parent=55 // pred_region
          %s334 = smul.u32 98, %s20
          %p335 = scmp.lt.s32.totalorder %s334, 195
          %s336 = scalar_select %p335, %s334, 195
          %s337 = smul.addr %s336, 8
          %s338 = scalar_lea.vmem %s0, %s337
          %s339 = smul.u32 98, %s20
        $region60: #{net_forward.1} parent=55 // pred_fallthru
          _
      $region56: #{net_forward.1} parent=5 // pred_fallthru
        _
      %p340 = scmp.le.s32.totalorder 1, %s20
      %p341 = scmp.lt.s32.totalorder %s20, 3
      %p342 = pnand %p340, %p341
      %p343 = pneg %p342
      // Predicated region
      $region61: #{net_forward.1} parent=5 // pred_check
        _
      $region62: #{net_forward.1} parent=5 // pred_check_branch
        %345 = sbr.rel (%p342) target = $region64
      $region63: #{net_forward.1} parent=5 // pred_region
        %s346 = ssub.s32 %s20, 1
        %s347 = smul.u32 98, %s25
        %p348 = scmp.lt.s32.totalorder %s347, 195
        %s349 = scalar_select %p348, %s347, 195
        %s350 = smul.addr %s349, 8
        %s351 = scalar_lea.vmem %s0, %s350
        %p352 = pneg %p46
        %p353 = pneg %p43
        %p354 = pneg %p67
        %p355 = pneg %p64
        %p356 = pneg %p88
        %p357 = pneg %p85
        %p358 = pneg %p109
        %p359 = pneg %p106
        %p360 = pneg %p130
        %p361 = pneg %p127
        %p362 = pneg %p151
        %p363 = pneg %p148
        %p364 = pneg %p172
        %p365 = pneg %p169
        %p366 = pneg %p193
        %p367 = pneg %p190
        %p368 = pneg %p214
        %p369 = pneg %p211
        %p370 = pneg %p235
        %p371 = pneg %p232
        %p372 = pneg %p256
        %p373 = pneg %p253
        %p374 = pneg %p282
        %p375 = pneg %p279
        %s376 = sand.u32 %s269, 1
        %s377 = scalar_lea.sflag [#allocation8], %s376
        %s378 = sand.u32 %s269, 1
        %s379 = scalar_lea.vmem [#allocation7], %s378
        %s380 = smul.u32 98, %s25
        %p381 = scmp.lt.s32.totalorder %s380, 195
        %s382 = scalar_select %p381, %s380, 195
        %s383 = smul.addr %s382, 8
        %s384 = scalar_lea.vmem %s0, %s383
        %s385 = smul.u32 98, %s25
        %v386 = vld [vmem:[%s384] sm:$0xff]
        %v387 = vld [vmem:[%s384 + $0x8] sm:$0xff]
        %v388 = vld [vmem:[%s384 + $0x10] sm:$0xff]
        %v389 = vld [vmem:[%s384 + $0x18] sm:$0xff]
        %v390 = vld [vmem:[%s384 + $0x20] sm:$0xff]
        %v391 = vld [vmem:[%s384 + $0x28] sm:$0xff]
        %v392 = vld [vmem:[%s384 + $0x30] sm:$0xff]
        %v393 = vld [vmem:[%s384 + $0x38] sm:$0xff]
        %v394 = vld [vmem:[%s384 + $0x40] sm:$0xff]
        %v395 = vld [vmem:[%s384 + $0x48] sm:$0xff]
        %v396 = vld [vmem:[%s384 + $0x50] sm:$0xff]
        %v397 = vld [vmem:[%s384 + $0x58] sm:$0xff]
        %v398 = vld [vmem:[%s384 + $0x60] sm:$0xff]
        %v399 = vld [vmem:[%s384 + $0x68] sm:$0xff]
        %v400 = vld [vmem:[%s384 + $0x70] sm:$0xff]
        %v401 = vld [vmem:[%s384 + $0x78] sm:$0xff]
        %v402 = vld [vmem:[%s384 + $0x80] sm:$0xff]
        %v403 = vld [vmem:[%s384 + $0x88] sm:$0xff]
        %v404 = vld [vmem:[%s384 + $0x90] sm:$0xff]
        %v405 = vld [vmem:[%s384 + $0x98] sm:$0xff]
        %v406 = vld [vmem:[%s384 + $0xa0] sm:$0xff]
        %v407 = vld [vmem:[%s384 + $0xa8] sm:$0xff]
        %v408 = vld [vmem:[%s384 + $0xb0] sm:$0xff]
        %v409 = vld [vmem:[%s384 + $0xb8] sm:$0xff]
        %v410 = vld [vmem:[%s384 + $0xc0] sm:$0xff]
        %v411 = vld [vmem:[%s384 + $0xc8] sm:$0xff]
        %v412 = vld [vmem:[%s384 + $0xd0] sm:$0xff]
        %v413 = vld [vmem:[%s384 + $0xd8] sm:$0xff]
        %v414 = vld [vmem:[%s384 + $0xe0] sm:$0xff]
        %v415 = vld [vmem:[%s384 + $0xe8] sm:$0xff]
        %v416 = vld [vmem:[%s384 + $0xf0] sm:$0xff]
        %v417 = vld [vmem:[%s384 + $0xf8] sm:$0xff]
        %v418 = vld [vmem:[%s384 + $0x100] sm:$0xff]
        %v419 = vld [vmem:[%s384 + $0x108] sm:$0xff]
        %v420 = vld [vmem:[%s384 + $0x110] sm:$0xff]
        %v421 = vld [vmem:[%s384 + $0x118] sm:$0xff]
        %v422 = vld [vmem:[%s384 + $0x120] sm:$0xff]
        %v423 = vld [vmem:[%s384 + $0x128] sm:$0xff]
        %v424 = vld [vmem:[%s384 + $0x130] sm:$0xff]
        %v425 = vld [vmem:[%s384 + $0x138] sm:$0xff]
        %v426 = vld [vmem:[%s384 + $0x140] sm:$0xff]
        %v427 = vld [vmem:[%s384 + $0x148] sm:$0xff]
        %v428 = vld [vmem:[%s384 + $0x150] sm:$0xff]
        %v429 = vld [vmem:[%s384 + $0x158] sm:$0xff]
        %v430 = vld [vmem:[%s384 + $0x160] sm:$0xff]
        %v431 = vld [vmem:[%s384 + $0x168] sm:$0xff]
        %v432 = vld [vmem:[%s384 + $0x170] sm:$0xff]
        %v433 = vld [vmem:[%s384 + $0x178] sm:$0xff]
        %v434 = vld [vmem:[%s384 + $0x180] sm:$0xff]
        %v435 = vld [vmem:[%s384 + $0x188] sm:$0xff]
        %v436 = vld [vmem:[%s384 + $0x190] sm:$0xff]
        %v437 = vld [vmem:[%s384 + $0x198] sm:$0xff]
        %v438 = vld [vmem:[%s384 + $0x1a0] sm:$0xff]
        %v439 = vld [vmem:[%s384 + $0x1a8] sm:$0xff]
        %v440 = vld [vmem:[%s384 + $0x1b0] sm:$0xff]
        %v441 = vld [vmem:[%s384 + $0x1b8] sm:$0xff]
        %v442 = vld [vmem:[%s384 + $0x1c0] sm:$0xff]
        %v443 = vld [vmem:[%s384 + $0x1c8] sm:$0xff]
        %v444 = vld [vmem:[%s384 + $0x1d0] sm:$0xff]
        %v445 = vld [vmem:[%s384 + $0x1d8] sm:$0xff]
        %v446 = vld [vmem:[%s384 + $0x1e0] sm:$0xff]
        %v447 = vld [vmem:[%s384 + $0x1e8] sm:$0xff]
        %v448 = vld [vmem:[%s384 + $0x1f0] sm:$0xff]
        %v449 = vld [vmem:[%s384 + $0x1f8] sm:$0xff]
        %v450 = vld [vmem:[%s384 + $0x200] sm:$0xff]
        %v451 = vld [vmem:[%s384 + $0x208] sm:$0xff]
        %v452 = vld [vmem:[%s384 + $0x210] sm:$0xff]
        %v453 = vld [vmem:[%s384 + $0x218] sm:$0xff]
        %v454 = vld [vmem:[%s384 + $0x220] sm:$0xff]
        %v455 = vld [vmem:[%s384 + $0x228] sm:$0xff]
        %v456 = vld [vmem:[%s384 + $0x230] sm:$0xff]
        %v457 = vld [vmem:[%s384 + $0x238] sm:$0xff]
        %v458 = vld [vmem:[%s384 + $0x240] sm:$0xff]
        %v459 = vld [vmem:[%s384 + $0x248] sm:$0xff]
        %v460 = vld [vmem:[%s384 + $0x250] sm:$0xff]
        %v461 = vld [vmem:[%s384 + $0x258] sm:$0xff]
        %v462 = vld [vmem:[%s384 + $0x260] sm:$0xff]
        %v463 = vld [vmem:[%s384 + $0x268] sm:$0xff]
        %v464 = vld [vmem:[%s384 + $0x270] sm:$0xff]
        %v465 = vld [vmem:[%s384 + $0x278] sm:$0xff]
        %v466 = vld [vmem:[%s384 + $0x280] sm:$0xff]
        %v467 = vld [vmem:[%s384 + $0x288] sm:$0xff]
        %v468 = vld [vmem:[%s384 + $0x290] sm:$0xff]
        %v469 = vld [vmem:[%s384 + $0x298] sm:$0xff]
        %v470 = vld [vmem:[%s384 + $0x2a0] sm:$0xff]
        %v471 = vld [vmem:[%s384 + $0x2a8] sm:$0xff]
        %v472 = vld [vmem:[%s384 + $0x2b0] sm:$0xff]
        %v473 = vld [vmem:[%s384 + $0x2b8] sm:$0xff]
        %v474 = vld [vmem:[%s384 + $0x2c0] sm:$0xff]
        %v475 = vld [vmem:[%s384 + $0x2c8] sm:$0xff]
        %v476 = vld [vmem:[%s384 + $0x2d0] sm:$0xff]
        %v477 = vld [vmem:[%s384 + $0x2d8] sm:$0xff]
        %v478 = vld [vmem:[%s384 + $0x2e0] sm:$0xff]
        %v479 = vld [vmem:[%s384 + $0x2e8] sm:$0xff]
        %v480 = vld [vmem:[%s384 + $0x2f0] sm:$0xff]
        %v481 = vld [vmem:[%s384 + $0x2f8] sm:$0xff]
        %v482 = vld [vmem:[%s384 + $0x300] sm:$0xff]
        %v483 = vld [vmem:[%s384 + $0x308] sm:$0xff]
        %v484 = vld [vmem:[%s1] sm:$0xff]
        %v485 = vld [vmem:[%s1 + $0x8] sm:$0xff]
        %v486 = vld [vmem:[%s1 + $0x10] sm:$0xff]
        %v487 = vld [vmem:[%s1 + $0x18] sm:$0xff]
        %v488 = vld [vmem:[%s1 + $0x20] sm:$0xff]
        %v489 = vld [vmem:[%s1 + $0x28] sm:$0xff]
        %v490 = vld [vmem:[%s1 + $0x30] sm:$0xff]
        %v491 = vld [vmem:[%s1 + $0x38] sm:$0xff]
        %v492 = vld [vmem:[%s1 + $0x40] sm:$0xff]
        %v493 = vld [vmem:[%s1 + $0x48] sm:$0xff]
        %v494 = vld [vmem:[%s1 + $0x50] sm:$0xff]
        %v495 = vld [vmem:[%s1 + $0x58] sm:$0xff]
        %v496 = vld [vmem:[%s1 + $0x60] sm:$0xff]
        %v497 = vld [vmem:[%s1 + $0x68] sm:$0xff]
        %v498 = vld [vmem:[%s1 + $0x70] sm:$0xff]
        %v499 = vld [vmem:[%s1 + $0x78] sm:$0xff]
        %v500 = vld [vmem:[%s2] sm:$0x1]
        %v502 = vperm.slane %v500, 0
        %504 = vmatpush.msra.mxu0 %v499
        %505 = vmatpush.msra.mxu0 %v498
        %506 = vmatpush.msra.mxu0 %v497
        %507 = vmatpush.msra.mxu0 %v496
        %508 = vmatpush.msra.mxu0 %v495
        %509 = vmatpush.msra.mxu0 %v494
        %510 = vmatpush.msra.mxu0 %v493
        %511 = vmatpush.msra.mxu0 %v492
        %512 = vmatpush.msra.mxu0 %v491
        %513 = vmatpush.msra.mxu0 %v490
        %514 = vmatpush.msra.mxu0 %v489
        %515 = vmatpush.msra.mxu0 %v488
        %516 = vmatpush.msra.mxu0 %v487
        %517 = vmatpush.msra.mxu0 %v486
        %518 = vmatpush.msra.mxu0 %v485
        %519 = vmatpush.msra.mxu0 %v484
        %520 = vmatmul.f32.gmra.mxu0 %v386
        %v521 = vpop.f32.mrf.mxu0
        %v522 = vadd.f32 %v502, %v521
        %523 = vmatmul.f32.gmra.mxu0 %v387
        %v524 = vpop.f32.mrf.mxu0
        %v525 = vadd.f32 %v502, %v524
        %526 = vmatmul.f32.gmra.mxu0 %v388
        %v527 = vpop.f32.mrf.mxu0
        %v528 = vadd.f32 %v502, %v527
        %529 = vmatmul.f32.gmra.mxu0 %v389
        %v530 = vpop.f32.mrf.mxu0
        %v531 = vadd.f32 %v502, %v530
        %532 = vmatmul.f32.gmra.mxu0 %v390
        %v533 = vpop.f32.mrf.mxu0
        %v534 = vadd.f32 %v502, %v533
        %535 = vmatmul.f32.gmra.mxu0 %v391
        %v536 = vpop.f32.mrf.mxu0
        %v537 = vadd.f32 %v502, %v536
        %538 = vmatmul.f32.gmra.mxu0 %v392
        %v539 = vpop.f32.mrf.mxu0
        %v540 = vadd.f32 %v502, %v539
        %541 = vmatmul.f32.gmra.mxu0 %v393
        %v542 = vpop.f32.mrf.mxu0
        %v543 = vadd.f32 %v502, %v542
        %544 = vmatmul.f32.gmra.mxu0 %v394
        %v545 = vpop.f32.mrf.mxu0
        %v546 = vadd.f32 %v502, %v545
        %547 = vmatmul.f32.gmra.mxu0 %v395
        %v548 = vpop.f32.mrf.mxu0
        %v549 = vadd.f32 %v502, %v548
        %550 = vmatmul.f32.gmra.mxu0 %v396
        %v551 = vpop.f32.mrf.mxu0
        %v552 = vadd.f32 %v502, %v551
        %553 = vmatmul.f32.gmra.mxu0 %v397
        %v554 = vpop.f32.mrf.mxu0
        %v555 = vadd.f32 %v502, %v554
        %556 = vmatmul.f32.gmra.mxu0 %v398
        %v557 = vpop.f32.mrf.mxu0
        %v558 = vadd.f32 %v502, %v557
        %559 = vmatmul.f32.gmra.mxu0 %v399
        %v560 = vpop.f32.mrf.mxu0
        %v561 = vadd.f32 %v502, %v560
        %562 = vmatmul.f32.gmra.mxu0 %v400
        %v563 = vpop.f32.mrf.mxu0
        %v564 = vadd.f32 %v502, %v563
        %565 = vmatmul.f32.gmra.mxu0 %v401
        %v566 = vpop.f32.mrf.mxu0
        %v567 = vadd.f32 %v502, %v566
        %568 = vmatmul.f32.gmra.mxu0 %v402
        %v569 = vpop.f32.mrf.mxu0
        %v570 = vadd.f32 %v502, %v569
        %571 = vmatmul.f32.gmra.mxu0 %v403
        %v572 = vpop.f32.mrf.mxu0
        %v573 = vadd.f32 %v502, %v572
        %574 = vmatmul.f32.gmra.mxu0 %v404
        %v575 = vpop.f32.mrf.mxu0
        %v576 = vadd.f32 %v502, %v575
        %577 = vmatmul.f32.gmra.mxu0 %v405
        %v578 = vpop.f32.mrf.mxu0
        %v579 = vadd.f32 %v502, %v578
        %580 = vmatmul.f32.gmra.mxu0 %v406
        %v581 = vpop.f32.mrf.mxu0
        %v582 = vadd.f32 %v502, %v581
        %583 = vmatmul.f32.gmra.mxu0 %v407
        %v584 = vpop.f32.mrf.mxu0
        %v585 = vadd.f32 %v502, %v584
        %586 = vmatmul.f32.gmra.mxu0 %v408
        %v587 = vpop.f32.mrf.mxu0
        %v588 = vadd.f32 %v502, %v587
        %589 = vmatmul.f32.gmra.mxu0 %v409
        %v590 = vpop.f32.mrf.mxu0
        %v591 = vadd.f32 %v502, %v590
        %592 = vmatmul.f32.gmra.mxu0 %v410
        %v593 = vpop.f32.mrf.mxu0
        %v594 = vadd.f32 %v502, %v593
        %595 = vmatmul.f32.gmra.mxu0 %v411
        %v596 = vpop.f32.mrf.mxu0
        %v597 = vadd.f32 %v502, %v596
        %598 = vmatmul.f32.gmra.mxu0 %v412
        %v599 = vpop.f32.mrf.mxu0
        %v600 = vadd.f32 %v502, %v599
        %601 = vmatmul.f32.gmra.mxu0 %v413
        %v602 = vpop.f32.mrf.mxu0
        %v603 = vadd.f32 %v502, %v602
        %604 = vmatmul.f32.gmra.mxu0 %v414
        %v605 = vpop.f32.mrf.mxu0
        %v606 = vadd.f32 %v502, %v605
        %607 = vmatmul.f32.gmra.mxu0 %v415
        %v608 = vpop.f32.mrf.mxu0
        %v609 = vadd.f32 %v502, %v608
        %610 = vmatmul.f32.gmra.mxu0 %v416
        %v611 = vpop.f32.mrf.mxu0
        %v612 = vadd.f32 %v502, %v611
        %613 = vmatmul.f32.gmra.mxu0 %v417
        %v614 = vpop.f32.mrf.mxu0
        %v615 = vadd.f32 %v502, %v614
        %616 = vmatmul.f32.gmra.mxu0 %v418
        %v617 = vpop.f32.mrf.mxu0
        %v618 = vadd.f32 %v502, %v617
        %619 = vmatmul.f32.gmra.mxu0 %v419
        %v620 = vpop.f32.mrf.mxu0
        %v621 = vadd.f32 %v502, %v620
        %622 = vmatmul.f32.gmra.mxu0 %v420
        %v623 = vpop.f32.mrf.mxu0
        %v624 = vadd.f32 %v502, %v623
        %625 = vmatmul.f32.gmra.mxu0 %v421
        %v626 = vpop.f32.mrf.mxu0
        %v627 = vadd.f32 %v502, %v626
        %628 = vmatmul.f32.gmra.mxu0 %v422
        %v629 = vpop.f32.mrf.mxu0
        %v630 = vadd.f32 %v502, %v629
        %631 = vmatmul.f32.gmra.mxu0 %v423
        %v632 = vpop.f32.mrf.mxu0
        %v633 = vadd.f32 %v502, %v632
        %634 = vmatmul.f32.gmra.mxu0 %v424
        %v635 = vpop.f32.mrf.mxu0
        %v636 = vadd.f32 %v502, %v635
        %637 = vmatmul.f32.gmra.mxu0 %v425
        %v638 = vpop.f32.mrf.mxu0
        %v639 = vadd.f32 %v502, %v638
        %640 = vmatmul.f32.gmra.mxu0 %v426
        %v641 = vpop.f32.mrf.mxu0
        %v642 = vadd.f32 %v502, %v641
        %643 = vmatmul.f32.gmra.mxu0 %v427
        %v644 = vpop.f32.mrf.mxu0
        %v645 = vadd.f32 %v502, %v644
        %646 = vmatmul.f32.gmra.mxu0 %v428
        %v647 = vpop.f32.mrf.mxu0
        %v648 = vadd.f32 %v502, %v647
        %649 = vmatmul.f32.gmra.mxu0 %v429
        %v650 = vpop.f32.mrf.mxu0
        %v651 = vadd.f32 %v502, %v650
        %652 = vmatmul.f32.gmra.mxu0 %v430
        %v653 = vpop.f32.mrf.mxu0
        %v654 = vadd.f32 %v502, %v653
        %655 = vmatmul.f32.gmra.mxu0 %v431
        %v656 = vpop.f32.mrf.mxu0
        %v657 = vadd.f32 %v502, %v656
        %658 = vmatmul.f32.gmra.mxu0 %v432
        %v659 = vpop.f32.mrf.mxu0
        %v660 = vadd.f32 %v502, %v659
        %661 = vmatmul.f32.gmra.mxu0 %v433
        %v662 = vpop.f32.mrf.mxu0
        %v663 = vadd.f32 %v502, %v662
        %664 = vmatmul.f32.gmra.mxu0 %v434
        %v665 = vpop.f32.mrf.mxu0
        %v666 = vadd.f32 %v502, %v665
        %667 = vmatmul.f32.gmra.mxu0 %v435
        %v668 = vpop.f32.mrf.mxu0
        %v669 = vadd.f32 %v502, %v668
        %670 = vmatmul.f32.gmra.mxu0 %v436
        %v671 = vpop.f32.mrf.mxu0
        %v672 = vadd.f32 %v502, %v671
        %673 = vmatmul.f32.gmra.mxu0 %v437
        %v674 = vpop.f32.mrf.mxu0
        %v675 = vadd.f32 %v502, %v674
        %676 = vmatmul.f32.gmra.mxu0 %v438
        %v677 = vpop.f32.mrf.mxu0
        %v678 = vadd.f32 %v502, %v677
        %679 = vmatmul.f32.gmra.mxu0 %v439
        %v680 = vpop.f32.mrf.mxu0
        %v681 = vadd.f32 %v502, %v680
        %682 = vmatmul.f32.gmra.mxu0 %v440
        %v683 = vpop.f32.mrf.mxu0
        %v684 = vadd.f32 %v502, %v683
        %685 = vmatmul.f32.gmra.mxu0 %v441
        %v686 = vpop.f32.mrf.mxu0
        %v687 = vadd.f32 %v502, %v686
        %688 = vmatmul.f32.gmra.mxu0 %v442
        %v689 = vpop.f32.mrf.mxu0
        %v690 = vadd.f32 %v502, %v689
        %691 = vmatmul.f32.gmra.mxu0 %v443
        %v692 = vpop.f32.mrf.mxu0
        %v693 = vadd.f32 %v502, %v692
        %694 = vmatmul.f32.gmra.mxu0 %v444
        %v695 = vpop.f32.mrf.mxu0
        %v696 = vadd.f32 %v502, %v695
        %697 = vmatmul.f32.gmra.mxu0 %v445
        %v698 = vpop.f32.mrf.mxu0
        %v699 = vadd.f32 %v502, %v698
        %700 = vmatmul.f32.gmra.mxu0 %v446
        %v701 = vpop.f32.mrf.mxu0
        %v702 = vadd.f32 %v502, %v701
        %703 = vmatmul.f32.gmra.mxu0 %v447
        %v704 = vpop.f32.mrf.mxu0
        %v705 = vadd.f32 %v502, %v704
        %706 = vmatmul.f32.gmra.mxu0 %v448
        %v707 = vpop.f32.mrf.mxu0
        %v708 = vadd.f32 %v502, %v707
        %709 = vmatmul.f32.gmra.mxu0 %v449
        %v710 = vpop.f32.mrf.mxu0
        %v711 = vadd.f32 %v502, %v710
        %712 = vmatmul.f32.gmra.mxu0 %v450
        %v713 = vpop.f32.mrf.mxu0
        %v714 = vadd.f32 %v502, %v713
        %715 = vmatmul.f32.gmra.mxu0 %v451
        %v716 = vpop.f32.mrf.mxu0
        %v717 = vadd.f32 %v502, %v716
        %718 = vmatmul.f32.gmra.mxu0 %v452
        %v719 = vpop.f32.mrf.mxu0
        %v720 = vadd.f32 %v502, %v719
        %721 = vmatmul.f32.gmra.mxu0 %v453
        %v722 = vpop.f32.mrf.mxu0
        %v723 = vadd.f32 %v502, %v722
        %724 = vmatmul.f32.gmra.mxu0 %v454
        %v725 = vpop.f32.mrf.mxu0
        %v726 = vadd.f32 %v502, %v725
        %727 = vmatmul.f32.gmra.mxu0 %v455
        %v728 = vpop.f32.mrf.mxu0
        %v729 = vadd.f32 %v502, %v728
        %730 = vmatmul.f32.gmra.mxu0 %v456
        %v731 = vpop.f32.mrf.mxu0
        %v732 = vadd.f32 %v502, %v731
        %733 = vmatmul.f32.gmra.mxu0 %v457
        %v734 = vpop.f32.mrf.mxu0
        %v735 = vadd.f32 %v502, %v734
        %736 = vmatmul.f32.gmra.mxu0 %v458
        %v737 = vpop.f32.mrf.mxu0
        %v738 = vadd.f32 %v502, %v737
        %739 = vmatmul.f32.gmra.mxu0 %v459
        %v740 = vpop.f32.mrf.mxu0
        %v741 = vadd.f32 %v502, %v740
        %742 = vmatmul.f32.gmra.mxu0 %v460
        %v743 = vpop.f32.mrf.mxu0
        %v744 = vadd.f32 %v502, %v743
        %745 = vmatmul.f32.gmra.mxu0 %v461
        %v746 = vpop.f32.mrf.mxu0
        %v747 = vadd.f32 %v502, %v746
        %748 = vmatmul.f32.gmra.mxu0 %v462
        %v749 = vpop.f32.mrf.mxu0
        %v750 = vadd.f32 %v502, %v749
        %751 = vmatmul.f32.gmra.mxu0 %v463
        %v752 = vpop.f32.mrf.mxu0
        %v753 = vadd.f32 %v502, %v752
        %754 = vmatmul.f32.gmra.mxu0 %v464
        %v755 = vpop.f32.mrf.mxu0
        %v756 = vadd.f32 %v502, %v755
        %757 = vmatmul.f32.gmra.mxu0 %v465
        %v758 = vpop.f32.mrf.mxu0
        %v759 = vadd.f32 %v502, %v758
        %760 = vmatmul.f32.gmra.mxu0 %v466
        %v761 = vpop.f32.mrf.mxu0
        %v762 = vadd.f32 %v502, %v761
        %763 = vmatmul.f32.gmra.mxu0 %v467
        %v764 = vpop.f32.mrf.mxu0
        %v765 = vadd.f32 %v502, %v764
        %766 = vmatmul.f32.gmra.mxu0 %v468
        %v767 = vpop.f32.mrf.mxu0
        %v768 = vadd.f32 %v502, %v767
        %769 = vmatmul.f32.gmra.mxu0 %v469
        %v770 = vpop.f32.mrf.mxu0
        %v771 = vadd.f32 %v502, %v770
        %772 = vmatmul.f32.gmra.mxu0 %v470
        %v773 = vpop.f32.mrf.mxu0
        %v774 = vadd.f32 %v502, %v773
        %775 = vmatmul.f32.gmra.mxu0 %v471
        %v776 = vpop.f32.mrf.mxu0
        %v777 = vadd.f32 %v502, %v776
        %778 = vmatmul.f32.gmra.mxu0 %v472
        %v779 = vpop.f32.mrf.mxu0
        %v780 = vadd.f32 %v502, %v779
        %781 = vmatmul.f32.gmra.mxu0 %v473
        %v782 = vpop.f32.mrf.mxu0
        %v783 = vadd.f32 %v502, %v782
        %784 = vmatmul.f32.gmra.mxu0 %v474
        %v785 = vpop.f32.mrf.mxu0
        %v786 = vadd.f32 %v502, %v785
        %787 = vmatmul.f32.gmra.mxu0 %v475
        %v788 = vpop.f32.mrf.mxu0
        %v789 = vadd.f32 %v502, %v788
        %790 = vmatmul.f32.gmra.mxu0 %v476
        %v791 = vpop.f32.mrf.mxu0
        %v792 = vadd.f32 %v502, %v791
        %793 = vmatmul.f32.gmra.mxu0 %v477
        %v794 = vpop.f32.mrf.mxu0
        %v795 = vadd.f32 %v502, %v794
        %796 = vmatmul.f32.gmra.mxu0 %v478
        %v797 = vpop.f32.mrf.mxu0
        %v798 = vadd.f32 %v502, %v797
        %799 = vmatmul.f32.gmra.mxu0 %v479
        %v800 = vpop.f32.mrf.mxu0
        %v801 = vadd.f32 %v502, %v800
        %802 = vmatmul.f32.gmra.mxu0 %v480
        %v803 = vpop.f32.mrf.mxu0
        %v804 = vadd.f32 %v502, %v803
        %805 = vmatmul.f32.gmra.mxu0 %v481
        %v806 = vpop.f32.mrf.mxu0
        %v807 = vadd.f32 %v502, %v806
        %808 = vmatmul.f32.gmra.mxu0 %v482
        %v809 = vpop.f32.mrf.mxu0
        %v810 = vadd.f32 %v502, %v809
        %811 = vmatmul.f32.gmra.mxu0 %v483
        %v812 = vpop.f32.mrf.mxu0
        %v813 = vadd.f32 %v502, %v812
        %814 = vdwg.mxu0
        %v815 = vmax.f32 %v522, 0.0
        %v816 = vmax.f32 %v525, 0.0
        %v817 = vmax.f32 %v528, 0.0
        %v818 = vmax.f32 %v531, 0.0
        %v819 = vmax.f32 %v534, 0.0
        %v820 = vmax.f32 %v537, 0.0
        %v821 = vmax.f32 %v540, 0.0
        %v822 = vmax.f32 %v543, 0.0
        %v823 = vmax.f32 %v546, 0.0
        %v824 = vmax.f32 %v549, 0.0
        %v825 = vmax.f32 %v552, 0.0
        %v826 = vmax.f32 %v555, 0.0
        %v827 = vmax.f32 %v558, 0.0
        %v828 = vmax.f32 %v561, 0.0
        %v829 = vmax.f32 %v564, 0.0
        %v830 = vmax.f32 %v567, 0.0
        %v831 = vmax.f32 %v570, 0.0
        %v832 = vmax.f32 %v573, 0.0
        %v833 = vmax.f32 %v576, 0.0
        %v834 = vmax.f32 %v579, 0.0
        %v835 = vmax.f32 %v582, 0.0
        %v836 = vmax.f32 %v585, 0.0
        %v837 = vmax.f32 %v588, 0.0
        %v838 = vmax.f32 %v591, 0.0
        %v839 = vmax.f32 %v594, 0.0
        %v840 = vmax.f32 %v597, 0.0
        %v841 = vmax.f32 %v600, 0.0
        %v842 = vmax.f32 %v603, 0.0
        %v843 = vmax.f32 %v606, 0.0
        %v844 = vmax.f32 %v609, 0.0
        %v845 = vmax.f32 %v612, 0.0
        %v846 = vmax.f32 %v615, 0.0
        %v847 = vmax.f32 %v618, 0.0
        %v848 = vmax.f32 %v621, 0.0
        %v849 = vmax.f32 %v624, 0.0
        %v850 = vmax.f32 %v627, 0.0
        %v851 = vmax.f32 %v630, 0.0
        %v852 = vmax.f32 %v633, 0.0
        %v853 = vmax.f32 %v636, 0.0
        %v854 = vmax.f32 %v639, 0.0
        %v855 = vmax.f32 %v642, 0.0
        %v856 = vmax.f32 %v645, 0.0
        %v857 = vmax.f32 %v648, 0.0
        %v858 = vmax.f32 %v651, 0.0
        %v859 = vmax.f32 %v654, 0.0
        %v860 = vmax.f32 %v657, 0.0
        %v861 = vmax.f32 %v660, 0.0
        %v862 = vmax.f32 %v663, 0.0
        %v863 = vmax.f32 %v666, 0.0
        %v864 = vmax.f32 %v669, 0.0
        %v865 = vmax.f32 %v672, 0.0
        %v866 = vmax.f32 %v675, 0.0
        %v867 = vmax.f32 %v678, 0.0
        %v868 = vmax.f32 %v681, 0.0
        %v869 = vmax.f32 %v684, 0.0
        %v870 = vmax.f32 %v687, 0.0
        %v871 = vmax.f32 %v690, 0.0
        %v872 = vmax.f32 %v693, 0.0
        %v873 = vmax.f32 %v696, 0.0
        %v874 = vmax.f32 %v699, 0.0
        %v875 = vmax.f32 %v702, 0.0
        %v876 = vmax.f32 %v705, 0.0
        %v877 = vmax.f32 %v708, 0.0
        %v878 = vmax.f32 %v711, 0.0
        %v879 = vmax.f32 %v714, 0.0
        %v880 = vmax.f32 %v717, 0.0
        %v881 = vmax.f32 %v720, 0.0
        %v882 = vmax.f32 %v723, 0.0
        %v883 = vmax.f32 %v726, 0.0
        %v884 = vmax.f32 %v729, 0.0
        %v885 = vmax.f32 %v732, 0.0
        %v886 = vmax.f32 %v735, 0.0
        %v887 = vmax.f32 %v738, 0.0
        %v888 = vmax.f32 %v741, 0.0
        %v889 = vmax.f32 %v744, 0.0
        %v890 = vmax.f32 %v747, 0.0
        %v891 = vmax.f32 %v750, 0.0
        %v892 = vmax.f32 %v753, 0.0
        %v893 = vmax.f32 %v756, 0.0
        %v894 = vmax.f32 %v759, 0.0
        %v895 = vmax.f32 %v762, 0.0
        %v896 = vmax.f32 %v765, 0.0
        %v897 = vmax.f32 %v768, 0.0
        %v898 = vmax.f32 %v771, 0.0
        %v899 = vmax.f32 %v774, 0.0
        %v900 = vmax.f32 %v777, 0.0
        %v901 = vmax.f32 %v780, 0.0
        %v902 = vmax.f32 %v783, 0.0
        %v903 = vmax.f32 %v786, 0.0
        %v904 = vmax.f32 %v789, 0.0
        %v905 = vmax.f32 %v792, 0.0
        %v906 = vmax.f32 %v795, 0.0
        %v907 = vmax.f32 %v798, 0.0
        %v908 = vmax.f32 %v801, 0.0
        %v909 = vmax.f32 %v804, 0.0
        %v910 = vmax.f32 %v807, 0.0
        %v911 = vmax.f32 %v810, 0.0
        %v912 = vmax.f32 %v813, 0.0
        %vm913 = vcmask 64512
        %914 = vst.msk [vmem:[#allocation2] sm:$0xff] %vm913, %v815
        %915 = vst.msk [vmem:[#allocation2 + $0x8] sm:$0xff] %vm913, %v816
        %916 = vst.msk [vmem:[#allocation2 + $0x10] sm:$0xff] %vm913, %v817
        %917 = vst.msk [vmem:[#allocation2 + $0x18] sm:$0xff] %vm913, %v818
        %918 = vst.msk [vmem:[#allocation2 + $0x20] sm:$0xff] %vm913, %v819
        %919 = vst.msk [vmem:[#allocation2 + $0x28] sm:$0xff] %vm913, %v820
        %920 = vst.msk [vmem:[#allocation2 + $0x30] sm:$0xff] %vm913, %v821
        %921 = vst.msk [vmem:[#allocation2 + $0x38] sm:$0xff] %vm913, %v822
        %922 = vst.msk [vmem:[#allocation2 + $0x40] sm:$0xff] %vm913, %v823
        %923 = vst.msk [vmem:[#allocation2 + $0x48] sm:$0xff] %vm913, %v824
        %924 = vst.msk [vmem:[#allocation2 + $0x50] sm:$0xff] %vm913, %v825
        %925 = vst.msk [vmem:[#allocation2 + $0x58] sm:$0xff] %vm913, %v826
        %926 = vst.msk [vmem:[#allocation2 + $0x60] sm:$0xff] %vm913, %v827
        %927 = vst.msk [vmem:[#allocation2 + $0x68] sm:$0xff] %vm913, %v828
        %928 = vst.msk [vmem:[#allocation2 + $0x70] sm:$0xff] %vm913, %v829
        %929 = vst.msk [vmem:[#allocation2 + $0x78] sm:$0xff] %vm913, %v830
        %930 = vst.msk [vmem:[#allocation2 + $0x80] sm:$0xff] %vm913, %v831
        %931 = vst.msk [vmem:[#allocation2 + $0x88] sm:$0xff] %vm913, %v832
        %932 = vst.msk [vmem:[#allocation2 + $0x90] sm:$0xff] %vm913, %v833
        %933 = vst.msk [vmem:[#allocation2 + $0x98] sm:$0xff] %vm913, %v834
        %934 = vst.msk [vmem:[#allocation2 + $0xa0] sm:$0xff] %vm913, %v835
        %935 = vst.msk [vmem:[#allocation2 + $0xa8] sm:$0xff] %vm913, %v836
        %936 = vst.msk [vmem:[#allocation2 + $0xb0] sm:$0xff] %vm913, %v837
        %937 = vst.msk [vmem:[#allocation2 + $0xb8] sm:$0xff] %vm913, %v838
        %938 = vst.msk [vmem:[#allocation2 + $0xc0] sm:$0xff] %vm913, %v839
        %939 = vst.msk [vmem:[#allocation2 + $0xc8] sm:$0xff] %vm913, %v840
        %940 = vst.msk [vmem:[#allocation2 + $0xd0] sm:$0xff] %vm913, %v841
        %941 = vst.msk [vmem:[#allocation2 + $0xd8] sm:$0xff] %vm913, %v842
        %942 = vst.msk [vmem:[#allocation2 + $0xe0] sm:$0xff] %vm913, %v843
        %943 = vst.msk [vmem:[#allocation2 + $0xe8] sm:$0xff] %vm913, %v844
        %944 = vst.msk [vmem:[#allocation2 + $0xf0] sm:$0xff] %vm913, %v845
        %945 = vst.msk [vmem:[#allocation2 + $0xf8] sm:$0xff] %vm913, %v846
        %946 = vst.msk [vmem:[#allocation2 + $0x100] sm:$0xff] %vm913, %v847
        %947 = vst.msk [vmem:[#allocation2 + $0x108] sm:$0xff] %vm913, %v848
        %948 = vst.msk [vmem:[#allocation2 + $0x110] sm:$0xff] %vm913, %v849
        %949 = vst.msk [vmem:[#allocation2 + $0x118] sm:$0xff] %vm913, %v850
        %950 = vst.msk [vmem:[#allocation2 + $0x120] sm:$0xff] %vm913, %v851
        %951 = vst.msk [vmem:[#allocation2 + $0x128] sm:$0xff] %vm913, %v852
        %952 = vst.msk [vmem:[#allocation2 + $0x130] sm:$0xff] %vm913, %v853
        %953 = vst.msk [vmem:[#allocation2 + $0x138] sm:$0xff] %vm913, %v854
        %954 = vst.msk [vmem:[#allocation2 + $0x140] sm:$0xff] %vm913, %v855
        %955 = vst.msk [vmem:[#allocation2 + $0x148] sm:$0xff] %vm913, %v856
        %956 = vst.msk [vmem:[#allocation2 + $0x150] sm:$0xff] %vm913, %v857
        %957 = vst.msk [vmem:[#allocation2 + $0x158] sm:$0xff] %vm913, %v858
        %958 = vst.msk [vmem:[#allocation2 + $0x160] sm:$0xff] %vm913, %v859
        %959 = vst.msk [vmem:[#allocation2 + $0x168] sm:$0xff] %vm913, %v860
        %960 = vst.msk [vmem:[#allocation2 + $0x170] sm:$0xff] %vm913, %v861
        %961 = vst.msk [vmem:[#allocation2 + $0x178] sm:$0xff] %vm913, %v862
        %962 = vst.msk [vmem:[#allocation2 + $0x180] sm:$0xff] %vm913, %v863
        %963 = vst.msk [vmem:[#allocation2 + $0x188] sm:$0xff] %vm913, %v864
        %964 = vst.msk [vmem:[#allocation2 + $0x190] sm:$0xff] %vm913, %v865
        %965 = vst.msk [vmem:[#allocation2 + $0x198] sm:$0xff] %vm913, %v866
        %966 = vst.msk [vmem:[#allocation2 + $0x1a0] sm:$0xff] %vm913, %v867
        %967 = vst.msk [vmem:[#allocation2 + $0x1a8] sm:$0xff] %vm913, %v868
        %968 = vst.msk [vmem:[#allocation2 + $0x1b0] sm:$0xff] %vm913, %v869
        %969 = vst.msk [vmem:[#allocation2 + $0x1b8] sm:$0xff] %vm913, %v870
        %970 = vst.msk [vmem:[#allocation2 + $0x1c0] sm:$0xff] %vm913, %v871
        %971 = vst.msk [vmem:[#allocation2 + $0x1c8] sm:$0xff] %vm913, %v872
        %972 = vst.msk [vmem:[#allocation2 + $0x1d0] sm:$0xff] %vm913, %v873
        %973 = vst.msk [vmem:[#allocation2 + $0x1d8] sm:$0xff] %vm913, %v874
        %974 = vst.msk [vmem:[#allocation2 + $0x1e0] sm:$0xff] %vm913, %v875
        %975 = vst.msk [vmem:[#allocation2 + $0x1e8] sm:$0xff] %vm913, %v876
        %976 = vst.msk [vmem:[#allocation2 + $0x1f0] sm:$0xff] %vm913, %v877
        %977 = vst.msk [vmem:[#allocation2 + $0x1f8] sm:$0xff] %vm913, %v878
        %978 = vst.msk [vmem:[#allocation2 + $0x200] sm:$0xff] %vm913, %v879
        %979 = vst.msk [vmem:[#allocation2 + $0x208] sm:$0xff] %vm913, %v880
        %980 = vst.msk [vmem:[#allocation2 + $0x210] sm:$0xff] %vm913, %v881
        %981 = vst.msk [vmem:[#allocation2 + $0x218] sm:$0xff] %vm913, %v882
        %982 = vst.msk [vmem:[#allocation2 + $0x220] sm:$0xff] %vm913, %v883
        %983 = vst.msk [vmem:[#allocation2 + $0x228] sm:$0xff] %vm913, %v884
        %984 = vst.msk [vmem:[#allocation2 + $0x230] sm:$0xff] %vm913, %v885
        %985 = vst.msk [vmem:[#allocation2 + $0x238] sm:$0xff] %vm913, %v886
        %986 = vst.msk [vmem:[#allocation2 + $0x240] sm:$0xff] %vm913, %v887
        %987 = vst.msk [vmem:[#allocation2 + $0x248] sm:$0xff] %vm913, %v888
        %988 = vst.msk [vmem:[#allocation2 + $0x250] sm:$0xff] %vm913, %v889
        %989 = vst.msk [vmem:[#allocation2 + $0x258] sm:$0xff] %vm913, %v890
        %990 = vst.msk [vmem:[#allocation2 + $0x260] sm:$0xff] %vm913, %v891
        %991 = vst.msk [vmem:[#allocation2 + $0x268] sm:$0xff] %vm913, %v892
        %992 = vst.msk [vmem:[#allocation2 + $0x270] sm:$0xff] %vm913, %v893
        %993 = vst.msk [vmem:[#allocation2 + $0x278] sm:$0xff] %vm913, %v894
        %994 = vst.msk [vmem:[#allocation2 + $0x280] sm:$0xff] %vm913, %v895
        %995 = vst.msk [vmem:[#allocation2 + $0x288] sm:$0xff] %vm913, %v896
        %996 = vst.msk [vmem:[#allocation2 + $0x290] sm:$0xff] %vm913, %v897
        %997 = vst.msk [vmem:[#allocation2 + $0x298] sm:$0xff] %vm913, %v898
        %998 = vst.msk [vmem:[#allocation2 + $0x2a0] sm:$0xff] %vm913, %v899
        %999 = vst.msk [vmem:[#allocation2 + $0x2a8] sm:$0xff] %vm913, %v900
        %1000 = vst.msk [vmem:[#allocation2 + $0x2b0] sm:$0xff] %vm913, %v901
        %1001 = vst.msk [vmem:[#allocation2 + $0x2b8] sm:$0xff] %vm913, %v902
        %1002 = vst.msk [vmem:[#allocation2 + $0x2c0] sm:$0xff] %vm913, %v903
        %1003 = vst.msk [vmem:[#allocation2 + $0x2c8] sm:$0xff] %vm913, %v904
        %1004 = vst.msk [vmem:[#allocation2 + $0x2d0] sm:$0xff] %vm913, %v905
        %1005 = vst.msk [vmem:[#allocation2 + $0x2d8] sm:$0xff] %vm913, %v906
        %1006 = vst.msk [vmem:[#allocation2 + $0x2e0] sm:$0xff] %vm913, %v907
        %1007 = vst.msk [vmem:[#allocation2 + $0x2e8] sm:$0xff] %vm913, %v908
        %1008 = vst.msk [vmem:[#allocation2 + $0x2f0] sm:$0xff] %vm913, %v909
        %1009 = vst.msk [vmem:[#allocation2 + $0x2f8] sm:$0xff] %vm913, %v910
        %1010 = vst.msk [vmem:[#allocation2 + $0x300] sm:$0xff] %vm913, %v911
        %1011 = vst.msk [vmem:[#allocation2 + $0x308] sm:$0xff] %vm913, %v912
        %v1012 = vld [vmem:[#allocation2] ss:$2 sm:$0xff]
        %s1013 = scalar_lea.vmem [#allocation2], 16
        %v1014 = vld [vmem:[%s1013] ss:$2 sm:$0x3f]
        %s1015 = scalar_lea.vmem [#allocation2], 1
        %v1016 = vld [vmem:[%s1015] ss:$2 sm:$0xff]
        %s1017 = scalar_lea.vmem [#allocation2], 17
        %v1018 = vld [vmem:[%s1017] ss:$2 sm:$0x3f]
        %v1019 = vmax.f32 %v1012, %v1016
        %v1020 = vmax.f32 %v1014, %v1018
        %s1021 = scalar_lea.vmem [#allocation2], 28
        %v1022 = vld [vmem:[%s1021] ss:$2 sm:$0xff]
        %s1023 = scalar_lea.vmem [#allocation2], 44
        %v1024 = vld [vmem:[%s1023] ss:$2 sm:$0x3f]
        %s1025 = scalar_lea.vmem [#allocation2], 29
        %v1026 = vld [vmem:[%s1025] ss:$2 sm:$0xff]
        %s1027 = scalar_lea.vmem [#allocation2], 45
        %v1028 = vld [vmem:[%s1027] ss:$2 sm:$0x3f]
        %v1029 = vmax.f32 %v1022, %v1026
        %v1030 = vmax.f32 %v1024, %v1028
        %v1031 = vmax.f32 %v1019, %v1029
        %v1032 = vmax.f32 %v1020, %v1030
        %1033 = vst.msk [vmem:[#allocation3] sm:$0xff] %vm913, %v1031
        %vm1034 = vcmask 62464
        %1035 = vst.msk [vmem:[#allocation3 + $0x8] sm:$0x3f] %vm1034, %v1032
        %s1036 = scalar_lea.vmem [#allocation2], 56
        %v1037 = vld [vmem:[%s1036] ss:$2 sm:$0xff]
        %s1038 = scalar_lea.vmem [#allocation2], 72
        %v1039 = vld [vmem:[%s1038] ss:$2 sm:$0x3f]
        %s1040 = scalar_lea.vmem [#allocation2], 57
        %v1041 = vld [vmem:[%s1040] ss:$2 sm:$0xff]
        %s1042 = scalar_lea.vmem [#allocation2], 73
        %v1043 = vld [vmem:[%s1042] ss:$2 sm:$0x3f]
        %v1044 = vmax.f32 %v1037, %v1041
        %v1045 = vmax.f32 %v1039, %v1043
        %s1046 = scalar_lea.vmem [#allocation2], 84
        %v1047 = vld [vmem:[%s1046] ss:$2 sm:$0xff]
        %s1048 = scalar_lea.vmem [#allocation2], 100
        %v1049 = vld [vmem:[%s1048] ss:$2 sm:$0x3f]
        %s1050 = scalar_lea.vmem [#allocation2], 85
        %v1051 = vld [vmem:[%s1050] ss:$2 sm:$0xff]
        %s1052 = scalar_lea.vmem [#allocation2], 101
        %v1053 = vld [vmem:[%s1052] ss:$2 sm:$0x3f]
        %v1054 = vmax.f32 %v1047, %v1051
        %v1055 = vmax.f32 %v1049, %v1053
        %v1056 = vmax.f32 %v1044, %v1054
        %v1057 = vmax.f32 %v1045, %v1055
        %1058 = vst.msk [vmem:[#allocation3 + $0xe] sm:$0xff] %vm913, %v1056
        %1059 = vst.msk [vmem:[#allocation3 + $0x16] sm:$0x3f] %vm1034, %v1057
        %s1060 = scalar_lea.vmem [#allocation2], 112
        %v1061 = vld [vmem:[%s1060] ss:$2 sm:$0xff]
        %s1062 = scalar_lea.vmem [#allocation2], 128
        %v1063 = vld [vmem:[%s1062] ss:$2 sm:$0x3f]
        %s1064 = scalar_lea.vmem [#allocation2], 113
        %v1065 = vld [vmem:[%s1064] ss:$2 sm:$0xff]
        %s1066 = scalar_lea.vmem [#allocation2], 129
        %v1067 = vld [vmem:[%s1066] ss:$2 sm:$0x3f]
        %v1068 = vmax.f32 %v1061, %v1065
        %v1069 = vmax.f32 %v1063, %v1067
        %s1070 = scalar_lea.vmem [#allocation2], 140
        %v1071 = vld [vmem:[%s1070] ss:$2 sm:$0xff]
        %s1072 = scalar_lea.vmem [#allocation2], 156
        %v1073 = vld [vmem:[%s1072] ss:$2 sm:$0x3f]
        %s1074 = scalar_lea.vmem [#allocation2], 141
        %v1075 = vld [vmem:[%s1074] ss:$2 sm:$0xff]
        %s1076 = scalar_lea.vmem [#allocation2], 157
        %v1077 = vld [vmem:[%s1076] ss:$2 sm:$0x3f]
        %v1078 = vmax.f32 %v1071, %v1075
        %v1079 = vmax.f32 %v1073, %v1077
        %v1080 = vmax.f32 %v1068, %v1078
        %v1081 = vmax.f32 %v1069, %v1079
        %1082 = vst.msk [vmem:[#allocation3 + $0x1c] sm:$0xff] %vm913, %v1080
        %1083 = vst.msk [vmem:[#allocation3 + $0x24] sm:$0x3f] %vm1034, %v1081
        %s1084 = scalar_lea.vmem [#allocation2], 168
        %v1085 = vld [vmem:[%s1084] ss:$2 sm:$0xff]
        %s1086 = scalar_lea.vmem [#allocation2], 184
        %v1087 = vld [vmem:[%s1086] ss:$2 sm:$0x3f]
        %s1088 = scalar_lea.vmem [#allocation2], 169
        %v1089 = vld [vmem:[%s1088] ss:$2 sm:$0xff]
        %s1090 = scalar_lea.vmem [#allocation2], 185
        %v1091 = vld [vmem:[%s1090] ss:$2 sm:$0x3f]
        %v1092 = vmax.f32 %v1085, %v1089
        %v1093 = vmax.f32 %v1087, %v1091
        %s1094 = scalar_lea.vmem [#allocation2], 196
        %v1095 = vld [vmem:[%s1094] ss:$2 sm:$0xff]
        %s1096 = scalar_lea.vmem [#allocation2], 212
        %v1097 = vld [vmem:[%s1096] ss:$2 sm:$0x3f]
        %s1098 = scalar_lea.vmem [#allocation2], 197
        %v1099 = vld [vmem:[%s1098] ss:$2 sm:$0xff]
        %s1100 = scalar_lea.vmem [#allocation2], 213
        %v1101 = vld [vmem:[%s1100] ss:$2 sm:$0x3f]
        %v1102 = vmax.f32 %v1095, %v1099
        %v1103 = vmax.f32 %v1097, %v1101
        %v1104 = vmax.f32 %v1092, %v1102
        %v1105 = vmax.f32 %v1093, %v1103
        %1106 = vst.msk [vmem:[#allocation3 + $0x2a] sm:$0xff] %vm913, %v1104
        %1107 = vst.msk [vmem:[#allocation3 + $0x32] sm:$0x3f] %vm1034, %v1105
        %s1108 = scalar_lea.vmem [#allocation2], 224
        %v1109 = vld [vmem:[%s1108] ss:$2 sm:$0xff]
        %s1110 = scalar_lea.vmem [#allocation2], 240
        %v1111 = vld [vmem:[%s1110] ss:$2 sm:$0x3f]
        %s1112 = scalar_lea.vmem [#allocation2], 225
        %v1113 = vld [vmem:[%s1112] ss:$2 sm:$0xff]
        %s1114 = scalar_lea.vmem [#allocation2], 241
        %v1115 = vld [vmem:[%s1114] ss:$2 sm:$0x3f]
        %v1116 = vmax.f32 %v1109, %v1113
        %v1117 = vmax.f32 %v1111, %v1115
        %s1118 = scalar_lea.vmem [#allocation2], 252
        %v1119 = vld [vmem:[%s1118] ss:$2 sm:$0xff]
        %s1120 = scalar_lea.vmem [#allocation2], 268
        %v1121 = vld [vmem:[%s1120] ss:$2 sm:$0x3f]
        %s1122 = scalar_lea.vmem [#allocation2], 253
        %v1123 = vld [vmem:[%s1122] ss:$2 sm:$0xff]
        %s1124 = scalar_lea.vmem [#allocation2], 269
        %v1125 = vld [vmem:[%s1124] ss:$2 sm:$0x3f]
        %v1126 = vmax.f32 %v1119, %v1123
        %v1127 = vmax.f32 %v1121, %v1125
        %v1128 = vmax.f32 %v1116, %v1126
        %v1129 = vmax.f32 %v1117, %v1127
        %1130 = vst.msk [vmem:[#allocation3 + $0x38] sm:$0xff] %vm913, %v1128
        %1131 = vst.msk [vmem:[#allocation3 + $0x40] sm:$0x3f] %vm1034, %v1129
        %s1132 = scalar_lea.vmem [#allocation2], 280
        %v1133 = vld [vmem:[%s1132] ss:$2 sm:$0xff]
        %s1134 = scalar_lea.vmem [#allocation2], 296
        %v1135 = vld [vmem:[%s1134] ss:$2 sm:$0x3f]
        %s1136 = scalar_lea.vmem [#allocation2], 281
        %v1137 = vld [vmem:[%s1136] ss:$2 sm:$0xff]
        %s1138 = scalar_lea.vmem [#allocation2], 297
        %v1139 = vld [vmem:[%s1138] ss:$2 sm:$0x3f]
        %v1140 = vmax.f32 %v1133, %v1137
        %v1141 = vmax.f32 %v1135, %v1139
        %s1142 = scalar_lea.vmem [#allocation2], 308
        %v1143 = vld [vmem:[%s1142] ss:$2 sm:$0xff]
        %s1144 = scalar_lea.vmem [#allocation2], 324
        %v1145 = vld [vmem:[%s1144] ss:$2 sm:$0x3f]
        %s1146 = scalar_lea.vmem [#allocation2], 309
        %v1147 = vld [vmem:[%s1146] ss:$2 sm:$0xff]
        %s1148 = scalar_lea.vmem [#allocation2], 325
        %v1149 = vld [vmem:[%s1148] ss:$2 sm:$0x3f]
        %v1150 = vmax.f32 %v1143, %v1147
        %v1151 = vmax.f32 %v1145, %v1149
        %v1152 = vmax.f32 %v1140, %v1150
        %v1153 = vmax.f32 %v1141, %v1151
        %1154 = vst.msk [vmem:[#allocation3 + $0x46] sm:$0xff] %vm913, %v1152
        %1155 = vst.msk [vmem:[#allocation3 + $0x4e] sm:$0x3f] %vm1034, %v1153
        %s1156 = scalar_lea.vmem [#allocation2], 336
        %v1157 = vld [vmem:[%s1156] ss:$2 sm:$0xff]
        %s1158 = scalar_lea.vmem [#allocation2], 352
        %v1159 = vld [vmem:[%s1158] ss:$2 sm:$0x3f]
        %s1160 = scalar_lea.vmem [#allocation2], 337
        %v1161 = vld [vmem:[%s1160] ss:$2 sm:$0xff]
        %s1162 = scalar_lea.vmem [#allocation2], 353
        %v1163 = vld [vmem:[%s1162] ss:$2 sm:$0x3f]
        %v1164 = vmax.f32 %v1157, %v1161
        %v1165 = vmax.f32 %v1159, %v1163
        %s1166 = scalar_lea.vmem [#allocation2], 364
        %v1167 = vld [vmem:[%s1166] ss:$2 sm:$0xff]
        %s1168 = scalar_lea.vmem [#allocation2], 380
        %v1169 = vld [vmem:[%s1168] ss:$2 sm:$0x3f]
        %s1170 = scalar_lea.vmem [#allocation2], 365
        %v1171 = vld [vmem:[%s1170] ss:$2 sm:$0xff]
        %s1172 = scalar_lea.vmem [#allocation2], 381
        %v1173 = vld [vmem:[%s1172] ss:$2 sm:$0x3f]
        %v1174 = vmax.f32 %v1167, %v1171
        %v1175 = vmax.f32 %v1169, %v1173
        %v1176 = vmax.f32 %v1164, %v1174
        %v1177 = vmax.f32 %v1165, %v1175
        %1178 = vst.msk [vmem:[#allocation3 + $0x54] sm:$0xff] %vm913, %v1176
        %1179 = vst.msk [vmem:[#allocation3 + $0x5c] sm:$0x3f] %vm1034, %v1177
        %s1180 = scalar_lea.vmem [#allocation2], 392
        %v1181 = vld [vmem:[%s1180] ss:$2 sm:$0xff]
        %s1182 = scalar_lea.vmem [#allocation2], 408
        %v1183 = vld [vmem:[%s1182] ss:$2 sm:$0x3f]
        %s1184 = scalar_lea.vmem [#allocation2], 393
        %v1185 = vld [vmem:[%s1184] ss:$2 sm:$0xff]
        %s1186 = scalar_lea.vmem [#allocation2], 409
        %v1187 = vld [vmem:[%s1186] ss:$2 sm:$0x3f]
        %v1188 = vmax.f32 %v1181, %v1185
        %v1189 = vmax.f32 %v1183, %v1187
        %s1190 = scalar_lea.vmem [#allocation2], 420
        %v1191 = vld [vmem:[%s1190] ss:$2 sm:$0xff]
        %s1192 = scalar_lea.vmem [#allocation2], 436
        %v1193 = vld [vmem:[%s1192] ss:$2 sm:$0x3f]
        %s1194 = scalar_lea.vmem [#allocation2], 421
        %v1195 = vld [vmem:[%s1194] ss:$2 sm:$0xff]
        %s1196 = scalar_lea.vmem [#allocation2], 437
        %v1197 = vld [vmem:[%s1196] ss:$2 sm:$0x3f]
        %v1198 = vmax.f32 %v1191, %v1195
        %v1199 = vmax.f32 %v1193, %v1197
        %v1200 = vmax.f32 %v1188, %v1198
        %v1201 = vmax.f32 %v1189, %v1199
        %1202 = vst.msk [vmem:[#allocation3 + $0x62] sm:$0xff] %vm913, %v1200
        %1203 = vst.msk [vmem:[#allocation3 + $0x6a] sm:$0x3f] %vm1034, %v1201
        %s1204 = scalar_lea.vmem [#allocation2], 448
        %v1205 = vld [vmem:[%s1204] ss:$2 sm:$0xff]
        %s1206 = scalar_lea.vmem [#allocation2], 464
        %v1207 = vld [vmem:[%s1206] ss:$2 sm:$0x3f]
        %s1208 = scalar_lea.vmem [#allocation2], 449
        %v1209 = vld [vmem:[%s1208] ss:$2 sm:$0xff]
        %s1210 = scalar_lea.vmem [#allocation2], 465
        %v1211 = vld [vmem:[%s1210] ss:$2 sm:$0x3f]
        %v1212 = vmax.f32 %v1205, %v1209
        %v1213 = vmax.f32 %v1207, %v1211
        %s1214 = scalar_lea.vmem [#allocation2], 476
        %v1215 = vld [vmem:[%s1214] ss:$2 sm:$0xff]
        %s1216 = scalar_lea.vmem [#allocation2], 492
        %v1217 = vld [vmem:[%s1216] ss:$2 sm:$0x3f]
        %s1218 = scalar_lea.vmem [#allocation2], 477
        %v1219 = vld [vmem:[%s1218] ss:$2 sm:$0xff]
        %s1220 = scalar_lea.vmem [#allocation2], 493
        %v1221 = vld [vmem:[%s1220] ss:$2 sm:$0x3f]
        %v1222 = vmax.f32 %v1215, %v1219
        %v1223 = vmax.f32 %v1217, %v1221
        %v1224 = vmax.f32 %v1212, %v1222
        %v1225 = vmax.f32 %v1213, %v1223
        %1226 = vst.msk [vmem:[#allocation3 + $0x70] sm:$0xff] %vm913, %v1224
        %1227 = vst.msk [vmem:[#allocation3 + $0x78] sm:$0x3f] %vm1034, %v1225
        %s1228 = scalar_lea.vmem [#allocation2], 504
        %v1229 = vld [vmem:[%s1228] ss:$2 sm:$0xff]
        %s1230 = scalar_lea.vmem [#allocation2], 520
        %v1231 = vld [vmem:[%s1230] ss:$2 sm:$0x3f]
        %s1232 = scalar_lea.vmem [#allocation2], 505
        %v1233 = vld [vmem:[%s1232] ss:$2 sm:$0xff]
        %s1234 = scalar_lea.vmem [#allocation2], 521
        %v1235 = vld [vmem:[%s1234] ss:$2 sm:$0x3f]
        %v1236 = vmax.f32 %v1229, %v1233
        %v1237 = vmax.f32 %v1231, %v1235
        %s1238 = scalar_lea.vmem [#allocation2], 532
        %v1239 = vld [vmem:[%s1238] ss:$2 sm:$0xff]
        %s1240 = scalar_lea.vmem [#allocation2], 548
        %v1241 = vld [vmem:[%s1240] ss:$2 sm:$0x3f]
        %s1242 = scalar_lea.vmem [#allocation2], 533
        %v1243 = vld [vmem:[%s1242] ss:$2 sm:$0xff]
        %s1244 = scalar_lea.vmem [#allocation2], 549
        %v1245 = vld [vmem:[%s1244] ss:$2 sm:$0x3f]
        %v1246 = vmax.f32 %v1239, %v1243
        %v1247 = vmax.f32 %v1241, %v1245
        %v1248 = vmax.f32 %v1236, %v1246
        %v1249 = vmax.f32 %v1237, %v1247
        %1250 = vst.msk [vmem:[#allocation3 + $0x7e] sm:$0xff] %vm913, %v1248
        %1251 = vst.msk [vmem:[#allocation3 + $0x86] sm:$0x3f] %vm1034, %v1249
        %s1252 = scalar_lea.vmem [#allocation2], 560
        %v1253 = vld [vmem:[%s1252] ss:$2 sm:$0xff]
        %s1254 = scalar_lea.vmem [#allocation2], 576
        %v1255 = vld [vmem:[%s1254] ss:$2 sm:$0x3f]
        %s1256 = scalar_lea.vmem [#allocation2], 561
        %v1257 = vld [vmem:[%s1256] ss:$2 sm:$0xff]
        %s1258 = scalar_lea.vmem [#allocation2], 577
        %v1259 = vld [vmem:[%s1258] ss:$2 sm:$0x3f]
        %v1260 = vmax.f32 %v1253, %v1257
        %v1261 = vmax.f32 %v1255, %v1259
        %s1262 = scalar_lea.vmem [#allocation2], 588
        %v1263 = vld [vmem:[%s1262] ss:$2 sm:$0xff]
        %s1264 = scalar_lea.vmem [#allocation2], 604
        %v1265 = vld [vmem:[%s1264] ss:$2 sm:$0x3f]
        %s1266 = scalar_lea.vmem [#allocation2], 589
        %v1267 = vld [vmem:[%s1266] ss:$2 sm:$0xff]
        %s1268 = scalar_lea.vmem [#allocation2], 605
        %v1269 = vld [vmem:[%s1268] ss:$2 sm:$0x3f]
        %v1270 = vmax.f32 %v1263, %v1267
        %v1271 = vmax.f32 %v1265, %v1269
        %v1272 = vmax.f32 %v1260, %v1270
        %v1273 = vmax.f32 %v1261, %v1271
        %1274 = vst.msk [vmem:[#allocation3 + $0x8c] sm:$0xff] %vm913, %v1272
        %1275 = vst.msk [vmem:[#allocation3 + $0x94] sm:$0x3f] %vm1034, %v1273
        %s1276 = scalar_lea.vmem [#allocation2], 616
        %v1277 = vld [vmem:[%s1276] ss:$2 sm:$0xff]
        %s1278 = scalar_lea.vmem [#allocation2], 632
        %v1279 = vld [vmem:[%s1278] ss:$2 sm:$0x3f]
        %s1280 = scalar_lea.vmem [#allocation2], 617
        %v1281 = vld [vmem:[%s1280] ss:$2 sm:$0xff]
        %s1282 = scalar_lea.vmem [#allocation2], 633
        %v1283 = vld [vmem:[%s1282] ss:$2 sm:$0x3f]
        %v1284 = vmax.f32 %v1277, %v1281
        %v1285 = vmax.f32 %v1279, %v1283
        %s1286 = scalar_lea.vmem [#allocation2], 644
        %v1287 = vld [vmem:[%s1286] ss:$2 sm:$0xff]
        %s1288 = scalar_lea.vmem [#allocation2], 660
        %v1289 = vld [vmem:[%s1288] ss:$2 sm:$0x3f]
        %s1290 = scalar_lea.vmem [#allocation2], 645
        %v1291 = vld [vmem:[%s1290] ss:$2 sm:$0xff]
        %s1292 = scalar_lea.vmem [#allocation2], 661
        %v1293 = vld [vmem:[%s1292] ss:$2 sm:$0x3f]
        %v1294 = vmax.f32 %v1287, %v1291
        %v1295 = vmax.f32 %v1289, %v1293
        %v1296 = vmax.f32 %v1284, %v1294
        %v1297 = vmax.f32 %v1285, %v1295
        %1298 = vst.msk [vmem:[#allocation3 + $0x9a] sm:$0xff] %vm913, %v1296
        %1299 = vst.msk [vmem:[#allocation3 + $0xa2] sm:$0x3f] %vm1034, %v1297
        %s1300 = scalar_lea.vmem [#allocation2], 672
        %v1301 = vld [vmem:[%s1300] ss:$2 sm:$0xff]
        %s1302 = scalar_lea.vmem [#allocation2], 688
        %v1303 = vld [vmem:[%s1302] ss:$2 sm:$0x3f]
        %s1304 = scalar_lea.vmem [#allocation2], 673
        %v1305 = vld [vmem:[%s1304] ss:$2 sm:$0xff]
        %s1306 = scalar_lea.vmem [#allocation2], 689
        %v1307 = vld [vmem:[%s1306] ss:$2 sm:$0x3f]
        %v1308 = vmax.f32 %v1301, %v1305
        %v1309 = vmax.f32 %v1303, %v1307
        %s1310 = scalar_lea.vmem [#allocation2], 700
        %v1311 = vld [vmem:[%s1310] ss:$2 sm:$0xff]
        %s1312 = scalar_lea.vmem [#allocation2], 716
        %v1313 = vld [vmem:[%s1312] ss:$2 sm:$0x3f]
        %s1314 = scalar_lea.vmem [#allocation2], 701
        %v1315 = vld [vmem:[%s1314] ss:$2 sm:$0xff]
        %s1316 = scalar_lea.vmem [#allocation2], 717
        %v1317 = vld [vmem:[%s1316] ss:$2 sm:$0x3f]
        %v1318 = vmax.f32 %v1311, %v1315
        %v1319 = vmax.f32 %v1313, %v1317
        %v1320 = vmax.f32 %v1308, %v1318
        %v1321 = vmax.f32 %v1309, %v1319
        %1322 = vst.msk [vmem:[#allocation3 + $0xa8] sm:$0xff] %vm913, %v1320
        %1323 = vst.msk [vmem:[#allocation3 + $0xb0] sm:$0x3f] %vm1034, %v1321
        %s1324 = scalar_lea.vmem [#allocation2], 728
        %v1325 = vld [vmem:[%s1324] ss:$2 sm:$0xff]
        %s1326 = scalar_lea.vmem [#allocation2], 744
        %v1327 = vld [vmem:[%s1326] ss:$2 sm:$0x3f]
        %s1328 = scalar_lea.vmem [#allocation2], 729
        %v1329 = vld [vmem:[%s1328] ss:$2 sm:$0xff]
        %s1330 = scalar_lea.vmem [#allocation2], 745
        %v1331 = vld [vmem:[%s1330] ss:$2 sm:$0x3f]
        %v1332 = vmax.f32 %v1325, %v1329
        %v1333 = vmax.f32 %v1327, %v1331
        %s1334 = scalar_lea.vmem [#allocation2], 756
        %v1335 = vld [vmem:[%s1334] ss:$2 sm:$0xff]
        %s1336 = scalar_lea.vmem [#allocation2], 772
        %v1337 = vld [vmem:[%s1336] ss:$2 sm:$0x3f]
        %s1338 = scalar_lea.vmem [#allocation2], 757
        %v1339 = vld [vmem:[%s1338] ss:$2 sm:$0xff]
        %s1340 = scalar_lea.vmem [#allocation2], 773
        %v1341 = vld [vmem:[%s1340] ss:$2 sm:$0x3f]
        %v1342 = vmax.f32 %v1335, %v1339
        %v1343 = vmax.f32 %v1337, %v1341
        %v1344 = vmax.f32 %v1332, %v1342
        %v1345 = vmax.f32 %v1333, %v1343
        %1346 = vst.msk [vmem:[#allocation3 + $0xb6] sm:$0xff] %vm913, %v1344
        %1347 = vst.msk [vmem:[#allocation3 + $0xbe] sm:$0x3f] %vm1034, %v1345
        %vm1348 = vcmask 130048
        %1349 = vst.msk [vmem:[#allocation4] sm:$0xff] %vm1348, 0.0
        %1350 = vst.msk [vmem:[#allocation4 + $0x8] sm:$0xff] %vm1348, 0.0
        %1351 = vst.msk [vmem:[#allocation4 + $0x10] sm:$0xff] %vm1348, 0.0
        %1352 = vst.msk [vmem:[#allocation4 + $0x18] sm:$0xff] %vm1348, 0.0
        %1353 = vst.msk [vmem:[#allocation4 + $0x20] sm:$0xff] %vm1348, 0.0
        %1354 = vst.msk [vmem:[#allocation4 + $0x28] sm:$0xff] %vm1348, 0.0
        %1355 = vst.msk [vmem:[#allocation4 + $0x30] sm:$0xff] %vm1348, 0.0
        %1356 = vst.msk [vmem:[#allocation4 + $0x38] sm:$0xff] %vm1348, 0.0
        %1357 = vst.msk [vmem:[#allocation4 + $0x40] sm:$0xff] %vm1348, 0.0
        %1358 = vst.msk [vmem:[#allocation4 + $0x48] sm:$0xff] %vm1348, 0.0
        %1359 = vst.msk [vmem:[#allocation4 + $0x50] sm:$0xff] %vm1348, 0.0
        %1360 = vst.msk [vmem:[#allocation4 + $0x58] sm:$0xff] %vm1348, 0.0
        %1361 = vst.msk [vmem:[#allocation4 + $0x60] sm:$0xff] %vm1348, 0.0
        %1362 = vst.msk [vmem:[#allocation4 + $0x68] sm:$0xff] %vm1348, 0.0
        %1363 = vst.msk [vmem:[#allocation4 + $0x70] sm:$0xff] %vm1348, 0.0
        %1364 = vst.msk [vmem:[#allocation4 + $0x78] sm:$0xff] %vm1348, 0.0
        %1365 = vst.msk [vmem:[#allocation4 + $0x80] sm:$0xff] %vm1348, 0.0
        %v1366 = vld [vmem:[#allocation4] sm:$0xff]
        %v1367 = vld [vmem:[#allocation4 + $0x8] sm:$0xff]
        %v1368 = vld [vmem:[#allocation4 + $0x10] sm:$0xff]
        %v1369 = vld [vmem:[#allocation4 + $0x18] sm:$0xff]
        %v1370 = vld [vmem:[#allocation4 + $0x20] sm:$0xff]
        %v1371 = vld [vmem:[#allocation4 + $0x28] sm:$0xff]
        %v1372 = vld [vmem:[#allocation4 + $0x30] sm:$0xff]
        %v1373 = vld [vmem:[#allocation4 + $0x38] sm:$0xff]
        %v1374 = vld [vmem:[#allocation4 + $0x40] sm:$0xff]
        %v1375 = vld [vmem:[#allocation4 + $0x48] sm:$0xff]
        %v1376 = vld [vmem:[#allocation4 + $0x50] sm:$0xff]
        %v1377 = vld [vmem:[#allocation4 + $0x58] sm:$0xff]
        %v1378 = vld [vmem:[#allocation4 + $0x60] sm:$0xff]
        %v1379 = vld [vmem:[#allocation4 + $0x68] sm:$0xff]
        %v1380 = vld [vmem:[#allocation4 + $0x70] sm:$0xff]
        %v1381 = vld [vmem:[#allocation4 + $0x78] sm:$0xff]
        %v1382 = vld [vmem:[#allocation4 + $0x80] sm:$0xff]
        %v1383 = vld [vmem:[#allocation3] sm:$0xff]
        %v1384 = vld [vmem:[#allocation3 + $0x8] sm:$0xff]
        %v1385 = vld [vmem:[#allocation3 + $0x10] sm:$0xff]
        %v1386 = vld [vmem:[#allocation3 + $0x18] sm:$0xff]
        %v1387 = vld [vmem:[#allocation3 + $0x20] sm:$0xff]
        %v1388 = vld [vmem:[#allocation3 + $0x28] sm:$0xff]
        %v1389 = vld [vmem:[#allocation3 + $0x30] sm:$0xff]
        %v1390 = vld [vmem:[#allocation3 + $0x38] sm:$0xff]
        %v1391 = vld [vmem:[#allocation3 + $0x40] sm:$0xff]
        %v1392 = vld [vmem:[#allocation3 + $0x48] sm:$0xff]
        %v1393 = vld [vmem:[#allocation3 + $0x50] sm:$0xff]
        %v1394 = vld [vmem:[#allocation3 + $0x58] sm:$0xff]
        %v1395 = vld [vmem:[#allocation3 + $0x60] sm:$0xff]
        %v1396 = vld [vmem:[#allocation3 + $0x68] sm:$0xff]
        %v1397 = vld [vmem:[#allocation3 + $0x70] sm:$0xff]
        %v1398 = vld [vmem:[#allocation3 + $0x78] sm:$0xff]
        %v1399 = vld [vmem:[#allocation3 + $0x80] sm:$0xff]
        %v1400 = vld [vmem:[%s3] sm:$0xff]
        %v1402 = vsel %vm913, %v1383, 0
        %v1405 = vsel %vm913, %v1384, 0
        %v1408 = vsel %vm913, %v1385, 0
        %v1411 = vsel %vm913, %v1386, 0
        %v1414 = vsel %vm913, %v1387, 0
        %v1417 = vsel %vm913, %v1388, 0
        %v1420 = vsel %vm913, %v1389, 0
        %v1423 = vsel %vm913, %v1390, 0
        %v1426 = vsel %vm913, %v1391, 0
        %v1429 = vsel %vm913, %v1392, 0
        %v1432 = vsel %vm913, %v1393, 0
        %v1435 = vsel %vm913, %v1394, 0
        %v1438 = vsel %vm913, %v1395, 0
        %v1441 = vsel %vm913, %v1396, 0
        %v1444 = vsel %vm913, %v1397, 0
        %v1447 = vsel %vm913, %v1398, 0
        %v1450 = vsel %vm913, %v1399, 0
        %1452 = vmatpush.msra.mxu0 0.0
        %1453 = vmatpush.msra.mxu0 0.0
        %1454 = vmatpush.msra.mxu0 0.0
        %1455 = vmatpush.msra.mxu0 0.0
        %1456 = vmatpush.msra.mxu0 0.0
        %1457 = vmatpush.msra.mxu0 0.0
        %1458 = vmatpush.msra.mxu0 0.0
        %1459 = vmatpush.msra.mxu0 0.0
        %1460 = vmatpush.msra.mxu0 0.0
        %1461 = vmatpush.msra.mxu0 0.0
        %1462 = vmatpush.msra.mxu0 0.0
        %1463 = vmatpush.msra.mxu0 0.0
        %1464 = vmatpush.msra.mxu0 0.0
        %1465 = vmatpush.msra.mxu0 0.0
        %1466 = vmatpush.msra.mxu0 0.0
        %1467 = vmatpush.msra.mxu0 %v1400
        %1468 = vmatmul.f32.gmra.mxu0 %v1402
        %v1469 = vpop.f32.mrf.mxu0
        %v1470 = vadd.f32 0.0, %v1469
        %1471 = vmatmul.f32.gmra.mxu0 %v1405
        %v1472 = vpop.f32.mrf.mxu0
        %v1473 = vadd.f32 0.0, %v1472
        %1474 = vmatmul.f32.gmra.mxu0 %v1408
        %v1475 = vpop.f32.mrf.mxu0
        %v1476 = vadd.f32 0.0, %v1475
        %1477 = vmatmul.f32.gmra.mxu0 %v1411
        %v1478 = vpop.f32.mrf.mxu0
        %v1479 = vadd.f32 0.0, %v1478
        %1480 = vmatmul.f32.gmra.mxu0 %v1414
        %v1481 = vpop.f32.mrf.mxu0
        %v1482 = vadd.f32 0.0, %v1481
        %1483 = vmatmul.f32.gmra.mxu0 %v1417
        %v1484 = vpop.f32.mrf.mxu0
        %v1485 = vadd.f32 0.0, %v1484
        %1486 = vmatmul.f32.gmra.mxu0 %v1420
        %v1487 = vpop.f32.mrf.mxu0
        %v1488 = vadd.f32 0.0, %v1487
        %1489 = vmatmul.f32.gmra.mxu0 %v1423
        %v1490 = vpop.f32.mrf.mxu0
        %v1491 = vadd.f32 0.0, %v1490
        %1492 = vmatmul.f32.gmra.mxu0 %v1426
        %v1493 = vpop.f32.mrf.mxu0
        %v1494 = vadd.f32 0.0, %v1493
        %1495 = vmatmul.f32.gmra.mxu0 %v1429
        %v1496 = vpop.f32.mrf.mxu0
        %v1497 = vadd.f32 0.0, %v1496
        %1498 = vmatmul.f32.gmra.mxu0 %v1432
        %v1499 = vpop.f32.mrf.mxu0
        %v1500 = vadd.f32 0.0, %v1499
        %1501 = vmatmul.f32.gmra.mxu0 %v1435
        %v1502 = vpop.f32.mrf.mxu0
        %v1503 = vadd.f32 0.0, %v1502
        %1504 = vmatmul.f32.gmra.mxu0 %v1438
        %v1505 = vpop.f32.mrf.mxu0
        %v1506 = vadd.f32 0.0, %v1505
        %1507 = vmatmul.f32.gmra.mxu0 %v1441
        %v1508 = vpop.f32.mrf.mxu0
        %v1509 = vadd.f32 0.0, %v1508
        %1510 = vmatmul.f32.gmra.mxu0 %v1444
        %v1511 = vpop.f32.mrf.mxu0
        %v1512 = vadd.f32 0.0, %v1511
        %1513 = vmatmul.f32.gmra.mxu0 %v1447
        %v1514 = vpop.f32.mrf.mxu0
        %v1515 = vadd.f32 0.0, %v1514
        %1516 = vmatmul.f32.gmra.mxu0 %v1450
        %v1517 = vpop.f32.mrf.mxu0
        %v1518 = vadd.f32 0.0, %v1517
        %1519 = vdwg.mxu0
        %v1520 = vadd.f32 %v1366, %v1470
        %v1521 = vadd.f32 %v1367, %v1473
        %v1522 = vadd.f32 %v1368, %v1476
        %v1523 = vadd.f32 %v1369, %v1479
        %v1524 = vadd.f32 %v1370, %v1482
        %v1525 = vadd.f32 %v1371, %v1485
        %v1526 = vadd.f32 %v1372, %v1488
        %v1527 = vadd.f32 %v1373, %v1491
        %v1528 = vadd.f32 %v1374, %v1494
        %v1529 = vadd.f32 %v1375, %v1497
        %v1530 = vadd.f32 %v1376, %v1500
        %v1531 = vadd.f32 %v1377, %v1503
        %v1532 = vadd.f32 %v1378, %v1506
        %v1533 = vadd.f32 %v1379, %v1509
        %v1534 = vadd.f32 %v1380, %v1512
        %v1535 = vadd.f32 %v1381, %v1515
        %v1536 = vadd.f32 %v1382, %v1518
        %1537 = vst.msk [vmem:[#allocation4] sm:$0xff] %vm1348, %v1520
        %1538 = vst.msk [vmem:[#allocation4 + $0x8] sm:$0xff] %vm1348, %v1521
        %1539 = vst.msk [vmem:[#allocation4 + $0x10] sm:$0xff] %vm1348, %v1522
        %1540 = vst.msk [vmem:[#allocation4 + $0x18] sm:$0xff] %vm1348, %v1523
        %1541 = vst.msk [vmem:[#allocation4 + $0x20] sm:$0xff] %vm1348, %v1524
        %1542 = vst.msk [vmem:[#allocation4 + $0x28] sm:$0xff] %vm1348, %v1525
        %1543 = vst.msk [vmem:[#allocation4 + $0x30] sm:$0xff] %vm1348, %v1526
        %1544 = vst.msk [vmem:[#allocation4 + $0x38] sm:$0xff] %vm1348, %v1527
        %1545 = vst.msk [vmem:[#allocation4 + $0x40] sm:$0xff] %vm1348, %v1528
        %1546 = vst.msk [vmem:[#allocation4 + $0x48] sm:$0xff] %vm1348, %v1529
        %1547 = vst.msk [vmem:[#allocation4 + $0x50] sm:$0xff] %vm1348, %v1530
        %1548 = vst.msk [vmem:[#allocation4 + $0x58] sm:$0xff] %vm1348, %v1531
        %1549 = vst.msk [vmem:[#allocation4 + $0x60] sm:$0xff] %vm1348, %v1532
        %1550 = vst.msk [vmem:[#allocation4 + $0x68] sm:$0xff] %vm1348, %v1533
        %1551 = vst.msk [vmem:[#allocation4 + $0x70] sm:$0xff] %vm1348, %v1534
        %1552 = vst.msk [vmem:[#allocation4 + $0x78] sm:$0xff] %vm1348, %v1535
        %1553 = vst.msk [vmem:[#allocation4 + $0x80] sm:$0xff] %vm1348, %v1536
        %v1554 = vld [vmem:[#allocation4] sm:$0xff]
        %v1555 = vld [vmem:[#allocation4 + $0x8] sm:$0xff]
        %v1556 = vld [vmem:[#allocation4 + $0x10] sm:$0xff]
        %v1557 = vld [vmem:[#allocation4 + $0x18] sm:$0xff]
        %v1558 = vld [vmem:[#allocation4 + $0x20] sm:$0xff]
        %v1559 = vld [vmem:[#allocation4 + $0x28] sm:$0xff]
        %v1560 = vld [vmem:[#allocation4 + $0x30] sm:$0xff]
        %v1561 = vld [vmem:[#allocation4 + $0x38] sm:$0xff]
        %v1562 = vld [vmem:[#allocation4 + $0x40] sm:$0xff]
        %v1563 = vld [vmem:[#allocation4 + $0x48] sm:$0xff]
        %v1564 = vld [vmem:[#allocation4 + $0x50] sm:$0xff]
        %v1565 = vld [vmem:[#allocation4 + $0x58] sm:$0xff]
        %v1566 = vld [vmem:[#allocation4 + $0x60] sm:$0xff]
        %v1567 = vld [vmem:[#allocation4 + $0x68] sm:$0xff]
        %v1568 = vld [vmem:[#allocation4 + $0x70] sm:$0xff]
        %v1569 = vld [vmem:[#allocation4 + $0x78] sm:$0xff]
        %v1570 = vld [vmem:[#allocation4 + $0x80] sm:$0xff]
        %v1571 = vld [vmem:[#allocation3 + $0x1] sm:$0xff]
        %v1572 = vld [vmem:[#allocation3 + $0x9] sm:$0xff]
        %v1573 = vld [vmem:[#allocation3 + $0x11] sm:$0xff]
        %v1574 = vld [vmem:[#allocation3 + $0x19] sm:$0xff]
        %v1575 = vld [vmem:[#allocation3 + $0x21] sm:$0xff]
        %v1576 = vld [vmem:[#allocation3 + $0x29] sm:$0xff]
        %v1577 = vld [vmem:[#allocation3 + $0x31] sm:$0xff]
        %v1578 = vld [vmem:[#allocation3 + $0x39] sm:$0xff]
        %v1579 = vld [vmem:[#allocation3 + $0x41] sm:$0xff]
        %v1580 = vld [vmem:[#allocation3 + $0x49] sm:$0xff]
        %v1581 = vld [vmem:[#allocation3 + $0x51] sm:$0xff]
        %v1582 = vld [vmem:[#allocation3 + $0x59] sm:$0xff]
        %v1583 = vld [vmem:[#allocation3 + $0x61] sm:$0xff]
        %v1584 = vld [vmem:[#allocation3 + $0x69] sm:$0xff]
        %v1585 = vld [vmem:[#allocation3 + $0x71] sm:$0xff]
        %v1586 = vld [vmem:[#allocation3 + $0x79] sm:$0xff]
        %v1587 = vld [vmem:[#allocation3 + $0x81] sm:$0xff]
        %s1588 = scalar_lea.vmem %s3, 8
        %v1589 = vld [vmem:[%s1588] sm:$0xff]
        %v1591 = vsel %vm913, %v1571, 0
        %v1594 = vsel %vm913, %v1572, 0
        %v1597 = vsel %vm913, %v1573, 0
        %v1600 = vsel %vm913, %v1574, 0
        %v1603 = vsel %vm913, %v1575, 0
        %v1606 = vsel %vm913, %v1576, 0
        %v1609 = vsel %vm913, %v1577, 0
        %v1612 = vsel %vm913, %v1578, 0
        %v1615 = vsel %vm913, %v1579, 0
        %v1618 = vsel %vm913, %v1580, 0
        %v1621 = vsel %vm913, %v1581, 0
        %v1624 = vsel %vm913, %v1582, 0
        %v1627 = vsel %vm913, %v1583, 0
        %v1630 = vsel %vm913, %v1584, 0
        %v1633 = vsel %vm913, %v1585, 0
        %v1636 = vsel %vm913, %v1586, 0
        %v1639 = vsel %vm913, %v1587, 0
        %1641 = vmatpush.msra.mxu0 0.0
        %1642 = vmatpush.msra.mxu0 0.0
        %1643 = vmatpush.msra.mxu0 0.0
        %1644 = vmatpush.msra.mxu0 0.0
        %1645 = vmatpush.msra.mxu0 0.0
        %1646 = vmatpush.msra.mxu0 0.0
        %1647 = vmatpush.msra.mxu0 0.0
        %1648 = vmatpush.msra.mxu0 0.0
        %1649 = vmatpush.msra.mxu0 0.0
        %1650 = vmatpush.msra.mxu0 0.0
        %1651 = vmatpush.msra.mxu0 0.0
        %1652 = vmatpush.msra.mxu0 0.0
        %1653 = vmatpush.msra.mxu0 0.0
        %1654 = vmatpush.msra.mxu0 0.0
        %1655 = vmatpush.msra.mxu0 0.0
        %1656 = vmatpush.msra.mxu0 %v1589
        %1657 = vmatmul.f32.gmra.mxu0 %v1591
        %v1658 = vpop.f32.mrf.mxu0
        %v1659 = vadd.f32 0.0, %v1658
        %1660 = vmatmul.f32.gmra.mxu0 %v1594
        %v1661 = vpop.f32.mrf.mxu0
        %v1662 = vadd.f32 0.0, %v1661
        %1663 = vmatmul.f32.gmra.mxu0 %v1597
        %v1664 = vpop.f32.mrf.mxu0
        %v1665 = vadd.f32 0.0, %v1664
        %1666 = vmatmul.f32.gmra.mxu0 %v1600
        %v1667 = vpop.f32.mrf.mxu0
        %v1668 = vadd.f32 0.0, %v1667
        %1669 = vmatmul.f32.gmra.mxu0 %v1603
        %v1670 = vpop.f32.mrf.mxu0
        %v1671 = vadd.f32 0.0, %v1670
        %1672 = vmatmul.f32.gmra.mxu0 %v1606
        %v1673 = vpop.f32.mrf.mxu0
        %v1674 = vadd.f32 0.0, %v1673
        %1675 = vmatmul.f32.gmra.mxu0 %v1609
        %v1676 = vpop.f32.mrf.mxu0
        %v1677 = vadd.f32 0.0, %v1676
        %1678 = vmatmul.f32.gmra.mxu0 %v1612
        %v1679 = vpop.f32.mrf.mxu0
        %v1680 = vadd.f32 0.0, %v1679
        %1681 = vmatmul.f32.gmra.mxu0 %v1615
        %v1682 = vpop.f32.mrf.mxu0
        %v1683 = vadd.f32 0.0, %v1682
        %1684 = vmatmul.f32.gmra.mxu0 %v1618
        %v1685 = vpop.f32.mrf.mxu0
        %v1686 = vadd.f32 0.0, %v1685
        %1687 = vmatmul.f32.gmra.mxu0 %v1621
        %v1688 = vpop.f32.mrf.mxu0
        %v1689 = vadd.f32 0.0, %v1688
        %1690 = vmatmul.f32.gmra.mxu0 %v1624
        %v1691 = vpop.f32.mrf.mxu0
        %v1692 = vadd.f32 0.0, %v1691
        %1693 = vmatmul.f32.gmra.mxu0 %v1627
        %v1694 = vpop.f32.mrf.mxu0
        %v1695 = vadd.f32 0.0, %v1694
        %1696 = vmatmul.f32.gmra.mxu0 %v1630
        %v1697 = vpop.f32.mrf.mxu0
        %v1698 = vadd.f32 0.0, %v1697
        %1699 = vmatmul.f32.gmra.mxu0 %v1633
        %v1700 = vpop.f32.mrf.mxu0
        %v1701 = vadd.f32 0.0, %v1700
        %1702 = vmatmul.f32.gmra.mxu0 %v1636
        %v1703 = vpop.f32.mrf.mxu0
        %v1704 = vadd.f32 0.0, %v1703
        %1705 = vmatmul.f32.gmra.mxu0 %v1639
        %v1706 = vpop.f32.mrf.mxu0
        %v1707 = vadd.f32 0.0, %v1706
        %1708 = vdwg.mxu0
        %v1709 = vadd.f32 %v1554, %v1659
        %v1710 = vadd.f32 %v1555, %v1662
        %v1711 = vadd.f32 %v1556, %v1665
        %v1712 = vadd.f32 %v1557, %v1668
        %v1713 = vadd.f32 %v1558, %v1671
        %v1714 = vadd.f32 %v1559, %v1674
        %v1715 = vadd.f32 %v1560, %v1677
        %v1716 = vadd.f32 %v1561, %v1680
        %v1717 = vadd.f32 %v1562, %v1683
        %v1718 = vadd.f32 %v1563, %v1686
        %v1719 = vadd.f32 %v1564, %v1689
        %v1720 = vadd.f32 %v1565, %v1692
        %v1721 = vadd.f32 %v1566, %v1695
        %v1722 = vadd.f32 %v1567, %v1698
        %v1723 = vadd.f32 %v1568, %v1701
        %v1724 = vadd.f32 %v1569, %v1704
        %v1725 = vadd.f32 %v1570, %v1707
        %1726 = vst.msk [vmem:[#allocation4] sm:$0xff] %vm1348, %v1709
        %1727 = vst.msk [vmem:[#allocation4 + $0x8] sm:$0xff] %vm1348, %v1710
        %1728 = vst.msk [vmem:[#allocation4 + $0x10] sm:$0xff] %vm1348, %v1711
        %1729 = vst.msk [vmem:[#allocation4 + $0x18] sm:$0xff] %vm1348, %v1712
        %1730 = vst.msk [vmem:[#allocation4 + $0x20] sm:$0xff] %vm1348, %v1713
        %1731 = vst.msk [vmem:[#allocation4 + $0x28] sm:$0xff] %vm1348, %v1714
        %1732 = vst.msk [vmem:[#allocation4 + $0x30] sm:$0xff] %vm1348, %v1715
        %1733 = vst.msk [vmem:[#allocation4 + $0x38] sm:$0xff] %vm1348, %v1716
        %1734 = vst.msk [vmem:[#allocation4 + $0x40] sm:$0xff] %vm1348, %v1717
        %1735 = vst.msk [vmem:[#allocation4 + $0x48] sm:$0xff] %vm1348, %v1718
        %1736 = vst.msk [vmem:[#allocation4 + $0x50] sm:$0xff] %vm1348, %v1719
        %1737 = vst.msk [vmem:[#allocation4 + $0x58] sm:$0xff] %vm1348, %v1720
        %1738 = vst.msk [vmem:[#allocation4 + $0x60] sm:$0xff] %vm1348, %v1721
        %1739 = vst.msk [vmem:[#allocation4 + $0x68] sm:$0xff] %vm1348, %v1722
        %1740 = vst.msk [vmem:[#allocation4 + $0x70] sm:$0xff] %vm1348, %v1723
        %1741 = vst.msk [vmem:[#allocation4 + $0x78] sm:$0xff] %vm1348, %v1724
        %1742 = vst.msk [vmem:[#allocation4 + $0x80] sm:$0xff] %vm1348, %v1725
        %v1743 = vld [vmem:[#allocation4] sm:$0xff]
        %v1744 = vld [vmem:[#allocation4 + $0x8] sm:$0xff]
        %v1745 = vld [vmem:[#allocation4 + $0x10] sm:$0xff]
        %v1746 = vld [vmem:[#allocation4 + $0x18] sm:$0xff]
        %v1747 = vld [vmem:[#allocation4 + $0x20] sm:$0xff]
        %v1748 = vld [vmem:[#allocation4 + $0x28] sm:$0xff]
        %v1749 = vld [vmem:[#allocation4 + $0x30] sm:$0xff]
        %v1750 = vld [vmem:[#allocation4 + $0x38] sm:$0xff]
        %v1751 = vld [vmem:[#allocation4 + $0x40] sm:$0xff]
        %v1752 = vld [vmem:[#allocation4 + $0x48] sm:$0xff]
        %v1753 = vld [vmem:[#allocation4 + $0x50] sm:$0xff]
        %v1754 = vld [vmem:[#allocation4 + $0x58] sm:$0xff]
        %v1755 = vld [vmem:[#allocation4 + $0x60] sm:$0xff]
        %v1756 = vld [vmem:[#allocation4 + $0x68] sm:$0xff]
        %v1757 = vld [vmem:[#allocation4 + $0x70] sm:$0xff]
        %v1758 = vld [vmem:[#allocation4 + $0x78] sm:$0xff]
        %v1759 = vld [vmem:[#allocation4 + $0x80] sm:$0xff]
        %v1760 = vld [vmem:[#allocation3 + $0x2] sm:$0xff]
        %v1761 = vld [vmem:[#allocation3 + $0xa] sm:$0xff]
        %v1762 = vld [vmem:[#allocation3 + $0x12] sm:$0xff]
        %v1763 = vld [vmem:[#allocation3 + $0x1a] sm:$0xff]
        %v1764 = vld [vmem:[#allocation3 + $0x22] sm:$0xff]
        %v1765 = vld [vmem:[#allocation3 + $0x2a] sm:$0xff]
        %v1766 = vld [vmem:[#allocation3 + $0x32] sm:$0xff]
        %v1767 = vld [vmem:[#allocation3 + $0x3a] sm:$0xff]
        %v1768 = vld [vmem:[#allocation3 + $0x42] sm:$0xff]
        %v1769 = vld [vmem:[#allocation3 + $0x4a] sm:$0xff]
        %v1770 = vld [vmem:[#allocation3 + $0x52] sm:$0xff]
        %v1771 = vld [vmem:[#allocation3 + $0x5a] sm:$0xff]
        %v1772 = vld [vmem:[#allocation3 + $0x62] sm:$0xff]
        %v1773 = vld [vmem:[#allocation3 + $0x6a] sm:$0xff]
        %v1774 = vld [vmem:[#allocation3 + $0x72] sm:$0xff]
        %v1775 = vld [vmem:[#allocation3 + $0x7a] sm:$0xff]
        %v1776 = vld [vmem:[#allocation3 + $0x82] sm:$0xff]
        %s1777 = scalar_lea.vmem %s3, 16
        %v1778 = vld [vmem:[%s1777] sm:$0xff]
        %v1780 = vsel %vm913, %v1760, 0
        %v1783 = vsel %vm913, %v1761, 0
        %v1786 = vsel %vm913, %v1762, 0
        %v1789 = vsel %vm913, %v1763, 0
        %v1792 = vsel %vm913, %v1764, 0
        %v1795 = vsel %vm913, %v1765, 0
        %v1798 = vsel %vm913, %v1766, 0
        %v1801 = vsel %vm913, %v1767, 0
        %v1804 = vsel %vm913, %v1768, 0
        %v1807 = vsel %vm913, %v1769, 0
        %v1810 = vsel %vm913, %v1770, 0
        %v1813 = vsel %vm913, %v1771, 0
        %v1816 = vsel %vm913, %v1772, 0
        %v1819 = vsel %vm913, %v1773, 0
        %v1822 = vsel %vm913, %v1774, 0
        %v1825 = vsel %vm913, %v1775, 0
        %v1828 = vsel %vm913, %v1776, 0
        %1830 = vmatpush.msra.mxu0 0.0
        %1831 = vmatpush.msra.mxu0 0.0
        %1832 = vmatpush.msra.mxu0 0.0
        %1833 = vmatpush.msra.mxu0 0.0
        %1834 = vmatpush.msra.mxu0 0.0
        %1835 = vmatpush.msra.mxu0 0.0
        %1836 = vmatpush.msra.mxu0 0.0
        %1837 = vmatpush.msra.mxu0 0.0
        %1838 = vmatpush.msra.mxu0 0.0
        %1839 = vmatpush.msra.mxu0 0.0
        %1840 = vmatpush.msra.mxu0 0.0
        %1841 = vmatpush.msra.mxu0 0.0
        %1842 = vmatpush.msra.mxu0 0.0
        %1843 = vmatpush.msra.mxu0 0.0
        %1844 = vmatpush.msra.mxu0 0.0
        %1845 = vmatpush.msra.mxu0 %v1778
        %1846 = vmatmul.f32.gmra.mxu0 %v1780
        %v1847 = vpop.f32.mrf.mxu0
        %v1848 = vadd.f32 0.0, %v1847
        %1849 = vmatmul.f32.gmra.mxu0 %v1783
        %v1850 = vpop.f32.mrf.mxu0
        %v1851 = vadd.f32 0.0, %v1850
        %1852 = vmatmul.f32.gmra.mxu0 %v1786
        %v1853 = vpop.f32.mrf.mxu0
        %v1854 = vadd.f32 0.0, %v1853
        %1855 = vmatmul.f32.gmra.mxu0 %v1789
        %v1856 = vpop.f32.mrf.mxu0
        %v1857 = vadd.f32 0.0, %v1856
        %1858 = vmatmul.f32.gmra.mxu0 %v1792
        %v1859 = vpop.f32.mrf.mxu0
        %v1860 = vadd.f32 0.0, %v1859
        %1861 = vmatmul.f32.gmra.mxu0 %v1795
        %v1862 = vpop.f32.mrf.mxu0
        %v1863 = vadd.f32 0.0, %v1862
        %1864 = vmatmul.f32.gmra.mxu0 %v1798
        %v1865 = vpop.f32.mrf.mxu0
        %v1866 = vadd.f32 0.0, %v1865
        %1867 = vmatmul.f32.gmra.mxu0 %v1801
        %v1868 = vpop.f32.mrf.mxu0
        %v1869 = vadd.f32 0.0, %v1868
        %1870 = vmatmul.f32.gmra.mxu0 %v1804
        %v1871 = vpop.f32.mrf.mxu0
        %v1872 = vadd.f32 0.0, %v1871
        %1873 = vmatmul.f32.gmra.mxu0 %v1807
        %v1874 = vpop.f32.mrf.mxu0
        %v1875 = vadd.f32 0.0, %v1874
        %1876 = vmatmul.f32.gmra.mxu0 %v1810
        %v1877 = vpop.f32.mrf.mxu0
        %v1878 = vadd.f32 0.0, %v1877
        %1879 = vmatmul.f32.gmra.mxu0 %v1813
        %v1880 = vpop.f32.mrf.mxu0
        %v1881 = vadd.f32 0.0, %v1880
        %1882 = vmatmul.f32.gmra.mxu0 %v1816
        %v1883 = vpop.f32.mrf.mxu0
        %v1884 = vadd.f32 0.0, %v1883
        %1885 = vmatmul.f32.gmra.mxu0 %v1819
        %v1886 = vpop.f32.mrf.mxu0
        %v1887 = vadd.f32 0.0, %v1886
        %1888 = vmatmul.f32.gmra.mxu0 %v1822
        %v1889 = vpop.f32.mrf.mxu0
        %v1890 = vadd.f32 0.0, %v1889
        %1891 = vmatmul.f32.gmra.mxu0 %v1825
        %v1892 = vpop.f32.mrf.mxu0
        %v1893 = vadd.f32 0.0, %v1892
        %1894 = vmatmul.f32.gmra.mxu0 %v1828
        %v1895 = vpop.f32.mrf.mxu0
        %v1896 = vadd.f32 0.0, %v1895
        %1897 = vdwg.mxu0
        %v1898 = vadd.f32 %v1743, %v1848
        %v1899 = vadd.f32 %v1744, %v1851
        %v1900 = vadd.f32 %v1745, %v1854
        %v1901 = vadd.f32 %v1746, %v1857
        %v1902 = vadd.f32 %v1747, %v1860
        %v1903 = vadd.f32 %v1748, %v1863
        %v1904 = vadd.f32 %v1749, %v1866
        %v1905 = vadd.f32 %v1750, %v1869
        %v1906 = vadd.f32 %v1751, %v1872
        %v1907 = vadd.f32 %v1752, %v1875
        %v1908 = vadd.f32 %v1753, %v1878
        %v1909 = vadd.f32 %v1754, %v1881
        %v1910 = vadd.f32 %v1755, %v1884
        %v1911 = vadd.f32 %v1756, %v1887
        %v1912 = vadd.f32 %v1757, %v1890
        %v1913 = vadd.f32 %v1758, %v1893
        %v1914 = vadd.f32 %v1759, %v1896
        %1915 = vst.msk [vmem:[#allocation4] sm:$0xff] %vm1348, %v1898
        %1916 = vst.msk [vmem:[#allocation4 + $0x8] sm:$0xff] %vm1348, %v1899
        %1917 = vst.msk [vmem:[#allocation4 + $0x10] sm:$0xff] %vm1348, %v1900
        %1918 = vst.msk [vmem:[#allocation4 + $0x18] sm:$0xff] %vm1348, %v1901
        %1919 = vst.msk [vmem:[#allocation4 + $0x20] sm:$0xff] %vm1348, %v1902
        %1920 = vst.msk [vmem:[#allocation4 + $0x28] sm:$0xff] %vm1348, %v1903
        %1921 = vst.msk [vmem:[#allocation4 + $0x30] sm:$0xff] %vm1348, %v1904
        %1922 = vst.msk [vmem:[#allocation4 + $0x38] sm:$0xff] %vm1348, %v1905
        %1923 = vst.msk [vmem:[#allocation4 + $0x40] sm:$0xff] %vm1348, %v1906
        %1924 = vst.msk [vmem:[#allocation4 + $0x48] sm:$0xff] %vm1348, %v1907
        %1925 = vst.msk [vmem:[#allocation4 + $0x50] sm:$0xff] %vm1348, %v1908
        %1926 = vst.msk [vmem:[#allocation4 + $0x58] sm:$0xff] %vm1348, %v1909
        %1927 = vst.msk [vmem:[#allocation4 + $0x60] sm:$0xff] %vm1348, %v1910
        %1928 = vst.msk [vmem:[#allocation4 + $0x68] sm:$0xff] %vm1348, %v1911
        %1929 = vst.msk [vmem:[#allocation4 + $0x70] sm:$0xff] %vm1348, %v1912
        %1930 = vst.msk [vmem:[#allocation4 + $0x78] sm:$0xff] %vm1348, %v1913
        %1931 = vst.msk [vmem:[#allocation4 + $0x80] sm:$0xff] %vm1348, %v1914
        %v1932 = vld [vmem:[#allocation4] sm:$0xff]
        %v1933 = vld [vmem:[#allocation4 + $0x8] sm:$0xff]
        %v1934 = vld [vmem:[#allocation4 + $0x10] sm:$0xff]
        %v1935 = vld [vmem:[#allocation4 + $0x18] sm:$0xff]
        %v1936 = vld [vmem:[#allocation4 + $0x20] sm:$0xff]
        %v1937 = vld [vmem:[#allocation4 + $0x28] sm:$0xff]
        %v1938 = vld [vmem:[#allocation4 + $0x30] sm:$0xff]
        %v1939 = vld [vmem:[#allocation4 + $0x38] sm:$0xff]
        %v1940 = vld [vmem:[#allocation4 + $0x40] sm:$0xff]
        %v1941 = vld [vmem:[#allocation4 + $0x48] sm:$0xff]
        %v1942 = vld [vmem:[#allocation4 + $0x50] sm:$0xff]
        %v1943 = vld [vmem:[#allocation4 + $0x58] sm:$0xff]
        %v1944 = vld [vmem:[#allocation4 + $0x60] sm:$0xff]
        %v1945 = vld [vmem:[#allocation4 + $0x68] sm:$0xff]
        %v1946 = vld [vmem:[#allocation4 + $0x70] sm:$0xff]
        %v1947 = vld [vmem:[#allocation4 + $0x78] sm:$0xff]
        %v1948 = vld [vmem:[#allocation4 + $0x80] sm:$0xff]
        %v1949 = vld [vmem:[#allocation3 + $0x3] sm:$0xff]
        %v1950 = vld [vmem:[#allocation3 + $0xb] sm:$0xff]
        %v1951 = vld [vmem:[#allocation3 + $0x13] sm:$0xff]
        %v1952 = vld [vmem:[#allocation3 + $0x1b] sm:$0xff]
        %v1953 = vld [vmem:[#allocation3 + $0x23] sm:$0xff]
        %v1954 = vld [vmem:[#allocation3 + $0x2b] sm:$0xff]
        %v1955 = vld [vmem:[#allocation3 + $0x33] sm:$0xff]
        %v1956 = vld [vmem:[#allocation3 + $0x3b] sm:$0xff]
        %v1957 = vld [vmem:[#allocation3 + $0x43] sm:$0xff]
        %v1958 = vld [vmem:[#allocation3 + $0x4b] sm:$0xff]
        %v1959 = vld [vmem:[#allocation3 + $0x53] sm:$0xff]
        %v1960 = vld [vmem:[#allocation3 + $0x5b] sm:$0xff]
        %v1961 = vld [vmem:[#allocation3 + $0x63] sm:$0xff]
        %v1962 = vld [vmem:[#allocation3 + $0x6b] sm:$0xff]
        %v1963 = vld [vmem:[#allocation3 + $0x73] sm:$0xff]
        %v1964 = vld [vmem:[#allocation3 + $0x7b] sm:$0xff]
        %v1965 = vld [vmem:[#allocation3 + $0x83] sm:$0xff]
        %s1966 = scalar_lea.vmem %s3, 24
        %v1967 = vld [vmem:[%s1966] sm:$0xff]
        %v1969 = vsel %vm913, %v1949, 0
        %v1972 = vsel %vm913, %v1950, 0
        %v1975 = vsel %vm913, %v1951, 0
        %v1978 = vsel %vm913, %v1952, 0
        %v1981 = vsel %vm913, %v1953, 0
        %v1984 = vsel %vm913, %v1954, 0
        %v1987 = vsel %vm913, %v1955, 0
        %v1990 = vsel %vm913, %v1956, 0
        %v1993 = vsel %vm913, %v1957, 0
        %v1996 = vsel %vm913, %v1958, 0
        %v1999 = vsel %vm913, %v1959, 0
        %v2002 = vsel %vm913, %v1960, 0
        %v2005 = vsel %vm913, %v1961, 0
        %v2008 = vsel %vm913, %v1962, 0
        %v2011 = vsel %vm913, %v1963, 0
        %v2014 = vsel %vm913, %v1964, 0
        %v2017 = vsel %vm913, %v1965, 0
        %2019 = vmatpush.msra.mxu0 0.0
        %2020 = vmatpush.msra.mxu0 0.0
        %2021 = vmatpush.msra.mxu0 0.0
        %2022 = vmatpush.msra.mxu0 0.0
        %2023 = vmatpush.msra.mxu0 0.0
        %2024 = vmatpush.msra.mxu0 0.0
        %2025 = vmatpush.msra.mxu0 0.0
        %2026 = vmatpush.msra.mxu0 0.0
        %2027 = vmatpush.msra.mxu0 0.0
        %2028 = vmatpush.msra.mxu0 0.0
        %2029 = vmatpush.msra.mxu0 0.0
        %2030 = vmatpush.msra.mxu0 0.0
        %2031 = vmatpush.msra.mxu0 0.0
        %2032 = vmatpush.msra.mxu0 0.0
        %2033 = vmatpush.msra.mxu0 0.0
        %2034 = vmatpush.msra.mxu0 %v1967
        %2035 = vmatmul.f32.gmra.mxu0 %v1969
        %v2036 = vpop.f32.mrf.mxu0
        %v2037 = vadd.f32 0.0, %v2036
        %2038 = vmatmul.f32.gmra.mxu0 %v1972
        %v2039 = vpop.f32.mrf.mxu0
        %v2040 = vadd.f32 0.0, %v2039
        %2041 = vmatmul.f32.gmra.mxu0 %v1975
        %v2042 = vpop.f32.mrf.mxu0
        %v2043 = vadd.f32 0.0, %v2042
        %2044 = vmatmul.f32.gmra.mxu0 %v1978
        %v2045 = vpop.f32.mrf.mxu0
        %v2046 = vadd.f32 0.0, %v2045
        %2047 = vmatmul.f32.gmra.mxu0 %v1981
        %v2048 = vpop.f32.mrf.mxu0
        %v2049 = vadd.f32 0.0, %v2048
        %2050 = vmatmul.f32.gmra.mxu0 %v1984
        %v2051 = vpop.f32.mrf.mxu0
        %v2052 = vadd.f32 0.0, %v2051
        %2053 = vmatmul.f32.gmra.mxu0 %v1987
        %v2054 = vpop.f32.mrf.mxu0
        %v2055 = vadd.f32 0.0, %v2054
        %2056 = vmatmul.f32.gmra.mxu0 %v1990
        %v2057 = vpop.f32.mrf.mxu0
        %v2058 = vadd.f32 0.0, %v2057
        %2059 = vmatmul.f32.gmra.mxu0 %v1993
        %v2060 = vpop.f32.mrf.mxu0
        %v2061 = vadd.f32 0.0, %v2060
        %2062 = vmatmul.f32.gmra.mxu0 %v1996
        %v2063 = vpop.f32.mrf.mxu0
        %v2064 = vadd.f32 0.0, %v2063
        %2065 = vmatmul.f32.gmra.mxu0 %v1999
        %v2066 = vpop.f32.mrf.mxu0
        %v2067 = vadd.f32 0.0, %v2066
        %2068 = vmatmul.f32.gmra.mxu0 %v2002
        %v2069 = vpop.f32.mrf.mxu0
        %v2070 = vadd.f32 0.0, %v2069
        %2071 = vmatmul.f32.gmra.mxu0 %v2005
        %v2072 = vpop.f32.mrf.mxu0
        %v2073 = vadd.f32 0.0, %v2072
        %2074 = vmatmul.f32.gmra.mxu0 %v2008
        %v2075 = vpop.f32.mrf.mxu0
        %v2076 = vadd.f32 0.0, %v2075
        %2077 = vmatmul.f32.gmra.mxu0 %v2011
        %v2078 = vpop.f32.mrf.mxu0
        %v2079 = vadd.f32 0.0, %v2078
        %2080 = vmatmul.f32.gmra.mxu0 %v2014
        %v2081 = vpop.f32.mrf.mxu0
        %v2082 = vadd.f32 0.0, %v2081
        %2083 = vmatmul.f32.gmra.mxu0 %v2017
        %v2084 = vpop.f32.mrf.mxu0
        %v2085 = vadd.f32 0.0, %v2084
        %2086 = vdwg.mxu0
        %v2087 = vadd.f32 %v1932, %v2037
        %v2088 = vadd.f32 %v1933, %v2040
        %v2089 = vadd.f32 %v1934, %v2043
        %v2090 = vadd.f32 %v1935, %v2046
        %v2091 = vadd.f32 %v1936, %v2049
        %v2092 = vadd.f32 %v1937, %v2052
        %v2093 = vadd.f32 %v1938, %v2055
        %v2094 = vadd.f32 %v1939, %v2058
        %v2095 = vadd.f32 %v1940, %v2061
        %v2096 = vadd.f32 %v1941, %v2064
        %v2097 = vadd.f32 %v1942, %v2067
        %v2098 = vadd.f32 %v1943, %v2070
        %v2099 = vadd.f32 %v1944, %v2073
        %v2100 = vadd.f32 %v1945, %v2076
        %v2101 = vadd.f32 %v1946, %v2079
        %v2102 = vadd.f32 %v1947, %v2082
        %v2103 = vadd.f32 %v1948, %v2085
        %2104 = vst.msk [vmem:[#allocation4] sm:$0xff] %vm1348, %v2087
        %2105 = vst.msk [vmem:[#allocation4 + $0x8] sm:$0xff] %vm1348, %v2088
        %2106 = vst.msk [vmem:[#allocation4 + $0x10] sm:$0xff] %vm1348, %v2089
        %2107 = vst.msk [vmem:[#allocation4 + $0x18] sm:$0xff] %vm1348, %v2090
        %2108 = vst.msk [vmem:[#allocation4 + $0x20] sm:$0xff] %vm1348, %v2091
        %2109 = vst.msk [vmem:[#allocation4 + $0x28] sm:$0xff] %vm1348, %v2092
        %2110 = vst.msk [vmem:[#allocation4 + $0x30] sm:$0xff] %vm1348, %v2093
        %2111 = vst.msk [vmem:[#allocation4 + $0x38] sm:$0xff] %vm1348, %v2094
        %2112 = vst.msk [vmem:[#allocation4 + $0x40] sm:$0xff] %vm1348, %v2095
        %2113 = vst.msk [vmem:[#allocation4 + $0x48] sm:$0xff] %vm1348, %v2096
        %2114 = vst.msk [vmem:[#allocation4 + $0x50] sm:$0xff] %vm1348, %v2097
        %2115 = vst.msk [vmem:[#allocation4 + $0x58] sm:$0xff] %vm1348, %v2098
        %2116 = vst.msk [vmem:[#allocation4 + $0x60] sm:$0xff] %vm1348, %v2099
        %2117 = vst.msk [vmem:[#allocation4 + $0x68] sm:$0xff] %vm1348, %v2100
        %2118 = vst.msk [vmem:[#allocation4 + $0x70] sm:$0xff] %vm1348, %v2101
        %2119 = vst.msk [vmem:[#allocation4 + $0x78] sm:$0xff] %vm1348, %v2102
        %2120 = vst.msk [vmem:[#allocation4 + $0x80] sm:$0xff] %vm1348, %v2103
        %v2121 = vld [vmem:[#allocation4] sm:$0xff]
        %v2122 = vld [vmem:[#allocation4 + $0x8] sm:$0xff]
        %v2123 = vld [vmem:[#allocation4 + $0x10] sm:$0xff]
        %v2124 = vld [vmem:[#allocation4 + $0x18] sm:$0xff]
        %v2125 = vld [vmem:[#allocation4 + $0x20] sm:$0xff]
        %v2126 = vld [vmem:[#allocation4 + $0x28] sm:$0xff]
        %v2127 = vld [vmem:[#allocation4 + $0x30] sm:$0xff]
        %v2128 = vld [vmem:[#allocation4 + $0x38] sm:$0xff]
        %v2129 = vld [vmem:[#allocation4 + $0x40] sm:$0xff]
        %v2130 = vld [vmem:[#allocation4 + $0x48] sm:$0xff]
        %v2131 = vld [vmem:[#allocation4 + $0x50] sm:$0xff]
        %v2132 = vld [vmem:[#allocation4 + $0x58] sm:$0xff]
        %v2133 = vld [vmem:[#allocation4 + $0x60] sm:$0xff]
        %v2134 = vld [vmem:[#allocation4 + $0x68] sm:$0xff]
        %v2135 = vld [vmem:[#allocation4 + $0x70] sm:$0xff]
        %v2136 = vld [vmem:[#allocation4 + $0x78] sm:$0xff]
        %v2137 = vld [vmem:[#allocation4 + $0x80] sm:$0xff]
        %v2138 = vld [vmem:[#allocation3 + $0x4] sm:$0xff]
        %v2139 = vld [vmem:[#allocation3 + $0xc] sm:$0xff]
        %v2140 = vld [vmem:[#allocation3 + $0x14] sm:$0xff]
        %v2141 = vld [vmem:[#allocation3 + $0x1c] sm:$0xff]
        %v2142 = vld [vmem:[#allocation3 + $0x24] sm:$0xff]
        %v2143 = vld [vmem:[#allocation3 + $0x2c] sm:$0xff]
        %v2144 = vld [vmem:[#allocation3 + $0x34] sm:$0xff]
        %v2145 = vld [vmem:[#allocation3 + $0x3c] sm:$0xff]
        %v2146 = vld [vmem:[#allocation3 + $0x44] sm:$0xff]
        %v2147 = vld [vmem:[#allocation3 + $0x4c] sm:$0xff]
        %v2148 = vld [vmem:[#allocation3 + $0x54] sm:$0xff]
        %v2149 = vld [vmem:[#allocation3 + $0x5c] sm:$0xff]
        %v2150 = vld [vmem:[#allocation3 + $0x64] sm:$0xff]
        %v2151 = vld [vmem:[#allocation3 + $0x6c] sm:$0xff]
        %v2152 = vld [vmem:[#allocation3 + $0x74] sm:$0xff]
        %v2153 = vld [vmem:[#allocation3 + $0x7c] sm:$0xff]
        %v2154 = vld [vmem:[#allocation3 + $0x84] sm:$0xff]
        %s2155 = scalar_lea.vmem %s3, 32
        %v2156 = vld [vmem:[%s2155] sm:$0xff]
        %v2158 = vsel %vm913, %v2138, 0
        %v2161 = vsel %vm913, %v2139, 0
        %v2164 = vsel %vm913, %v2140, 0
        %v2167 = vsel %vm913, %v2141, 0
        %v2170 = vsel %vm913, %v2142, 0
        %v2173 = vsel %vm913, %v2143, 0
        %v2176 = vsel %vm913, %v2144, 0
        %v2179 = vsel %vm913, %v2145, 0
        %v2182 = vsel %vm913, %v2146, 0
        %v2185 = vsel %vm913, %v2147, 0
        %v2188 = vsel %vm913, %v2148, 0
        %v2191 = vsel %vm913, %v2149, 0
        %v2194 = vsel %vm913, %v2150, 0
        %v2197 = vsel %vm913, %v2151, 0
        %v2200 = vsel %vm913, %v2152, 0
        %v2203 = vsel %vm913, %v2153, 0
        %v2206 = vsel %vm913, %v2154, 0
        %2208 = vmatpush.msra.mxu0 0.0
        %2209 = vmatpush.msra.mxu0 0.0
        %2210 = vmatpush.msra.mxu0 0.0
        %2211 = vmatpush.msra.mxu0 0.0
        %2212 = vmatpush.msra.mxu0 0.0
        %2213 = vmatpush.msra.mxu0 0.0
        %2214 = vmatpush.msra.mxu0 0.0
        %2215 = vmatpush.msra.mxu0 0.0
        %2216 = vmatpush.msra.mxu0 0.0
        %2217 = vmatpush.msra.mxu0 0.0
        %2218 = vmatpush.msra.mxu0 0.0
        %2219 = vmatpush.msra.mxu0 0.0
        %2220 = vmatpush.msra.mxu0 0.0
        %2221 = vmatpush.msra.mxu0 0.0
        %2222 = vmatpush.msra.mxu0 0.0
        %2223 = vmatpush.msra.mxu0 %v2156
        %2224 = vmatmul.f32.gmra.mxu0 %v2158
        %v2225 = vpop.f32.mrf.mxu0
        %v2226 = vadd.f32 0.0, %v2225
        %2227 = vmatmul.f32.gmra.mxu0 %v2161
        %v2228 = vpop.f32.mrf.mxu0
        %v2229 = vadd.f32 0.0, %v2228
        %2230 = vmatmul.f32.gmra.mxu0 %v2164
        %v2231 = vpop.f32.mrf.mxu0
        %v2232 = vadd.f32 0.0, %v2231
        %2233 = vmatmul.f32.gmra.mxu0 %v2167
        %v2234 = vpop.f32.mrf.mxu0
        %v2235 = vadd.f32 0.0, %v2234
        %2236 = vmatmul.f32.gmra.mxu0 %v2170
        %v2237 = vpop.f32.mrf.mxu0
        %v2238 = vadd.f32 0.0, %v2237
        %2239 = vmatmul.f32.gmra.mxu0 %v2173
        %v2240 = vpop.f32.mrf.mxu0
        %v2241 = vadd.f32 0.0, %v2240
        %2242 = vmatmul.f32.gmra.mxu0 %v2176
        %v2243 = vpop.f32.mrf.mxu0
        %v2244 = vadd.f32 0.0, %v2243
        %2245 = vmatmul.f32.gmra.mxu0 %v2179
        %v2246 = vpop.f32.mrf.mxu0
        %v2247 = vadd.f32 0.0, %v2246
        %2248 = vmatmul.f32.gmra.mxu0 %v2182
        %v2249 = vpop.f32.mrf.mxu0
        %v2250 = vadd.f32 0.0, %v2249
        %2251 = vmatmul.f32.gmra.mxu0 %v2185
        %v2252 = vpop.f32.mrf.mxu0
        %v2253 = vadd.f32 0.0, %v2252
        %2254 = vmatmul.f32.gmra.mxu0 %v2188
        %v2255 = vpop.f32.mrf.mxu0
        %v2256 = vadd.f32 0.0, %v2255
        %2257 = vmatmul.f32.gmra.mxu0 %v2191
        %v2258 = vpop.f32.mrf.mxu0
        %v2259 = vadd.f32 0.0, %v2258
        %2260 = vmatmul.f32.gmra.mxu0 %v2194
        %v2261 = vpop.f32.mrf.mxu0
        %v2262 = vadd.f32 0.0, %v2261
        %2263 = vmatmul.f32.gmra.mxu0 %v2197
        %v2264 = vpop.f32.mrf.mxu0
        %v2265 = vadd.f32 0.0, %v2264
        %2266 = vmatmul.f32.gmra.mxu0 %v2200
        %v2267 = vpop.f32.mrf.mxu0
        %v2268 = vadd.f32 0.0, %v2267
        %2269 = vmatmul.f32.gmra.mxu0 %v2203
        %v2270 = vpop.f32.mrf.mxu0
        %v2271 = vadd.f32 0.0, %v2270
        %2272 = vmatmul.f32.gmra.mxu0 %v2206
        %v2273 = vpop.f32.mrf.mxu0
        %v2274 = vadd.f32 0.0, %v2273
        %2275 = vdwg.mxu0
        %v2276 = vadd.f32 %v2121, %v2226
        %v2277 = vadd.f32 %v2122, %v2229
        %v2278 = vadd.f32 %v2123, %v2232
        %v2279 = vadd.f32 %v2124, %v2235
        %v2280 = vadd.f32 %v2125, %v2238
        %v2281 = vadd.f32 %v2126, %v2241
        %v2282 = vadd.f32 %v2127, %v2244
        %v2283 = vadd.f32 %v2128, %v2247
        %v2284 = vadd.f32 %v2129, %v2250
        %v2285 = vadd.f32 %v2130, %v2253
        %v2286 = vadd.f32 %v2131, %v2256
        %v2287 = vadd.f32 %v2132, %v2259
        %v2288 = vadd.f32 %v2133, %v2262
        %v2289 = vadd.f32 %v2134, %v2265
        %v2290 = vadd.f32 %v2135, %v2268
        %v2291 = vadd.f32 %v2136, %v2271
        %v2292 = vadd.f32 %v2137, %v2274
        %2293 = vst.msk [vmem:[#allocation4] sm:$0xff] %vm1348, %v2276
        %2294 = vst.msk [vmem:[#allocation4 + $0x8] sm:$0xff] %vm1348, %v2277
        %2295 = vst.msk [vmem:[#allocation4 + $0x10] sm:$0xff] %vm1348, %v2278
        %2296 = vst.msk [vmem:[#allocation4 + $0x18] sm:$0xff] %vm1348, %v2279
        %2297 = vst.msk [vmem:[#allocation4 + $0x20] sm:$0xff] %vm1348, %v2280
        %2298 = vst.msk [vmem:[#allocation4 + $0x28] sm:$0xff] %vm1348, %v2281
        %2299 = vst.msk [vmem:[#allocation4 + $0x30] sm:$0xff] %vm1348, %v2282
        %2300 = vst.msk [vmem:[#allocation4 + $0x38] sm:$0xff] %vm1348, %v2283
        %2301 = vst.msk [vmem:[#allocation4 + $0x40] sm:$0xff] %vm1348, %v2284
        %2302 = vst.msk [vmem:[#allocation4 + $0x48] sm:$0xff] %vm1348, %v2285
        %2303 = vst.msk [vmem:[#allocation4 + $0x50] sm:$0xff] %vm1348, %v2286
        %2304 = vst.msk [vmem:[#allocation4 + $0x58] sm:$0xff] %vm1348, %v2287
        %2305 = vst.msk [vmem:[#allocation4 + $0x60] sm:$0xff] %vm1348, %v2288
        %2306 = vst.msk [vmem:[#allocation4 + $0x68] sm:$0xff] %vm1348, %v2289
        %2307 = vst.msk [vmem:[#allocation4 + $0x70] sm:$0xff] %vm1348, %v2290
        %2308 = vst.msk [vmem:[#allocation4 + $0x78] sm:$0xff] %vm1348, %v2291
        %2309 = vst.msk [vmem:[#allocation4 + $0x80] sm:$0xff] %vm1348, %v2292
        %v2310 = vld [vmem:[#allocation4] sm:$0xff]
        %v2311 = vld [vmem:[#allocation4 + $0x8] sm:$0xff]
        %v2312 = vld [vmem:[#allocation4 + $0x10] sm:$0xff]
        %v2313 = vld [vmem:[#allocation4 + $0x18] sm:$0xff]
        %v2314 = vld [vmem:[#allocation4 + $0x20] sm:$0xff]
        %v2315 = vld [vmem:[#allocation4 + $0x28] sm:$0xff]
        %v2316 = vld [vmem:[#allocation4 + $0x30] sm:$0xff]
        %v2317 = vld [vmem:[#allocation4 + $0x38] sm:$0xff]
        %v2318 = vld [vmem:[#allocation4 + $0x40] sm:$0xff]
        %v2319 = vld [vmem:[#allocation4 + $0x48] sm:$0xff]
        %v2320 = vld [vmem:[#allocation4 + $0x50] sm:$0xff]
        %v2321 = vld [vmem:[#allocation4 + $0x58] sm:$0xff]
        %v2322 = vld [vmem:[#allocation4 + $0x60] sm:$0xff]
        %v2323 = vld [vmem:[#allocation4 + $0x68] sm:$0xff]
        %v2324 = vld [vmem:[#allocation4 + $0x70] sm:$0xff]
        %v2325 = vld [vmem:[#allocation4 + $0x78] sm:$0xff]
        %v2326 = vld [vmem:[#allocation4 + $0x80] sm:$0xff]
        %v2327 = vld [vmem:[#allocation3 + $0xe] sm:$0xff]
        %v2328 = vld [vmem:[#allocation3 + $0x16] sm:$0xff]
        %v2329 = vld [vmem:[#allocation3 + $0x1e] sm:$0xff]
        %v2330 = vld [vmem:[#allocation3 + $0x26] sm:$0xff]
        %v2331 = vld [vmem:[#allocation3 + $0x2e] sm:$0xff]
        %v2332 = vld [vmem:[#allocation3 + $0x36] sm:$0xff]
        %v2333 = vld [vmem:[#allocation3 + $0x3e] sm:$0xff]
        %v2334 = vld [vmem:[#allocation3 + $0x46] sm:$0xff]
        %v2335 = vld [vmem:[#allocation3 + $0x4e] sm:$0xff]
        %v2336 = vld [vmem:[#allocation3 + $0x56] sm:$0xff]
        %v2337 = vld [vmem:[#allocation3 + $0x5e] sm:$0xff]
        %v2338 = vld [vmem:[#allocation3 + $0x66] sm:$0xff]
        %v2339 = vld [vmem:[#allocation3 + $0x6e] sm:$0xff]
        %v2340 = vld [vmem:[#allocation3 + $0x76] sm:$0xff]
        %v2341 = vld [vmem:[#allocation3 + $0x7e] sm:$0xff]
        %v2342 = vld [vmem:[#allocation3 + $0x86] sm:$0xff]
        %v2343 = vld [vmem:[#allocation3 + $0x8e] sm:$0xff]
        %s2344 = scalar_lea.vmem %s3, 40
        %v2345 = vld [vmem:[%s2344] sm:$0xff]
        %v2347 = vsel %vm913, %v2327, 0
        %v2350 = vsel %vm913, %v2328, 0
        %v2353 = vsel %vm913, %v2329, 0
        %v2356 = vsel %vm913, %v2330, 0
        %v2359 = vsel %vm913, %v2331, 0
        %v2362 = vsel %vm913, %v2332, 0
        %v2365 = vsel %vm913, %v2333, 0
        %v2368 = vsel %vm913, %v2334, 0
        %v2371 = vsel %vm913, %v2335, 0
        %v2374 = vsel %vm913, %v2336, 0
        %v2377 = vsel %vm913, %v2337, 0
        %v2380 = vsel %vm913, %v2338, 0
        %v2383 = vsel %vm913, %v2339, 0
        %v2386 = vsel %vm913, %v2340, 0
        %v2389 = vsel %vm913, %v2341, 0
        %v2392 = vsel %vm913, %v2342, 0
        %v2395 = vsel %vm913, %v2343, 0
        %2397 = vmatpush.msra.mxu0 0.0
        %2398 = vmatpush.msra.mxu0 0.0
        %2399 = vmatpush.msra.mxu0 0.0
        %2400 = vmatpush.msra.mxu0 0.0
        %2401 = vmatpush.msra.mxu0 0.0
        %2402 = vmatpush.msra.mxu0 0.0
        %2403 = vmatpush.msra.mxu0 0.0
        %2404 = vmatpush.msra.mxu0 0.0
        %2405 = vmatpush.msra.mxu0 0.0
        %2406 = vmatpush.msra.mxu0 0.0
        %2407 = vmatpush.msra.mxu0 0.0
        %2408 = vmatpush.msra.mxu0 0.0
        %2409 = vmatpush.msra.mxu0 0.0
        %2410 = vmatpush.msra.mxu0 0.0
        %2411 = vmatpush.msra.mxu0 0.0
        %2412 = vmatpush.msra.mxu0 %v2345
        %2413 = vmatmul.f32.gmra.mxu0 %v2347
        %v2414 = vpop.f32.mrf.mxu0
        %v2415 = vadd.f32 0.0, %v2414
        %2416 = vmatmul.f32.gmra.mxu0 %v2350
        %v2417 = vpop.f32.mrf.mxu0
        %v2418 = vadd.f32 0.0, %v2417
        %2419 = vmatmul.f32.gmra.mxu0 %v2353
        %v2420 = vpop.f32.mrf.mxu0
        %v2421 = vadd.f32 0.0, %v2420
        %2422 = vmatmul.f32.gmra.mxu0 %v2356
        %v2423 = vpop.f32.mrf.mxu0
        %v2424 = vadd.f32 0.0, %v2423
        %2425 = vmatmul.f32.gmra.mxu0 %v2359
        %v2426 = vpop.f32.mrf.mxu0
        %v2427 = vadd.f32 0.0, %v2426
        %2428 = vmatmul.f32.gmra.mxu0 %v2362
        %v2429 = vpop.f32.mrf.mxu0
        %v2430 = vadd.f32 0.0, %v2429
        %2431 = vmatmul.f32.gmra.mxu0 %v2365
        %v2432 = vpop.f32.mrf.mxu0
        %v2433 = vadd.f32 0.0, %v2432
        %2434 = vmatmul.f32.gmra.mxu0 %v2368
        %v2435 = vpop.f32.mrf.mxu0
        %v2436 = vadd.f32 0.0, %v2435
        %2437 = vmatmul.f32.gmra.mxu0 %v2371
        %v2438 = vpop.f32.mrf.mxu0
        %v2439 = vadd.f32 0.0, %v2438
        %2440 = vmatmul.f32.gmra.mxu0 %v2374
        %v2441 = vpop.f32.mrf.mxu0
        %v2442 = vadd.f32 0.0, %v2441
        %2443 = vmatmul.f32.gmra.mxu0 %v2377
        %v2444 = vpop.f32.mrf.mxu0
        %v2445 = vadd.f32 0.0, %v2444
        %2446 = vmatmul.f32.gmra.mxu0 %v2380
        %v2447 = vpop.f32.mrf.mxu0
        %v2448 = vadd.f32 0.0, %v2447
        %2449 = vmatmul.f32.gmra.mxu0 %v2383
        %v2450 = vpop.f32.mrf.mxu0
        %v2451 = vadd.f32 0.0, %v2450
        %2452 = vmatmul.f32.gmra.mxu0 %v2386
        %v2453 = vpop.f32.mrf.mxu0
        %v2454 = vadd.f32 0.0, %v2453
        %2455 = vmatmul.f32.gmra.mxu0 %v2389
        %v2456 = vpop.f32.mrf.mxu0
        %v2457 = vadd.f32 0.0, %v2456
        %2458 = vmatmul.f32.gmra.mxu0 %v2392
        %v2459 = vpop.f32.mrf.mxu0
        %v2460 = vadd.f32 0.0, %v2459
        %2461 = vmatmul.f32.gmra.mxu0 %v2395
        %v2462 = vpop.f32.mrf.mxu0
        %v2463 = vadd.f32 0.0, %v2462
        %2464 = vdwg.mxu0
        %v2465 = vadd.f32 %v2310, %v2415
        %v2466 = vadd.f32 %v2311, %v2418
        %v2467 = vadd.f32 %v2312, %v2421
        %v2468 = vadd.f32 %v2313, %v2424
        %v2469 = vadd.f32 %v2314, %v2427
        %v2470 = vadd.f32 %v2315, %v2430
        %v2471 = vadd.f32 %v2316, %v2433
        %v2472 = vadd.f32 %v2317, %v2436
        %v2473 = vadd.f32 %v2318, %v2439
        %v2474 = vadd.f32 %v2319, %v2442
        %v2475 = vadd.f32 %v2320, %v2445
        %v2476 = vadd.f32 %v2321, %v2448
        %v2477 = vadd.f32 %v2322, %v2451
        %v2478 = vadd.f32 %v2323, %v2454
        %v2479 = vadd.f32 %v2324, %v2457
        %v2480 = vadd.f32 %v2325, %v2460
        %v2481 = vadd.f32 %v2326, %v2463
        %2482 = vst.msk [vmem:[#allocation4] sm:$0xff] %vm1348, %v2465
        %2483 = vst.msk [vmem:[#allocation4 + $0x8] sm:$0xff] %vm1348, %v2466
        %2484 = vst.msk [vmem:[#allocation4 + $0x10] sm:$0xff] %vm1348, %v2467
        %2485 = vst.msk [vmem:[#allocation4 + $0x18] sm:$0xff] %vm1348, %v2468
        %2486 = vst.msk [vmem:[#allocation4 + $0x20] sm:$0xff] %vm1348, %v2469
        %2487 = vst.msk [vmem:[#allocation4 + $0x28] sm:$0xff] %vm1348, %v2470
        %2488 = vst.msk [vmem:[#allocation4 + $0x30] sm:$0xff] %vm1348, %v2471
        %2489 = vst.msk [vmem:[#allocation4 + $0x38] sm:$0xff] %vm1348, %v2472
        %2490 = vst.msk [vmem:[#allocation4 + $0x40] sm:$0xff] %vm1348, %v2473
        %2491 = vst.msk [vmem:[#allocation4 + $0x48] sm:$0xff] %vm1348, %v2474
        %2492 = vst.msk [vmem:[#allocation4 + $0x50] sm:$0xff] %vm1348, %v2475
        %2493 = vst.msk [vmem:[#allocation4 + $0x58] sm:$0xff] %vm1348, %v2476
        %2494 = vst.msk [vmem:[#allocation4 + $0x60] sm:$0xff] %vm1348, %v2477
        %2495 = vst.msk [vmem:[#allocation4 + $0x68] sm:$0xff] %vm1348, %v2478
        %2496 = vst.msk [vmem:[#allocation4 + $0x70] sm:$0xff] %vm1348, %v2479
        %2497 = vst.msk [vmem:[#allocation4 + $0x78] sm:$0xff] %vm1348, %v2480
        %2498 = vst.msk [vmem:[#allocation4 + $0x80] sm:$0xff] %vm1348, %v2481
        %v2499 = vld [vmem:[#allocation4] sm:$0xff]
        %v2500 = vld [vmem:[#allocation4 + $0x8] sm:$0xff]
        %v2501 = vld [vmem:[#allocation4 + $0x10] sm:$0xff]
        %v2502 = vld [vmem:[#allocation4 + $0x18] sm:$0xff]
        %v2503 = vld [vmem:[#allocation4 + $0x20] sm:$0xff]
        %v2504 = vld [vmem:[#allocation4 + $0x28] sm:$0xff]
        %v2505 = vld [vmem:[#allocation4 + $0x30] sm:$0xff]
        %v2506 = vld [vmem:[#allocation4 + $0x38] sm:$0xff]
        %v2507 = vld [vmem:[#allocation4 + $0x40] sm:$0xff]
        %v2508 = vld [vmem:[#allocation4 + $0x48] sm:$0xff]
        %v2509 = vld [vmem:[#allocation4 + $0x50] sm:$0xff]
        %v2510 = vld [vmem:[#allocation4 + $0x58] sm:$0xff]
        %v2511 = vld [vmem:[#allocation4 + $0x60] sm:$0xff]
        %v2512 = vld [vmem:[#allocation4 + $0x68] sm:$0xff]
        %v2513 = vld [vmem:[#allocation4 + $0x70] sm:$0xff]
        %v2514 = vld [vmem:[#allocation4 + $0x78] sm:$0xff]
        %v2515 = vld [vmem:[#allocation4 + $0x80] sm:$0xff]
        %v2516 = vld [vmem:[#allocation3 + $0xf] sm:$0xff]
        %v2517 = vld [vmem:[#allocation3 + $0x17] sm:$0xff]
        %v2518 = vld [vmem:[#allocation3 + $0x1f] sm:$0xff]
        %v2519 = vld [vmem:[#allocation3 + $0x27] sm:$0xff]
        %v2520 = vld [vmem:[#allocation3 + $0x2f] sm:$0xff]
        %v2521 = vld [vmem:[#allocation3 + $0x37] sm:$0xff]
        %v2522 = vld [vmem:[#allocation3 + $0x3f] sm:$0xff]
        %v2523 = vld [vmem:[#allocation3 + $0x47] sm:$0xff]
        %v2524 = vld [vmem:[#allocation3 + $0x4f] sm:$0xff]
        %v2525 = vld [vmem:[#allocation3 + $0x57] sm:$0xff]
        %v2526 = vld [vmem:[#allocation3 + $0x5f] sm:$0xff]
        %v2527 = vld [vmem:[#allocation3 + $0x67] sm:$0xff]
        %v2528 = vld [vmem:[#allocation3 + $0x6f] sm:$0xff]
        %v2529 = vld [vmem:[#allocation3 + $0x77] sm:$0xff]
        %v2530 = vld [vmem:[#allocation3 + $0x7f] sm:$0xff]
        %v2531 = vld [vmem:[#allocation3 + $0x87] sm:$0xff]
        %v2532 = vld [vmem:[#allocation3 + $0x8f] sm:$0xff]
        %s2533 = scalar_lea.vmem %s3, 48
        %v2534 = vld [vmem:[%s2533] sm:$0xff]
        %v2536 = vsel %vm913, %v2516, 0
        %v2539 = vsel %vm913, %v2517, 0
        %v2542 = vsel %vm913, %v2518, 0
        %v2545 = vsel %vm913, %v2519, 0
        %v2548 = vsel %vm913, %v2520, 0
        %v2551 = vsel %vm913, %v2521, 0
        %v2554 = vsel %vm913, %v2522, 0
        %v2557 = vsel %vm913, %v2523, 0
        %v2560 = vsel %vm913, %v2524, 0
        %v2563 = vsel %vm913, %v2525, 0
        %v2566 = vsel %vm913, %v2526, 0
        %v2569 = vsel %vm913, %v2527, 0
        %v2572 = vsel %vm913, %v2528, 0
        %v2575 = vsel %vm913, %v2529, 0
        %v2578 = vsel %vm913, %v2530, 0
        %v2581 = vsel %vm913, %v2531, 0
        %v2584 = vsel %vm913, %v2532, 0
        %2586 = vmatpush.msra.mxu0 0.0
        %2587 = vmatpush.msra.mxu0 0.0
        %2588 = vmatpush.msra.mxu0 0.0
        %2589 = vmatpush.msra.mxu0 0.0
        %2590 = vmatpush.msra.mxu0 0.0
        %2591 = vmatpush.msra.mxu0 0.0
        %2592 = vmatpush.msra.mxu0 0.0
        %2593 = vmatpush.msra.mxu0 0.0
        %2594 = vmatpush.msra.mxu0 0.0
        %2595 = vmatpush.msra.mxu0 0.0
        %2596 = vmatpush.msra.mxu0 0.0
        %2597 = vmatpush.msra.mxu0 0.0
        %2598 = vmatpush.msra.mxu0 0.0
        %2599 = vmatpush.msra.mxu0 0.0
        %2600 = vmatpush.msra.mxu0 0.0
        %2601 = vmatpush.msra.mxu0 %v2534
        %2602 = vmatmul.f32.gmra.mxu0 %v2536
        %v2603 = vpop.f32.mrf.mxu0
        %v2604 = vadd.f32 0.0, %v2603
        %2605 = vmatmul.f32.gmra.mxu0 %v2539
        %v2606 = vpop.f32.mrf.mxu0
        %v2607 = vadd.f32 0.0, %v2606
        %2608 = vmatmul.f32.gmra.mxu0 %v2542
        %v2609 = vpop.f32.mrf.mxu0
        %v2610 = vadd.f32 0.0, %v2609
        %2611 = vmatmul.f32.gmra.mxu0 %v2545
        %v2612 = vpop.f32.mrf.mxu0
        %v2613 = vadd.f32 0.0, %v2612
        %2614 = vmatmul.f32.gmra.mxu0 %v2548
        %v2615 = vpop.f32.mrf.mxu0
        %v2616 = vadd.f32 0.0, %v2615
        %2617 = vmatmul.f32.gmra.mxu0 %v2551
        %v2618 = vpop.f32.mrf.mxu0
        %v2619 = vadd.f32 0.0, %v2618
        %2620 = vmatmul.f32.gmra.mxu0 %v2554
        %v2621 = vpop.f32.mrf.mxu0
        %v2622 = vadd.f32 0.0, %v2621
        %2623 = vmatmul.f32.gmra.mxu0 %v2557
        %v2624 = vpop.f32.mrf.mxu0
        %v2625 = vadd.f32 0.0, %v2624
        %2626 = vmatmul.f32.gmra.mxu0 %v2560
        %v2627 = vpop.f32.mrf.mxu0
        %v2628 = vadd.f32 0.0, %v2627
        %2629 = vmatmul.f32.gmra.mxu0 %v2563
        %v2630 = vpop.f32.mrf.mxu0
        %v2631 = vadd.f32 0.0, %v2630
        %2632 = vmatmul.f32.gmra.mxu0 %v2566
        %v2633 = vpop.f32.mrf.mxu0
        %v2634 = vadd.f32 0.0, %v2633
        %2635 = vmatmul.f32.gmra.mxu0 %v2569
        %v2636 = vpop.f32.mrf.mxu0
        %v2637 = vadd.f32 0.0, %v2636
        %2638 = vmatmul.f32.gmra.mxu0 %v2572
        %v2639 = vpop.f32.mrf.mxu0
        %v2640 = vadd.f32 0.0, %v2639
        %2641 = vmatmul.f32.gmra.mxu0 %v2575
        %v2642 = vpop.f32.mrf.mxu0
        %v2643 = vadd.f32 0.0, %v2642
        %2644 = vmatmul.f32.gmra.mxu0 %v2578
        %v2645 = vpop.f32.mrf.mxu0
        %v2646 = vadd.f32 0.0, %v2645
        %2647 = vmatmul.f32.gmra.mxu0 %v2581
        %v2648 = vpop.f32.mrf.mxu0
        %v2649 = vadd.f32 0.0, %v2648
        %2650 = vmatmul.f32.gmra.mxu0 %v2584
        %v2651 = vpop.f32.mrf.mxu0
        %v2652 = vadd.f32 0.0, %v2651
        %2653 = vdwg.mxu0
        %v2654 = vadd.f32 %v2499, %v2604
        %v2655 = vadd.f32 %v2500, %v2607
        %v2656 = vadd.f32 %v2501, %v2610
        %v2657 = vadd.f32 %v2502, %v2613
        %v2658 = vadd.f32 %v2503, %v2616
        %v2659 = vadd.f32 %v2504, %v2619
        %v2660 = vadd.f32 %v2505, %v2622
        %v2661 = vadd.f32 %v2506, %v2625
        %v2662 = vadd.f32 %v2507, %v2628
        %v2663 = vadd.f32 %v2508, %v2631
        %v2664 = vadd.f32 %v2509, %v2634
        %v2665 = vadd.f32 %v2510, %v2637
        %v2666 = vadd.f32 %v2511, %v2640
        %v2667 = vadd.f32 %v2512, %v2643
        %v2668 = vadd.f32 %v2513, %v2646
        %v2669 = vadd.f32 %v2514, %v2649
        %v2670 = vadd.f32 %v2515, %v2652
        %2671 = vst.msk [vmem:[#allocation4] sm:$0xff] %vm1348, %v2654
        %2672 = vst.msk [vmem:[#allocation4 + $0x8] sm:$0xff] %vm1348, %v2655
        %2673 = vst.msk [vmem:[#allocation4 + $0x10] sm:$0xff] %vm1348, %v2656
        %2674 = vst.msk [vmem:[#allocation4 + $0x18] sm:$0xff] %vm1348, %v2657
        %2675 = vst.msk [vmem:[#allocation4 + $0x20] sm:$0xff] %vm1348, %v2658
        %2676 = vst.msk [vmem:[#allocation4 + $0x28] sm:$0xff] %vm1348, %v2659
        %2677 = vst.msk [vmem:[#allocation4 + $0x30] sm:$0xff] %vm1348, %v2660
        %2678 = vst.msk [vmem:[#allocation4 + $0x38] sm:$0xff] %vm1348, %v2661
        %2679 = vst.msk [vmem:[#allocation4 + $0x40] sm:$0xff] %vm1348, %v2662
        %2680 = vst.msk [vmem:[#allocation4 + $0x48] sm:$0xff] %vm1348, %v2663
        %2681 = vst.msk [vmem:[#allocation4 + $0x50] sm:$0xff] %vm1348, %v2664
        %2682 = vst.msk [vmem:[#allocation4 + $0x58] sm:$0xff] %vm1348, %v2665
        %2683 = vst.msk [vmem:[#allocation4 + $0x60] sm:$0xff] %vm1348, %v2666
        %2684 = vst.msk [vmem:[#allocation4 + $0x68] sm:$0xff] %vm1348, %v2667
        %2685 = vst.msk [vmem:[#allocation4 + $0x70] sm:$0xff] %vm1348, %v2668
        %2686 = vst.msk [vmem:[#allocation4 + $0x78] sm:$0xff] %vm1348, %v2669
        %2687 = vst.msk [vmem:[#allocation4 + $0x80] sm:$0xff] %vm1348, %v2670
        %v2688 = vld [vmem:[#allocation4] sm:$0xff]
        %v2689 = vld [vmem:[#allocation4 + $0x8] sm:$0xff]
        %v2690 = vld [vmem:[#allocation4 + $0x10] sm:$0xff]
        %v2691 = vld [vmem:[#allocation4 + $0x18] sm:$0xff]
        %v2692 = vld [vmem:[#allocation4 + $0x20] sm:$0xff]
        %v2693 = vld [vmem:[#allocation4 + $0x28] sm:$0xff]
        %v2694 = vld [vmem:[#allocation4 + $0x30] sm:$0xff]
        %v2695 = vld [vmem:[#allocation4 + $0x38] sm:$0xff]
        %v2696 = vld [vmem:[#allocation4 + $0x40] sm:$0xff]
        %v2697 = vld [vmem:[#allocation4 + $0x48] sm:$0xff]
        %v2698 = vld [vmem:[#allocation4 + $0x50] sm:$0xff]
        %v2699 = vld [vmem:[#allocation4 + $0x58] sm:$0xff]
        %v2700 = vld [vmem:[#allocation4 + $0x60] sm:$0xff]
        %v2701 = vld [vmem:[#allocation4 + $0x68] sm:$0xff]
        %v2702 = vld [vmem:[#allocation4 + $0x70] sm:$0xff]
        %v2703 = vld [vmem:[#allocation4 + $0x78] sm:$0xff]
        %v2704 = vld [vmem:[#allocation4 + $0x80] sm:$0xff]
        %v2705 = vld [vmem:[#allocation3 + $0x10] sm:$0xff]
        %v2706 = vld [vmem:[#allocation3 + $0x18] sm:$0xff]
        %v2707 = vld [vmem:[#allocation3 + $0x20] sm:$0xff]
        %v2708 = vld [vmem:[#allocation3 + $0x28] sm:$0xff]
        %v2709 = vld [vmem:[#allocation3 + $0x30] sm:$0xff]
        %v2710 = vld [vmem:[#allocation3 + $0x38] sm:$0xff]
        %v2711 = vld [vmem:[#allocation3 + $0x40] sm:$0xff]
        %v2712 = vld [vmem:[#allocation3 + $0x48] sm:$0xff]
        %v2713 = vld [vmem:[#allocation3 + $0x50] sm:$0xff]
        %v2714 = vld [vmem:[#allocation3 + $0x58] sm:$0xff]
        %v2715 = vld [vmem:[#allocation3 + $0x60] sm:$0xff]
        %v2716 = vld [vmem:[#allocation3 + $0x68] sm:$0xff]
        %v2717 = vld [vmem:[#allocation3 + $0x70] sm:$0xff]
        %v2718 = vld [vmem:[#allocation3 + $0x78] sm:$0xff]
        %v2719 = vld [vmem:[#allocation3 + $0x80] sm:$0xff]
        %v2720 = vld [vmem:[#allocation3 + $0x88] sm:$0xff]
        %v2721 = vld [vmem:[#allocation3 + $0x90] sm:$0xff]
        %s2722 = scalar_lea.vmem %s3, 56
        %v2723 = vld [vmem:[%s2722] sm:$0xff]
        %v2725 = vsel %vm913, %v2705, 0
        %v2728 = vsel %vm913, %v2706, 0
        %v2731 = vsel %vm913, %v2707, 0
        %v2734 = vsel %vm913, %v2708, 0
        %v2737 = vsel %vm913, %v2709, 0
        %v2740 = vsel %vm913, %v2710, 0
        %v2743 = vsel %vm913, %v2711, 0
        %v2746 = vsel %vm913, %v2712, 0
        %v2749 = vsel %vm913, %v2713, 0
        %v2752 = vsel %vm913, %v2714, 0
        %v2755 = vsel %vm913, %v2715, 0
        %v2758 = vsel %vm913, %v2716, 0
        %v2761 = vsel %vm913, %v2717, 0
        %v2764 = vsel %vm913, %v2718, 0
        %v2767 = vsel %vm913, %v2719, 0
        %v2770 = vsel %vm913, %v2720, 0
        %v2773 = vsel %vm913, %v2721, 0
        %2775 = vmatpush.msra.mxu0 0.0
        %2776 = vmatpush.msra.mxu0 0.0
        %2777 = vmatpush.msra.mxu0 0.0
        %2778 = vmatpush.msra.mxu0 0.0
        %2779 = vmatpush.msra.mxu0 0.0
        %2780 = vmatpush.msra.mxu0 0.0
        %2781 = vmatpush.msra.mxu0 0.0
        %2782 = vmatpush.msra.mxu0 0.0
        %2783 = vmatpush.msra.mxu0 0.0
        %2784 = vmatpush.msra.mxu0 0.0
        %2785 = vmatpush.msra.mxu0 0.0
        %2786 = vmatpush.msra.mxu0 0.0
        %2787 = vmatpush.msra.mxu0 0.0
        %2788 = vmatpush.msra.mxu0 0.0
        %2789 = vmatpush.msra.mxu0 0.0
        %2790 = vmatpush.msra.mxu0 %v2723
        %2791 = vmatmul.f32.gmra.mxu0 %v2725
        %v2792 = vpop.f32.mrf.mxu0
        %v2793 = vadd.f32 0.0, %v2792
        %2794 = vmatmul.f32.gmra.mxu0 %v2728
        %v2795 = vpop.f32.mrf.mxu0
        %v2796 = vadd.f32 0.0, %v2795
        %2797 = vmatmul.f32.gmra.mxu0 %v2731
        %v2798 = vpop.f32.mrf.mxu0
        %v2799 = vadd.f32 0.0, %v2798
        %2800 = vmatmul.f32.gmra.mxu0 %v2734
        %v2801 = vpop.f32.mrf.mxu0
        %v2802 = vadd.f32 0.0, %v2801
        %2803 = vmatmul.f32.gmra.mxu0 %v2737
        %v2804 = vpop.f32.mrf.mxu0
        %v2805 = vadd.f32 0.0, %v2804
        %2806 = vmatmul.f32.gmra.mxu0 %v2740
        %v2807 = vpop.f32.mrf.mxu0
        %v2808 = vadd.f32 0.0, %v2807
        %2809 = vmatmul.f32.gmra.mxu0 %v2743
        %v2810 = vpop.f32.mrf.mxu0
        %v2811 = vadd.f32 0.0, %v2810
        %2812 = vmatmul.f32.gmra.mxu0 %v2746
        %v2813 = vpop.f32.mrf.mxu0
        %v2814 = vadd.f32 0.0, %v2813
        %2815 = vmatmul.f32.gmra.mxu0 %v2749
        %v2816 = vpop.f32.mrf.mxu0
        %v2817 = vadd.f32 0.0, %v2816
        %2818 = vmatmul.f32.gmra.mxu0 %v2752
        %v2819 = vpop.f32.mrf.mxu0
        %v2820 = vadd.f32 0.0, %v2819
        %2821 = vmatmul.f32.gmra.mxu0 %v2755
        %v2822 = vpop.f32.mrf.mxu0
        %v2823 = vadd.f32 0.0, %v2822
        %2824 = vmatmul.f32.gmra.mxu0 %v2758
        %v2825 = vpop.f32.mrf.mxu0
        %v2826 = vadd.f32 0.0, %v2825
        %2827 = vmatmul.f32.gmra.mxu0 %v2761
        %v2828 = vpop.f32.mrf.mxu0
        %v2829 = vadd.f32 0.0, %v2828
        %2830 = vmatmul.f32.gmra.mxu0 %v2764
        %v2831 = vpop.f32.mrf.mxu0
        %v2832 = vadd.f32 0.0, %v2831
        %2833 = vmatmul.f32.gmra.mxu0 %v2767
        %v2834 = vpop.f32.mrf.mxu0
        %v2835 = vadd.f32 0.0, %v2834
        %2836 = vmatmul.f32.gmra.mxu0 %v2770
        %v2837 = vpop.f32.mrf.mxu0
        %v2838 = vadd.f32 0.0, %v2837
        %2839 = vmatmul.f32.gmra.mxu0 %v2773
        %v2840 = vpop.f32.mrf.mxu0
        %v2841 = vadd.f32 0.0, %v2840
        %2842 = vdwg.mxu0
        %v2843 = vadd.f32 %v2688, %v2793
        %v2844 = vadd.f32 %v2689, %v2796
        %v2845 = vadd.f32 %v2690, %v2799
        %v2846 = vadd.f32 %v2691, %v2802
        %v2847 = vadd.f32 %v2692, %v2805
        %v2848 = vadd.f32 %v2693, %v2808
        %v2849 = vadd.f32 %v2694, %v2811
        %v2850 = vadd.f32 %v2695, %v2814
        %v2851 = vadd.f32 %v2696, %v2817
        %v2852 = vadd.f32 %v2697, %v2820
        %v2853 = vadd.f32 %v2698, %v2823
        %v2854 = vadd.f32 %v2699, %v2826
        %v2855 = vadd.f32 %v2700, %v2829
        %v2856 = vadd.f32 %v2701, %v2832
        %v2857 = vadd.f32 %v2702, %v2835
        %v2858 = vadd.f32 %v2703, %v2838
        %v2859 = vadd.f32 %v2704, %v2841
        %2860 = vst.msk [vmem:[#allocation4] sm:$0xff] %vm1348, %v2843
        %2861 = vst.msk [vmem:[#allocation4 + $0x8] sm:$0xff] %vm1348, %v2844
        %2862 = vst.msk [vmem:[#allocation4 + $0x10] sm:$0xff] %vm1348, %v2845
        %2863 = vst.msk [vmem:[#allocation4 + $0x18] sm:$0xff] %vm1348, %v2846
        %2864 = vst.msk [vmem:[#allocation4 + $0x20] sm:$0xff] %vm1348, %v2847
        %2865 = vst.msk [vmem:[#allocation4 + $0x28] sm:$0xff] %vm1348, %v2848
        %2866 = vst.msk [vmem:[#allocation4 + $0x30] sm:$0xff] %vm1348, %v2849
        %2867 = vst.msk [vmem:[#allocation4 + $0x38] sm:$0xff] %vm1348, %v2850
        %2868 = vst.msk [vmem:[#allocation4 + $0x40] sm:$0xff] %vm1348, %v2851
        %2869 = vst.msk [vmem:[#allocation4 + $0x48] sm:$0xff] %vm1348, %v2852
        %2870 = vst.msk [vmem:[#allocation4 + $0x50] sm:$0xff] %vm1348, %v2853
        %2871 = vst.msk [vmem:[#allocation4 + $0x58] sm:$0xff] %vm1348, %v2854
        %2872 = vst.msk [vmem:[#allocation4 + $0x60] sm:$0xff] %vm1348, %v2855
        %2873 = vst.msk [vmem:[#allocation4 + $0x68] sm:$0xff] %vm1348, %v2856
        %2874 = vst.msk [vmem:[#allocation4 + $0x70] sm:$0xff] %vm1348, %v2857
        %2875 = vst.msk [vmem:[#allocation4 + $0x78] sm:$0xff] %vm1348, %v2858
        %2876 = vst.msk [vmem:[#allocation4 + $0x80] sm:$0xff] %vm1348, %v2859
        %v2877 = vld [vmem:[#allocation4] sm:$0xff]
        %v2878 = vld [vmem:[#allocation4 + $0x8] sm:$0xff]
        %v2879 = vld [vmem:[#allocation4 + $0x10] sm:$0xff]
        %v2880 = vld [vmem:[#allocation4 + $0x18] sm:$0xff]
        %v2881 = vld [vmem:[#allocation4 + $0x20] sm:$0xff]
        %v2882 = vld [vmem:[#allocation4 + $0x28] sm:$0xff]
        %v2883 = vld [vmem:[#allocation4 + $0x30] sm:$0xff]
        %v2884 = vld [vmem:[#allocation4 + $0x38] sm:$0xff]
        %v2885 = vld [vmem:[#allocation4 + $0x40] sm:$0xff]
        %v2886 = vld [vmem:[#allocation4 + $0x48] sm:$0xff]
        %v2887 = vld [vmem:[#allocation4 + $0x50] sm:$0xff]
        %v2888 = vld [vmem:[#allocation4 + $0x58] sm:$0xff]
        %v2889 = vld [vmem:[#allocation4 + $0x60] sm:$0xff]
        %v2890 = vld [vmem:[#allocation4 + $0x68] sm:$0xff]
        %v2891 = vld [vmem:[#allocation4 + $0x70] sm:$0xff]
        %v2892 = vld [vmem:[#allocation4 + $0x78] sm:$0xff]
        %v2893 = vld [vmem:[#allocation4 + $0x80] sm:$0xff]
        %v2894 = vld [vmem:[#allocation3 + $0x11] sm:$0xff]
        %v2895 = vld [vmem:[#allocation3 + $0x19] sm:$0xff]
        %v2896 = vld [vmem:[#allocation3 + $0x21] sm:$0xff]
        %v2897 = vld [vmem:[#allocation3 + $0x29] sm:$0xff]
        %v2898 = vld [vmem:[#allocation3 + $0x31] sm:$0xff]
        %v2899 = vld [vmem:[#allocation3 + $0x39] sm:$0xff]
        %v2900 = vld [vmem:[#allocation3 + $0x41] sm:$0xff]
        %v2901 = vld [vmem:[#allocation3 + $0x49] sm:$0xff]
        %v2902 = vld [vmem:[#allocation3 + $0x51] sm:$0xff]
        %v2903 = vld [vmem:[#allocation3 + $0x59] sm:$0xff]
        %v2904 = vld [vmem:[#allocation3 + $0x61] sm:$0xff]
        %v2905 = vld [vmem:[#allocation3 + $0x69] sm:$0xff]
        %v2906 = vld [vmem:[#allocation3 + $0x71] sm:$0xff]
        %v2907 = vld [vmem:[#allocation3 + $0x79] sm:$0xff]
        %v2908 = vld [vmem:[#allocation3 + $0x81] sm:$0xff]
        %v2909 = vld [vmem:[#allocation3 + $0x89] sm:$0xff]
        %v2910 = vld [vmem:[#allocation3 + $0x91] sm:$0xff]
        %s2911 = scalar_lea.vmem %s3, 64
        %v2912 = vld [vmem:[%s2911] sm:$0xff]
        %v2914 = vsel %vm913, %v2894, 0
        %v2917 = vsel %vm913, %v2895, 0
        %v2920 = vsel %vm913, %v2896, 0
        %v2923 = vsel %vm913, %v2897, 0
        %v2926 = vsel %vm913, %v2898, 0
        %v2929 = vsel %vm913, %v2899, 0
        %v2932 = vsel %vm913, %v2900, 0
        %v2935 = vsel %vm913, %v2901, 0
        %v2938 = vsel %vm913, %v2902, 0
        %v2941 = vsel %vm913, %v2903, 0
        %v2944 = vsel %vm913, %v2904, 0
        %v2947 = vsel %vm913, %v2905, 0
        %v2950 = vsel %vm913, %v2906, 0
        %v2953 = vsel %vm913, %v2907, 0
        %v2956 = vsel %vm913, %v2908, 0
        %v2959 = vsel %vm913, %v2909, 0
        %v2962 = vsel %vm913, %v2910, 0
        %2964 = vmatpush.msra.mxu0 0.0
        %2965 = vmatpush.msra.mxu0 0.0
        %2966 = vmatpush.msra.mxu0 0.0
        %2967 = vmatpush.msra.mxu0 0.0
        %2968 = vmatpush.msra.mxu0 0.0
        %2969 = vmatpush.msra.mxu0 0.0
        %2970 = vmatpush.msra.mxu0 0.0
        %2971 = vmatpush.msra.mxu0 0.0
        %2972 = vmatpush.msra.mxu0 0.0
        %2973 = vmatpush.msra.mxu0 0.0
        %2974 = vmatpush.msra.mxu0 0.0
        %2975 = vmatpush.msra.mxu0 0.0
        %2976 = vmatpush.msra.mxu0 0.0
        %2977 = vmatpush.msra.mxu0 0.0
        %2978 = vmatpush.msra.mxu0 0.0
        %2979 = vmatpush.msra.mxu0 %v2912
        %2980 = vmatmul.f32.gmra.mxu0 %v2914
        %v2981 = vpop.f32.mrf.mxu0
        %v2982 = vadd.f32 0.0, %v2981
        %2983 = vmatmul.f32.gmra.mxu0 %v2917
        %v2984 = vpop.f32.mrf.mxu0
        %v2985 = vadd.f32 0.0, %v2984
        %2986 = vmatmul.f32.gmra.mxu0 %v2920
        %v2987 = vpop.f32.mrf.mxu0
        %v2988 = vadd.f32 0.0, %v2987
        %2989 = vmatmul.f32.gmra.mxu0 %v2923
        %v2990 = vpop.f32.mrf.mxu0
        %v2991 = vadd.f32 0.0, %v2990
        %2992 = vmatmul.f32.gmra.mxu0 %v2926
        %v2993 = vpop.f32.mrf.mxu0
        %v2994 = vadd.f32 0.0, %v2993
        %2995 = vmatmul.f32.gmra.mxu0 %v2929
        %v2996 = vpop.f32.mrf.mxu0
        %v2997 = vadd.f32 0.0, %v2996
        %2998 = vmatmul.f32.gmra.mxu0 %v2932
        %v2999 = vpop.f32.mrf.mxu0
        %v3000 = vadd.f32 0.0, %v2999
        %3001 = vmatmul.f32.gmra.mxu0 %v2935
        %v3002 = vpop.f32.mrf.mxu0
        %v3003 = vadd.f32 0.0, %v3002
        %3004 = vmatmul.f32.gmra.mxu0 %v2938
        %v3005 = vpop.f32.mrf.mxu0
        %v3006 = vadd.f32 0.0, %v3005
        %3007 = vmatmul.f32.gmra.mxu0 %v2941
        %v3008 = vpop.f32.mrf.mxu0
        %v3009 = vadd.f32 0.0, %v3008
        %3010 = vmatmul.f32.gmra.mxu0 %v2944
        %v3011 = vpop.f32.mrf.mxu0
        %v3012 = vadd.f32 0.0, %v3011
        %3013 = vmatmul.f32.gmra.mxu0 %v2947
        %v3014 = vpop.f32.mrf.mxu0
        %v3015 = vadd.f32 0.0, %v3014
        %3016 = vmatmul.f32.gmra.mxu0 %v2950
        %v3017 = vpop.f32.mrf.mxu0
        %v3018 = vadd.f32 0.0, %v3017
        %3019 = vmatmul.f32.gmra.mxu0 %v2953
        %v3020 = vpop.f32.mrf.mxu0
        %v3021 = vadd.f32 0.0, %v3020
        %3022 = vmatmul.f32.gmra.mxu0 %v2956
        %v3023 = vpop.f32.mrf.mxu0
        %v3024 = vadd.f32 0.0, %v3023
        %3025 = vmatmul.f32.gmra.mxu0 %v2959
        %v3026 = vpop.f32.mrf.mxu0
        %v3027 = vadd.f32 0.0, %v3026
        %3028 = vmatmul.f32.gmra.mxu0 %v2962
        %v3029 = vpop.f32.mrf.mxu0
        %v3030 = vadd.f32 0.0, %v3029
        %3031 = vdwg.mxu0
        %v3032 = vadd.f32 %v2877, %v2982
        %v3033 = vadd.f32 %v2878, %v2985
        %v3034 = vadd.f32 %v2879, %v2988
        %v3035 = vadd.f32 %v2880, %v2991
        %v3036 = vadd.f32 %v2881, %v2994
        %v3037 = vadd.f32 %v2882, %v2997
        %v3038 = vadd.f32 %v2883, %v3000
        %v3039 = vadd.f32 %v2884, %v3003
        %v3040 = vadd.f32 %v2885, %v3006
        %v3041 = vadd.f32 %v2886, %v3009
        %v3042 = vadd.f32 %v2887, %v3012
        %v3043 = vadd.f32 %v2888, %v3015
        %v3044 = vadd.f32 %v2889, %v3018
        %v3045 = vadd.f32 %v2890, %v3021
        %v3046 = vadd.f32 %v2891, %v3024
        %v3047 = vadd.f32 %v2892, %v3027
        %v3048 = vadd.f32 %v2893, %v3030
        %3049 = vst.msk [vmem:[#allocation4] sm:$0xff] %vm1348, %v3032
        %3050 = vst.msk [vmem:[#allocation4 + $0x8] sm:$0xff] %vm1348, %v3033
        %3051 = vst.msk [vmem:[#allocation4 + $0x10] sm:$0xff] %vm1348, %v3034
        %3052 = vst.msk [vmem:[#allocation4 + $0x18] sm:$0xff] %vm1348, %v3035
        %3053 = vst.msk [vmem:[#allocation4 + $0x20] sm:$0xff] %vm1348, %v3036
        %3054 = vst.msk [vmem:[#allocation4 + $0x28] sm:$0xff] %vm1348, %v3037
        %3055 = vst.msk [vmem:[#allocation4 + $0x30] sm:$0xff] %vm1348, %v3038
        %3056 = vst.msk [vmem:[#allocation4 + $0x38] sm:$0xff] %vm1348, %v3039
        %3057 = vst.msk [vmem:[#allocation4 + $0x40] sm:$0xff] %vm1348, %v3040
        %3058 = vst.msk [vmem:[#allocation4 + $0x48] sm:$0xff] %vm1348, %v3041
        %3059 = vst.msk [vmem:[#allocation4 + $0x50] sm:$0xff] %vm1348, %v3042
        %3060 = vst.msk [vmem:[#allocation4 + $0x58] sm:$0xff] %vm1348, %v3043
        %3061 = vst.msk [vmem:[#allocation4 + $0x60] sm:$0xff] %vm1348, %v3044
        %3062 = vst.msk [vmem:[#allocation4 + $0x68] sm:$0xff] %vm1348, %v3045
        %3063 = vst.msk [vmem:[#allocation4 + $0x70] sm:$0xff] %vm1348, %v3046
        %3064 = vst.msk [vmem:[#allocation4 + $0x78] sm:$0xff] %vm1348, %v3047
        %3065 = vst.msk [vmem:[#allocation4 + $0x80] sm:$0xff] %vm1348, %v3048
        %v3066 = vld [vmem:[#allocation4] sm:$0xff]
        %v3067 = vld [vmem:[#allocation4 + $0x8] sm:$0xff]
        %v3068 = vld [vmem:[#allocation4 + $0x10] sm:$0xff]
        %v3069 = vld [vmem:[#allocation4 + $0x18] sm:$0xff]
        %v3070 = vld [vmem:[#allocation4 + $0x20] sm:$0xff]
        %v3071 = vld [vmem:[#allocation4 + $0x28] sm:$0xff]
        %v3072 = vld [vmem:[#allocation4 + $0x30] sm:$0xff]
        %v3073 = vld [vmem:[#allocation4 + $0x38] sm:$0xff]
        %v3074 = vld [vmem:[#allocation4 + $0x40] sm:$0xff]
        %v3075 = vld [vmem:[#allocation4 + $0x48] sm:$0xff]
        %v3076 = vld [vmem:[#allocation4 + $0x50] sm:$0xff]
        %v3077 = vld [vmem:[#allocation4 + $0x58] sm:$0xff]
        %v3078 = vld [vmem:[#allocation4 + $0x60] sm:$0xff]
        %v3079 = vld [vmem:[#allocation4 + $0x68] sm:$0xff]
        %v3080 = vld [vmem:[#allocation4 + $0x70] sm:$0xff]
        %v3081 = vld [vmem:[#allocation4 + $0x78] sm:$0xff]
        %v3082 = vld [vmem:[#allocation4 + $0x80] sm:$0xff]
        %v3083 = vld [vmem:[#allocation3 + $0x12] sm:$0xff]
        %v3084 = vld [vmem:[#allocation3 + $0x1a] sm:$0xff]
        %v3085 = vld [vmem:[#allocation3 + $0x22] sm:$0xff]
        %v3086 = vld [vmem:[#allocation3 + $0x2a] sm:$0xff]
        %v3087 = vld [vmem:[#allocation3 + $0x32] sm:$0xff]
        %v3088 = vld [vmem:[#allocation3 + $0x3a] sm:$0xff]
        %v3089 = vld [vmem:[#allocation3 + $0x42] sm:$0xff]
        %v3090 = vld [vmem:[#allocation3 + $0x4a] sm:$0xff]
        %v3091 = vld [vmem:[#allocation3 + $0x52] sm:$0xff]
        %v3092 = vld [vmem:[#allocation3 + $0x5a] sm:$0xff]
        %v3093 = vld [vmem:[#allocation3 + $0x62] sm:$0xff]
        %v3094 = vld [vmem:[#allocation3 + $0x6a] sm:$0xff]
        %v3095 = vld [vmem:[#allocation3 + $0x72] sm:$0xff]
        %v3096 = vld [vmem:[#allocation3 + $0x7a] sm:$0xff]
        %v3097 = vld [vmem:[#allocation3 + $0x82] sm:$0xff]
        %v3098 = vld [vmem:[#allocation3 + $0x8a] sm:$0xff]
        %v3099 = vld [vmem:[#allocation3 + $0x92] sm:$0xff]
        %s3100 = scalar_lea.vmem %s3, 72
        %v3101 = vld [vmem:[%s3100] sm:$0xff]
        %v3103 = vsel %vm913, %v3083, 0
        %v3106 = vsel %vm913, %v3084, 0
        %v3109 = vsel %vm913, %v3085, 0
        %v3112 = vsel %vm913, %v3086, 0
        %v3115 = vsel %vm913, %v3087, 0
        %v3118 = vsel %vm913, %v3088, 0
        %v3121 = vsel %vm913, %v3089, 0
        %v3124 = vsel %vm913, %v3090, 0
        %v3127 = vsel %vm913, %v3091, 0
        %v3130 = vsel %vm913, %v3092, 0
        %v3133 = vsel %vm913, %v3093, 0
        %v3136 = vsel %vm913, %v3094, 0
        %v3139 = vsel %vm913, %v3095, 0
        %v3142 = vsel %vm913, %v3096, 0
        %v3145 = vsel %vm913, %v3097, 0
        %v3148 = vsel %vm913, %v3098, 0
        %v3151 = vsel %vm913, %v3099, 0
        %3153 = vmatpush.msra.mxu0 0.0
        %3154 = vmatpush.msra.mxu0 0.0
        %3155 = vmatpush.msra.mxu0 0.0
        %3156 = vmatpush.msra.mxu0 0.0
        %3157 = vmatpush.msra.mxu0 0.0
        %3158 = vmatpush.msra.mxu0 0.0
        %3159 = vmatpush.msra.mxu0 0.0
        %3160 = vmatpush.msra.mxu0 0.0
        %3161 = vmatpush.msra.mxu0 0.0
        %3162 = vmatpush.msra.mxu0 0.0
        %3163 = vmatpush.msra.mxu0 0.0
        %3164 = vmatpush.msra.mxu0 0.0
        %3165 = vmatpush.msra.mxu0 0.0
        %3166 = vmatpush.msra.mxu0 0.0
        %3167 = vmatpush.msra.mxu0 0.0
        %3168 = vmatpush.msra.mxu0 %v3101
        %3169 = vmatmul.f32.gmra.mxu0 %v3103
        %v3170 = vpop.f32.mrf.mxu0
        %v3171 = vadd.f32 0.0, %v3170
        %3172 = vmatmul.f32.gmra.mxu0 %v3106
        %v3173 = vpop.f32.mrf.mxu0
        %v3174 = vadd.f32 0.0, %v3173
        %3175 = vmatmul.f32.gmra.mxu0 %v3109
        %v3176 = vpop.f32.mrf.mxu0
        %v3177 = vadd.f32 0.0, %v3176
        %3178 = vmatmul.f32.gmra.mxu0 %v3112
        %v3179 = vpop.f32.mrf.mxu0
        %v3180 = vadd.f32 0.0, %v3179
        %3181 = vmatmul.f32.gmra.mxu0 %v3115
        %v3182 = vpop.f32.mrf.mxu0
        %v3183 = vadd.f32 0.0, %v3182
        %3184 = vmatmul.f32.gmra.mxu0 %v3118
        %v3185 = vpop.f32.mrf.mxu0
        %v3186 = vadd.f32 0.0, %v3185
        %3187 = vmatmul.f32.gmra.mxu0 %v3121
        %v3188 = vpop.f32.mrf.mxu0
        %v3189 = vadd.f32 0.0, %v3188
        %3190 = vmatmul.f32.gmra.mxu0 %v3124
        %v3191 = vpop.f32.mrf.mxu0
        %v3192 = vadd.f32 0.0, %v3191
        %3193 = vmatmul.f32.gmra.mxu0 %v3127
        %v3194 = vpop.f32.mrf.mxu0
        %v3195 = vadd.f32 0.0, %v3194
        %3196 = vmatmul.f32.gmra.mxu0 %v3130
        %v3197 = vpop.f32.mrf.mxu0
        %v3198 = vadd.f32 0.0, %v3197
        %3199 = vmatmul.f32.gmra.mxu0 %v3133
        %v3200 = vpop.f32.mrf.mxu0
        %v3201 = vadd.f32 0.0, %v3200
        %3202 = vmatmul.f32.gmra.mxu0 %v3136
        %v3203 = vpop.f32.mrf.mxu0
        %v3204 = vadd.f32 0.0, %v3203
        %3205 = vmatmul.f32.gmra.mxu0 %v3139
        %v3206 = vpop.f32.mrf.mxu0
        %v3207 = vadd.f32 0.0, %v3206
        %3208 = vmatmul.f32.gmra.mxu0 %v3142
        %v3209 = vpop.f32.mrf.mxu0
        %v3210 = vadd.f32 0.0, %v3209
        %3211 = vmatmul.f32.gmra.mxu0 %v3145
        %v3212 = vpop.f32.mrf.mxu0
        %v3213 = vadd.f32 0.0, %v3212
        %3214 = vmatmul.f32.gmra.mxu0 %v3148
        %v3215 = vpop.f32.mrf.mxu0
        %v3216 = vadd.f32 0.0, %v3215
        %3217 = vmatmul.f32.gmra.mxu0 %v3151
        %v3218 = vpop.f32.mrf.mxu0
        %v3219 = vadd.f32 0.0, %v3218
        %3220 = vdwg.mxu0
        %v3221 = vadd.f32 %v3066, %v3171
        %v3222 = vadd.f32 %v3067, %v3174
        %v3223 = vadd.f32 %v3068, %v3177
        %v3224 = vadd.f32 %v3069, %v3180
        %v3225 = vadd.f32 %v3070, %v3183
        %v3226 = vadd.f32 %v3071, %v3186
        %v3227 = vadd.f32 %v3072, %v3189
        %v3228 = vadd.f32 %v3073, %v3192
        %v3229 = vadd.f32 %v3074, %v3195
        %v3230 = vadd.f32 %v3075, %v3198
        %v3231 = vadd.f32 %v3076, %v3201
        %v3232 = vadd.f32 %v3077, %v3204
        %v3233 = vadd.f32 %v3078, %v3207
        %v3234 = vadd.f32 %v3079, %v3210
        %v3235 = vadd.f32 %v3080, %v3213
        %v3236 = vadd.f32 %v3081, %v3216
        %v3237 = vadd.f32 %v3082, %v3219
        %3238 = vst.msk [vmem:[#allocation4] sm:$0xff] %vm1348, %v3221
        %3239 = vst.msk [vmem:[#allocation4 + $0x8] sm:$0xff] %vm1348, %v3222
        %3240 = vst.msk [vmem:[#allocation4 + $0x10] sm:$0xff] %vm1348, %v3223
        %3241 = vst.msk [vmem:[#allocation4 + $0x18] sm:$0xff] %vm1348, %v3224
        %3242 = vst.msk [vmem:[#allocation4 + $0x20] sm:$0xff] %vm1348, %v3225
        %3243 = vst.msk [vmem:[#allocation4 + $0x28] sm:$0xff] %vm1348, %v3226
        %3244 = vst.msk [vmem:[#allocation4 + $0x30] sm:$0xff] %vm1348, %v3227
        %3245 = vst.msk [vmem:[#allocation4 + $0x38] sm:$0xff] %vm1348, %v3228
        %3246 = vst.msk [vmem:[#allocation4 + $0x40] sm:$0xff] %vm1348, %v3229
        %3247 = vst.msk [vmem:[#allocation4 + $0x48] sm:$0xff] %vm1348, %v3230
        %3248 = vst.msk [vmem:[#allocation4 + $0x50] sm:$0xff] %vm1348, %v3231
        %3249 = vst.msk [vmem:[#allocation4 + $0x58] sm:$0xff] %vm1348, %v3232
        %3250 = vst.msk [vmem:[#allocation4 + $0x60] sm:$0xff] %vm1348, %v3233
        %3251 = vst.msk [vmem:[#allocation4 + $0x68] sm:$0xff] %vm1348, %v3234
        %3252 = vst.msk [vmem:[#allocation4 + $0x70] sm:$0xff] %vm1348, %v3235
        %3253 = vst.msk [vmem:[#allocation4 + $0x78] sm:$0xff] %vm1348, %v3236
        %3254 = vst.msk [vmem:[#allocation4 + $0x80] sm:$0xff] %vm1348, %v3237
        %v3255 = vld [vmem:[#allocation4] sm:$0xff]
        %v3256 = vld [vmem:[#allocation4 + $0x8] sm:$0xff]
        %v3257 = vld [vmem:[#allocation4 + $0x10] sm:$0xff]
        %v3258 = vld [vmem:[#allocation4 + $0x18] sm:$0xff]
        %v3259 = vld [vmem:[#allocation4 + $0x20] sm:$0xff]
        %v3260 = vld [vmem:[#allocation4 + $0x28] sm:$0xff]
        %v3261 = vld [vmem:[#allocation4 + $0x30] sm:$0xff]
        %v3262 = vld [vmem:[#allocation4 + $0x38] sm:$0xff]
        %v3263 = vld [vmem:[#allocation4 + $0x40] sm:$0xff]
        %v3264 = vld [vmem:[#allocation4 + $0x48] sm:$0xff]
        %v3265 = vld [vmem:[#allocation4 + $0x50] sm:$0xff]
        %v3266 = vld [vmem:[#allocation4 + $0x58] sm:$0xff]
        %v3267 = vld [vmem:[#allocation4 + $0x60] sm:$0xff]
        %v3268 = vld [vmem:[#allocation4 + $0x68] sm:$0xff]
        %v3269 = vld [vmem:[#allocation4 + $0x70] sm:$0xff]
        %v3270 = vld [vmem:[#allocation4 + $0x78] sm:$0xff]
        %v3271 = vld [vmem:[#allocation4 + $0x80] sm:$0xff]
        %v3272 = vld [vmem:[#allocation3 + $0x1c] sm:$0xff]
        %v3273 = vld [vmem:[#allocation3 + $0x24] sm:$0xff]
        %v3274 = vld [vmem:[#allocation3 + $0x2c] sm:$0xff]
        %v3275 = vld [vmem:[#allocation3 + $0x34] sm:$0xff]
        %v3276 = vld [vmem:[#allocation3 + $0x3c] sm:$0xff]
        %v3277 = vld [vmem:[#allocation3 + $0x44] sm:$0xff]
        %v3278 = vld [vmem:[#allocation3 + $0x4c] sm:$0xff]
        %v3279 = vld [vmem:[#allocation3 + $0x54] sm:$0xff]
        %v3280 = vld [vmem:[#allocation3 + $0x5c] sm:$0xff]
        %v3281 = vld [vmem:[#allocation3 + $0x64] sm:$0xff]
        %v3282 = vld [vmem:[#allocation3 + $0x6c] sm:$0xff]
        %v3283 = vld [vmem:[#allocation3 + $0x74] sm:$0xff]
        %v3284 = vld [vmem:[#allocation3 + $0x7c] sm:$0xff]
        %v3285 = vld [vmem:[#allocation3 + $0x84] sm:$0xff]
        %v3286 = vld [vmem:[#allocation3 + $0x8c] sm:$0xff]
        %v3287 = vld [vmem:[#allocation3 + $0x94] sm:$0xff]
        %v3288 = vld [vmem:[#allocation3 + $0x9c] sm:$0xff]
        %s3289 = scalar_lea.vmem %s3, 80
        %v3290 = vld [vmem:[%s3289] sm:$0xff]
        %v3292 = vsel %vm913, %v3272, 0
        %v3295 = vsel %vm913, %v3273, 0
        %v3298 = vsel %vm913, %v3274, 0
        %v3301 = vsel %vm913, %v3275, 0
        %v3304 = vsel %vm913, %v3276, 0
        %v3307 = vsel %vm913, %v3277, 0
        %v3310 = vsel %vm913, %v3278, 0
        %v3313 = vsel %vm913, %v3279, 0
        %v3316 = vsel %vm913, %v3280, 0
        %v3319 = vsel %vm913, %v3281, 0
        %v3322 = vsel %vm913, %v3282, 0
        %v3325 = vsel %vm913, %v3283, 0
        %v3328 = vsel %vm913, %v3284, 0
        %v3331 = vsel %vm913, %v3285, 0
        %v3334 = vsel %vm913, %v3286, 0
        %v3337 = vsel %vm913, %v3287, 0
        %v3340 = vsel %vm913, %v3288, 0
        %3342 = vmatpush.msra.mxu0 0.0
        %3343 = vmatpush.msra.mxu0 0.0
        %3344 = vmatpush.msra.mxu0 0.0
        %3345 = vmatpush.msra.mxu0 0.0
        %3346 = vmatpush.msra.mxu0 0.0
        %3347 = vmatpush.msra.mxu0 0.0
        %3348 = vmatpush.msra.mxu0 0.0
        %3349 = vmatpush.msra.mxu0 0.0
        %3350 = vmatpush.msra.mxu0 0.0
        %3351 = vmatpush.msra.mxu0 0.0
        %3352 = vmatpush.msra.mxu0 0.0
        %3353 = vmatpush.msra.mxu0 0.0
        %3354 = vmatpush.msra.mxu0 0.0
        %3355 = vmatpush.msra.mxu0 0.0
        %3356 = vmatpush.msra.mxu0 0.0
        %3357 = vmatpush.msra.mxu0 %v3290
        %3358 = vmatmul.f32.gmra.mxu0 %v3292
        %v3359 = vpop.f32.mrf.mxu0
        %v3360 = vadd.f32 0.0, %v3359
        %3361 = vmatmul.f32.gmra.mxu0 %v3295
        %v3362 = vpop.f32.mrf.mxu0
        %v3363 = vadd.f32 0.0, %v3362
        %3364 = vmatmul.f32.gmra.mxu0 %v3298
        %v3365 = vpop.f32.mrf.mxu0
        %v3366 = vadd.f32 0.0, %v3365
        %3367 = vmatmul.f32.gmra.mxu0 %v3301
        %v3368 = vpop.f32.mrf.mxu0
        %v3369 = vadd.f32 0.0, %v3368
        %3370 = vmatmul.f32.gmra.mxu0 %v3304
        %v3371 = vpop.f32.mrf.mxu0
        %v3372 = vadd.f32 0.0, %v3371
        %3373 = vmatmul.f32.gmra.mxu0 %v3307
        %v3374 = vpop.f32.mrf.mxu0
        %v3375 = vadd.f32 0.0, %v3374
        %3376 = vmatmul.f32.gmra.mxu0 %v3310
        %v3377 = vpop.f32.mrf.mxu0
        %v3378 = vadd.f32 0.0, %v3377
        %3379 = vmatmul.f32.gmra.mxu0 %v3313
        %v3380 = vpop.f32.mrf.mxu0
        %v3381 = vadd.f32 0.0, %v3380
        %3382 = vmatmul.f32.gmra.mxu0 %v3316
        %v3383 = vpop.f32.mrf.mxu0
        %v3384 = vadd.f32 0.0, %v3383
        %3385 = vmatmul.f32.gmra.mxu0 %v3319
        %v3386 = vpop.f32.mrf.mxu0
        %v3387 = vadd.f32 0.0, %v3386
        %3388 = vmatmul.f32.gmra.mxu0 %v3322
        %v3389 = vpop.f32.mrf.mxu0
        %v3390 = vadd.f32 0.0, %v3389
        %3391 = vmatmul.f32.gmra.mxu0 %v3325
        %v3392 = vpop.f32.mrf.mxu0
        %v3393 = vadd.f32 0.0, %v3392
        %3394 = vmatmul.f32.gmra.mxu0 %v3328
        %v3395 = vpop.f32.mrf.mxu0
        %v3396 = vadd.f32 0.0, %v3395
        %3397 = vmatmul.f32.gmra.mxu0 %v3331
        %v3398 = vpop.f32.mrf.mxu0
        %v3399 = vadd.f32 0.0, %v3398
        %3400 = vmatmul.f32.gmra.mxu0 %v3334
        %v3401 = vpop.f32.mrf.mxu0
        %v3402 = vadd.f32 0.0, %v3401
        %3403 = vmatmul.f32.gmra.mxu0 %v3337
        %v3404 = vpop.f32.mrf.mxu0
        %v3405 = vadd.f32 0.0, %v3404
        %3406 = vmatmul.f32.gmra.mxu0 %v3340
        %v3407 = vpop.f32.mrf.mxu0
        %v3408 = vadd.f32 0.0, %v3407
        %3409 = vdwg.mxu0
        %v3410 = vadd.f32 %v3255, %v3360
        %v3411 = vadd.f32 %v3256, %v3363
        %v3412 = vadd.f32 %v3257, %v3366
        %v3413 = vadd.f32 %v3258, %v3369
        %v3414 = vadd.f32 %v3259, %v3372
        %v3415 = vadd.f32 %v3260, %v3375
        %v3416 = vadd.f32 %v3261, %v3378
        %v3417 = vadd.f32 %v3262, %v3381
        %v3418 = vadd.f32 %v3263, %v3384
        %v3419 = vadd.f32 %v3264, %v3387
        %v3420 = vadd.f32 %v3265, %v3390
        %v3421 = vadd.f32 %v3266, %v3393
        %v3422 = vadd.f32 %v3267, %v3396
        %v3423 = vadd.f32 %v3268, %v3399
        %v3424 = vadd.f32 %v3269, %v3402
        %v3425 = vadd.f32 %v3270, %v3405
        %v3426 = vadd.f32 %v3271, %v3408
        %3427 = vst.msk [vmem:[#allocation4] sm:$0xff] %vm1348, %v3410
        %3428 = vst.msk [vmem:[#allocation4 + $0x8] sm:$0xff] %vm1348, %v3411
        %3429 = vst.msk [vmem:[#allocation4 + $0x10] sm:$0xff] %vm1348, %v3412
        %3430 = vst.msk [vmem:[#allocation4 + $0x18] sm:$0xff] %vm1348, %v3413
        %3431 = vst.msk [vmem:[#allocation4 + $0x20] sm:$0xff] %vm1348, %v3414
        %3432 = vst.msk [vmem:[#allocation4 + $0x28] sm:$0xff] %vm1348, %v3415
        %3433 = vst.msk [vmem:[#allocation4 + $0x30] sm:$0xff] %vm1348, %v3416
        %3434 = vst.msk [vmem:[#allocation4 + $0x38] sm:$0xff] %vm1348, %v3417
        %3435 = vst.msk [vmem:[#allocation4 + $0x40] sm:$0xff] %vm1348, %v3418
        %3436 = vst.msk [vmem:[#allocation4 + $0x48] sm:$0xff] %vm1348, %v3419
        %3437 = vst.msk [vmem:[#allocation4 + $0x50] sm:$0xff] %vm1348, %v3420
        %3438 = vst.msk [vmem:[#allocation4 + $0x58] sm:$0xff] %vm1348, %v3421
        %3439 = vst.msk [vmem:[#allocation4 + $0x60] sm:$0xff] %vm1348, %v3422
        %3440 = vst.msk [vmem:[#allocation4 + $0x68] sm:$0xff] %vm1348, %v3423
        %3441 = vst.msk [vmem:[#allocation4 + $0x70] sm:$0xff] %vm1348, %v3424
        %3442 = vst.msk [vmem:[#allocation4 + $0x78] sm:$0xff] %vm1348, %v3425
        %3443 = vst.msk [vmem:[#allocation4 + $0x80] sm:$0xff] %vm1348, %v3426
        %v3444 = vld [vmem:[#allocation4] sm:$0xff]
        %v3445 = vld [vmem:[#allocation4 + $0x8] sm:$0xff]
        %v3446 = vld [vmem:[#allocation4 + $0x10] sm:$0xff]
        %v3447 = vld [vmem:[#allocation4 + $0x18] sm:$0xff]
        %v3448 = vld [vmem:[#allocation4 + $0x20] sm:$0xff]
        %v3449 = vld [vmem:[#allocation4 + $0x28] sm:$0xff]
        %v3450 = vld [vmem:[#allocation4 + $0x30] sm:$0xff]
        %v3451 = vld [vmem:[#allocation4 + $0x38] sm:$0xff]
        %v3452 = vld [vmem:[#allocation4 + $0x40] sm:$0xff]
        %v3453 = vld [vmem:[#allocation4 + $0x48] sm:$0xff]
        %v3454 = vld [vmem:[#allocation4 + $0x50] sm:$0xff]
        %v3455 = vld [vmem:[#allocation4 + $0x58] sm:$0xff]
        %v3456 = vld [vmem:[#allocation4 + $0x60] sm:$0xff]
        %v3457 = vld [vmem:[#allocation4 + $0x68] sm:$0xff]
        %v3458 = vld [vmem:[#allocation4 + $0x70] sm:$0xff]
        %v3459 = vld [vmem:[#allocation4 + $0x78] sm:$0xff]
        %v3460 = vld [vmem:[#allocation4 + $0x80] sm:$0xff]
        %v3461 = vld [vmem:[#allocation3 + $0x1d] sm:$0xff]
        %v3462 = vld [vmem:[#allocation3 + $0x25] sm:$0xff]
        %v3463 = vld [vmem:[#allocation3 + $0x2d] sm:$0xff]
        %v3464 = vld [vmem:[#allocation3 + $0x35] sm:$0xff]
        %v3465 = vld [vmem:[#allocation3 + $0x3d] sm:$0xff]
        %v3466 = vld [vmem:[#allocation3 + $0x45] sm:$0xff]
        %v3467 = vld [vmem:[#allocation3 + $0x4d] sm:$0xff]
        %v3468 = vld [vmem:[#allocation3 + $0x55] sm:$0xff]
        %v3469 = vld [vmem:[#allocation3 + $0x5d] sm:$0xff]
        %v3470 = vld [vmem:[#allocation3 + $0x65] sm:$0xff]
        %v3471 = vld [vmem:[#allocation3 + $0x6d] sm:$0xff]
        %v3472 = vld [vmem:[#allocation3 + $0x75] sm:$0xff]
        %v3473 = vld [vmem:[#allocation3 + $0x7d] sm:$0xff]
        %v3474 = vld [vmem:[#allocation3 + $0x85] sm:$0xff]
        %v3475 = vld [vmem:[#allocation3 + $0x8d] sm:$0xff]
        %v3476 = vld [vmem:[#allocation3 + $0x95] sm:$0xff]
        %v3477 = vld [vmem:[#allocation3 + $0x9d] sm:$0xff]
        %s3478 = scalar_lea.vmem %s3, 88
        %v3479 = vld [vmem:[%s3478] sm:$0xff]
        %v3481 = vsel %vm913, %v3461, 0
        %v3484 = vsel %vm913, %v3462, 0
        %v3487 = vsel %vm913, %v3463, 0
        %v3490 = vsel %vm913, %v3464, 0
        %v3493 = vsel %vm913, %v3465, 0
        %v3496 = vsel %vm913, %v3466, 0
        %v3499 = vsel %vm913, %v3467, 0
        %v3502 = vsel %vm913, %v3468, 0
        %v3505 = vsel %vm913, %v3469, 0
        %v3508 = vsel %vm913, %v3470, 0
        %v3511 = vsel %vm913, %v3471, 0
        %v3514 = vsel %vm913, %v3472, 0
        %v3517 = vsel %vm913, %v3473, 0
        %v3520 = vsel %vm913, %v3474, 0
        %v3523 = vsel %vm913, %v3475, 0
        %v3526 = vsel %vm913, %v3476, 0
        %v3529 = vsel %vm913, %v3477, 0
        %3531 = vmatpush.msra.mxu0 0.0
        %3532 = vmatpush.msra.mxu0 0.0
        %3533 = vmatpush.msra.mxu0 0.0
        %3534 = vmatpush.msra.mxu0 0.0
        %3535 = vmatpush.msra.mxu0 0.0
        %3536 = vmatpush.msra.mxu0 0.0
        %3537 = vmatpush.msra.mxu0 0.0
        %3538 = vmatpush.msra.mxu0 0.0
        %3539 = vmatpush.msra.mxu0 0.0
        %3540 = vmatpush.msra.mxu0 0.0
        %3541 = vmatpush.msra.mxu0 0.0
        %3542 = vmatpush.msra.mxu0 0.0
        %3543 = vmatpush.msra.mxu0 0.0
        %3544 = vmatpush.msra.mxu0 0.0
        %3545 = vmatpush.msra.mxu0 0.0
        %3546 = vmatpush.msra.mxu0 %v3479
        %3547 = vmatmul.f32.gmra.mxu0 %v3481
        %v3548 = vpop.f32.mrf.mxu0
        %v3549 = vadd.f32 0.0, %v3548
        %3550 = vmatmul.f32.gmra.mxu0 %v3484
        %v3551 = vpop.f32.mrf.mxu0
        %v3552 = vadd.f32 0.0, %v3551
        %3553 = vmatmul.f32.gmra.mxu0 %v3487
        %v3554 = vpop.f32.mrf.mxu0
        %v3555 = vadd.f32 0.0, %v3554
        %3556 = vmatmul.f32.gmra.mxu0 %v3490
        %v3557 = vpop.f32.mrf.mxu0
        %v3558 = vadd.f32 0.0, %v3557
        %3559 = vmatmul.f32.gmra.mxu0 %v3493
        %v3560 = vpop.f32.mrf.mxu0
        %v3561 = vadd.f32 0.0, %v3560
        %3562 = vmatmul.f32.gmra.mxu0 %v3496
        %v3563 = vpop.f32.mrf.mxu0
        %v3564 = vadd.f32 0.0, %v3563
        %3565 = vmatmul.f32.gmra.mxu0 %v3499
        %v3566 = vpop.f32.mrf.mxu0
        %v3567 = vadd.f32 0.0, %v3566
        %3568 = vmatmul.f32.gmra.mxu0 %v3502
        %v3569 = vpop.f32.mrf.mxu0
        %v3570 = vadd.f32 0.0, %v3569
        %3571 = vmatmul.f32.gmra.mxu0 %v3505
        %v3572 = vpop.f32.mrf.mxu0
        %v3573 = vadd.f32 0.0, %v3572
        %3574 = vmatmul.f32.gmra.mxu0 %v3508
        %v3575 = vpop.f32.mrf.mxu0
        %v3576 = vadd.f32 0.0, %v3575
        %3577 = vmatmul.f32.gmra.mxu0 %v3511
        %v3578 = vpop.f32.mrf.mxu0
        %v3579 = vadd.f32 0.0, %v3578
        %3580 = vmatmul.f32.gmra.mxu0 %v3514
        %v3581 = vpop.f32.mrf.mxu0
        %v3582 = vadd.f32 0.0, %v3581
        %3583 = vmatmul.f32.gmra.mxu0 %v3517
        %v3584 = vpop.f32.mrf.mxu0
        %v3585 = vadd.f32 0.0, %v3584
        %3586 = vmatmul.f32.gmra.mxu0 %v3520
        %v3587 = vpop.f32.mrf.mxu0
        %v3588 = vadd.f32 0.0, %v3587
        %3589 = vmatmul.f32.gmra.mxu0 %v3523
        %v3590 = vpop.f32.mrf.mxu0
        %v3591 = vadd.f32 0.0, %v3590
        %3592 = vmatmul.f32.gmra.mxu0 %v3526
        %v3593 = vpop.f32.mrf.mxu0
        %v3594 = vadd.f32 0.0, %v3593
        %3595 = vmatmul.f32.gmra.mxu0 %v3529
        %v3596 = vpop.f32.mrf.mxu0
        %v3597 = vadd.f32 0.0, %v3596
        %3598 = vdwg.mxu0
        %v3599 = vadd.f32 %v3444, %v3549
        %v3600 = vadd.f32 %v3445, %v3552
        %v3601 = vadd.f32 %v3446, %v3555
        %v3602 = vadd.f32 %v3447, %v3558
        %v3603 = vadd.f32 %v3448, %v3561
        %v3604 = vadd.f32 %v3449, %v3564
        %v3605 = vadd.f32 %v3450, %v3567
        %v3606 = vadd.f32 %v3451, %v3570
        %v3607 = vadd.f32 %v3452, %v3573
        %v3608 = vadd.f32 %v3453, %v3576
        %v3609 = vadd.f32 %v3454, %v3579
        %v3610 = vadd.f32 %v3455, %v3582
        %v3611 = vadd.f32 %v3456, %v3585
        %v3612 = vadd.f32 %v3457, %v3588
        %v3613 = vadd.f32 %v3458, %v3591
        %v3614 = vadd.f32 %v3459, %v3594
        %v3615 = vadd.f32 %v3460, %v3597
        %3616 = vst.msk [vmem:[#allocation4] sm:$0xff] %vm1348, %v3599
        %3617 = vst.msk [vmem:[#allocation4 + $0x8] sm:$0xff] %vm1348, %v3600
        %3618 = vst.msk [vmem:[#allocation4 + $0x10] sm:$0xff] %vm1348, %v3601
        %3619 = vst.msk [vmem:[#allocation4 + $0x18] sm:$0xff] %vm1348, %v3602
        %3620 = vst.msk [vmem:[#allocation4 + $0x20] sm:$0xff] %vm1348, %v3603
        %3621 = vst.msk [vmem:[#allocation4 + $0x28] sm:$0xff] %vm1348, %v3604
        %3622 = vst.msk [vmem:[#allocation4 + $0x30] sm:$0xff] %vm1348, %v3605
        %3623 = vst.msk [vmem:[#allocation4 + $0x38] sm:$0xff] %vm1348, %v3606
        %3624 = vst.msk [vmem:[#allocation4 + $0x40] sm:$0xff] %vm1348, %v3607
        %3625 = vst.msk [vmem:[#allocation4 + $0x48] sm:$0xff] %vm1348, %v3608
        %3626 = vst.msk [vmem:[#allocation4 + $0x50] sm:$0xff] %vm1348, %v3609
        %3627 = vst.msk [vmem:[#allocation4 + $0x58] sm:$0xff] %vm1348, %v3610
        %3628 = vst.msk [vmem:[#allocation4 + $0x60] sm:$0xff] %vm1348, %v3611
        %3629 = vst.msk [vmem:[#allocation4 + $0x68] sm:$0xff] %vm1348, %v3612
        %3630 = vst.msk [vmem:[#allocation4 + $0x70] sm:$0xff] %vm1348, %v3613
        %3631 = vst.msk [vmem:[#allocation4 + $0x78] sm:$0xff] %vm1348, %v3614
        %3632 = vst.msk [vmem:[#allocation4 + $0x80] sm:$0xff] %vm1348, %v3615
        %v3633 = vld [vmem:[#allocation4] sm:$0xff]
        %v3634 = vld [vmem:[#allocation4 + $0x8] sm:$0xff]
        %v3635 = vld [vmem:[#allocation4 + $0x10] sm:$0xff]
        %v3636 = vld [vmem:[#allocation4 + $0x18] sm:$0xff]
        %v3637 = vld [vmem:[#allocation4 + $0x20] sm:$0xff]
        %v3638 = vld [vmem:[#allocation4 + $0x28] sm:$0xff]
        %v3639 = vld [vmem:[#allocation4 + $0x30] sm:$0xff]
        %v3640 = vld [vmem:[#allocation4 + $0x38] sm:$0xff]
        %v3641 = vld [vmem:[#allocation4 + $0x40] sm:$0xff]
        %v3642 = vld [vmem:[#allocation4 + $0x48] sm:$0xff]
        %v3643 = vld [vmem:[#allocation4 + $0x50] sm:$0xff]
        %v3644 = vld [vmem:[#allocation4 + $0x58] sm:$0xff]
        %v3645 = vld [vmem:[#allocation4 + $0x60] sm:$0xff]
        %v3646 = vld [vmem:[#allocation4 + $0x68] sm:$0xff]
        %v3647 = vld [vmem:[#allocation4 + $0x70] sm:$0xff]
        %v3648 = vld [vmem:[#allocation4 + $0x78] sm:$0xff]
        %v3649 = vld [vmem:[#allocation4 + $0x80] sm:$0xff]
        %v3650 = vld [vmem:[#allocation3 + $0x1e] sm:$0xff]
        %v3651 = vld [vmem:[#allocation3 + $0x26] sm:$0xff]
        %v3652 = vld [vmem:[#allocation3 + $0x2e] sm:$0xff]
        %v3653 = vld [vmem:[#allocation3 + $0x36] sm:$0xff]
        %v3654 = vld [vmem:[#allocation3 + $0x3e] sm:$0xff]
        %v3655 = vld [vmem:[#allocation3 + $0x46] sm:$0xff]
        %v3656 = vld [vmem:[#allocation3 + $0x4e] sm:$0xff]
        %v3657 = vld [vmem:[#allocation3 + $0x56] sm:$0xff]
        %v3658 = vld [vmem:[#allocation3 + $0x5e] sm:$0xff]
        %v3659 = vld [vmem:[#allocation3 + $0x66] sm:$0xff]
        %v3660 = vld [vmem:[#allocation3 + $0x6e] sm:$0xff]
        %v3661 = vld [vmem:[#allocation3 + $0x76] sm:$0xff]
        %v3662 = vld [vmem:[#allocation3 + $0x7e] sm:$0xff]
        %v3663 = vld [vmem:[#allocation3 + $0x86] sm:$0xff]
        %v3664 = vld [vmem:[#allocation3 + $0x8e] sm:$0xff]
        %v3665 = vld [vmem:[#allocation3 + $0x96] sm:$0xff]
        %v3666 = vld [vmem:[#allocation3 + $0x9e] sm:$0xff]
        %s3667 = scalar_lea.vmem %s3, 96
        %v3668 = vld [vmem:[%s3667] sm:$0xff]
        %v3670 = vsel %vm913, %v3650, 0
        %v3673 = vsel %vm913, %v3651, 0
        %v3676 = vsel %vm913, %v3652, 0
        %v3679 = vsel %vm913, %v3653, 0
        %v3682 = vsel %vm913, %v3654, 0
        %v3685 = vsel %vm913, %v3655, 0
        %v3688 = vsel %vm913, %v3656, 0
        %v3691 = vsel %vm913, %v3657, 0
        %v3694 = vsel %vm913, %v3658, 0
        %v3697 = vsel %vm913, %v3659, 0
        %v3700 = vsel %vm913, %v3660, 0
        %v3703 = vsel %vm913, %v3661, 0
        %v3706 = vsel %vm913, %v3662, 0
        %v3709 = vsel %vm913, %v3663, 0
        %v3712 = vsel %vm913, %v3664, 0
        %v3715 = vsel %vm913, %v3665, 0
        %v3718 = vsel %vm913, %v3666, 0
        %3720 = vmatpush.msra.mxu0 0.0
        %3721 = vmatpush.msra.mxu0 0.0
        %3722 = vmatpush.msra.mxu0 0.0
        %3723 = vmatpush.msra.mxu0 0.0
        %3724 = vmatpush.msra.mxu0 0.0
        %3725 = vmatpush.msra.mxu0 0.0
        %3726 = vmatpush.msra.mxu0 0.0
        %3727 = vmatpush.msra.mxu0 0.0
        %3728 = vmatpush.msra.mxu0 0.0
        %3729 = vmatpush.msra.mxu0 0.0
        %3730 = vmatpush.msra.mxu0 0.0
        %3731 = vmatpush.msra.mxu0 0.0
        %3732 = vmatpush.msra.mxu0 0.0
        %3733 = vmatpush.msra.mxu0 0.0
        %3734 = vmatpush.msra.mxu0 0.0
        %3735 = vmatpush.msra.mxu0 %v3668
        %3736 = vmatmul.f32.gmra.mxu0 %v3670
        %v3737 = vpop.f32.mrf.mxu0
        %v3738 = vadd.f32 0.0, %v3737
        %3739 = vmatmul.f32.gmra.mxu0 %v3673
        %v3740 = vpop.f32.mrf.mxu0
        %v3741 = vadd.f32 0.0, %v3740
        %3742 = vmatmul.f32.gmra.mxu0 %v3676
        %v3743 = vpop.f32.mrf.mxu0
        %v3744 = vadd.f32 0.0, %v3743
        %3745 = vmatmul.f32.gmra.mxu0 %v3679
        %v3746 = vpop.f32.mrf.mxu0
        %v3747 = vadd.f32 0.0, %v3746
        %3748 = vmatmul.f32.gmra.mxu0 %v3682
        %v3749 = vpop.f32.mrf.mxu0
        %v3750 = vadd.f32 0.0, %v3749
        %3751 = vmatmul.f32.gmra.mxu0 %v3685
        %v3752 = vpop.f32.mrf.mxu0
        %v3753 = vadd.f32 0.0, %v3752
        %3754 = vmatmul.f32.gmra.mxu0 %v3688
        %v3755 = vpop.f32.mrf.mxu0
        %v3756 = vadd.f32 0.0, %v3755
        %3757 = vmatmul.f32.gmra.mxu0 %v3691
        %v3758 = vpop.f32.mrf.mxu0
        %v3759 = vadd.f32 0.0, %v3758
        %3760 = vmatmul.f32.gmra.mxu0 %v3694
        %v3761 = vpop.f32.mrf.mxu0
        %v3762 = vadd.f32 0.0, %v3761
        %3763 = vmatmul.f32.gmra.mxu0 %v3697
        %v3764 = vpop.f32.mrf.mxu0
        %v3765 = vadd.f32 0.0, %v3764
        %3766 = vmatmul.f32.gmra.mxu0 %v3700
        %v3767 = vpop.f32.mrf.mxu0
        %v3768 = vadd.f32 0.0, %v3767
        %3769 = vmatmul.f32.gmra.mxu0 %v3703
        %v3770 = vpop.f32.mrf.mxu0
        %v3771 = vadd.f32 0.0, %v3770
        %3772 = vmatmul.f32.gmra.mxu0 %v3706
        %v3773 = vpop.f32.mrf.mxu0
        %v3774 = vadd.f32 0.0, %v3773
        %3775 = vmatmul.f32.gmra.mxu0 %v3709
        %v3776 = vpop.f32.mrf.mxu0
        %v3777 = vadd.f32 0.0, %v3776
        %3778 = vmatmul.f32.gmra.mxu0 %v3712
        %v3779 = vpop.f32.mrf.mxu0
        %v3780 = vadd.f32 0.0, %v3779
        %3781 = vmatmul.f32.gmra.mxu0 %v3715
        %v3782 = vpop.f32.mrf.mxu0
        %v3783 = vadd.f32 0.0, %v3782
        %3784 = vmatmul.f32.gmra.mxu0 %v3718
        %v3785 = vpop.f32.mrf.mxu0
        %v3786 = vadd.f32 0.0, %v3785
        %3787 = vdwg.mxu0
        %v3788 = vadd.f32 %v3633, %v3738
        %v3789 = vadd.f32 %v3634, %v3741
        %v3790 = vadd.f32 %v3635, %v3744
        %v3791 = vadd.f32 %v3636, %v3747
        %v3792 = vadd.f32 %v3637, %v3750
        %v3793 = vadd.f32 %v3638, %v3753
        %v3794 = vadd.f32 %v3639, %v3756
        %v3795 = vadd.f32 %v3640, %v3759
        %v3796 = vadd.f32 %v3641, %v3762
        %v3797 = vadd.f32 %v3642, %v3765
        %v3798 = vadd.f32 %v3643, %v3768
        %v3799 = vadd.f32 %v3644, %v3771
        %v3800 = vadd.f32 %v3645, %v3774
        %v3801 = vadd.f32 %v3646, %v3777
        %v3802 = vadd.f32 %v3647, %v3780
        %v3803 = vadd.f32 %v3648, %v3783
        %v3804 = vadd.f32 %v3649, %v3786
        %3805 = vst.msk [vmem:[#allocation4] sm:$0xff] %vm1348, %v3788
        %3806 = vst.msk [vmem:[#allocation4 + $0x8] sm:$0xff] %vm1348, %v3789
        %3807 = vst.msk [vmem:[#allocation4 + $0x10] sm:$0xff] %vm1348, %v3790
        %3808 = vst.msk [vmem:[#allocation4 + $0x18] sm:$0xff] %vm1348, %v3791
        %3809 = vst.msk [vmem:[#allocation4 + $0x20] sm:$0xff] %vm1348, %v3792
        %3810 = vst.msk [vmem:[#allocation4 + $0x28] sm:$0xff] %vm1348, %v3793
        %3811 = vst.msk [vmem:[#allocation4 + $0x30] sm:$0xff] %vm1348, %v3794
        %3812 = vst.msk [vmem:[#allocation4 + $0x38] sm:$0xff] %vm1348, %v3795
        %3813 = vst.msk [vmem:[#allocation4 + $0x40] sm:$0xff] %vm1348, %v3796
        %3814 = vst.msk [vmem:[#allocation4 + $0x48] sm:$0xff] %vm1348, %v3797
        %3815 = vst.msk [vmem:[#allocation4 + $0x50] sm:$0xff] %vm1348, %v3798
        %3816 = vst.msk [vmem:[#allocation4 + $0x58] sm:$0xff] %vm1348, %v3799
        %3817 = vst.msk [vmem:[#allocation4 + $0x60] sm:$0xff] %vm1348, %v3800
        %3818 = vst.msk [vmem:[#allocation4 + $0x68] sm:$0xff] %vm1348, %v3801
        %3819 = vst.msk [vmem:[#allocation4 + $0x70] sm:$0xff] %vm1348, %v3802
        %3820 = vst.msk [vmem:[#allocation4 + $0x78] sm:$0xff] %vm1348, %v3803
        %3821 = vst.msk [vmem:[#allocation4 + $0x80] sm:$0xff] %vm1348, %v3804
        %v3822 = vld [vmem:[#allocation4] sm:$0xff]
        %v3823 = vld [vmem:[#allocation4 + $0x8] sm:$0xff]
        %v3824 = vld [vmem:[#allocation4 + $0x10] sm:$0xff]
        %v3825 = vld [vmem:[#allocation4 + $0x18] sm:$0xff]
        %v3826 = vld [vmem:[#allocation4 + $0x20] sm:$0xff]
        %v3827 = vld [vmem:[#allocation4 + $0x28] sm:$0xff]
        %v3828 = vld [vmem:[#allocation4 + $0x30] sm:$0xff]
        %v3829 = vld [vmem:[#allocation4 + $0x38] sm:$0xff]
        %v3830 = vld [vmem:[#allocation4 + $0x40] sm:$0xff]
        %v3831 = vld [vmem:[#allocation4 + $0x48] sm:$0xff]
        %v3832 = vld [vmem:[#allocation4 + $0x50] sm:$0xff]
        %v3833 = vld [vmem:[#allocation4 + $0x58] sm:$0xff]
        %v3834 = vld [vmem:[#allocation4 + $0x60] sm:$0xff]
        %v3835 = vld [vmem:[#allocation4 + $0x68] sm:$0xff]
        %v3836 = vld [vmem:[#allocation4 + $0x70] sm:$0xff]
        %v3837 = vld [vmem:[#allocation4 + $0x78] sm:$0xff]
        %v3838 = vld [vmem:[#allocation4 + $0x80] sm:$0xff]
        %v3839 = vld [vmem:[#allocation3 + $0x1f] sm:$0xff]
        %v3840 = vld [vmem:[#allocation3 + $0x27] sm:$0xff]
        %v3841 = vld [vmem:[#allocation3 + $0x2f] sm:$0xff]
        %v3842 = vld [vmem:[#allocation3 + $0x37] sm:$0xff]
        %v3843 = vld [vmem:[#allocation3 + $0x3f] sm:$0xff]
        %v3844 = vld [vmem:[#allocation3 + $0x47] sm:$0xff]
        %v3845 = vld [vmem:[#allocation3 + $0x4f] sm:$0xff]
        %v3846 = vld [vmem:[#allocation3 + $0x57] sm:$0xff]
        %v3847 = vld [vmem:[#allocation3 + $0x5f] sm:$0xff]
        %v3848 = vld [vmem:[#allocation3 + $0x67] sm:$0xff]
        %v3849 = vld [vmem:[#allocation3 + $0x6f] sm:$0xff]
        %v3850 = vld [vmem:[#allocation3 + $0x77] sm:$0xff]
        %v3851 = vld [vmem:[#allocation3 + $0x7f] sm:$0xff]
        %v3852 = vld [vmem:[#allocation3 + $0x87] sm:$0xff]
        %v3853 = vld [vmem:[#allocation3 + $0x8f] sm:$0xff]
        %v3854 = vld [vmem:[#allocation3 + $0x97] sm:$0xff]
        %v3855 = vld [vmem:[#allocation3 + $0x9f] sm:$0xff]
        %s3856 = scalar_lea.vmem %s3, 104
        %v3857 = vld [vmem:[%s3856] sm:$0xff]
        %v3859 = vsel %vm913, %v3839, 0
        %v3862 = vsel %vm913, %v3840, 0
        %v3865 = vsel %vm913, %v3841, 0
        %v3868 = vsel %vm913, %v3842, 0
        %v3871 = vsel %vm913, %v3843, 0
        %v3874 = vsel %vm913, %v3844, 0
        %v3877 = vsel %vm913, %v3845, 0
        %v3880 = vsel %vm913, %v3846, 0
        %v3883 = vsel %vm913, %v3847, 0
        %v3886 = vsel %vm913, %v3848, 0
        %v3889 = vsel %vm913, %v3849, 0
        %v3892 = vsel %vm913, %v3850, 0
        %v3895 = vsel %vm913, %v3851, 0
        %v3898 = vsel %vm913, %v3852, 0
        %v3901 = vsel %vm913, %v3853, 0
        %v3904 = vsel %vm913, %v3854, 0
        %v3907 = vsel %vm913, %v3855, 0
        %3909 = vmatpush.msra.mxu0 0.0
        %3910 = vmatpush.msra.mxu0 0.0
        %3911 = vmatpush.msra.mxu0 0.0
        %3912 = vmatpush.msra.mxu0 0.0
        %3913 = vmatpush.msra.mxu0 0.0
        %3914 = vmatpush.msra.mxu0 0.0
        %3915 = vmatpush.msra.mxu0 0.0
        %3916 = vmatpush.msra.mxu0 0.0
        %3917 = vmatpush.msra.mxu0 0.0
        %3918 = vmatpush.msra.mxu0 0.0
        %3919 = vmatpush.msra.mxu0 0.0
        %3920 = vmatpush.msra.mxu0 0.0
        %3921 = vmatpush.msra.mxu0 0.0
        %3922 = vmatpush.msra.mxu0 0.0
        %3923 = vmatpush.msra.mxu0 0.0
        %3924 = vmatpush.msra.mxu0 %v3857
        %3925 = vmatmul.f32.gmra.mxu0 %v3859
        %v3926 = vpop.f32.mrf.mxu0
        %v3927 = vadd.f32 0.0, %v3926
        %3928 = vmatmul.f32.gmra.mxu0 %v3862
        %v3929 = vpop.f32.mrf.mxu0
        %v3930 = vadd.f32 0.0, %v3929
        %3931 = vmatmul.f32.gmra.mxu0 %v3865
        %v3932 = vpop.f32.mrf.mxu0
        %v3933 = vadd.f32 0.0, %v3932
        %3934 = vmatmul.f32.gmra.mxu0 %v3868
        %v3935 = vpop.f32.mrf.mxu0
        %v3936 = vadd.f32 0.0, %v3935
        %3937 = vmatmul.f32.gmra.mxu0 %v3871
        %v3938 = vpop.f32.mrf.mxu0
        %v3939 = vadd.f32 0.0, %v3938
        %3940 = vmatmul.f32.gmra.mxu0 %v3874
        %v3941 = vpop.f32.mrf.mxu0
        %v3942 = vadd.f32 0.0, %v3941
        %3943 = vmatmul.f32.gmra.mxu0 %v3877
        %v3944 = vpop.f32.mrf.mxu0
        %v3945 = vadd.f32 0.0, %v3944
        %3946 = vmatmul.f32.gmra.mxu0 %v3880
        %v3947 = vpop.f32.mrf.mxu0
        %v3948 = vadd.f32 0.0, %v3947
        %3949 = vmatmul.f32.gmra.mxu0 %v3883
        %v3950 = vpop.f32.mrf.mxu0
        %v3951 = vadd.f32 0.0, %v3950
        %3952 = vmatmul.f32.gmra.mxu0 %v3886
        %v3953 = vpop.f32.mrf.mxu0
        %v3954 = vadd.f32 0.0, %v3953
        %3955 = vmatmul.f32.gmra.mxu0 %v3889
        %v3956 = vpop.f32.mrf.mxu0
        %v3957 = vadd.f32 0.0, %v3956
        %3958 = vmatmul.f32.gmra.mxu0 %v3892
        %v3959 = vpop.f32.mrf.mxu0
        %v3960 = vadd.f32 0.0, %v3959
        %3961 = vmatmul.f32.gmra.mxu0 %v3895
        %v3962 = vpop.f32.mrf.mxu0
        %v3963 = vadd.f32 0.0, %v3962
        %3964 = vmatmul.f32.gmra.mxu0 %v3898
        %v3965 = vpop.f32.mrf.mxu0
        %v3966 = vadd.f32 0.0, %v3965
        %3967 = vmatmul.f32.gmra.mxu0 %v3901
        %v3968 = vpop.f32.mrf.mxu0
        %v3969 = vadd.f32 0.0, %v3968
        %3970 = vmatmul.f32.gmra.mxu0 %v3904
        %v3971 = vpop.f32.mrf.mxu0
        %v3972 = vadd.f32 0.0, %v3971
        %3973 = vmatmul.f32.gmra.mxu0 %v3907
        %v3974 = vpop.f32.mrf.mxu0
        %v3975 = vadd.f32 0.0, %v3974
        %3976 = vdwg.mxu0
        %v3977 = vadd.f32 %v3822, %v3927
        %v3978 = vadd.f32 %v3823, %v3930
        %v3979 = vadd.f32 %v3824, %v3933
        %v3980 = vadd.f32 %v3825, %v3936
        %v3981 = vadd.f32 %v3826, %v3939
        %v3982 = vadd.f32 %v3827, %v3942
        %v3983 = vadd.f32 %v3828, %v3945
        %v3984 = vadd.f32 %v3829, %v3948
        %v3985 = vadd.f32 %v3830, %v3951
        %v3986 = vadd.f32 %v3831, %v3954
        %v3987 = vadd.f32 %v3832, %v3957
        %v3988 = vadd.f32 %v3833, %v3960
        %v3989 = vadd.f32 %v3834, %v3963
        %v3990 = vadd.f32 %v3835, %v3966
        %v3991 = vadd.f32 %v3836, %v3969
        %v3992 = vadd.f32 %v3837, %v3972
        %v3993 = vadd.f32 %v3838, %v3975
        %3994 = vst.msk [vmem:[#allocation4] sm:$0xff] %vm1348, %v3977
        %3995 = vst.msk [vmem:[#allocation4 + $0x8] sm:$0xff] %vm1348, %v3978
        %3996 = vst.msk [vmem:[#allocation4 + $0x10] sm:$0xff] %vm1348, %v3979
        %3997 = vst.msk [vmem:[#allocation4 + $0x18] sm:$0xff] %vm1348, %v3980
        %3998 = vst.msk [vmem:[#allocation4 + $0x20] sm:$0xff] %vm1348, %v3981
        %3999 = vst.msk [vmem:[#allocation4 + $0x28] sm:$0xff] %vm1348, %v3982
        %4000 = vst.msk [vmem:[#allocation4 + $0x30] sm:$0xff] %vm1348, %v3983
        %4001 = vst.msk [vmem:[#allocation4 + $0x38] sm:$0xff] %vm1348, %v3984
        %4002 = vst.msk [vmem:[#allocation4 + $0x40] sm:$0xff] %vm1348, %v3985
        %4003 = vst.msk [vmem:[#allocation4 + $0x48] sm:$0xff] %vm1348, %v3986
        %4004 = vst.msk [vmem:[#allocation4 + $0x50] sm:$0xff] %vm1348, %v3987
        %4005 = vst.msk [vmem:[#allocation4 + $0x58] sm:$0xff] %vm1348, %v3988
        %4006 = vst.msk [vmem:[#allocation4 + $0x60] sm:$0xff] %vm1348, %v3989
        %4007 = vst.msk [vmem:[#allocation4 + $0x68] sm:$0xff] %vm1348, %v3990
        %4008 = vst.msk [vmem:[#allocation4 + $0x70] sm:$0xff] %vm1348, %v3991
        %4009 = vst.msk [vmem:[#allocation4 + $0x78] sm:$0xff] %vm1348, %v3992
        %4010 = vst.msk [vmem:[#allocation4 + $0x80] sm:$0xff] %vm1348, %v3993
        %v4011 = vld [vmem:[#allocation4] sm:$0xff]
        %v4012 = vld [vmem:[#allocation4 + $0x8] sm:$0xff]
        %v4013 = vld [vmem:[#allocation4 + $0x10] sm:$0xff]
        %v4014 = vld [vmem:[#allocation4 + $0x18] sm:$0xff]
        %v4015 = vld [vmem:[#allocation4 + $0x20] sm:$0xff]
        %v4016 = vld [vmem:[#allocation4 + $0x28] sm:$0xff]
        %v4017 = vld [vmem:[#allocation4 + $0x30] sm:$0xff]
        %v4018 = vld [vmem:[#allocation4 + $0x38] sm:$0xff]
        %v4019 = vld [vmem:[#allocation4 + $0x40] sm:$0xff]
        %v4020 = vld [vmem:[#allocation4 + $0x48] sm:$0xff]
        %v4021 = vld [vmem:[#allocation4 + $0x50] sm:$0xff]
        %v4022 = vld [vmem:[#allocation4 + $0x58] sm:$0xff]
        %v4023 = vld [vmem:[#allocation4 + $0x60] sm:$0xff]
        %v4024 = vld [vmem:[#allocation4 + $0x68] sm:$0xff]
        %v4025 = vld [vmem:[#allocation4 + $0x70] sm:$0xff]
        %v4026 = vld [vmem:[#allocation4 + $0x78] sm:$0xff]
        %v4027 = vld [vmem:[#allocation4 + $0x80] sm:$0xff]
        %v4028 = vld [vmem:[#allocation3 + $0x20] sm:$0xff]
        %v4029 = vld [vmem:[#allocation3 + $0x28] sm:$0xff]
        %v4030 = vld [vmem:[#allocation3 + $0x30] sm:$0xff]
        %v4031 = vld [vmem:[#allocation3 + $0x38] sm:$0xff]
        %v4032 = vld [vmem:[#allocation3 + $0x40] sm:$0xff]
        %v4033 = vld [vmem:[#allocation3 + $0x48] sm:$0xff]
        %v4034 = vld [vmem:[#allocation3 + $0x50] sm:$0xff]
        %v4035 = vld [vmem:[#allocation3 + $0x58] sm:$0xff]
        %v4036 = vld [vmem:[#allocation3 + $0x60] sm:$0xff]
        %v4037 = vld [vmem:[#allocation3 + $0x68] sm:$0xff]
        %v4038 = vld [vmem:[#allocation3 + $0x70] sm:$0xff]
        %v4039 = vld [vmem:[#allocation3 + $0x78] sm:$0xff]
        %v4040 = vld [vmem:[#allocation3 + $0x80] sm:$0xff]
        %v4041 = vld [vmem:[#allocation3 + $0x88] sm:$0xff]
        %v4042 = vld [vmem:[#allocation3 + $0x90] sm:$0xff]
        %v4043 = vld [vmem:[#allocation3 + $0x98] sm:$0xff]
        %v4044 = vld [vmem:[#allocation3 + $0xa0] sm:$0xff]
        %s4045 = scalar_lea.vmem %s3, 112
        %v4046 = vld [vmem:[%s4045] sm:$0xff]
        %v4048 = vsel %vm913, %v4028, 0
        %v4051 = vsel %vm913, %v4029, 0
        %v4054 = vsel %vm913, %v4030, 0
        %v4057 = vsel %vm913, %v4031, 0
        %v4060 = vsel %vm913, %v4032, 0
        %v4063 = vsel %vm913, %v4033, 0
        %v4066 = vsel %vm913, %v4034, 0
        %v4069 = vsel %vm913, %v4035, 0
        %v4072 = vsel %vm913, %v4036, 0
        %v4075 = vsel %vm913, %v4037, 0
        %v4078 = vsel %vm913, %v4038, 0
        %v4081 = vsel %vm913, %v4039, 0
        %v4084 = vsel %vm913, %v4040, 0
        %v4087 = vsel %vm913, %v4041, 0
        %v4090 = vsel %vm913, %v4042, 0
        %v4093 = vsel %vm913, %v4043, 0
        %v4096 = vsel %vm913, %v4044, 0
        %4098 = vmatpush.msra.mxu0 0.0
        %4099 = vmatpush.msra.mxu0 0.0
        %4100 = vmatpush.msra.mxu0 0.0
        %4101 = vmatpush.msra.mxu0 0.0
        %4102 = vmatpush.msra.mxu0 0.0
        %4103 = vmatpush.msra.mxu0 0.0
        %4104 = vmatpush.msra.mxu0 0.0
        %4105 = vmatpush.msra.mxu0 0.0
        %4106 = vmatpush.msra.mxu0 0.0
        %4107 = vmatpush.msra.mxu0 0.0
        %4108 = vmatpush.msra.mxu0 0.0
        %4109 = vmatpush.msra.mxu0 0.0
        %4110 = vmatpush.msra.mxu0 0.0
        %4111 = vmatpush.msra.mxu0 0.0
        %4112 = vmatpush.msra.mxu0 0.0
        %4113 = vmatpush.msra.mxu0 %v4046
        %4114 = vmatmul.f32.gmra.mxu0 %v4048
        %v4115 = vpop.f32.mrf.mxu0
        %v4116 = vadd.f32 0.0, %v4115
        %4117 = vmatmul.f32.gmra.mxu0 %v4051
        %v4118 = vpop.f32.mrf.mxu0
        %v4119 = vadd.f32 0.0, %v4118
        %4120 = vmatmul.f32.gmra.mxu0 %v4054
        %v4121 = vpop.f32.mrf.mxu0
        %v4122 = vadd.f32 0.0, %v4121
        %4123 = vmatmul.f32.gmra.mxu0 %v4057
        %v4124 = vpop.f32.mrf.mxu0
        %v4125 = vadd.f32 0.0, %v4124
        %4126 = vmatmul.f32.gmra.mxu0 %v4060
        %v4127 = vpop.f32.mrf.mxu0
        %v4128 = vadd.f32 0.0, %v4127
        %4129 = vmatmul.f32.gmra.mxu0 %v4063
        %v4130 = vpop.f32.mrf.mxu0
        %v4131 = vadd.f32 0.0, %v4130
        %4132 = vmatmul.f32.gmra.mxu0 %v4066
        %v4133 = vpop.f32.mrf.mxu0
        %v4134 = vadd.f32 0.0, %v4133
        %4135 = vmatmul.f32.gmra.mxu0 %v4069
        %v4136 = vpop.f32.mrf.mxu0
        %v4137 = vadd.f32 0.0, %v4136
        %4138 = vmatmul.f32.gmra.mxu0 %v4072
        %v4139 = vpop.f32.mrf.mxu0
        %v4140 = vadd.f32 0.0, %v4139
        %4141 = vmatmul.f32.gmra.mxu0 %v4075
        %v4142 = vpop.f32.mrf.mxu0
        %v4143 = vadd.f32 0.0, %v4142
        %4144 = vmatmul.f32.gmra.mxu0 %v4078
        %v4145 = vpop.f32.mrf.mxu0
        %v4146 = vadd.f32 0.0, %v4145
        %4147 = vmatmul.f32.gmra.mxu0 %v4081
        %v4148 = vpop.f32.mrf.mxu0
        %v4149 = vadd.f32 0.0, %v4148
        %4150 = vmatmul.f32.gmra.mxu0 %v4084
        %v4151 = vpop.f32.mrf.mxu0
        %v4152 = vadd.f32 0.0, %v4151
        %4153 = vmatmul.f32.gmra.mxu0 %v4087
        %v4154 = vpop.f32.mrf.mxu0
        %v4155 = vadd.f32 0.0, %v4154
        %4156 = vmatmul.f32.gmra.mxu0 %v4090
        %v4157 = vpop.f32.mrf.mxu0
        %v4158 = vadd.f32 0.0, %v4157
        %4159 = vmatmul.f32.gmra.mxu0 %v4093
        %v4160 = vpop.f32.mrf.mxu0
        %v4161 = vadd.f32 0.0, %v4160
        %4162 = vmatmul.f32.gmra.mxu0 %v4096
        %v4163 = vpop.f32.mrf.mxu0
        %v4164 = vadd.f32 0.0, %v4163
        %4165 = vdwg.mxu0
        %v4166 = vadd.f32 %v4011, %v4116
        %v4167 = vadd.f32 %v4012, %v4119
        %v4168 = vadd.f32 %v4013, %v4122
        %v4169 = vadd.f32 %v4014, %v4125
        %v4170 = vadd.f32 %v4015, %v4128
        %v4171 = vadd.f32 %v4016, %v4131
        %v4172 = vadd.f32 %v4017, %v4134
        %v4173 = vadd.f32 %v4018, %v4137
        %v4174 = vadd.f32 %v4019, %v4140
        %v4175 = vadd.f32 %v4020, %v4143
        %v4176 = vadd.f32 %v4021, %v4146
        %v4177 = vadd.f32 %v4022, %v4149
        %v4178 = vadd.f32 %v4023, %v4152
        %v4179 = vadd.f32 %v4024, %v4155
        %v4180 = vadd.f32 %v4025, %v4158
        %v4181 = vadd.f32 %v4026, %v4161
        %v4182 = vadd.f32 %v4027, %v4164
        %4183 = vst.msk [vmem:[#allocation4] sm:$0xff] %vm1348, %v4166
        %4184 = vst.msk [vmem:[#allocation4 + $0x8] sm:$0xff] %vm1348, %v4167
        %4185 = vst.msk [vmem:[#allocation4 + $0x10] sm:$0xff] %vm1348, %v4168
        %4186 = vst.msk [vmem:[#allocation4 + $0x18] sm:$0xff] %vm1348, %v4169
        %4187 = vst.msk [vmem:[#allocation4 + $0x20] sm:$0xff] %vm1348, %v4170
        %4188 = vst.msk [vmem:[#allocation4 + $0x28] sm:$0xff] %vm1348, %v4171
        %4189 = vst.msk [vmem:[#allocation4 + $0x30] sm:$0xff] %vm1348, %v4172
        %4190 = vst.msk [vmem:[#allocation4 + $0x38] sm:$0xff] %vm1348, %v4173
        %4191 = vst.msk [vmem:[#allocation4 + $0x40] sm:$0xff] %vm1348, %v4174
        %4192 = vst.msk [vmem:[#allocation4 + $0x48] sm:$0xff] %vm1348, %v4175
        %4193 = vst.msk [vmem:[#allocation4 + $0x50] sm:$0xff] %vm1348, %v4176
        %4194 = vst.msk [vmem:[#allocation4 + $0x58] sm:$0xff] %vm1348, %v4177
        %4195 = vst.msk [vmem:[#allocation4 + $0x60] sm:$0xff] %vm1348, %v4178
        %4196 = vst.msk [vmem:[#allocation4 + $0x68] sm:$0xff] %vm1348, %v4179
        %4197 = vst.msk [vmem:[#allocation4 + $0x70] sm:$0xff] %vm1348, %v4180
        %4198 = vst.msk [vmem:[#allocation4 + $0x78] sm:$0xff] %vm1348, %v4181
        %4199 = vst.msk [vmem:[#allocation4 + $0x80] sm:$0xff] %vm1348, %v4182
        %v4200 = vld [vmem:[#allocation4] sm:$0xff]
        %v4201 = vld [vmem:[#allocation4 + $0x8] sm:$0xff]
        %v4202 = vld [vmem:[#allocation4 + $0x10] sm:$0xff]
        %v4203 = vld [vmem:[#allocation4 + $0x18] sm:$0xff]
        %v4204 = vld [vmem:[#allocation4 + $0x20] sm:$0xff]
        %v4205 = vld [vmem:[#allocation4 + $0x28] sm:$0xff]
        %v4206 = vld [vmem:[#allocation4 + $0x30] sm:$0xff]
        %v4207 = vld [vmem:[#allocation4 + $0x38] sm:$0xff]
        %v4208 = vld [vmem:[#allocation4 + $0x40] sm:$0xff]
        %v4209 = vld [vmem:[#allocation4 + $0x48] sm:$0xff]
        %v4210 = vld [vmem:[#allocation4 + $0x50] sm:$0xff]
        %v4211 = vld [vmem:[#allocation4 + $0x58] sm:$0xff]
        %v4212 = vld [vmem:[#allocation4 + $0x60] sm:$0xff]
        %v4213 = vld [vmem:[#allocation4 + $0x68] sm:$0xff]
        %v4214 = vld [vmem:[#allocation4 + $0x70] sm:$0xff]
        %v4215 = vld [vmem:[#allocation4 + $0x78] sm:$0xff]
        %v4216 = vld [vmem:[#allocation4 + $0x80] sm:$0xff]
        %v4217 = vld [vmem:[#allocation3 + $0x2a] sm:$0xff]
        %v4218 = vld [vmem:[#allocation3 + $0x32] sm:$0xff]
        %v4219 = vld [vmem:[#allocation3 + $0x3a] sm:$0xff]
        %v4220 = vld [vmem:[#allocation3 + $0x42] sm:$0xff]
        %v4221 = vld [vmem:[#allocation3 + $0x4a] sm:$0xff]
        %v4222 = vld [vmem:[#allocation3 + $0x52] sm:$0xff]
        %v4223 = vld [vmem:[#allocation3 + $0x5a] sm:$0xff]
        %v4224 = vld [vmem:[#allocation3 + $0x62] sm:$0xff]
        %v4225 = vld [vmem:[#allocation3 + $0x6a] sm:$0xff]
        %v4226 = vld [vmem:[#allocation3 + $0x72] sm:$0xff]
        %v4227 = vld [vmem:[#allocation3 + $0x7a] sm:$0xff]
        %v4228 = vld [vmem:[#allocation3 + $0x82] sm:$0xff]
        %v4229 = vld [vmem:[#allocation3 + $0x8a] sm:$0xff]
        %v4230 = vld [vmem:[#allocation3 + $0x92] sm:$0xff]
        %v4231 = vld [vmem:[#allocation3 + $0x9a] sm:$0xff]
        %v4232 = vld [vmem:[#allocation3 + $0xa2] sm:$0xff]
        %v4233 = vld [vmem:[#allocation3 + $0xaa] sm:$0xff]
        %s4234 = scalar_lea.vmem %s3, 120
        %v4235 = vld [vmem:[%s4234] sm:$0xff]
        %v4237 = vsel %vm913, %v4217, 0
        %v4240 = vsel %vm913, %v4218, 0
        %v4243 = vsel %vm913, %v4219, 0
        %v4246 = vsel %vm913, %v4220, 0
        %v4249 = vsel %vm913, %v4221, 0
        %v4252 = vsel %vm913, %v4222, 0
        %v4255 = vsel %vm913, %v4223, 0
        %v4258 = vsel %vm913, %v4224, 0
        %v4261 = vsel %vm913, %v4225, 0
        %v4264 = vsel %vm913, %v4226, 0
        %v4267 = vsel %vm913, %v4227, 0
        %v4270 = vsel %vm913, %v4228, 0
        %v4273 = vsel %vm913, %v4229, 0
        %v4276 = vsel %vm913, %v4230, 0
        %v4279 = vsel %vm913, %v4231, 0
        %v4282 = vsel %vm913, %v4232, 0
        %v4285 = vsel %vm913, %v4233, 0
        %4287 = vmatpush.msra.mxu0 0.0
        %4288 = vmatpush.msra.mxu0 0.0
        %4289 = vmatpush.msra.mxu0 0.0
        %4290 = vmatpush.msra.mxu0 0.0
        %4291 = vmatpush.msra.mxu0 0.0
        %4292 = vmatpush.msra.mxu0 0.0
        %4293 = vmatpush.msra.mxu0 0.0
        %4294 = vmatpush.msra.mxu0 0.0
        %4295 = vmatpush.msra.mxu0 0.0
        %4296 = vmatpush.msra.mxu0 0.0
        %4297 = vmatpush.msra.mxu0 0.0
        %4298 = vmatpush.msra.mxu0 0.0
        %4299 = vmatpush.msra.mxu0 0.0
        %4300 = vmatpush.msra.mxu0 0.0
        %4301 = vmatpush.msra.mxu0 0.0
        %4302 = vmatpush.msra.mxu0 %v4235
        %4303 = vmatmul.f32.gmra.mxu0 %v4237
        %v4304 = vpop.f32.mrf.mxu0
        %v4305 = vadd.f32 0.0, %v4304
        %4306 = vmatmul.f32.gmra.mxu0 %v4240
        %v4307 = vpop.f32.mrf.mxu0
        %v4308 = vadd.f32 0.0, %v4307
        %4309 = vmatmul.f32.gmra.mxu0 %v4243
        %v4310 = vpop.f32.mrf.mxu0
        %v4311 = vadd.f32 0.0, %v4310
        %4312 = vmatmul.f32.gmra.mxu0 %v4246
        %v4313 = vpop.f32.mrf.mxu0
        %v4314 = vadd.f32 0.0, %v4313
        %4315 = vmatmul.f32.gmra.mxu0 %v4249
        %v4316 = vpop.f32.mrf.mxu0
        %v4317 = vadd.f32 0.0, %v4316
        %4318 = vmatmul.f32.gmra.mxu0 %v4252
        %v4319 = vpop.f32.mrf.mxu0
        %v4320 = vadd.f32 0.0, %v4319
        %4321 = vmatmul.f32.gmra.mxu0 %v4255
        %v4322 = vpop.f32.mrf.mxu0
        %v4323 = vadd.f32 0.0, %v4322
        %4324 = vmatmul.f32.gmra.mxu0 %v4258
        %v4325 = vpop.f32.mrf.mxu0
        %v4326 = vadd.f32 0.0, %v4325
        %4327 = vmatmul.f32.gmra.mxu0 %v4261
        %v4328 = vpop.f32.mrf.mxu0
        %v4329 = vadd.f32 0.0, %v4328
        %4330 = vmatmul.f32.gmra.mxu0 %v4264
        %v4331 = vpop.f32.mrf.mxu0
        %v4332 = vadd.f32 0.0, %v4331
        %4333 = vmatmul.f32.gmra.mxu0 %v4267
        %v4334 = vpop.f32.mrf.mxu0
        %v4335 = vadd.f32 0.0, %v4334
        %4336 = vmatmul.f32.gmra.mxu0 %v4270
        %v4337 = vpop.f32.mrf.mxu0
        %v4338 = vadd.f32 0.0, %v4337
        %4339 = vmatmul.f32.gmra.mxu0 %v4273
        %v4340 = vpop.f32.mrf.mxu0
        %v4341 = vadd.f32 0.0, %v4340
        %4342 = vmatmul.f32.gmra.mxu0 %v4276
        %v4343 = vpop.f32.mrf.mxu0
        %v4344 = vadd.f32 0.0, %v4343
        %4345 = vmatmul.f32.gmra.mxu0 %v4279
        %v4346 = vpop.f32.mrf.mxu0
        %v4347 = vadd.f32 0.0, %v4346
        %4348 = vmatmul.f32.gmra.mxu0 %v4282
        %v4349 = vpop.f32.mrf.mxu0
        %v4350 = vadd.f32 0.0, %v4349
        %4351 = vmatmul.f32.gmra.mxu0 %v4285
        %v4352 = vpop.f32.mrf.mxu0
        %v4353 = vadd.f32 0.0, %v4352
        %4354 = vdwg.mxu0
        %v4355 = vadd.f32 %v4200, %v4305
        %v4356 = vadd.f32 %v4201, %v4308
        %v4357 = vadd.f32 %v4202, %v4311
        %v4358 = vadd.f32 %v4203, %v4314
        %v4359 = vadd.f32 %v4204, %v4317
        %v4360 = vadd.f32 %v4205, %v4320
        %v4361 = vadd.f32 %v4206, %v4323
        %v4362 = vadd.f32 %v4207, %v4326
        %v4363 = vadd.f32 %v4208, %v4329
        %v4364 = vadd.f32 %v4209, %v4332
        %v4365 = vadd.f32 %v4210, %v4335
        %v4366 = vadd.f32 %v4211, %v4338
        %v4367 = vadd.f32 %v4212, %v4341
        %v4368 = vadd.f32 %v4213, %v4344
        %v4369 = vadd.f32 %v4214, %v4347
        %v4370 = vadd.f32 %v4215, %v4350
        %v4371 = vadd.f32 %v4216, %v4353
        %4372 = vst.msk [vmem:[#allocation4] sm:$0xff] %vm1348, %v4355
        %4373 = vst.msk [vmem:[#allocation4 + $0x8] sm:$0xff] %vm1348, %v4356
        %4374 = vst.msk [vmem:[#allocation4 + $0x10] sm:$0xff] %vm1348, %v4357
        %4375 = vst.msk [vmem:[#allocation4 + $0x18] sm:$0xff] %vm1348, %v4358
        %4376 = vst.msk [vmem:[#allocation4 + $0x20] sm:$0xff] %vm1348, %v4359
        %4377 = vst.msk [vmem:[#allocation4 + $0x28] sm:$0xff] %vm1348, %v4360
        %4378 = vst.msk [vmem:[#allocation4 + $0x30] sm:$0xff] %vm1348, %v4361
        %4379 = vst.msk [vmem:[#allocation4 + $0x38] sm:$0xff] %vm1348, %v4362
        %4380 = vst.msk [vmem:[#allocation4 + $0x40] sm:$0xff] %vm1348, %v4363
        %4381 = vst.msk [vmem:[#allocation4 + $0x48] sm:$0xff] %vm1348, %v4364
        %4382 = vst.msk [vmem:[#allocation4 + $0x50] sm:$0xff] %vm1348, %v4365
        %4383 = vst.msk [vmem:[#allocation4 + $0x58] sm:$0xff] %vm1348, %v4366
        %4384 = vst.msk [vmem:[#allocation4 + $0x60] sm:$0xff] %vm1348, %v4367
        %4385 = vst.msk [vmem:[#allocation4 + $0x68] sm:$0xff] %vm1348, %v4368
        %4386 = vst.msk [vmem:[#allocation4 + $0x70] sm:$0xff] %vm1348, %v4369
        %4387 = vst.msk [vmem:[#allocation4 + $0x78] sm:$0xff] %vm1348, %v4370
        %4388 = vst.msk [vmem:[#allocation4 + $0x80] sm:$0xff] %vm1348, %v4371
        %v4389 = vld [vmem:[#allocation4] sm:$0xff]
        %v4390 = vld [vmem:[#allocation4 + $0x8] sm:$0xff]
        %v4391 = vld [vmem:[#allocation4 + $0x10] sm:$0xff]
        %v4392 = vld [vmem:[#allocation4 + $0x18] sm:$0xff]
        %v4393 = vld [vmem:[#allocation4 + $0x20] sm:$0xff]
        %v4394 = vld [vmem:[#allocation4 + $0x28] sm:$0xff]
        %v4395 = vld [vmem:[#allocation4 + $0x30] sm:$0xff]
        %v4396 = vld [vmem:[#allocation4 + $0x38] sm:$0xff]
        %v4397 = vld [vmem:[#allocation4 + $0x40] sm:$0xff]
        %v4398 = vld [vmem:[#allocation4 + $0x48] sm:$0xff]
        %v4399 = vld [vmem:[#allocation4 + $0x50] sm:$0xff]
        %v4400 = vld [vmem:[#allocation4 + $0x58] sm:$0xff]
        %v4401 = vld [vmem:[#allocation4 + $0x60] sm:$0xff]
        %v4402 = vld [vmem:[#allocation4 + $0x68] sm:$0xff]
        %v4403 = vld [vmem:[#allocation4 + $0x70] sm:$0xff]
        %v4404 = vld [vmem:[#allocation4 + $0x78] sm:$0xff]
        %v4405 = vld [vmem:[#allocation4 + $0x80] sm:$0xff]
        %v4406 = vld [vmem:[#allocation3 + $0x2b] sm:$0xff]
        %v4407 = vld [vmem:[#allocation3 + $0x33] sm:$0xff]
        %v4408 = vld [vmem:[#allocation3 + $0x3b] sm:$0xff]
        %v4409 = vld [vmem:[#allocation3 + $0x43] sm:$0xff]
        %v4410 = vld [vmem:[#allocation3 + $0x4b] sm:$0xff]
        %v4411 = vld [vmem:[#allocation3 + $0x53] sm:$0xff]
        %v4412 = vld [vmem:[#allocation3 + $0x5b] sm:$0xff]
        %v4413 = vld [vmem:[#allocation3 + $0x63] sm:$0xff]
        %v4414 = vld [vmem:[#allocation3 + $0x6b] sm:$0xff]
        %v4415 = vld [vmem:[#allocation3 + $0x73] sm:$0xff]
        %v4416 = vld [vmem:[#allocation3 + $0x7b] sm:$0xff]
        %v4417 = vld [vmem:[#allocation3 + $0x83] sm:$0xff]
        %v4418 = vld [vmem:[#allocation3 + $0x8b] sm:$0xff]
        %v4419 = vld [vmem:[#allocation3 + $0x93] sm:$0xff]
        %v4420 = vld [vmem:[#allocation3 + $0x9b] sm:$0xff]
        %v4421 = vld [vmem:[#allocation3 + $0xa3] sm:$0xff]
        %v4422 = vld [vmem:[#allocation3 + $0xab] sm:$0xff]
        %s4423 = scalar_lea.vmem %s3, 128
        %v4424 = vld [vmem:[%s4423] sm:$0xff]
        %v4426 = vsel %vm913, %v4406, 0
        %v4429 = vsel %vm913, %v4407, 0
        %v4432 = vsel %vm913, %v4408, 0
        %v4435 = vsel %vm913, %v4409, 0
        %v4438 = vsel %vm913, %v4410, 0
        %v4441 = vsel %vm913, %v4411, 0
        %v4444 = vsel %vm913, %v4412, 0
        %v4447 = vsel %vm913, %v4413, 0
        %v4450 = vsel %vm913, %v4414, 0
        %v4453 = vsel %vm913, %v4415, 0
        %v4456 = vsel %vm913, %v4416, 0
        %v4459 = vsel %vm913, %v4417, 0
        %v4462 = vsel %vm913, %v4418, 0
        %v4465 = vsel %vm913, %v4419, 0
        %v4468 = vsel %vm913, %v4420, 0
        %v4471 = vsel %vm913, %v4421, 0
        %v4474 = vsel %vm913, %v4422, 0
        %4476 = vmatpush.msra.mxu0 0.0
        %4477 = vmatpush.msra.mxu0 0.0
        %4478 = vmatpush.msra.mxu0 0.0
        %4479 = vmatpush.msra.mxu0 0.0
        %4480 = vmatpush.msra.mxu0 0.0
        %4481 = vmatpush.msra.mxu0 0.0
        %4482 = vmatpush.msra.mxu0 0.0
        %4483 = vmatpush.msra.mxu0 0.0
        %4484 = vmatpush.msra.mxu0 0.0
        %4485 = vmatpush.msra.mxu0 0.0
        %4486 = vmatpush.msra.mxu0 0.0
        %4487 = vmatpush.msra.mxu0 0.0
        %4488 = vmatpush.msra.mxu0 0.0
        %4489 = vmatpush.msra.mxu0 0.0
        %4490 = vmatpush.msra.mxu0 0.0
        %4491 = vmatpush.msra.mxu0 %v4424
        %4492 = vmatmul.f32.gmra.mxu0 %v4426
        %v4493 = vpop.f32.mrf.mxu0
        %v4494 = vadd.f32 0.0, %v4493
        %4495 = vmatmul.f32.gmra.mxu0 %v4429
        %v4496 = vpop.f32.mrf.mxu0
        %v4497 = vadd.f32 0.0, %v4496
        %4498 = vmatmul.f32.gmra.mxu0 %v4432
        %v4499 = vpop.f32.mrf.mxu0
        %v4500 = vadd.f32 0.0, %v4499
        %4501 = vmatmul.f32.gmra.mxu0 %v4435
        %v4502 = vpop.f32.mrf.mxu0
        %v4503 = vadd.f32 0.0, %v4502
        %4504 = vmatmul.f32.gmra.mxu0 %v4438
        %v4505 = vpop.f32.mrf.mxu0
        %v4506 = vadd.f32 0.0, %v4505
        %4507 = vmatmul.f32.gmra.mxu0 %v4441
        %v4508 = vpop.f32.mrf.mxu0
        %v4509 = vadd.f32 0.0, %v4508
        %4510 = vmatmul.f32.gmra.mxu0 %v4444
        %v4511 = vpop.f32.mrf.mxu0
        %v4512 = vadd.f32 0.0, %v4511
        %4513 = vmatmul.f32.gmra.mxu0 %v4447
        %v4514 = vpop.f32.mrf.mxu0
        %v4515 = vadd.f32 0.0, %v4514
        %4516 = vmatmul.f32.gmra.mxu0 %v4450
        %v4517 = vpop.f32.mrf.mxu0
        %v4518 = vadd.f32 0.0, %v4517
        %4519 = vmatmul.f32.gmra.mxu0 %v4453
        %v4520 = vpop.f32.mrf.mxu0
        %v4521 = vadd.f32 0.0, %v4520
        %4522 = vmatmul.f32.gmra.mxu0 %v4456
        %v4523 = vpop.f32.mrf.mxu0
        %v4524 = vadd.f32 0.0, %v4523
        %4525 = vmatmul.f32.gmra.mxu0 %v4459
        %v4526 = vpop.f32.mrf.mxu0
        %v4527 = vadd.f32 0.0, %v4526
        %4528 = vmatmul.f32.gmra.mxu0 %v4462
        %v4529 = vpop.f32.mrf.mxu0
        %v4530 = vadd.f32 0.0, %v4529
        %4531 = vmatmul.f32.gmra.mxu0 %v4465
        %v4532 = vpop.f32.mrf.mxu0
        %v4533 = vadd.f32 0.0, %v4532
        %4534 = vmatmul.f32.gmra.mxu0 %v4468
        %v4535 = vpop.f32.mrf.mxu0
        %v4536 = vadd.f32 0.0, %v4535
        %4537 = vmatmul.f32.gmra.mxu0 %v4471
        %v4538 = vpop.f32.mrf.mxu0
        %v4539 = vadd.f32 0.0, %v4538
        %4540 = vmatmul.f32.gmra.mxu0 %v4474
        %v4541 = vpop.f32.mrf.mxu0
        %v4542 = vadd.f32 0.0, %v4541
        %4543 = vdwg.mxu0
        %v4544 = vadd.f32 %v4389, %v4494
        %v4545 = vadd.f32 %v4390, %v4497
        %v4546 = vadd.f32 %v4391, %v4500
        %v4547 = vadd.f32 %v4392, %v4503
        %v4548 = vadd.f32 %v4393, %v4506
        %v4549 = vadd.f32 %v4394, %v4509
        %v4550 = vadd.f32 %v4395, %v4512
        %v4551 = vadd.f32 %v4396, %v4515
        %v4552 = vadd.f32 %v4397, %v4518
        %v4553 = vadd.f32 %v4398, %v4521
        %v4554 = vadd.f32 %v4399, %v4524
        %v4555 = vadd.f32 %v4400, %v4527
        %v4556 = vadd.f32 %v4401, %v4530
        %v4557 = vadd.f32 %v4402, %v4533
        %v4558 = vadd.f32 %v4403, %v4536
        %v4559 = vadd.f32 %v4404, %v4539
        %v4560 = vadd.f32 %v4405, %v4542
        %4561 = vst.msk [vmem:[#allocation4] sm:$0xff] %vm1348, %v4544
        %4562 = vst.msk [vmem:[#allocation4 + $0x8] sm:$0xff] %vm1348, %v4545
        %4563 = vst.msk [vmem:[#allocation4 + $0x10] sm:$0xff] %vm1348, %v4546
        %4564 = vst.msk [vmem:[#allocation4 + $0x18] sm:$0xff] %vm1348, %v4547
        %4565 = vst.msk [vmem:[#allocation4 + $0x20] sm:$0xff] %vm1348, %v4548
        %4566 = vst.msk [vmem:[#allocation4 + $0x28] sm:$0xff] %vm1348, %v4549
        %4567 = vst.msk [vmem:[#allocation4 + $0x30] sm:$0xff] %vm1348, %v4550
        %4568 = vst.msk [vmem:[#allocation4 + $0x38] sm:$0xff] %vm1348, %v4551
        %4569 = vst.msk [vmem:[#allocation4 + $0x40] sm:$0xff] %vm1348, %v4552
        %4570 = vst.msk [vmem:[#allocation4 + $0x48] sm:$0xff] %vm1348, %v4553
        %4571 = vst.msk [vmem:[#allocation4 + $0x50] sm:$0xff] %vm1348, %v4554
        %4572 = vst.msk [vmem:[#allocation4 + $0x58] sm:$0xff] %vm1348, %v4555
        %4573 = vst.msk [vmem:[#allocation4 + $0x60] sm:$0xff] %vm1348, %v4556
        %4574 = vst.msk [vmem:[#allocation4 + $0x68] sm:$0xff] %vm1348, %v4557
        %4575 = vst.msk [vmem:[#allocation4 + $0x70] sm:$0xff] %vm1348, %v4558
        %4576 = vst.msk [vmem:[#allocation4 + $0x78] sm:$0xff] %vm1348, %v4559
        %4577 = vst.msk [vmem:[#allocation4 + $0x80] sm:$0xff] %vm1348, %v4560
        %v4578 = vld [vmem:[#allocation4] sm:$0xff]
        %v4579 = vld [vmem:[#allocation4 + $0x8] sm:$0xff]
        %v4580 = vld [vmem:[#allocation4 + $0x10] sm:$0xff]
        %v4581 = vld [vmem:[#allocation4 + $0x18] sm:$0xff]
        %v4582 = vld [vmem:[#allocation4 + $0x20] sm:$0xff]
        %v4583 = vld [vmem:[#allocation4 + $0x28] sm:$0xff]
        %v4584 = vld [vmem:[#allocation4 + $0x30] sm:$0xff]
        %v4585 = vld [vmem:[#allocation4 + $0x38] sm:$0xff]
        %v4586 = vld [vmem:[#allocation4 + $0x40] sm:$0xff]
        %v4587 = vld [vmem:[#allocation4 + $0x48] sm:$0xff]
        %v4588 = vld [vmem:[#allocation4 + $0x50] sm:$0xff]
        %v4589 = vld [vmem:[#allocation4 + $0x58] sm:$0xff]
        %v4590 = vld [vmem:[#allocation4 + $0x60] sm:$0xff]
        %v4591 = vld [vmem:[#allocation4 + $0x68] sm:$0xff]
        %v4592 = vld [vmem:[#allocation4 + $0x70] sm:$0xff]
        %v4593 = vld [vmem:[#allocation4 + $0x78] sm:$0xff]
        %v4594 = vld [vmem:[#allocation4 + $0x80] sm:$0xff]
        %v4595 = vld [vmem:[#allocation3 + $0x2c] sm:$0xff]
        %v4596 = vld [vmem:[#allocation3 + $0x34] sm:$0xff]
        %v4597 = vld [vmem:[#allocation3 + $0x3c] sm:$0xff]
        %v4598 = vld [vmem:[#allocation3 + $0x44] sm:$0xff]
        %v4599 = vld [vmem:[#allocation3 + $0x4c] sm:$0xff]
        %v4600 = vld [vmem:[#allocation3 + $0x54] sm:$0xff]
        %v4601 = vld [vmem:[#allocation3 + $0x5c] sm:$0xff]
        %v4602 = vld [vmem:[#allocation3 + $0x64] sm:$0xff]
        %v4603 = vld [vmem:[#allocation3 + $0x6c] sm:$0xff]
        %v4604 = vld [vmem:[#allocation3 + $0x74] sm:$0xff]
        %v4605 = vld [vmem:[#allocation3 + $0x7c] sm:$0xff]
        %v4606 = vld [vmem:[#allocation3 + $0x84] sm:$0xff]
        %v4607 = vld [vmem:[#allocation3 + $0x8c] sm:$0xff]
        %v4608 = vld [vmem:[#allocation3 + $0x94] sm:$0xff]
        %v4609 = vld [vmem:[#allocation3 + $0x9c] sm:$0xff]
        %v4610 = vld [vmem:[#allocation3 + $0xa4] sm:$0xff]
        %v4611 = vld [vmem:[#allocation3 + $0xac] sm:$0xff]
        %s4612 = scalar_lea.vmem %s3, 136
        %v4613 = vld [vmem:[%s4612] sm:$0xff]
        %v4615 = vsel %vm913, %v4595, 0
        %v4618 = vsel %vm913, %v4596, 0
        %v4621 = vsel %vm913, %v4597, 0
        %v4624 = vsel %vm913, %v4598, 0
        %v4627 = vsel %vm913, %v4599, 0
        %v4630 = vsel %vm913, %v4600, 0
        %v4633 = vsel %vm913, %v4601, 0
        %v4636 = vsel %vm913, %v4602, 0
        %v4639 = vsel %vm913, %v4603, 0
        %v4642 = vsel %vm913, %v4604, 0
        %v4645 = vsel %vm913, %v4605, 0
        %v4648 = vsel %vm913, %v4606, 0
        %v4651 = vsel %vm913, %v4607, 0
        %v4654 = vsel %vm913, %v4608, 0
        %v4657 = vsel %vm913, %v4609, 0
        %v4660 = vsel %vm913, %v4610, 0
        %v4663 = vsel %vm913, %v4611, 0
        %4665 = vmatpush.msra.mxu0 0.0
        %4666 = vmatpush.msra.mxu0 0.0
        %4667 = vmatpush.msra.mxu0 0.0
        %4668 = vmatpush.msra.mxu0 0.0
        %4669 = vmatpush.msra.mxu0 0.0
        %4670 = vmatpush.msra.mxu0 0.0
        %4671 = vmatpush.msra.mxu0 0.0
        %4672 = vmatpush.msra.mxu0 0.0
        %4673 = vmatpush.msra.mxu0 0.0
        %4674 = vmatpush.msra.mxu0 0.0
        %4675 = vmatpush.msra.mxu0 0.0
        %4676 = vmatpush.msra.mxu0 0.0
        %4677 = vmatpush.msra.mxu0 0.0
        %4678 = vmatpush.msra.mxu0 0.0
        %4679 = vmatpush.msra.mxu0 0.0
        %4680 = vmatpush.msra.mxu0 %v4613
        %4681 = vmatmul.f32.gmra.mxu0 %v4615
        %v4682 = vpop.f32.mrf.mxu0
        %v4683 = vadd.f32 0.0, %v4682
        %4684 = vmatmul.f32.gmra.mxu0 %v4618
        %v4685 = vpop.f32.mrf.mxu0
        %v4686 = vadd.f32 0.0, %v4685
        %4687 = vmatmul.f32.gmra.mxu0 %v4621
        %v4688 = vpop.f32.mrf.mxu0
        %v4689 = vadd.f32 0.0, %v4688
        %4690 = vmatmul.f32.gmra.mxu0 %v4624
        %v4691 = vpop.f32.mrf.mxu0
        %v4692 = vadd.f32 0.0, %v4691
        %4693 = vmatmul.f32.gmra.mxu0 %v4627
        %v4694 = vpop.f32.mrf.mxu0
        %v4695 = vadd.f32 0.0, %v4694
        %4696 = vmatmul.f32.gmra.mxu0 %v4630
        %v4697 = vpop.f32.mrf.mxu0
        %v4698 = vadd.f32 0.0, %v4697
        %4699 = vmatmul.f32.gmra.mxu0 %v4633
        %v4700 = vpop.f32.mrf.mxu0
        %v4701 = vadd.f32 0.0, %v4700
        %4702 = vmatmul.f32.gmra.mxu0 %v4636
        %v4703 = vpop.f32.mrf.mxu0
        %v4704 = vadd.f32 0.0, %v4703
        %4705 = vmatmul.f32.gmra.mxu0 %v4639
        %v4706 = vpop.f32.mrf.mxu0
        %v4707 = vadd.f32 0.0, %v4706
        %4708 = vmatmul.f32.gmra.mxu0 %v4642
        %v4709 = vpop.f32.mrf.mxu0
        %v4710 = vadd.f32 0.0, %v4709
        %4711 = vmatmul.f32.gmra.mxu0 %v4645
        %v4712 = vpop.f32.mrf.mxu0
        %v4713 = vadd.f32 0.0, %v4712
        %4714 = vmatmul.f32.gmra.mxu0 %v4648
        %v4715 = vpop.f32.mrf.mxu0
        %v4716 = vadd.f32 0.0, %v4715
        %4717 = vmatmul.f32.gmra.mxu0 %v4651
        %v4718 = vpop.f32.mrf.mxu0
        %v4719 = vadd.f32 0.0, %v4718
        %4720 = vmatmul.f32.gmra.mxu0 %v4654
        %v4721 = vpop.f32.mrf.mxu0
        %v4722 = vadd.f32 0.0, %v4721
        %4723 = vmatmul.f32.gmra.mxu0 %v4657
        %v4724 = vpop.f32.mrf.mxu0
        %v4725 = vadd.f32 0.0, %v4724
        %4726 = vmatmul.f32.gmra.mxu0 %v4660
        %v4727 = vpop.f32.mrf.mxu0
        %v4728 = vadd.f32 0.0, %v4727
        %4729 = vmatmul.f32.gmra.mxu0 %v4663
        %v4730 = vpop.f32.mrf.mxu0
        %v4731 = vadd.f32 0.0, %v4730
        %4732 = vdwg.mxu0
        %v4733 = vadd.f32 %v4578, %v4683
        %v4734 = vadd.f32 %v4579, %v4686
        %v4735 = vadd.f32 %v4580, %v4689
        %v4736 = vadd.f32 %v4581, %v4692
        %v4737 = vadd.f32 %v4582, %v4695
        %v4738 = vadd.f32 %v4583, %v4698
        %v4739 = vadd.f32 %v4584, %v4701
        %v4740 = vadd.f32 %v4585, %v4704
        %v4741 = vadd.f32 %v4586, %v4707
        %v4742 = vadd.f32 %v4587, %v4710
        %v4743 = vadd.f32 %v4588, %v4713
        %v4744 = vadd.f32 %v4589, %v4716
        %v4745 = vadd.f32 %v4590, %v4719
        %v4746 = vadd.f32 %v4591, %v4722
        %v4747 = vadd.f32 %v4592, %v4725
        %v4748 = vadd.f32 %v4593, %v4728
        %v4749 = vadd.f32 %v4594, %v4731
        %4750 = vst.msk [vmem:[#allocation4] sm:$0xff] %vm1348, %v4733
        %4751 = vst.msk [vmem:[#allocation4 + $0x8] sm:$0xff] %vm1348, %v4734
        %4752 = vst.msk [vmem:[#allocation4 + $0x10] sm:$0xff] %vm1348, %v4735
        %4753 = vst.msk [vmem:[#allocation4 + $0x18] sm:$0xff] %vm1348, %v4736
        %4754 = vst.msk [vmem:[#allocation4 + $0x20] sm:$0xff] %vm1348, %v4737
        %4755 = vst.msk [vmem:[#allocation4 + $0x28] sm:$0xff] %vm1348, %v4738
        %4756 = vst.msk [vmem:[#allocation4 + $0x30] sm:$0xff] %vm1348, %v4739
        %4757 = vst.msk [vmem:[#allocation4 + $0x38] sm:$0xff] %vm1348, %v4740
        %4758 = vst.msk [vmem:[#allocation4 + $0x40] sm:$0xff] %vm1348, %v4741
        %4759 = vst.msk [vmem:[#allocation4 + $0x48] sm:$0xff] %vm1348, %v4742
        %4760 = vst.msk [vmem:[#allocation4 + $0x50] sm:$0xff] %vm1348, %v4743
        %4761 = vst.msk [vmem:[#allocation4 + $0x58] sm:$0xff] %vm1348, %v4744
        %4762 = vst.msk [vmem:[#allocation4 + $0x60] sm:$0xff] %vm1348, %v4745
        %4763 = vst.msk [vmem:[#allocation4 + $0x68] sm:$0xff] %vm1348, %v4746
        %4764 = vst.msk [vmem:[#allocation4 + $0x70] sm:$0xff] %vm1348, %v4747
        %4765 = vst.msk [vmem:[#allocation4 + $0x78] sm:$0xff] %vm1348, %v4748
        %4766 = vst.msk [vmem:[#allocation4 + $0x80] sm:$0xff] %vm1348, %v4749
        %v4767 = vld [vmem:[#allocation4] sm:$0xff]
        %v4768 = vld [vmem:[#allocation4 + $0x8] sm:$0xff]
        %v4769 = vld [vmem:[#allocation4 + $0x10] sm:$0xff]
        %v4770 = vld [vmem:[#allocation4 + $0x18] sm:$0xff]
        %v4771 = vld [vmem:[#allocation4 + $0x20] sm:$0xff]
        %v4772 = vld [vmem:[#allocation4 + $0x28] sm:$0xff]
        %v4773 = vld [vmem:[#allocation4 + $0x30] sm:$0xff]
        %v4774 = vld [vmem:[#allocation4 + $0x38] sm:$0xff]
        %v4775 = vld [vmem:[#allocation4 + $0x40] sm:$0xff]
        %v4776 = vld [vmem:[#allocation4 + $0x48] sm:$0xff]
        %v4777 = vld [vmem:[#allocation4 + $0x50] sm:$0xff]
        %v4778 = vld [vmem:[#allocation4 + $0x58] sm:$0xff]
        %v4779 = vld [vmem:[#allocation4 + $0x60] sm:$0xff]
        %v4780 = vld [vmem:[#allocation4 + $0x68] sm:$0xff]
        %v4781 = vld [vmem:[#allocation4 + $0x70] sm:$0xff]
        %v4782 = vld [vmem:[#allocation4 + $0x78] sm:$0xff]
        %v4783 = vld [vmem:[#allocation4 + $0x80] sm:$0xff]
        %v4784 = vld [vmem:[#allocation3 + $0x2d] sm:$0xff]
        %v4785 = vld [vmem:[#allocation3 + $0x35] sm:$0xff]
        %v4786 = vld [vmem:[#allocation3 + $0x3d] sm:$0xff]
        %v4787 = vld [vmem:[#allocation3 + $0x45] sm:$0xff]
        %v4788 = vld [vmem:[#allocation3 + $0x4d] sm:$0xff]
        %v4789 = vld [vmem:[#allocation3 + $0x55] sm:$0xff]
        %v4790 = vld [vmem:[#allocation3 + $0x5d] sm:$0xff]
        %v4791 = vld [vmem:[#allocation3 + $0x65] sm:$0xff]
        %v4792 = vld [vmem:[#allocation3 + $0x6d] sm:$0xff]
        %v4793 = vld [vmem:[#allocation3 + $0x75] sm:$0xff]
        %v4794 = vld [vmem:[#allocation3 + $0x7d] sm:$0xff]
        %v4795 = vld [vmem:[#allocation3 + $0x85] sm:$0xff]
        %v4796 = vld [vmem:[#allocation3 + $0x8d] sm:$0xff]
        %v4797 = vld [vmem:[#allocation3 + $0x95] sm:$0xff]
        %v4798 = vld [vmem:[#allocation3 + $0x9d] sm:$0xff]
        %v4799 = vld [vmem:[#allocation3 + $0xa5] sm:$0xff]
        %v4800 = vld [vmem:[#allocation3 + $0xad] sm:$0xff]
        %s4801 = scalar_lea.vmem %s3, 144
        %v4802 = vld [vmem:[%s4801] sm:$0xff]
        %v4804 = vsel %vm913, %v4784, 0
        %v4807 = vsel %vm913, %v4785, 0
        %v4810 = vsel %vm913, %v4786, 0
        %v4813 = vsel %vm913, %v4787, 0
        %v4816 = vsel %vm913, %v4788, 0
        %v4819 = vsel %vm913, %v4789, 0
        %v4822 = vsel %vm913, %v4790, 0
        %v4825 = vsel %vm913, %v4791, 0
        %v4828 = vsel %vm913, %v4792, 0
        %v4831 = vsel %vm913, %v4793, 0
        %v4834 = vsel %vm913, %v4794, 0
        %v4837 = vsel %vm913, %v4795, 0
        %v4840 = vsel %vm913, %v4796, 0
        %v4843 = vsel %vm913, %v4797, 0
        %v4846 = vsel %vm913, %v4798, 0
        %v4849 = vsel %vm913, %v4799, 0
        %v4852 = vsel %vm913, %v4800, 0
        %4854 = vmatpush.msra.mxu0 0.0
        %4855 = vmatpush.msra.mxu0 0.0
        %4856 = vmatpush.msra.mxu0 0.0
        %4857 = vmatpush.msra.mxu0 0.0
        %4858 = vmatpush.msra.mxu0 0.0
        %4859 = vmatpush.msra.mxu0 0.0
        %4860 = vmatpush.msra.mxu0 0.0
        %4861 = vmatpush.msra.mxu0 0.0
        %4862 = vmatpush.msra.mxu0 0.0
        %4863 = vmatpush.msra.mxu0 0.0
        %4864 = vmatpush.msra.mxu0 0.0
        %4865 = vmatpush.msra.mxu0 0.0
        %4866 = vmatpush.msra.mxu0 0.0
        %4867 = vmatpush.msra.mxu0 0.0
        %4868 = vmatpush.msra.mxu0 0.0
        %4869 = vmatpush.msra.mxu0 %v4802
        %4870 = vmatmul.f32.gmra.mxu0 %v4804
        %v4871 = vpop.f32.mrf.mxu0
        %v4872 = vadd.f32 0.0, %v4871
        %4873 = vmatmul.f32.gmra.mxu0 %v4807
        %v4874 = vpop.f32.mrf.mxu0
        %v4875 = vadd.f32 0.0, %v4874
        %4876 = vmatmul.f32.gmra.mxu0 %v4810
        %v4877 = vpop.f32.mrf.mxu0
        %v4878 = vadd.f32 0.0, %v4877
        %4879 = vmatmul.f32.gmra.mxu0 %v4813
        %v4880 = vpop.f32.mrf.mxu0
        %v4881 = vadd.f32 0.0, %v4880
        %4882 = vmatmul.f32.gmra.mxu0 %v4816
        %v4883 = vpop.f32.mrf.mxu0
        %v4884 = vadd.f32 0.0, %v4883
        %4885 = vmatmul.f32.gmra.mxu0 %v4819
        %v4886 = vpop.f32.mrf.mxu0
        %v4887 = vadd.f32 0.0, %v4886
        %4888 = vmatmul.f32.gmra.mxu0 %v4822
        %v4889 = vpop.f32.mrf.mxu0
        %v4890 = vadd.f32 0.0, %v4889
        %4891 = vmatmul.f32.gmra.mxu0 %v4825
        %v4892 = vpop.f32.mrf.mxu0
        %v4893 = vadd.f32 0.0, %v4892
        %4894 = vmatmul.f32.gmra.mxu0 %v4828
        %v4895 = vpop.f32.mrf.mxu0
        %v4896 = vadd.f32 0.0, %v4895
        %4897 = vmatmul.f32.gmra.mxu0 %v4831
        %v4898 = vpop.f32.mrf.mxu0
        %v4899 = vadd.f32 0.0, %v4898
        %4900 = vmatmul.f32.gmra.mxu0 %v4834
        %v4901 = vpop.f32.mrf.mxu0
        %v4902 = vadd.f32 0.0, %v4901
        %4903 = vmatmul.f32.gmra.mxu0 %v4837
        %v4904 = vpop.f32.mrf.mxu0
        %v4905 = vadd.f32 0.0, %v4904
        %4906 = vmatmul.f32.gmra.mxu0 %v4840
        %v4907 = vpop.f32.mrf.mxu0
        %v4908 = vadd.f32 0.0, %v4907
        %4909 = vmatmul.f32.gmra.mxu0 %v4843
        %v4910 = vpop.f32.mrf.mxu0
        %v4911 = vadd.f32 0.0, %v4910
        %4912 = vmatmul.f32.gmra.mxu0 %v4846
        %v4913 = vpop.f32.mrf.mxu0
        %v4914 = vadd.f32 0.0, %v4913
        %4915 = vmatmul.f32.gmra.mxu0 %v4849
        %v4916 = vpop.f32.mrf.mxu0
        %v4917 = vadd.f32 0.0, %v4916
        %4918 = vmatmul.f32.gmra.mxu0 %v4852
        %v4919 = vpop.f32.mrf.mxu0
        %v4920 = vadd.f32 0.0, %v4919
        %4921 = vdwg.mxu0
        %v4922 = vadd.f32 %v4767, %v4872
        %v4923 = vadd.f32 %v4768, %v4875
        %v4924 = vadd.f32 %v4769, %v4878
        %v4925 = vadd.f32 %v4770, %v4881
        %v4926 = vadd.f32 %v4771, %v4884
        %v4927 = vadd.f32 %v4772, %v4887
        %v4928 = vadd.f32 %v4773, %v4890
        %v4929 = vadd.f32 %v4774, %v4893
        %v4930 = vadd.f32 %v4775, %v4896
        %v4931 = vadd.f32 %v4776, %v4899
        %v4932 = vadd.f32 %v4777, %v4902
        %v4933 = vadd.f32 %v4778, %v4905
        %v4934 = vadd.f32 %v4779, %v4908
        %v4935 = vadd.f32 %v4780, %v4911
        %v4936 = vadd.f32 %v4781, %v4914
        %v4937 = vadd.f32 %v4782, %v4917
        %v4938 = vadd.f32 %v4783, %v4920
        %4939 = vst.msk [vmem:[#allocation4] sm:$0xff] %vm1348, %v4922
        %4940 = vst.msk [vmem:[#allocation4 + $0x8] sm:$0xff] %vm1348, %v4923
        %4941 = vst.msk [vmem:[#allocation4 + $0x10] sm:$0xff] %vm1348, %v4924
        %4942 = vst.msk [vmem:[#allocation4 + $0x18] sm:$0xff] %vm1348, %v4925
        %4943 = vst.msk [vmem:[#allocation4 + $0x20] sm:$0xff] %vm1348, %v4926
        %4944 = vst.msk [vmem:[#allocation4 + $0x28] sm:$0xff] %vm1348, %v4927
        %4945 = vst.msk [vmem:[#allocation4 + $0x30] sm:$0xff] %vm1348, %v4928
        %4946 = vst.msk [vmem:[#allocation4 + $0x38] sm:$0xff] %vm1348, %v4929
        %4947 = vst.msk [vmem:[#allocation4 + $0x40] sm:$0xff] %vm1348, %v4930
        %4948 = vst.msk [vmem:[#allocation4 + $0x48] sm:$0xff] %vm1348, %v4931
        %4949 = vst.msk [vmem:[#allocation4 + $0x50] sm:$0xff] %vm1348, %v4932
        %4950 = vst.msk [vmem:[#allocation4 + $0x58] sm:$0xff] %vm1348, %v4933
        %4951 = vst.msk [vmem:[#allocation4 + $0x60] sm:$0xff] %vm1348, %v4934
        %4952 = vst.msk [vmem:[#allocation4 + $0x68] sm:$0xff] %vm1348, %v4935
        %4953 = vst.msk [vmem:[#allocation4 + $0x70] sm:$0xff] %vm1348, %v4936
        %4954 = vst.msk [vmem:[#allocation4 + $0x78] sm:$0xff] %vm1348, %v4937
        %4955 = vst.msk [vmem:[#allocation4 + $0x80] sm:$0xff] %vm1348, %v4938
        %v4956 = vld [vmem:[#allocation4] sm:$0xff]
        %v4957 = vld [vmem:[#allocation4 + $0x8] sm:$0xff]
        %v4958 = vld [vmem:[#allocation4 + $0x10] sm:$0xff]
        %v4959 = vld [vmem:[#allocation4 + $0x18] sm:$0xff]
        %v4960 = vld [vmem:[#allocation4 + $0x20] sm:$0xff]
        %v4961 = vld [vmem:[#allocation4 + $0x28] sm:$0xff]
        %v4962 = vld [vmem:[#allocation4 + $0x30] sm:$0xff]
        %v4963 = vld [vmem:[#allocation4 + $0x38] sm:$0xff]
        %v4964 = vld [vmem:[#allocation4 + $0x40] sm:$0xff]
        %v4965 = vld [vmem:[#allocation4 + $0x48] sm:$0xff]
        %v4966 = vld [vmem:[#allocation4 + $0x50] sm:$0xff]
        %v4967 = vld [vmem:[#allocation4 + $0x58] sm:$0xff]
        %v4968 = vld [vmem:[#allocation4 + $0x60] sm:$0xff]
        %v4969 = vld [vmem:[#allocation4 + $0x68] sm:$0xff]
        %v4970 = vld [vmem:[#allocation4 + $0x70] sm:$0xff]
        %v4971 = vld [vmem:[#allocation4 + $0x78] sm:$0xff]
        %v4972 = vld [vmem:[#allocation4 + $0x80] sm:$0xff]
        %v4973 = vld [vmem:[#allocation3 + $0x2e] sm:$0xff]
        %v4974 = vld [vmem:[#allocation3 + $0x36] sm:$0xff]
        %v4975 = vld [vmem:[#allocation3 + $0x3e] sm:$0xff]
        %v4976 = vld [vmem:[#allocation3 + $0x46] sm:$0xff]
        %v4977 = vld [vmem:[#allocation3 + $0x4e] sm:$0xff]
        %v4978 = vld [vmem:[#allocation3 + $0x56] sm:$0xff]
        %v4979 = vld [vmem:[#allocation3 + $0x5e] sm:$0xff]
        %v4980 = vld [vmem:[#allocation3 + $0x66] sm:$0xff]
        %v4981 = vld [vmem:[#allocation3 + $0x6e] sm:$0xff]
        %v4982 = vld [vmem:[#allocation3 + $0x76] sm:$0xff]
        %v4983 = vld [vmem:[#allocation3 + $0x7e] sm:$0xff]
        %v4984 = vld [vmem:[#allocation3 + $0x86] sm:$0xff]
        %v4985 = vld [vmem:[#allocation3 + $0x8e] sm:$0xff]
        %v4986 = vld [vmem:[#allocation3 + $0x96] sm:$0xff]
        %v4987 = vld [vmem:[#allocation3 + $0x9e] sm:$0xff]
        %v4988 = vld [vmem:[#allocation3 + $0xa6] sm:$0xff]
        %v4989 = vld [vmem:[#allocation3 + $0xae] sm:$0xff]
        %s4990 = scalar_lea.vmem %s3, 152
        %v4991 = vld [vmem:[%s4990] sm:$0xff]
        %v4993 = vsel %vm913, %v4973, 0
        %v4996 = vsel %vm913, %v4974, 0
        %v4999 = vsel %vm913, %v4975, 0
        %v5002 = vsel %vm913, %v4976, 0
        %v5005 = vsel %vm913, %v4977, 0
        %v5008 = vsel %vm913, %v4978, 0
        %v5011 = vsel %vm913, %v4979, 0
        %v5014 = vsel %vm913, %v4980, 0
        %v5017 = vsel %vm913, %v4981, 0
        %v5020 = vsel %vm913, %v4982, 0
        %v5023 = vsel %vm913, %v4983, 0
        %v5026 = vsel %vm913, %v4984, 0
        %v5029 = vsel %vm913, %v4985, 0
        %v5032 = vsel %vm913, %v4986, 0
        %v5035 = vsel %vm913, %v4987, 0
        %v5038 = vsel %vm913, %v4988, 0
        %v5041 = vsel %vm913, %v4989, 0
        %5043 = vmatpush.msra.mxu0 0.0
        %5044 = vmatpush.msra.mxu0 0.0
        %5045 = vmatpush.msra.mxu0 0.0
        %5046 = vmatpush.msra.mxu0 0.0
        %5047 = vmatpush.msra.mxu0 0.0
        %5048 = vmatpush.msra.mxu0 0.0
        %5049 = vmatpush.msra.mxu0 0.0
        %5050 = vmatpush.msra.mxu0 0.0
        %5051 = vmatpush.msra.mxu0 0.0
        %5052 = vmatpush.msra.mxu0 0.0
        %5053 = vmatpush.msra.mxu0 0.0
        %5054 = vmatpush.msra.mxu0 0.0
        %5055 = vmatpush.msra.mxu0 0.0
        %5056 = vmatpush.msra.mxu0 0.0
        %5057 = vmatpush.msra.mxu0 0.0
        %5058 = vmatpush.msra.mxu0 %v4991
        %5059 = vmatmul.f32.gmra.mxu0 %v4993
        %v5060 = vpop.f32.mrf.mxu0
        %v5061 = vadd.f32 0.0, %v5060
        %5062 = vmatmul.f32.gmra.mxu0 %v4996
        %v5063 = vpop.f32.mrf.mxu0
        %v5064 = vadd.f32 0.0, %v5063
        %5065 = vmatmul.f32.gmra.mxu0 %v4999
        %v5066 = vpop.f32.mrf.mxu0
        %v5067 = vadd.f32 0.0, %v5066
        %5068 = vmatmul.f32.gmra.mxu0 %v5002
        %v5069 = vpop.f32.mrf.mxu0
        %v5070 = vadd.f32 0.0, %v5069
        %5071 = vmatmul.f32.gmra.mxu0 %v5005
        %v5072 = vpop.f32.mrf.mxu0
        %v5073 = vadd.f32 0.0, %v5072
        %5074 = vmatmul.f32.gmra.mxu0 %v5008
        %v5075 = vpop.f32.mrf.mxu0
        %v5076 = vadd.f32 0.0, %v5075
        %5077 = vmatmul.f32.gmra.mxu0 %v5011
        %v5078 = vpop.f32.mrf.mxu0
        %v5079 = vadd.f32 0.0, %v5078
        %5080 = vmatmul.f32.gmra.mxu0 %v5014
        %v5081 = vpop.f32.mrf.mxu0
        %v5082 = vadd.f32 0.0, %v5081
        %5083 = vmatmul.f32.gmra.mxu0 %v5017
        %v5084 = vpop.f32.mrf.mxu0
        %v5085 = vadd.f32 0.0, %v5084
        %5086 = vmatmul.f32.gmra.mxu0 %v5020
        %v5087 = vpop.f32.mrf.mxu0
        %v5088 = vadd.f32 0.0, %v5087
        %5089 = vmatmul.f32.gmra.mxu0 %v5023
        %v5090 = vpop.f32.mrf.mxu0
        %v5091 = vadd.f32 0.0, %v5090
        %5092 = vmatmul.f32.gmra.mxu0 %v5026
        %v5093 = vpop.f32.mrf.mxu0
        %v5094 = vadd.f32 0.0, %v5093
        %5095 = vmatmul.f32.gmra.mxu0 %v5029
        %v5096 = vpop.f32.mrf.mxu0
        %v5097 = vadd.f32 0.0, %v5096
        %5098 = vmatmul.f32.gmra.mxu0 %v5032
        %v5099 = vpop.f32.mrf.mxu0
        %v5100 = vadd.f32 0.0, %v5099
        %5101 = vmatmul.f32.gmra.mxu0 %v5035
        %v5102 = vpop.f32.mrf.mxu0
        %v5103 = vadd.f32 0.0, %v5102
        %5104 = vmatmul.f32.gmra.mxu0 %v5038
        %v5105 = vpop.f32.mrf.mxu0
        %v5106 = vadd.f32 0.0, %v5105
        %5107 = vmatmul.f32.gmra.mxu0 %v5041
        %v5108 = vpop.f32.mrf.mxu0
        %v5109 = vadd.f32 0.0, %v5108
        %5110 = vdwg.mxu0
        %v5111 = vadd.f32 %v4956, %v5061
        %v5112 = vadd.f32 %v4957, %v5064
        %v5113 = vadd.f32 %v4958, %v5067
        %v5114 = vadd.f32 %v4959, %v5070
        %v5115 = vadd.f32 %v4960, %v5073
        %v5116 = vadd.f32 %v4961, %v5076
        %v5117 = vadd.f32 %v4962, %v5079
        %v5118 = vadd.f32 %v4963, %v5082
        %v5119 = vadd.f32 %v4964, %v5085
        %v5120 = vadd.f32 %v4965, %v5088
        %v5121 = vadd.f32 %v4966, %v5091
        %v5122 = vadd.f32 %v4967, %v5094
        %v5123 = vadd.f32 %v4968, %v5097
        %v5124 = vadd.f32 %v4969, %v5100
        %v5125 = vadd.f32 %v4970, %v5103
        %v5126 = vadd.f32 %v4971, %v5106
        %v5127 = vadd.f32 %v4972, %v5109
        %5128 = vst.msk [vmem:[#allocation4] sm:$0xff] %vm1348, %v5111
        %5129 = vst.msk [vmem:[#allocation4 + $0x8] sm:$0xff] %vm1348, %v5112
        %5130 = vst.msk [vmem:[#allocation4 + $0x10] sm:$0xff] %vm1348, %v5113
        %5131 = vst.msk [vmem:[#allocation4 + $0x18] sm:$0xff] %vm1348, %v5114
        %5132 = vst.msk [vmem:[#allocation4 + $0x20] sm:$0xff] %vm1348, %v5115
        %5133 = vst.msk [vmem:[#allocation4 + $0x28] sm:$0xff] %vm1348, %v5116
        %5134 = vst.msk [vmem:[#allocation4 + $0x30] sm:$0xff] %vm1348, %v5117
        %5135 = vst.msk [vmem:[#allocation4 + $0x38] sm:$0xff] %vm1348, %v5118
        %5136 = vst.msk [vmem:[#allocation4 + $0x40] sm:$0xff] %vm1348, %v5119
        %5137 = vst.msk [vmem:[#allocation4 + $0x48] sm:$0xff] %vm1348, %v5120
        %5138 = vst.msk [vmem:[#allocation4 + $0x50] sm:$0xff] %vm1348, %v5121
        %5139 = vst.msk [vmem:[#allocation4 + $0x58] sm:$0xff] %vm1348, %v5122
        %5140 = vst.msk [vmem:[#allocation4 + $0x60] sm:$0xff] %vm1348, %v5123
        %5141 = vst.msk [vmem:[#allocation4 + $0x68] sm:$0xff] %vm1348, %v5124
        %5142 = vst.msk [vmem:[#allocation4 + $0x70] sm:$0xff] %vm1348, %v5125
        %5143 = vst.msk [vmem:[#allocation4 + $0x78] sm:$0xff] %vm1348, %v5126
        %5144 = vst.msk [vmem:[#allocation4 + $0x80] sm:$0xff] %vm1348, %v5127
        %v5145 = vld [vmem:[#allocation4] sm:$0xff]
        %v5146 = vld [vmem:[#allocation4 + $0x8] sm:$0xff]
        %v5147 = vld [vmem:[#allocation4 + $0x10] sm:$0xff]
        %v5148 = vld [vmem:[#allocation4 + $0x18] sm:$0xff]
        %v5149 = vld [vmem:[#allocation4 + $0x20] sm:$0xff]
        %v5150 = vld [vmem:[#allocation4 + $0x28] sm:$0xff]
        %v5151 = vld [vmem:[#allocation4 + $0x30] sm:$0xff]
        %v5152 = vld [vmem:[#allocation4 + $0x38] sm:$0xff]
        %v5153 = vld [vmem:[#allocation4 + $0x40] sm:$0xff]
        %v5154 = vld [vmem:[#allocation4 + $0x48] sm:$0xff]
        %v5155 = vld [vmem:[#allocation4 + $0x50] sm:$0xff]
        %v5156 = vld [vmem:[#allocation4 + $0x58] sm:$0xff]
        %v5157 = vld [vmem:[#allocation4 + $0x60] sm:$0xff]
        %v5158 = vld [vmem:[#allocation4 + $0x68] sm:$0xff]
        %v5159 = vld [vmem:[#allocation4 + $0x70] sm:$0xff]
        %v5160 = vld [vmem:[#allocation4 + $0x78] sm:$0xff]
        %v5161 = vld [vmem:[#allocation4 + $0x80] sm:$0xff]
        %v5162 = vld [vmem:[#allocation3 + $0x38] sm:$0xff]
        %v5163 = vld [vmem:[#allocation3 + $0x40] sm:$0xff]
        %v5164 = vld [vmem:[#allocation3 + $0x48] sm:$0xff]
        %v5165 = vld [vmem:[#allocation3 + $0x50] sm:$0xff]
        %v5166 = vld [vmem:[#allocation3 + $0x58] sm:$0xff]
        %v5167 = vld [vmem:[#allocation3 + $0x60] sm:$0xff]
        %v5168 = vld [vmem:[#allocation3 + $0x68] sm:$0xff]
        %v5169 = vld [vmem:[#allocation3 + $0x70] sm:$0xff]
        %v5170 = vld [vmem:[#allocation3 + $0x78] sm:$0xff]
        %v5171 = vld [vmem:[#allocation3 + $0x80] sm:$0xff]
        %v5172 = vld [vmem:[#allocation3 + $0x88] sm:$0xff]
        %v5173 = vld [vmem:[#allocation3 + $0x90] sm:$0xff]
        %v5174 = vld [vmem:[#allocation3 + $0x98] sm:$0xff]
        %v5175 = vld [vmem:[#allocation3 + $0xa0] sm:$0xff]
        %v5176 = vld [vmem:[#allocation3 + $0xa8] sm:$0xff]
        %v5177 = vld [vmem:[#allocation3 + $0xb0] sm:$0xff]
        %v5178 = vld [vmem:[#allocation3 + $0xb8] sm:$0xff]
        %s5179 = scalar_lea.vmem %s3, 160
        %v5180 = vld [vmem:[%s5179] sm:$0xff]
        %v5182 = vsel %vm913, %v5162, 0
        %v5185 = vsel %vm913, %v5163, 0
        %v5188 = vsel %vm913, %v5164, 0
        %v5191 = vsel %vm913, %v5165, 0
        %v5194 = vsel %vm913, %v5166, 0
        %v5197 = vsel %vm913, %v5167, 0
        %v5200 = vsel %vm913, %v5168, 0
        %v5203 = vsel %vm913, %v5169, 0
        %v5206 = vsel %vm913, %v5170, 0
        %v5209 = vsel %vm913, %v5171, 0
        %v5212 = vsel %vm913, %v5172, 0
        %v5215 = vsel %vm913, %v5173, 0
        %v5218 = vsel %vm913, %v5174, 0
        %v5221 = vsel %vm913, %v5175, 0
        %v5224 = vsel %vm913, %v5176, 0
        %v5227 = vsel %vm913, %v5177, 0
        %v5230 = vsel %vm913, %v5178, 0
        %5232 = vmatpush.msra.mxu0 0.0
        %5233 = vmatpush.msra.mxu0 0.0
        %5234 = vmatpush.msra.mxu0 0.0
        %5235 = vmatpush.msra.mxu0 0.0
        %5236 = vmatpush.msra.mxu0 0.0
        %5237 = vmatpush.msra.mxu0 0.0
        %5238 = vmatpush.msra.mxu0 0.0
        %5239 = vmatpush.msra.mxu0 0.0
        %5240 = vmatpush.msra.mxu0 0.0
        %5241 = vmatpush.msra.mxu0 0.0
        %5242 = vmatpush.msra.mxu0 0.0
        %5243 = vmatpush.msra.mxu0 0.0
        %5244 = vmatpush.msra.mxu0 0.0
        %5245 = vmatpush.msra.mxu0 0.0
        %5246 = vmatpush.msra.mxu0 0.0
        %5247 = vmatpush.msra.mxu0 %v5180
        %5248 = vmatmul.f32.gmra.mxu0 %v5182
        %v5249 = vpop.f32.mrf.mxu0
        %v5250 = vadd.f32 0.0, %v5249
        %5251 = vmatmul.f32.gmra.mxu0 %v5185
        %v5252 = vpop.f32.mrf.mxu0
        %v5253 = vadd.f32 0.0, %v5252
        %5254 = vmatmul.f32.gmra.mxu0 %v5188
        %v5255 = vpop.f32.mrf.mxu0
        %v5256 = vadd.f32 0.0, %v5255
        %5257 = vmatmul.f32.gmra.mxu0 %v5191
        %v5258 = vpop.f32.mrf.mxu0
        %v5259 = vadd.f32 0.0, %v5258
        %5260 = vmatmul.f32.gmra.mxu0 %v5194
        %v5261 = vpop.f32.mrf.mxu0
        %v5262 = vadd.f32 0.0, %v5261
        %5263 = vmatmul.f32.gmra.mxu0 %v5197
        %v5264 = vpop.f32.mrf.mxu0
        %v5265 = vadd.f32 0.0, %v5264
        %5266 = vmatmul.f32.gmra.mxu0 %v5200
        %v5267 = vpop.f32.mrf.mxu0
        %v5268 = vadd.f32 0.0, %v5267
        %5269 = vmatmul.f32.gmra.mxu0 %v5203
        %v5270 = vpop.f32.mrf.mxu0
        %v5271 = vadd.f32 0.0, %v5270
        %5272 = vmatmul.f32.gmra.mxu0 %v5206
        %v5273 = vpop.f32.mrf.mxu0
        %v5274 = vadd.f32 0.0, %v5273
        %5275 = vmatmul.f32.gmra.mxu0 %v5209
        %v5276 = vpop.f32.mrf.mxu0
        %v5277 = vadd.f32 0.0, %v5276
        %5278 = vmatmul.f32.gmra.mxu0 %v5212
        %v5279 = vpop.f32.mrf.mxu0
        %v5280 = vadd.f32 0.0, %v5279
        %5281 = vmatmul.f32.gmra.mxu0 %v5215
        %v5282 = vpop.f32.mrf.mxu0
        %v5283 = vadd.f32 0.0, %v5282
        %5284 = vmatmul.f32.gmra.mxu0 %v5218
        %v5285 = vpop.f32.mrf.mxu0
        %v5286 = vadd.f32 0.0, %v5285
        %5287 = vmatmul.f32.gmra.mxu0 %v5221
        %v5288 = vpop.f32.mrf.mxu0
        %v5289 = vadd.f32 0.0, %v5288
        %5290 = vmatmul.f32.gmra.mxu0 %v5224
        %v5291 = vpop.f32.mrf.mxu0
        %v5292 = vadd.f32 0.0, %v5291
        %5293 = vmatmul.f32.gmra.mxu0 %v5227
        %v5294 = vpop.f32.mrf.mxu0
        %v5295 = vadd.f32 0.0, %v5294
        %5296 = vmatmul.f32.gmra.mxu0 %v5230
        %v5297 = vpop.f32.mrf.mxu0
        %v5298 = vadd.f32 0.0, %v5297
        %5299 = vdwg.mxu0
        %v5300 = vadd.f32 %v5145, %v5250
        %v5301 = vadd.f32 %v5146, %v5253
        %v5302 = vadd.f32 %v5147, %v5256
        %v5303 = vadd.f32 %v5148, %v5259
        %v5304 = vadd.f32 %v5149, %v5262
        %v5305 = vadd.f32 %v5150, %v5265
        %v5306 = vadd.f32 %v5151, %v5268
        %v5307 = vadd.f32 %v5152, %v5271
        %v5308 = vadd.f32 %v5153, %v5274
        %v5309 = vadd.f32 %v5154, %v5277
        %v5310 = vadd.f32 %v5155, %v5280
        %v5311 = vadd.f32 %v5156, %v5283
        %v5312 = vadd.f32 %v5157, %v5286
        %v5313 = vadd.f32 %v5158, %v5289
        %v5314 = vadd.f32 %v5159, %v5292
        %v5315 = vadd.f32 %v5160, %v5295
        %v5316 = vadd.f32 %v5161, %v5298
        %5317 = vst.msk [vmem:[#allocation4] sm:$0xff] %vm1348, %v5300
        %5318 = vst.msk [vmem:[#allocation4 + $0x8] sm:$0xff] %vm1348, %v5301
        %5319 = vst.msk [vmem:[#allocation4 + $0x10] sm:$0xff] %vm1348, %v5302
        %5320 = vst.msk [vmem:[#allocation4 + $0x18] sm:$0xff] %vm1348, %v5303
        %5321 = vst.msk [vmem:[#allocation4 + $0x20] sm:$0xff] %vm1348, %v5304
        %5322 = vst.msk [vmem:[#allocation4 + $0x28] sm:$0xff] %vm1348, %v5305
        %5323 = vst.msk [vmem:[#allocation4 + $0x30] sm:$0xff] %vm1348, %v5306
        %5324 = vst.msk [vmem:[#allocation4 + $0x38] sm:$0xff] %vm1348, %v5307
        %5325 = vst.msk [vmem:[#allocation4 + $0x40] sm:$0xff] %vm1348, %v5308
        %5326 = vst.msk [vmem:[#allocation4 + $0x48] sm:$0xff] %vm1348, %v5309
        %5327 = vst.msk [vmem:[#allocation4 + $0x50] sm:$0xff] %vm1348, %v5310
        %5328 = vst.msk [vmem:[#allocation4 + $0x58] sm:$0xff] %vm1348, %v5311
        %5329 = vst.msk [vmem:[#allocation4 + $0x60] sm:$0xff] %vm1348, %v5312
        %5330 = vst.msk [vmem:[#allocation4 + $0x68] sm:$0xff] %vm1348, %v5313
        %5331 = vst.msk [vmem:[#allocation4 + $0x70] sm:$0xff] %vm1348, %v5314
        %5332 = vst.msk [vmem:[#allocation4 + $0x78] sm:$0xff] %vm1348, %v5315
        %5333 = vst.msk [vmem:[#allocation4 + $0x80] sm:$0xff] %vm1348, %v5316
        %v5334 = vld [vmem:[#allocation4] sm:$0xff]
        %v5335 = vld [vmem:[#allocation4 + $0x8] sm:$0xff]
        %v5336 = vld [vmem:[#allocation4 + $0x10] sm:$0xff]
        %v5337 = vld [vmem:[#allocation4 + $0x18] sm:$0xff]
        %v5338 = vld [vmem:[#allocation4 + $0x20] sm:$0xff]
        %v5339 = vld [vmem:[#allocation4 + $0x28] sm:$0xff]
        %v5340 = vld [vmem:[#allocation4 + $0x30] sm:$0xff]
        %v5341 = vld [vmem:[#allocation4 + $0x38] sm:$0xff]
        %v5342 = vld [vmem:[#allocation4 + $0x40] sm:$0xff]
        %v5343 = vld [vmem:[#allocation4 + $0x48] sm:$0xff]
        %v5344 = vld [vmem:[#allocation4 + $0x50] sm:$0xff]
        %v5345 = vld [vmem:[#allocation4 + $0x58] sm:$0xff]
        %v5346 = vld [vmem:[#allocation4 + $0x60] sm:$0xff]
        %v5347 = vld [vmem:[#allocation4 + $0x68] sm:$0xff]
        %v5348 = vld [vmem:[#allocation4 + $0x70] sm:$0xff]
        %v5349 = vld [vmem:[#allocation4 + $0x78] sm:$0xff]
        %v5350 = vld [vmem:[#allocation4 + $0x80] sm:$0xff]
        %v5351 = vld [vmem:[#allocation3 + $0x39] sm:$0xff]
        %v5352 = vld [vmem:[#allocation3 + $0x41] sm:$0xff]
        %v5353 = vld [vmem:[#allocation3 + $0x49] sm:$0xff]
        %v5354 = vld [vmem:[#allocation3 + $0x51] sm:$0xff]
        %v5355 = vld [vmem:[#allocation3 + $0x59] sm:$0xff]
        %v5356 = vld [vmem:[#allocation3 + $0x61] sm:$0xff]
        %v5357 = vld [vmem:[#allocation3 + $0x69] sm:$0xff]
        %v5358 = vld [vmem:[#allocation3 + $0x71] sm:$0xff]
        %v5359 = vld [vmem:[#allocation3 + $0x79] sm:$0xff]
        %v5360 = vld [vmem:[#allocation3 + $0x81] sm:$0xff]
        %v5361 = vld [vmem:[#allocation3 + $0x89] sm:$0xff]
        %v5362 = vld [vmem:[#allocation3 + $0x91] sm:$0xff]
        %v5363 = vld [vmem:[#allocation3 + $0x99] sm:$0xff]
        %v5364 = vld [vmem:[#allocation3 + $0xa1] sm:$0xff]
        %v5365 = vld [vmem:[#allocation3 + $0xa9] sm:$0xff]
        %v5366 = vld [vmem:[#allocation3 + $0xb1] sm:$0xff]
        %v5367 = vld [vmem:[#allocation3 + $0xb9] sm:$0xff]
        %s5368 = scalar_lea.vmem %s3, 168
        %v5369 = vld [vmem:[%s5368] sm:$0xff]
        %v5371 = vsel %vm913, %v5351, 0
        %v5374 = vsel %vm913, %v5352, 0
        %v5377 = vsel %vm913, %v5353, 0
        %v5380 = vsel %vm913, %v5354, 0
        %v5383 = vsel %vm913, %v5355, 0
        %v5386 = vsel %vm913, %v5356, 0
        %v5389 = vsel %vm913, %v5357, 0
        %v5392 = vsel %vm913, %v5358, 0
        %v5395 = vsel %vm913, %v5359, 0
        %v5398 = vsel %vm913, %v5360, 0
        %v5401 = vsel %vm913, %v5361, 0
        %v5404 = vsel %vm913, %v5362, 0
        %v5407 = vsel %vm913, %v5363, 0
        %v5410 = vsel %vm913, %v5364, 0
        %v5413 = vsel %vm913, %v5365, 0
        %v5416 = vsel %vm913, %v5366, 0
        %v5419 = vsel %vm913, %v5367, 0
        %5421 = vmatpush.msra.mxu0 0.0
        %5422 = vmatpush.msra.mxu0 0.0
        %5423 = vmatpush.msra.mxu0 0.0
        %5424 = vmatpush.msra.mxu0 0.0
        %5425 = vmatpush.msra.mxu0 0.0
        %5426 = vmatpush.msra.mxu0 0.0
        %5427 = vmatpush.msra.mxu0 0.0
        %5428 = vmatpush.msra.mxu0 0.0
        %5429 = vmatpush.msra.mxu0 0.0
        %5430 = vmatpush.msra.mxu0 0.0
        %5431 = vmatpush.msra.mxu0 0.0
        %5432 = vmatpush.msra.mxu0 0.0
        %5433 = vmatpush.msra.mxu0 0.0
        %5434 = vmatpush.msra.mxu0 0.0
        %5435 = vmatpush.msra.mxu0 0.0
        %5436 = vmatpush.msra.mxu0 %v5369
        %5437 = vmatmul.f32.gmra.mxu0 %v5371
        %v5438 = vpop.f32.mrf.mxu0
        %v5439 = vadd.f32 0.0, %v5438
        %5440 = vmatmul.f32.gmra.mxu0 %v5374
        %v5441 = vpop.f32.mrf.mxu0
        %v5442 = vadd.f32 0.0, %v5441
        %5443 = vmatmul.f32.gmra.mxu0 %v5377
        %v5444 = vpop.f32.mrf.mxu0
        %v5445 = vadd.f32 0.0, %v5444
        %5446 = vmatmul.f32.gmra.mxu0 %v5380
        %v5447 = vpop.f32.mrf.mxu0
        %v5448 = vadd.f32 0.0, %v5447
        %5449 = vmatmul.f32.gmra.mxu0 %v5383
        %v5450 = vpop.f32.mrf.mxu0
        %v5451 = vadd.f32 0.0, %v5450
        %5452 = vmatmul.f32.gmra.mxu0 %v5386
        %v5453 = vpop.f32.mrf.mxu0
        %v5454 = vadd.f32 0.0, %v5453
        %5455 = vmatmul.f32.gmra.mxu0 %v5389
        %v5456 = vpop.f32.mrf.mxu0
        %v5457 = vadd.f32 0.0, %v5456
        %5458 = vmatmul.f32.gmra.mxu0 %v5392
        %v5459 = vpop.f32.mrf.mxu0
        %v5460 = vadd.f32 0.0, %v5459
        %5461 = vmatmul.f32.gmra.mxu0 %v5395
        %v5462 = vpop.f32.mrf.mxu0
        %v5463 = vadd.f32 0.0, %v5462
        %5464 = vmatmul.f32.gmra.mxu0 %v5398
        %v5465 = vpop.f32.mrf.mxu0
        %v5466 = vadd.f32 0.0, %v5465
        %5467 = vmatmul.f32.gmra.mxu0 %v5401
        %v5468 = vpop.f32.mrf.mxu0
        %v5469 = vadd.f32 0.0, %v5468
        %5470 = vmatmul.f32.gmra.mxu0 %v5404
        %v5471 = vpop.f32.mrf.mxu0
        %v5472 = vadd.f32 0.0, %v5471
        %5473 = vmatmul.f32.gmra.mxu0 %v5407
        %v5474 = vpop.f32.mrf.mxu0
        %v5475 = vadd.f32 0.0, %v5474
        %5476 = vmatmul.f32.gmra.mxu0 %v5410
        %v5477 = vpop.f32.mrf.mxu0
        %v5478 = vadd.f32 0.0, %v5477
        %5479 = vmatmul.f32.gmra.mxu0 %v5413
        %v5480 = vpop.f32.mrf.mxu0
        %v5481 = vadd.f32 0.0, %v5480
        %5482 = vmatmul.f32.gmra.mxu0 %v5416
        %v5483 = vpop.f32.mrf.mxu0
        %v5484 = vadd.f32 0.0, %v5483
        %5485 = vmatmul.f32.gmra.mxu0 %v5419
        %v5486 = vpop.f32.mrf.mxu0
        %v5487 = vadd.f32 0.0, %v5486
        %5488 = vdwg.mxu0
        %v5489 = vadd.f32 %v5334, %v5439
        %v5490 = vadd.f32 %v5335, %v5442
        %v5491 = vadd.f32 %v5336, %v5445
        %v5492 = vadd.f32 %v5337, %v5448
        %v5493 = vadd.f32 %v5338, %v5451
        %v5494 = vadd.f32 %v5339, %v5454
        %v5495 = vadd.f32 %v5340, %v5457
        %v5496 = vadd.f32 %v5341, %v5460
        %v5497 = vadd.f32 %v5342, %v5463
        %v5498 = vadd.f32 %v5343, %v5466
        %v5499 = vadd.f32 %v5344, %v5469
        %v5500 = vadd.f32 %v5345, %v5472
        %v5501 = vadd.f32 %v5346, %v5475
        %v5502 = vadd.f32 %v5347, %v5478
        %v5503 = vadd.f32 %v5348, %v5481
        %v5504 = vadd.f32 %v5349, %v5484
        %v5505 = vadd.f32 %v5350, %v5487
        %5506 = vst.msk [vmem:[#allocation4] sm:$0xff] %vm1348, %v5489
        %5507 = vst.msk [vmem:[#allocation4 + $0x8] sm:$0xff] %vm1348, %v5490
        %5508 = vst.msk [vmem:[#allocation4 + $0x10] sm:$0xff] %vm1348, %v5491
        %5509 = vst.msk [vmem:[#allocation4 + $0x18] sm:$0xff] %vm1348, %v5492
        %5510 = vst.msk [vmem:[#allocation4 + $0x20] sm:$0xff] %vm1348, %v5493
        %5511 = vst.msk [vmem:[#allocation4 + $0x28] sm:$0xff] %vm1348, %v5494
        %5512 = vst.msk [vmem:[#allocation4 + $0x30] sm:$0xff] %vm1348, %v5495
        %5513 = vst.msk [vmem:[#allocation4 + $0x38] sm:$0xff] %vm1348, %v5496
        %5514 = vst.msk [vmem:[#allocation4 + $0x40] sm:$0xff] %vm1348, %v5497
        %5515 = vst.msk [vmem:[#allocation4 + $0x48] sm:$0xff] %vm1348, %v5498
        %5516 = vst.msk [vmem:[#allocation4 + $0x50] sm:$0xff] %vm1348, %v5499
        %5517 = vst.msk [vmem:[#allocation4 + $0x58] sm:$0xff] %vm1348, %v5500
        %5518 = vst.msk [vmem:[#allocation4 + $0x60] sm:$0xff] %vm1348, %v5501
        %5519 = vst.msk [vmem:[#allocation4 + $0x68] sm:$0xff] %vm1348, %v5502
        %5520 = vst.msk [vmem:[#allocation4 + $0x70] sm:$0xff] %vm1348, %v5503
        %5521 = vst.msk [vmem:[#allocation4 + $0x78] sm:$0xff] %vm1348, %v5504
        %5522 = vst.msk [vmem:[#allocation4 + $0x80] sm:$0xff] %vm1348, %v5505
        %v5523 = vld [vmem:[#allocation4] sm:$0xff]
        %v5524 = vld [vmem:[#allocation4 + $0x8] sm:$0xff]
        %v5525 = vld [vmem:[#allocation4 + $0x10] sm:$0xff]
        %v5526 = vld [vmem:[#allocation4 + $0x18] sm:$0xff]
        %v5527 = vld [vmem:[#allocation4 + $0x20] sm:$0xff]
        %v5528 = vld [vmem:[#allocation4 + $0x28] sm:$0xff]
        %v5529 = vld [vmem:[#allocation4 + $0x30] sm:$0xff]
        %v5530 = vld [vmem:[#allocation4 + $0x38] sm:$0xff]
        %v5531 = vld [vmem:[#allocation4 + $0x40] sm:$0xff]
        %v5532 = vld [vmem:[#allocation4 + $0x48] sm:$0xff]
        %v5533 = vld [vmem:[#allocation4 + $0x50] sm:$0xff]
        %v5534 = vld [vmem:[#allocation4 + $0x58] sm:$0xff]
        %v5535 = vld [vmem:[#allocation4 + $0x60] sm:$0xff]
        %v5536 = vld [vmem:[#allocation4 + $0x68] sm:$0xff]
        %v5537 = vld [vmem:[#allocation4 + $0x70] sm:$0xff]
        %v5538 = vld [vmem:[#allocation4 + $0x78] sm:$0xff]
        %v5539 = vld [vmem:[#allocation4 + $0x80] sm:$0xff]
        %v5540 = vld [vmem:[#allocation3 + $0x3a] sm:$0xff]
        %v5541 = vld [vmem:[#allocation3 + $0x42] sm:$0xff]
        %v5542 = vld [vmem:[#allocation3 + $0x4a] sm:$0xff]
        %v5543 = vld [vmem:[#allocation3 + $0x52] sm:$0xff]
        %v5544 = vld [vmem:[#allocation3 + $0x5a] sm:$0xff]
        %v5545 = vld [vmem:[#allocation3 + $0x62] sm:$0xff]
        %v5546 = vld [vmem:[#allocation3 + $0x6a] sm:$0xff]
        %v5547 = vld [vmem:[#allocation3 + $0x72] sm:$0xff]
        %v5548 = vld [vmem:[#allocation3 + $0x7a] sm:$0xff]
        %v5549 = vld [vmem:[#allocation3 + $0x82] sm:$0xff]
        %v5550 = vld [vmem:[#allocation3 + $0x8a] sm:$0xff]
        %v5551 = vld [vmem:[#allocation3 + $0x92] sm:$0xff]
        %v5552 = vld [vmem:[#allocation3 + $0x9a] sm:$0xff]
        %v5553 = vld [vmem:[#allocation3 + $0xa2] sm:$0xff]
        %v5554 = vld [vmem:[#allocation3 + $0xaa] sm:$0xff]
        %v5555 = vld [vmem:[#allocation3 + $0xb2] sm:$0xff]
        %v5556 = vld [vmem:[#allocation3 + $0xba] sm:$0xff]
        %s5557 = scalar_lea.vmem %s3, 176
        %v5558 = vld [vmem:[%s5557] sm:$0xff]
        %v5560 = vsel %vm913, %v5540, 0
        %v5563 = vsel %vm913, %v5541, 0
        %v5566 = vsel %vm913, %v5542, 0
        %v5569 = vsel %vm913, %v5543, 0
        %v5572 = vsel %vm913, %v5544, 0
        %v5575 = vsel %vm913, %v5545, 0
        %v5578 = vsel %vm913, %v5546, 0
        %v5581 = vsel %vm913, %v5547, 0
        %v5584 = vsel %vm913, %v5548, 0
        %v5587 = vsel %vm913, %v5549, 0
        %v5590 = vsel %vm913, %v5550, 0
        %v5593 = vsel %vm913, %v5551, 0
        %v5596 = vsel %vm913, %v5552, 0
        %v5599 = vsel %vm913, %v5553, 0
        %v5602 = vsel %vm913, %v5554, 0
        %v5605 = vsel %vm913, %v5555, 0
        %v5608 = vsel %vm913, %v5556, 0
        %5610 = vmatpush.msra.mxu0 0.0
        %5611 = vmatpush.msra.mxu0 0.0
        %5612 = vmatpush.msra.mxu0 0.0
        %5613 = vmatpush.msra.mxu0 0.0
        %5614 = vmatpush.msra.mxu0 0.0
        %5615 = vmatpush.msra.mxu0 0.0
        %5616 = vmatpush.msra.mxu0 0.0
        %5617 = vmatpush.msra.mxu0 0.0
        %5618 = vmatpush.msra.mxu0 0.0
        %5619 = vmatpush.msra.mxu0 0.0
        %5620 = vmatpush.msra.mxu0 0.0
        %5621 = vmatpush.msra.mxu0 0.0
        %5622 = vmatpush.msra.mxu0 0.0
        %5623 = vmatpush.msra.mxu0 0.0
        %5624 = vmatpush.msra.mxu0 0.0
        %5625 = vmatpush.msra.mxu0 %v5558
        %5626 = vmatmul.f32.gmra.mxu0 %v5560
        %v5627 = vpop.f32.mrf.mxu0
        %v5628 = vadd.f32 0.0, %v5627
        %5629 = vmatmul.f32.gmra.mxu0 %v5563
        %v5630 = vpop.f32.mrf.mxu0
        %v5631 = vadd.f32 0.0, %v5630
        %5632 = vmatmul.f32.gmra.mxu0 %v5566
        %v5633 = vpop.f32.mrf.mxu0
        %v5634 = vadd.f32 0.0, %v5633
        %5635 = vmatmul.f32.gmra.mxu0 %v5569
        %v5636 = vpop.f32.mrf.mxu0
        %v5637 = vadd.f32 0.0, %v5636
        %5638 = vmatmul.f32.gmra.mxu0 %v5572
        %v5639 = vpop.f32.mrf.mxu0
        %v5640 = vadd.f32 0.0, %v5639
        %5641 = vmatmul.f32.gmra.mxu0 %v5575
        %v5642 = vpop.f32.mrf.mxu0
        %v5643 = vadd.f32 0.0, %v5642
        %5644 = vmatmul.f32.gmra.mxu0 %v5578
        %v5645 = vpop.f32.mrf.mxu0
        %v5646 = vadd.f32 0.0, %v5645
        %5647 = vmatmul.f32.gmra.mxu0 %v5581
        %v5648 = vpop.f32.mrf.mxu0
        %v5649 = vadd.f32 0.0, %v5648
        %5650 = vmatmul.f32.gmra.mxu0 %v5584
        %v5651 = vpop.f32.mrf.mxu0
        %v5652 = vadd.f32 0.0, %v5651
        %5653 = vmatmul.f32.gmra.mxu0 %v5587
        %v5654 = vpop.f32.mrf.mxu0
        %v5655 = vadd.f32 0.0, %v5654
        %5656 = vmatmul.f32.gmra.mxu0 %v5590
        %v5657 = vpop.f32.mrf.mxu0
        %v5658 = vadd.f32 0.0, %v5657
        %5659 = vmatmul.f32.gmra.mxu0 %v5593
        %v5660 = vpop.f32.mrf.mxu0
        %v5661 = vadd.f32 0.0, %v5660
        %5662 = vmatmul.f32.gmra.mxu0 %v5596
        %v5663 = vpop.f32.mrf.mxu0
        %v5664 = vadd.f32 0.0, %v5663
        %5665 = vmatmul.f32.gmra.mxu0 %v5599
        %v5666 = vpop.f32.mrf.mxu0
        %v5667 = vadd.f32 0.0, %v5666
        %5668 = vmatmul.f32.gmra.mxu0 %v5602
        %v5669 = vpop.f32.mrf.mxu0
        %v5670 = vadd.f32 0.0, %v5669
        %5671 = vmatmul.f32.gmra.mxu0 %v5605
        %v5672 = vpop.f32.mrf.mxu0
        %v5673 = vadd.f32 0.0, %v5672
        %5674 = vmatmul.f32.gmra.mxu0 %v5608
        %v5675 = vpop.f32.mrf.mxu0
        %v5676 = vadd.f32 0.0, %v5675
        %5677 = vdwg.mxu0
        %v5678 = vadd.f32 %v5523, %v5628
        %v5679 = vadd.f32 %v5524, %v5631
        %v5680 = vadd.f32 %v5525, %v5634
        %v5681 = vadd.f32 %v5526, %v5637
        %v5682 = vadd.f32 %v5527, %v5640
        %v5683 = vadd.f32 %v5528, %v5643
        %v5684 = vadd.f32 %v5529, %v5646
        %v5685 = vadd.f32 %v5530, %v5649
        %v5686 = vadd.f32 %v5531, %v5652
        %v5687 = vadd.f32 %v5532, %v5655
        %v5688 = vadd.f32 %v5533, %v5658
        %v5689 = vadd.f32 %v5534, %v5661
        %v5690 = vadd.f32 %v5535, %v5664
        %v5691 = vadd.f32 %v5536, %v5667
        %v5692 = vadd.f32 %v5537, %v5670
        %v5693 = vadd.f32 %v5538, %v5673
        %v5694 = vadd.f32 %v5539, %v5676
        %5695 = vst.msk [vmem:[#allocation4] sm:$0xff] %vm1348, %v5678
        %5696 = vst.msk [vmem:[#allocation4 + $0x8] sm:$0xff] %vm1348, %v5679
        %5697 = vst.msk [vmem:[#allocation4 + $0x10] sm:$0xff] %vm1348, %v5680
        %5698 = vst.msk [vmem:[#allocation4 + $0x18] sm:$0xff] %vm1348, %v5681
        %5699 = vst.msk [vmem:[#allocation4 + $0x20] sm:$0xff] %vm1348, %v5682
        %5700 = vst.msk [vmem:[#allocation4 + $0x28] sm:$0xff] %vm1348, %v5683
        %5701 = vst.msk [vmem:[#allocation4 + $0x30] sm:$0xff] %vm1348, %v5684
        %5702 = vst.msk [vmem:[#allocation4 + $0x38] sm:$0xff] %vm1348, %v5685
        %5703 = vst.msk [vmem:[#allocation4 + $0x40] sm:$0xff] %vm1348, %v5686
        %5704 = vst.msk [vmem:[#allocation4 + $0x48] sm:$0xff] %vm1348, %v5687
        %5705 = vst.msk [vmem:[#allocation4 + $0x50] sm:$0xff] %vm1348, %v5688
        %5706 = vst.msk [vmem:[#allocation4 + $0x58] sm:$0xff] %vm1348, %v5689
        %5707 = vst.msk [vmem:[#allocation4 + $0x60] sm:$0xff] %vm1348, %v5690
        %5708 = vst.msk [vmem:[#allocation4 + $0x68] sm:$0xff] %vm1348, %v5691
        %5709 = vst.msk [vmem:[#allocation4 + $0x70] sm:$0xff] %vm1348, %v5692
        %5710 = vst.msk [vmem:[#allocation4 + $0x78] sm:$0xff] %vm1348, %v5693
        %5711 = vst.msk [vmem:[#allocation4 + $0x80] sm:$0xff] %vm1348, %v5694
        %v5712 = vld [vmem:[#allocation4] sm:$0xff]
        %v5713 = vld [vmem:[#allocation4 + $0x8] sm:$0xff]
        %v5714 = vld [vmem:[#allocation4 + $0x10] sm:$0xff]
        %v5715 = vld [vmem:[#allocation4 + $0x18] sm:$0xff]
        %v5716 = vld [vmem:[#allocation4 + $0x20] sm:$0xff]
        %v5717 = vld [vmem:[#allocation4 + $0x28] sm:$0xff]
        %v5718 = vld [vmem:[#allocation4 + $0x30] sm:$0xff]
        %v5719 = vld [vmem:[#allocation4 + $0x38] sm:$0xff]
        %v5720 = vld [vmem:[#allocation4 + $0x40] sm:$0xff]
        %v5721 = vld [vmem:[#allocation4 + $0x48] sm:$0xff]
        %v5722 = vld [vmem:[#allocation4 + $0x50] sm:$0xff]
        %v5723 = vld [vmem:[#allocation4 + $0x58] sm:$0xff]
        %v5724 = vld [vmem:[#allocation4 + $0x60] sm:$0xff]
        %v5725 = vld [vmem:[#allocation4 + $0x68] sm:$0xff]
        %v5726 = vld [vmem:[#allocation4 + $0x70] sm:$0xff]
        %v5727 = vld [vmem:[#allocation4 + $0x78] sm:$0xff]
        %v5728 = vld [vmem:[#allocation4 + $0x80] sm:$0xff]
        %v5729 = vld [vmem:[#allocation3 + $0x3b] sm:$0xff]
        %v5730 = vld [vmem:[#allocation3 + $0x43] sm:$0xff]
        %v5731 = vld [vmem:[#allocation3 + $0x4b] sm:$0xff]
        %v5732 = vld [vmem:[#allocation3 + $0x53] sm:$0xff]
        %v5733 = vld [vmem:[#allocation3 + $0x5b] sm:$0xff]
        %v5734 = vld [vmem:[#allocation3 + $0x63] sm:$0xff]
        %v5735 = vld [vmem:[#allocation3 + $0x6b] sm:$0xff]
        %v5736 = vld [vmem:[#allocation3 + $0x73] sm:$0xff]
        %v5737 = vld [vmem:[#allocation3 + $0x7b] sm:$0xff]
        %v5738 = vld [vmem:[#allocation3 + $0x83] sm:$0xff]
        %v5739 = vld [vmem:[#allocation3 + $0x8b] sm:$0xff]
        %v5740 = vld [vmem:[#allocation3 + $0x93] sm:$0xff]
        %v5741 = vld [vmem:[#allocation3 + $0x9b] sm:$0xff]
        %v5742 = vld [vmem:[#allocation3 + $0xa3] sm:$0xff]
        %v5743 = vld [vmem:[#allocation3 + $0xab] sm:$0xff]
        %v5744 = vld [vmem:[#allocation3 + $0xb3] sm:$0xff]
        %v5745 = vld [vmem:[#allocation3 + $0xbb] sm:$0xff]
        %s5746 = scalar_lea.vmem %s3, 184
        %v5747 = vld [vmem:[%s5746] sm:$0xff]
        %v5749 = vsel %vm913, %v5729, 0
        %v5752 = vsel %vm913, %v5730, 0
        %v5755 = vsel %vm913, %v5731, 0
        %v5758 = vsel %vm913, %v5732, 0
        %v5761 = vsel %vm913, %v5733, 0
        %v5764 = vsel %vm913, %v5734, 0
        %v5767 = vsel %vm913, %v5735, 0
        %v5770 = vsel %vm913, %v5736, 0
        %v5773 = vsel %vm913, %v5737, 0
        %v5776 = vsel %vm913, %v5738, 0
        %v5779 = vsel %vm913, %v5739, 0
        %v5782 = vsel %vm913, %v5740, 0
        %v5785 = vsel %vm913, %v5741, 0
        %v5788 = vsel %vm913, %v5742, 0
        %v5791 = vsel %vm913, %v5743, 0
        %v5794 = vsel %vm913, %v5744, 0
        %v5797 = vsel %vm913, %v5745, 0
        %5799 = vmatpush.msra.mxu0 0.0
        %5800 = vmatpush.msra.mxu0 0.0
        %5801 = vmatpush.msra.mxu0 0.0
        %5802 = vmatpush.msra.mxu0 0.0
        %5803 = vmatpush.msra.mxu0 0.0
        %5804 = vmatpush.msra.mxu0 0.0
        %5805 = vmatpush.msra.mxu0 0.0
        %5806 = vmatpush.msra.mxu0 0.0
        %5807 = vmatpush.msra.mxu0 0.0
        %5808 = vmatpush.msra.mxu0 0.0
        %5809 = vmatpush.msra.mxu0 0.0
        %5810 = vmatpush.msra.mxu0 0.0
        %5811 = vmatpush.msra.mxu0 0.0
        %5812 = vmatpush.msra.mxu0 0.0
        %5813 = vmatpush.msra.mxu0 0.0
        %5814 = vmatpush.msra.mxu0 %v5747
        %5815 = vmatmul.f32.gmra.mxu0 %v5749
        %v5816 = vpop.f32.mrf.mxu0
        %v5817 = vadd.f32 0.0, %v5816
        %5818 = vmatmul.f32.gmra.mxu0 %v5752
        %v5819 = vpop.f32.mrf.mxu0
        %v5820 = vadd.f32 0.0, %v5819
        %5821 = vmatmul.f32.gmra.mxu0 %v5755
        %v5822 = vpop.f32.mrf.mxu0
        %v5823 = vadd.f32 0.0, %v5822
        %5824 = vmatmul.f32.gmra.mxu0 %v5758
        %v5825 = vpop.f32.mrf.mxu0
        %v5826 = vadd.f32 0.0, %v5825
        %5827 = vmatmul.f32.gmra.mxu0 %v5761
        %v5828 = vpop.f32.mrf.mxu0
        %v5829 = vadd.f32 0.0, %v5828
        %5830 = vmatmul.f32.gmra.mxu0 %v5764
        %v5831 = vpop.f32.mrf.mxu0
        %v5832 = vadd.f32 0.0, %v5831
        %5833 = vmatmul.f32.gmra.mxu0 %v5767
        %v5834 = vpop.f32.mrf.mxu0
        %v5835 = vadd.f32 0.0, %v5834
        %5836 = vmatmul.f32.gmra.mxu0 %v5770
        %v5837 = vpop.f32.mrf.mxu0
        %v5838 = vadd.f32 0.0, %v5837
        %5839 = vmatmul.f32.gmra.mxu0 %v5773
        %v5840 = vpop.f32.mrf.mxu0
        %v5841 = vadd.f32 0.0, %v5840
        %5842 = vmatmul.f32.gmra.mxu0 %v5776
        %v5843 = vpop.f32.mrf.mxu0
        %v5844 = vadd.f32 0.0, %v5843
        %5845 = vmatmul.f32.gmra.mxu0 %v5779
        %v5846 = vpop.f32.mrf.mxu0
        %v5847 = vadd.f32 0.0, %v5846
        %5848 = vmatmul.f32.gmra.mxu0 %v5782
        %v5849 = vpop.f32.mrf.mxu0
        %v5850 = vadd.f32 0.0, %v5849
        %5851 = vmatmul.f32.gmra.mxu0 %v5785
        %v5852 = vpop.f32.mrf.mxu0
        %v5853 = vadd.f32 0.0, %v5852
        %5854 = vmatmul.f32.gmra.mxu0 %v5788
        %v5855 = vpop.f32.mrf.mxu0
        %v5856 = vadd.f32 0.0, %v5855
        %5857 = vmatmul.f32.gmra.mxu0 %v5791
        %v5858 = vpop.f32.mrf.mxu0
        %v5859 = vadd.f32 0.0, %v5858
        %5860 = vmatmul.f32.gmra.mxu0 %v5794
        %v5861 = vpop.f32.mrf.mxu0
        %v5862 = vadd.f32 0.0, %v5861
        %5863 = vmatmul.f32.gmra.mxu0 %v5797
        %v5864 = vpop.f32.mrf.mxu0
        %v5865 = vadd.f32 0.0, %v5864
        %5866 = vdwg.mxu0
        %v5867 = vadd.f32 %v5712, %v5817
        %v5868 = vadd.f32 %v5713, %v5820
        %v5869 = vadd.f32 %v5714, %v5823
        %v5870 = vadd.f32 %v5715, %v5826
        %v5871 = vadd.f32 %v5716, %v5829
        %v5872 = vadd.f32 %v5717, %v5832
        %v5873 = vadd.f32 %v5718, %v5835
        %v5874 = vadd.f32 %v5719, %v5838
        %v5875 = vadd.f32 %v5720, %v5841
        %v5876 = vadd.f32 %v5721, %v5844
        %v5877 = vadd.f32 %v5722, %v5847
        %v5878 = vadd.f32 %v5723, %v5850
        %v5879 = vadd.f32 %v5724, %v5853
        %v5880 = vadd.f32 %v5725, %v5856
        %v5881 = vadd.f32 %v5726, %v5859
        %v5882 = vadd.f32 %v5727, %v5862
        %v5883 = vadd.f32 %v5728, %v5865
        %5884 = vst.msk [vmem:[#allocation4] sm:$0xff] %vm1348, %v5867
        %5885 = vst.msk [vmem:[#allocation4 + $0x8] sm:$0xff] %vm1348, %v5868
        %5886 = vst.msk [vmem:[#allocation4 + $0x10] sm:$0xff] %vm1348, %v5869
        %5887 = vst.msk [vmem:[#allocation4 + $0x18] sm:$0xff] %vm1348, %v5870
        %5888 = vst.msk [vmem:[#allocation4 + $0x20] sm:$0xff] %vm1348, %v5871
        %5889 = vst.msk [vmem:[#allocation4 + $0x28] sm:$0xff] %vm1348, %v5872
        %5890 = vst.msk [vmem:[#allocation4 + $0x30] sm:$0xff] %vm1348, %v5873
        %5891 = vst.msk [vmem:[#allocation4 + $0x38] sm:$0xff] %vm1348, %v5874
        %5892 = vst.msk [vmem:[#allocation4 + $0x40] sm:$0xff] %vm1348, %v5875
        %5893 = vst.msk [vmem:[#allocation4 + $0x48] sm:$0xff] %vm1348, %v5876
        %5894 = vst.msk [vmem:[#allocation4 + $0x50] sm:$0xff] %vm1348, %v5877
        %5895 = vst.msk [vmem:[#allocation4 + $0x58] sm:$0xff] %vm1348, %v5878
        %5896 = vst.msk [vmem:[#allocation4 + $0x60] sm:$0xff] %vm1348, %v5879
        %5897 = vst.msk [vmem:[#allocation4 + $0x68] sm:$0xff] %vm1348, %v5880
        %5898 = vst.msk [vmem:[#allocation4 + $0x70] sm:$0xff] %vm1348, %v5881
        %5899 = vst.msk [vmem:[#allocation4 + $0x78] sm:$0xff] %vm1348, %v5882
        %5900 = vst.msk [vmem:[#allocation4 + $0x80] sm:$0xff] %vm1348, %v5883
        %v5901 = vld [vmem:[#allocation4] sm:$0xff]
        %v5902 = vld [vmem:[#allocation4 + $0x8] sm:$0xff]
        %v5903 = vld [vmem:[#allocation4 + $0x10] sm:$0xff]
        %v5904 = vld [vmem:[#allocation4 + $0x18] sm:$0xff]
        %v5905 = vld [vmem:[#allocation4 + $0x20] sm:$0xff]
        %v5906 = vld [vmem:[#allocation4 + $0x28] sm:$0xff]
        %v5907 = vld [vmem:[#allocation4 + $0x30] sm:$0xff]
        %v5908 = vld [vmem:[#allocation4 + $0x38] sm:$0xff]
        %v5909 = vld [vmem:[#allocation4 + $0x40] sm:$0xff]
        %v5910 = vld [vmem:[#allocation4 + $0x48] sm:$0xff]
        %v5911 = vld [vmem:[#allocation4 + $0x50] sm:$0xff]
        %v5912 = vld [vmem:[#allocation4 + $0x58] sm:$0xff]
        %v5913 = vld [vmem:[#allocation4 + $0x60] sm:$0xff]
        %v5914 = vld [vmem:[#allocation4 + $0x68] sm:$0xff]
        %v5915 = vld [vmem:[#allocation4 + $0x70] sm:$0xff]
        %v5916 = vld [vmem:[#allocation4 + $0x78] sm:$0xff]
        %v5917 = vld [vmem:[#allocation4 + $0x80] sm:$0xff]
        %v5918 = vld [vmem:[#allocation3 + $0x3c] sm:$0xff]
        %v5919 = vld [vmem:[#allocation3 + $0x44] sm:$0xff]
        %v5920 = vld [vmem:[#allocation3 + $0x4c] sm:$0xff]
        %v5921 = vld [vmem:[#allocation3 + $0x54] sm:$0xff]
        %v5922 = vld [vmem:[#allocation3 + $0x5c] sm:$0xff]
        %v5923 = vld [vmem:[#allocation3 + $0x64] sm:$0xff]
        %v5924 = vld [vmem:[#allocation3 + $0x6c] sm:$0xff]
        %v5925 = vld [vmem:[#allocation3 + $0x74] sm:$0xff]
        %v5926 = vld [vmem:[#allocation3 + $0x7c] sm:$0xff]
        %v5927 = vld [vmem:[#allocation3 + $0x84] sm:$0xff]
        %v5928 = vld [vmem:[#allocation3 + $0x8c] sm:$0xff]
        %v5929 = vld [vmem:[#allocation3 + $0x94] sm:$0xff]
        %v5930 = vld [vmem:[#allocation3 + $0x9c] sm:$0xff]
        %v5931 = vld [vmem:[#allocation3 + $0xa4] sm:$0xff]
        %v5932 = vld [vmem:[#allocation3 + $0xac] sm:$0xff]
        %v5933 = vld [vmem:[#allocation3 + $0xb4] sm:$0xff]
        %v5934 = vld [vmem:[#allocation3 + $0xbc] sm:$0xff]
        %s5935 = scalar_lea.vmem %s3, 192
        %v5936 = vld [vmem:[%s5935] sm:$0xff]
        %v5938 = vsel %vm913, %v5918, 0
        %v5941 = vsel %vm913, %v5919, 0
        %v5944 = vsel %vm913, %v5920, 0
        %v5947 = vsel %vm913, %v5921, 0
        %v5950 = vsel %vm913, %v5922, 0
        %v5953 = vsel %vm913, %v5923, 0
        %v5956 = vsel %vm913, %v5924, 0
        %v5959 = vsel %vm913, %v5925, 0
        %v5962 = vsel %vm913, %v5926, 0
        %v5965 = vsel %vm913, %v5927, 0
        %v5968 = vsel %vm913, %v5928, 0
        %v5971 = vsel %vm913, %v5929, 0
        %v5974 = vsel %vm913, %v5930, 0
        %v5977 = vsel %vm913, %v5931, 0
        %v5980 = vsel %vm913, %v5932, 0
        %v5983 = vsel %vm913, %v5933, 0
        %v5986 = vsel %vm913, %v5934, 0
        %5988 = vmatpush.msra.mxu0 0.0
        %5989 = vmatpush.msra.mxu0 0.0
        %5990 = vmatpush.msra.mxu0 0.0
        %5991 = vmatpush.msra.mxu0 0.0
        %5992 = vmatpush.msra.mxu0 0.0
        %5993 = vmatpush.msra.mxu0 0.0
        %5994 = vmatpush.msra.mxu0 0.0
        %5995 = vmatpush.msra.mxu0 0.0
        %5996 = vmatpush.msra.mxu0 0.0
        %5997 = vmatpush.msra.mxu0 0.0
        %5998 = vmatpush.msra.mxu0 0.0
        %5999 = vmatpush.msra.mxu0 0.0
        %6000 = vmatpush.msra.mxu0 0.0
        %6001 = vmatpush.msra.mxu0 0.0
        %6002 = vmatpush.msra.mxu0 0.0
        %6003 = vmatpush.msra.mxu0 %v5936
        %6004 = vmatmul.f32.gmra.mxu0 %v5938
        %v6005 = vpop.f32.mrf.mxu0
        %v6006 = vadd.f32 0.0, %v6005
        %6007 = vmatmul.f32.gmra.mxu0 %v5941
        %v6008 = vpop.f32.mrf.mxu0
        %v6009 = vadd.f32 0.0, %v6008
        %6010 = vmatmul.f32.gmra.mxu0 %v5944
        %v6011 = vpop.f32.mrf.mxu0
        %v6012 = vadd.f32 0.0, %v6011
        %6013 = vmatmul.f32.gmra.mxu0 %v5947
        %v6014 = vpop.f32.mrf.mxu0
        %v6015 = vadd.f32 0.0, %v6014
        %6016 = vmatmul.f32.gmra.mxu0 %v5950
        %v6017 = vpop.f32.mrf.mxu0
        %v6018 = vadd.f32 0.0, %v6017
        %6019 = vmatmul.f32.gmra.mxu0 %v5953
        %v6020 = vpop.f32.mrf.mxu0
        %v6021 = vadd.f32 0.0, %v6020
        %6022 = vmatmul.f32.gmra.mxu0 %v5956
        %v6023 = vpop.f32.mrf.mxu0
        %v6024 = vadd.f32 0.0, %v6023
        %6025 = vmatmul.f32.gmra.mxu0 %v5959
        %v6026 = vpop.f32.mrf.mxu0
        %v6027 = vadd.f32 0.0, %v6026
        %6028 = vmatmul.f32.gmra.mxu0 %v5962
        %v6029 = vpop.f32.mrf.mxu0
        %v6030 = vadd.f32 0.0, %v6029
        %6031 = vmatmul.f32.gmra.mxu0 %v5965
        %v6032 = vpop.f32.mrf.mxu0
        %v6033 = vadd.f32 0.0, %v6032
        %6034 = vmatmul.f32.gmra.mxu0 %v5968
        %v6035 = vpop.f32.mrf.mxu0
        %v6036 = vadd.f32 0.0, %v6035
        %6037 = vmatmul.f32.gmra.mxu0 %v5971
        %v6038 = vpop.f32.mrf.mxu0
        %v6039 = vadd.f32 0.0, %v6038
        %6040 = vmatmul.f32.gmra.mxu0 %v5974
        %v6041 = vpop.f32.mrf.mxu0
        %v6042 = vadd.f32 0.0, %v6041
        %6043 = vmatmul.f32.gmra.mxu0 %v5977
        %v6044 = vpop.f32.mrf.mxu0
        %v6045 = vadd.f32 0.0, %v6044
        %6046 = vmatmul.f32.gmra.mxu0 %v5980
        %v6047 = vpop.f32.mrf.mxu0
        %v6048 = vadd.f32 0.0, %v6047
        %6049 = vmatmul.f32.gmra.mxu0 %v5983
        %v6050 = vpop.f32.mrf.mxu0
        %v6051 = vadd.f32 0.0, %v6050
        %6052 = vmatmul.f32.gmra.mxu0 %v5986
        %v6053 = vpop.f32.mrf.mxu0
        %v6054 = vadd.f32 0.0, %v6053
        %6055 = vdwg.mxu0
        %v6056 = vadd.f32 %v5901, %v6006
        %v6057 = vadd.f32 %v5902, %v6009
        %v6058 = vadd.f32 %v5903, %v6012
        %v6059 = vadd.f32 %v5904, %v6015
        %v6060 = vadd.f32 %v5905, %v6018
        %v6061 = vadd.f32 %v5906, %v6021
        %v6062 = vadd.f32 %v5907, %v6024
        %v6063 = vadd.f32 %v5908, %v6027
        %v6064 = vadd.f32 %v5909, %v6030
        %v6065 = vadd.f32 %v5910, %v6033
        %v6066 = vadd.f32 %v5911, %v6036
        %v6067 = vadd.f32 %v5912, %v6039
        %v6068 = vadd.f32 %v5913, %v6042
        %v6069 = vadd.f32 %v5914, %v6045
        %v6070 = vadd.f32 %v5915, %v6048
        %v6071 = vadd.f32 %v5916, %v6051
        %v6072 = vadd.f32 %v5917, %v6054
        %6073 = vst.msk [vmem:[#allocation4] sm:$0xff] %vm1348, %v6056
        %6074 = vst.msk [vmem:[#allocation4 + $0x8] sm:$0xff] %vm1348, %v6057
        %6075 = vst.msk [vmem:[#allocation4 + $0x10] sm:$0xff] %vm1348, %v6058
        %6076 = vst.msk [vmem:[#allocation4 + $0x18] sm:$0xff] %vm1348, %v6059
        %6077 = vst.msk [vmem:[#allocation4 + $0x20] sm:$0xff] %vm1348, %v6060
        %6078 = vst.msk [vmem:[#allocation4 + $0x28] sm:$0xff] %vm1348, %v6061
        %6079 = vst.msk [vmem:[#allocation4 + $0x30] sm:$0xff] %vm1348, %v6062
        %6080 = vst.msk [vmem:[#allocation4 + $0x38] sm:$0xff] %vm1348, %v6063
        %6081 = vst.msk [vmem:[#allocation4 + $0x40] sm:$0xff] %vm1348, %v6064
        %6082 = vst.msk [vmem:[#allocation4 + $0x48] sm:$0xff] %vm1348, %v6065
        %6083 = vst.msk [vmem:[#allocation4 + $0x50] sm:$0xff] %vm1348, %v6066
        %6084 = vst.msk [vmem:[#allocation4 + $0x58] sm:$0xff] %vm1348, %v6067
        %6085 = vst.msk [vmem:[#allocation4 + $0x60] sm:$0xff] %vm1348, %v6068
        %6086 = vst.msk [vmem:[#allocation4 + $0x68] sm:$0xff] %vm1348, %v6069
        %6087 = vst.msk [vmem:[#allocation4 + $0x70] sm:$0xff] %vm1348, %v6070
        %6088 = vst.msk [vmem:[#allocation4 + $0x78] sm:$0xff] %vm1348, %v6071
        %6089 = vst.msk [vmem:[#allocation4 + $0x80] sm:$0xff] %vm1348, %v6072
        %v6090 = vld [vmem:[#allocation4] sm:$0xff]
        %v6091 = vld [vmem:[#allocation4 + $0x8] sm:$0xff]
        %v6092 = vld [vmem:[#allocation4 + $0x10] sm:$0xff]
        %v6093 = vld [vmem:[#allocation4 + $0x18] sm:$0xff]
        %v6094 = vld [vmem:[#allocation4 + $0x20] sm:$0xff]
        %v6095 = vld [vmem:[#allocation4 + $0x28] sm:$0xff]
        %v6096 = vld [vmem:[#allocation4 + $0x30] sm:$0xff]
        %v6097 = vld [vmem:[#allocation4 + $0x38] sm:$0xff]
        %v6098 = vld [vmem:[#allocation4 + $0x40] sm:$0xff]
        %v6099 = vld [vmem:[#allocation4 + $0x48] sm:$0xff]
        %v6100 = vld [vmem:[#allocation4 + $0x50] sm:$0xff]
        %v6101 = vld [vmem:[#allocation4 + $0x58] sm:$0xff]
        %v6102 = vld [vmem:[#allocation4 + $0x60] sm:$0xff]
        %v6103 = vld [vmem:[#allocation4 + $0x68] sm:$0xff]
        %v6104 = vld [vmem:[#allocation4 + $0x70] sm:$0xff]
        %v6105 = vld [vmem:[#allocation4 + $0x78] sm:$0xff]
        %v6106 = vld [vmem:[#allocation4 + $0x80] sm:$0xff]
        %v6107 = vld [vmem:[%s4] sm:$0x1]
        %v6109 = vperm.slane %v6107, 0
        %v6111 = vadd.f32 %v6090, %v6109
        %v6112 = vadd.f32 %v6091, %v6109
        %v6113 = vadd.f32 %v6092, %v6109
        %v6114 = vadd.f32 %v6093, %v6109
        %v6115 = vadd.f32 %v6094, %v6109
        %v6116 = vadd.f32 %v6095, %v6109
        %v6117 = vadd.f32 %v6096, %v6109
        %v6118 = vadd.f32 %v6097, %v6109
        %v6119 = vadd.f32 %v6098, %v6109
        %v6120 = vadd.f32 %v6099, %v6109
        %v6121 = vadd.f32 %v6100, %v6109
        %v6122 = vadd.f32 %v6101, %v6109
        %v6123 = vadd.f32 %v6102, %v6109
        %v6124 = vadd.f32 %v6103, %v6109
        %v6125 = vadd.f32 %v6104, %v6109
        %v6126 = vadd.f32 %v6105, %v6109
        %v6127 = vadd.f32 %v6106, %v6109
        %v6128 = vmax.f32 %v6111, 0.0
        %v6129 = vmax.f32 %v6112, 0.0
        %v6130 = vmax.f32 %v6113, 0.0
        %v6131 = vmax.f32 %v6114, 0.0
        %v6132 = vmax.f32 %v6115, 0.0
        %v6133 = vmax.f32 %v6116, 0.0
        %v6134 = vmax.f32 %v6117, 0.0
        %v6135 = vmax.f32 %v6118, 0.0
        %v6136 = vmax.f32 %v6119, 0.0
        %v6137 = vmax.f32 %v6120, 0.0
        %v6138 = vmax.f32 %v6121, 0.0
        %v6139 = vmax.f32 %v6122, 0.0
        %v6140 = vmax.f32 %v6123, 0.0
        %v6141 = vmax.f32 %v6124, 0.0
        %v6142 = vmax.f32 %v6125, 0.0
        %v6143 = vmax.f32 %v6126, 0.0
        %v6144 = vmax.f32 %v6127, 0.0
        %6145 = vst.msk [vmem:[#allocation4] sm:$0xff] %vm1348, %v6128
        %6146 = vst.msk [vmem:[#allocation4 + $0x8] sm:$0xff] %vm1348, %v6129
        %6147 = vst.msk [vmem:[#allocation4 + $0x10] sm:$0xff] %vm1348, %v6130
        %6148 = vst.msk [vmem:[#allocation4 + $0x18] sm:$0xff] %vm1348, %v6131
        %6149 = vst.msk [vmem:[#allocation4 + $0x20] sm:$0xff] %vm1348, %v6132
        %6150 = vst.msk [vmem:[#allocation4 + $0x28] sm:$0xff] %vm1348, %v6133
        %6151 = vst.msk [vmem:[#allocation4 + $0x30] sm:$0xff] %vm1348, %v6134
        %6152 = vst.msk [vmem:[#allocation4 + $0x38] sm:$0xff] %vm1348, %v6135
        %6153 = vst.msk [vmem:[#allocation4 + $0x40] sm:$0xff] %vm1348, %v6136
        %6154 = vst.msk [vmem:[#allocation4 + $0x48] sm:$0xff] %vm1348, %v6137
        %6155 = vst.msk [vmem:[#allocation4 + $0x50] sm:$0xff] %vm1348, %v6138
        %6156 = vst.msk [vmem:[#allocation4 + $0x58] sm:$0xff] %vm1348, %v6139
        %6157 = vst.msk [vmem:[#allocation4 + $0x60] sm:$0xff] %vm1348, %v6140
        %6158 = vst.msk [vmem:[#allocation4 + $0x68] sm:$0xff] %vm1348, %v6141
        %6159 = vst.msk [vmem:[#allocation4 + $0x70] sm:$0xff] %vm1348, %v6142
        %6160 = vst.msk [vmem:[#allocation4 + $0x78] sm:$0xff] %vm1348, %v6143
        %6161 = vst.msk [vmem:[#allocation4 + $0x80] sm:$0xff] %vm1348, %v6144
        %v6162 = vld [vmem:[#allocation4] ss:$2 sm:$0x1f]
        %s6163 = scalar_lea.vmem [#allocation4], 1
        %v6164 = vld [vmem:[%s6163] ss:$2 sm:$0x1f]
        %v6165 = vmax.f32 %v6162, %v6164
        %s6166 = scalar_lea.vmem [#allocation4], 14
        %v6167 = vld [vmem:[%s6166] ss:$2 sm:$0x1f]
        %s6168 = scalar_lea.vmem [#allocation4], 15
        %v6169 = vld [vmem:[%s6168] ss:$2 sm:$0x1f]
        %v6170 = vmax.f32 %v6167, %v6169
        %v6171 = vmax.f32 %v6165, %v6170
        %vm6172 = vcmask 126976
        %6173 = vst.msk [vmem:[#allocation5] sm:$0x1f] %vm6172, %v6171
        %s6174 = scalar_lea.vmem [#allocation4], 28
        %v6175 = vld [vmem:[%s6174] ss:$2 sm:$0x1f]
        %s6176 = scalar_lea.vmem [#allocation4], 29
        %v6177 = vld [vmem:[%s6176] ss:$2 sm:$0x1f]
        %v6178 = vmax.f32 %v6175, %v6177
        %s6179 = scalar_lea.vmem [#allocation4], 42
        %v6180 = vld [vmem:[%s6179] ss:$2 sm:$0x1f]
        %s6181 = scalar_lea.vmem [#allocation4], 43
        %v6182 = vld [vmem:[%s6181] ss:$2 sm:$0x1f]
        %v6183 = vmax.f32 %v6180, %v6182
        %v6184 = vmax.f32 %v6178, %v6183
        %6185 = vst.msk [vmem:[#allocation5 + $0x5] sm:$0x1f] %vm6172, %v6184
        %s6186 = scalar_lea.vmem [#allocation4], 56
        %v6187 = vld [vmem:[%s6186] ss:$2 sm:$0x1f]
        %s6188 = scalar_lea.vmem [#allocation4], 57
        %v6189 = vld [vmem:[%s6188] ss:$2 sm:$0x1f]
        %v6190 = vmax.f32 %v6187, %v6189
        %s6191 = scalar_lea.vmem [#allocation4], 70
        %v6192 = vld [vmem:[%s6191] ss:$2 sm:$0x1f]
        %s6193 = scalar_lea.vmem [#allocation4], 71
        %v6194 = vld [vmem:[%s6193] ss:$2 sm:$0x1f]
        %v6195 = vmax.f32 %v6192, %v6194
        %v6196 = vmax.f32 %v6190, %v6195
        %6197 = vst.msk [vmem:[#allocation5 + $0xa] sm:$0x1f] %vm6172, %v6196
        %s6198 = scalar_lea.vmem [#allocation4], 84
        %v6199 = vld [vmem:[%s6198] ss:$2 sm:$0x1f]
        %s6200 = scalar_lea.vmem [#allocation4], 85
        %v6201 = vld [vmem:[%s6200] ss:$2 sm:$0x1f]
        %v6202 = vmax.f32 %v6199, %v6201
        %s6203 = scalar_lea.vmem [#allocation4], 98
        %v6204 = vld [vmem:[%s6203] ss:$2 sm:$0x1f]
        %s6205 = scalar_lea.vmem [#allocation4], 99
        %v6206 = vld [vmem:[%s6205] ss:$2 sm:$0x1f]
        %v6207 = vmax.f32 %v6204, %v6206
        %v6208 = vmax.f32 %v6202, %v6207
        %6209 = vst.msk [vmem:[#allocation5 + $0xf] sm:$0x1f] %vm6172, %v6208
        %s6210 = scalar_lea.vmem [#allocation4], 112
        %v6211 = vld [vmem:[%s6210] ss:$2 sm:$0x1f]
        %s6212 = scalar_lea.vmem [#allocation4], 113
        %v6213 = vld [vmem:[%s6212] ss:$2 sm:$0x1f]
        %v6214 = vmax.f32 %v6211, %v6213
        %s6215 = scalar_lea.vmem [#allocation4], 126
        %v6216 = vld [vmem:[%s6215] ss:$2 sm:$0x1f]
        %s6217 = scalar_lea.vmem [#allocation4], 127
        %v6218 = vld [vmem:[%s6217] ss:$2 sm:$0x1f]
        %v6219 = vmax.f32 %v6216, %v6218
        %v6220 = vmax.f32 %v6214, %v6219
        %6221 = vst.msk [vmem:[#allocation5 + $0x14] sm:$0x1f] %vm6172, %v6220
        %v6222 = vld [vmem:[#allocation5] sm:$0x1]
        %v6223 = vld [vmem:[%s5] sm:$0xff]
        %v6224 = vld [vmem:[%s5 + $0x8] sm:$0xff]
        %v6225 = vld [vmem:[#allocation5 + $0x1] sm:$0x1]
        %s6226 = scalar_lea.vmem %s5, 16
        %v6227 = vld [vmem:[%s6226] sm:$0xff]
        %v6228 = vld [vmem:[%s6226 + $0x8] sm:$0xff]
        %v6230 = vsel %vm1348, %v6225, 0
        %6232 = vmatpush.msra.mxu0 0.0
        %6233 = vmatpush.msra.mxu0 0.0
        %6234 = vmatpush.msra.mxu0 0.0
        %6235 = vmatpush.msra.mxu0 0.0
        %6236 = vmatpush.msra.mxu0 0.0
        %6237 = vmatpush.msra.mxu0 0.0
        %6238 = vmatpush.msra.mxu0 0.0
        %6239 = vmatpush.msra.mxu0 0.0
        %6240 = vmatpush.msra.mxu0 0.0
        %6241 = vmatpush.msra.mxu0 0.0
        %6242 = vmatpush.msra.mxu0 0.0
        %6243 = vmatpush.msra.mxu0 0.0
        %6244 = vmatpush.msra.mxu0 0.0
        %6245 = vmatpush.msra.mxu0 0.0
        %6246 = vmatpush.msra.mxu0 %v6228
        %6247 = vmatpush.msra.mxu0 %v6227
        %6248 = vmatmul.f32.gmra.mxu0 %v6230
        %v6249 = vpop.f32.mrf.mxu0
        %v6250 = vadd.f32 0.0, %v6249
        %6251 = vdwg.mxu0
        %v6253 = vsel %vm1348, %v6222, 0
        %6255 = vmatpush.msra.mxu0 0.0
        %6256 = vmatpush.msra.mxu0 0.0
        %6257 = vmatpush.msra.mxu0 0.0
        %6258 = vmatpush.msra.mxu0 0.0
        %6259 = vmatpush.msra.mxu0 0.0
        %6260 = vmatpush.msra.mxu0 0.0
        %6261 = vmatpush.msra.mxu0 0.0
        %6262 = vmatpush.msra.mxu0 0.0
        %6263 = vmatpush.msra.mxu0 0.0
        %6264 = vmatpush.msra.mxu0 0.0
        %6265 = vmatpush.msra.mxu0 0.0
        %6266 = vmatpush.msra.mxu0 0.0
        %6267 = vmatpush.msra.mxu0 0.0
        %6268 = vmatpush.msra.mxu0 0.0
        %6269 = vmatpush.msra.mxu0 %v6224
        %6270 = vmatpush.msra.mxu0 %v6223
        %6271 = vmatmul.f32.gmra.mxu0 %v6253
        %v6272 = vpop.f32.mrf.mxu0
        %v6273 = vadd.f32 %v6250, %v6272
        %6274 = vdwg.mxu0
        %v6275 = vld [vmem:[#allocation5 + $0x2] sm:$0x1]
        %s6276 = scalar_lea.vmem %s5, 32
        %v6277 = vld [vmem:[%s6276] sm:$0xff]
        %v6278 = vld [vmem:[%s6276 + $0x8] sm:$0xff]
        %v6280 = vsel %vm1348, %v6275, 0
        %6282 = vmatpush.msra.mxu0 0.0
        %6283 = vmatpush.msra.mxu0 0.0
        %6284 = vmatpush.msra.mxu0 0.0
        %6285 = vmatpush.msra.mxu0 0.0
        %6286 = vmatpush.msra.mxu0 0.0
        %6287 = vmatpush.msra.mxu0 0.0
        %6288 = vmatpush.msra.mxu0 0.0
        %6289 = vmatpush.msra.mxu0 0.0
        %6290 = vmatpush.msra.mxu0 0.0
        %6291 = vmatpush.msra.mxu0 0.0
        %6292 = vmatpush.msra.mxu0 0.0
        %6293 = vmatpush.msra.mxu0 0.0
        %6294 = vmatpush.msra.mxu0 0.0
        %6295 = vmatpush.msra.mxu0 0.0
        %6296 = vmatpush.msra.mxu0 %v6278
        %6297 = vmatpush.msra.mxu0 %v6277
        %6298 = vmatmul.f32.gmra.mxu0 %v6280
        %v6299 = vpop.f32.mrf.mxu0
        %v6300 = vadd.f32 0.0, %v6299
        %6301 = vdwg.mxu0
        %v6302 = vadd.f32 %v6273, %v6300
        %v6303 = vld [vmem:[#allocation5 + $0x3] sm:$0x1]
        %s6304 = scalar_lea.vmem %s5, 48
        %v6305 = vld [vmem:[%s6304] sm:$0xff]
        %v6306 = vld [vmem:[%s6304 + $0x8] sm:$0xff]
        %v6308 = vsel %vm1348, %v6303, 0
        %6310 = vmatpush.msra.mxu0 0.0
        %6311 = vmatpush.msra.mxu0 0.0
        %6312 = vmatpush.msra.mxu0 0.0
        %6313 = vmatpush.msra.mxu0 0.0
        %6314 = vmatpush.msra.mxu0 0.0
        %6315 = vmatpush.msra.mxu0 0.0
        %6316 = vmatpush.msra.mxu0 0.0
        %6317 = vmatpush.msra.mxu0 0.0
        %6318 = vmatpush.msra.mxu0 0.0
        %6319 = vmatpush.msra.mxu0 0.0
        %6320 = vmatpush.msra.mxu0 0.0
        %6321 = vmatpush.msra.mxu0 0.0
        %6322 = vmatpush.msra.mxu0 0.0
        %6323 = vmatpush.msra.mxu0 0.0
        %6324 = vmatpush.msra.mxu0 %v6306
        %6325 = vmatpush.msra.mxu0 %v6305
        %6326 = vmatmul.f32.gmra.mxu0 %v6308
        %v6327 = vpop.f32.mrf.mxu0
        %v6328 = vadd.f32 0.0, %v6327
        %6329 = vdwg.mxu0
        %v6330 = vadd.f32 %v6302, %v6328
        %v6331 = vld [vmem:[#allocation5 + $0x4] sm:$0x1]
        %s6332 = scalar_lea.vmem %s5, 64
        %v6333 = vld [vmem:[%s6332] sm:$0xff]
        %v6334 = vld [vmem:[%s6332 + $0x8] sm:$0xff]
        %v6336 = vsel %vm1348, %v6331, 0
        %6338 = vmatpush.msra.mxu0 0.0
        %6339 = vmatpush.msra.mxu0 0.0
        %6340 = vmatpush.msra.mxu0 0.0
        %6341 = vmatpush.msra.mxu0 0.0
        %6342 = vmatpush.msra.mxu0 0.0
        %6343 = vmatpush.msra.mxu0 0.0
        %6344 = vmatpush.msra.mxu0 0.0
        %6345 = vmatpush.msra.mxu0 0.0
        %6346 = vmatpush.msra.mxu0 0.0
        %6347 = vmatpush.msra.mxu0 0.0
        %6348 = vmatpush.msra.mxu0 0.0
        %6349 = vmatpush.msra.mxu0 0.0
        %6350 = vmatpush.msra.mxu0 0.0
        %6351 = vmatpush.msra.mxu0 0.0
        %6352 = vmatpush.msra.mxu0 %v6334
        %6353 = vmatpush.msra.mxu0 %v6333
        %6354 = vmatmul.f32.gmra.mxu0 %v6336
        %v6355 = vpop.f32.mrf.mxu0
        %v6356 = vadd.f32 0.0, %v6355
        %6357 = vdwg.mxu0
        %v6358 = vadd.f32 %v6330, %v6356
        %v6359 = vld [vmem:[#allocation5 + $0x5] sm:$0x1]
        %s6360 = scalar_lea.vmem %s5, 80
        %v6361 = vld [vmem:[%s6360] sm:$0xff]
        %v6362 = vld [vmem:[%s6360 + $0x8] sm:$0xff]
        %v6364 = vsel %vm1348, %v6359, 0
        %6366 = vmatpush.msra.mxu0 0.0
        %6367 = vmatpush.msra.mxu0 0.0
        %6368 = vmatpush.msra.mxu0 0.0
        %6369 = vmatpush.msra.mxu0 0.0
        %6370 = vmatpush.msra.mxu0 0.0
        %6371 = vmatpush.msra.mxu0 0.0
        %6372 = vmatpush.msra.mxu0 0.0
        %6373 = vmatpush.msra.mxu0 0.0
        %6374 = vmatpush.msra.mxu0 0.0
        %6375 = vmatpush.msra.mxu0 0.0
        %6376 = vmatpush.msra.mxu0 0.0
        %6377 = vmatpush.msra.mxu0 0.0
        %6378 = vmatpush.msra.mxu0 0.0
        %6379 = vmatpush.msra.mxu0 0.0
        %6380 = vmatpush.msra.mxu0 %v6362
        %6381 = vmatpush.msra.mxu0 %v6361
        %6382 = vmatmul.f32.gmra.mxu0 %v6364
        %v6383 = vpop.f32.mrf.mxu0
        %v6384 = vadd.f32 0.0, %v6383
        %6385 = vdwg.mxu0
        %v6386 = vadd.f32 %v6358, %v6384
        %v6387 = vld [vmem:[#allocation5 + $0x6] sm:$0x1]
        %s6388 = scalar_lea.vmem %s5, 96
        %v6389 = vld [vmem:[%s6388] sm:$0xff]
        %v6390 = vld [vmem:[%s6388 + $0x8] sm:$0xff]
        %v6392 = vsel %vm1348, %v6387, 0
        %6394 = vmatpush.msra.mxu0 0.0
        %6395 = vmatpush.msra.mxu0 0.0
        %6396 = vmatpush.msra.mxu0 0.0
        %6397 = vmatpush.msra.mxu0 0.0
        %6398 = vmatpush.msra.mxu0 0.0
        %6399 = vmatpush.msra.mxu0 0.0
        %6400 = vmatpush.msra.mxu0 0.0
        %6401 = vmatpush.msra.mxu0 0.0
        %6402 = vmatpush.msra.mxu0 0.0
        %6403 = vmatpush.msra.mxu0 0.0
        %6404 = vmatpush.msra.mxu0 0.0
        %6405 = vmatpush.msra.mxu0 0.0
        %6406 = vmatpush.msra.mxu0 0.0
        %6407 = vmatpush.msra.mxu0 0.0
        %6408 = vmatpush.msra.mxu0 %v6390
        %6409 = vmatpush.msra.mxu0 %v6389
        %6410 = vmatmul.f32.gmra.mxu0 %v6392
        %v6411 = vpop.f32.mrf.mxu0
        %v6412 = vadd.f32 0.0, %v6411
        %6413 = vdwg.mxu0
        %v6414 = vadd.f32 %v6386, %v6412
        %v6415 = vld [vmem:[#allocation5 + $0x7] sm:$0x1]
        %s6416 = scalar_lea.vmem %s5, 112
        %v6417 = vld [vmem:[%s6416] sm:$0xff]
        %v6418 = vld [vmem:[%s6416 + $0x8] sm:$0xff]
        %v6420 = vsel %vm1348, %v6415, 0
        %6422 = vmatpush.msra.mxu0 0.0
        %6423 = vmatpush.msra.mxu0 0.0
        %6424 = vmatpush.msra.mxu0 0.0
        %6425 = vmatpush.msra.mxu0 0.0
        %6426 = vmatpush.msra.mxu0 0.0
        %6427 = vmatpush.msra.mxu0 0.0
        %6428 = vmatpush.msra.mxu0 0.0
        %6429 = vmatpush.msra.mxu0 0.0
        %6430 = vmatpush.msra.mxu0 0.0
        %6431 = vmatpush.msra.mxu0 0.0
        %6432 = vmatpush.msra.mxu0 0.0
        %6433 = vmatpush.msra.mxu0 0.0
        %6434 = vmatpush.msra.mxu0 0.0
        %6435 = vmatpush.msra.mxu0 0.0
        %6436 = vmatpush.msra.mxu0 %v6418
        %6437 = vmatpush.msra.mxu0 %v6417
        %6438 = vmatmul.f32.gmra.mxu0 %v6420
        %v6439 = vpop.f32.mrf.mxu0
        %v6440 = vadd.f32 0.0, %v6439
        %6441 = vdwg.mxu0
        %v6442 = vadd.f32 %v6414, %v6440
        %v6443 = vld [vmem:[#allocation5 + $0x8] sm:$0x1]
        %s6444 = scalar_lea.vmem %s5, 128
        %v6445 = vld [vmem:[%s6444] sm:$0xff]
        %v6446 = vld [vmem:[%s6444 + $0x8] sm:$0xff]
        %v6448 = vsel %vm1348, %v6443, 0
        %6450 = vmatpush.msra.mxu0 0.0
        %6451 = vmatpush.msra.mxu0 0.0
        %6452 = vmatpush.msra.mxu0 0.0
        %6453 = vmatpush.msra.mxu0 0.0
        %6454 = vmatpush.msra.mxu0 0.0
        %6455 = vmatpush.msra.mxu0 0.0
        %6456 = vmatpush.msra.mxu0 0.0
        %6457 = vmatpush.msra.mxu0 0.0
        %6458 = vmatpush.msra.mxu0 0.0
        %6459 = vmatpush.msra.mxu0 0.0
        %6460 = vmatpush.msra.mxu0 0.0
        %6461 = vmatpush.msra.mxu0 0.0
        %6462 = vmatpush.msra.mxu0 0.0
        %6463 = vmatpush.msra.mxu0 0.0
        %6464 = vmatpush.msra.mxu0 %v6446
        %6465 = vmatpush.msra.mxu0 %v6445
        %6466 = vmatmul.f32.gmra.mxu0 %v6448
        %v6467 = vpop.f32.mrf.mxu0
        %v6468 = vadd.f32 0.0, %v6467
        %6469 = vdwg.mxu0
        %v6470 = vadd.f32 %v6442, %v6468
        %v6471 = vld [vmem:[#allocation5 + $0x9] sm:$0x1]
        %s6472 = scalar_lea.vmem %s5, 144
        %v6473 = vld [vmem:[%s6472] sm:$0xff]
        %v6474 = vld [vmem:[%s6472 + $0x8] sm:$0xff]
        %v6476 = vsel %vm1348, %v6471, 0
        %6478 = vmatpush.msra.mxu0 0.0
        %6479 = vmatpush.msra.mxu0 0.0
        %6480 = vmatpush.msra.mxu0 0.0
        %6481 = vmatpush.msra.mxu0 0.0
        %6482 = vmatpush.msra.mxu0 0.0
        %6483 = vmatpush.msra.mxu0 0.0
        %6484 = vmatpush.msra.mxu0 0.0
        %6485 = vmatpush.msra.mxu0 0.0
        %6486 = vmatpush.msra.mxu0 0.0
        %6487 = vmatpush.msra.mxu0 0.0
        %6488 = vmatpush.msra.mxu0 0.0
        %6489 = vmatpush.msra.mxu0 0.0
        %6490 = vmatpush.msra.mxu0 0.0
        %6491 = vmatpush.msra.mxu0 0.0
        %6492 = vmatpush.msra.mxu0 %v6474
        %6493 = vmatpush.msra.mxu0 %v6473
        %6494 = vmatmul.f32.gmra.mxu0 %v6476
        %v6495 = vpop.f32.mrf.mxu0
        %v6496 = vadd.f32 0.0, %v6495
        %6497 = vdwg.mxu0
        %v6498 = vadd.f32 %v6470, %v6496
        %v6499 = vld [vmem:[#allocation5 + $0xa] sm:$0x1]
        %s6500 = scalar_lea.vmem %s5, 160
        %v6501 = vld [vmem:[%s6500] sm:$0xff]
        %v6502 = vld [vmem:[%s6500 + $0x8] sm:$0xff]
        %v6504 = vsel %vm1348, %v6499, 0
        %6506 = vmatpush.msra.mxu0 0.0
        %6507 = vmatpush.msra.mxu0 0.0
        %6508 = vmatpush.msra.mxu0 0.0
        %6509 = vmatpush.msra.mxu0 0.0
        %6510 = vmatpush.msra.mxu0 0.0
        %6511 = vmatpush.msra.mxu0 0.0
        %6512 = vmatpush.msra.mxu0 0.0
        %6513 = vmatpush.msra.mxu0 0.0
        %6514 = vmatpush.msra.mxu0 0.0
        %6515 = vmatpush.msra.mxu0 0.0
        %6516 = vmatpush.msra.mxu0 0.0
        %6517 = vmatpush.msra.mxu0 0.0
        %6518 = vmatpush.msra.mxu0 0.0
        %6519 = vmatpush.msra.mxu0 0.0
        %6520 = vmatpush.msra.mxu0 %v6502
        %6521 = vmatpush.msra.mxu0 %v6501
        %6522 = vmatmul.f32.gmra.mxu0 %v6504
        %v6523 = vpop.f32.mrf.mxu0
        %v6524 = vadd.f32 0.0, %v6523
        %6525 = vdwg.mxu0
        %v6526 = vadd.f32 %v6498, %v6524
        %v6527 = vld [vmem:[#allocation5 + $0xb] sm:$0x1]
        %s6528 = scalar_lea.vmem %s5, 176
        %v6529 = vld [vmem:[%s6528] sm:$0xff]
        %v6530 = vld [vmem:[%s6528 + $0x8] sm:$0xff]
        %v6532 = vsel %vm1348, %v6527, 0
        %6534 = vmatpush.msra.mxu0 0.0
        %6535 = vmatpush.msra.mxu0 0.0
        %6536 = vmatpush.msra.mxu0 0.0
        %6537 = vmatpush.msra.mxu0 0.0
        %6538 = vmatpush.msra.mxu0 0.0
        %6539 = vmatpush.msra.mxu0 0.0
        %6540 = vmatpush.msra.mxu0 0.0
        %6541 = vmatpush.msra.mxu0 0.0
        %6542 = vmatpush.msra.mxu0 0.0
        %6543 = vmatpush.msra.mxu0 0.0
        %6544 = vmatpush.msra.mxu0 0.0
        %6545 = vmatpush.msra.mxu0 0.0
        %6546 = vmatpush.msra.mxu0 0.0
        %6547 = vmatpush.msra.mxu0 0.0
        %6548 = vmatpush.msra.mxu0 %v6530
        %6549 = vmatpush.msra.mxu0 %v6529
        %6550 = vmatmul.f32.gmra.mxu0 %v6532
        %v6551 = vpop.f32.mrf.mxu0
        %v6552 = vadd.f32 0.0, %v6551
        %6553 = vdwg.mxu0
        %v6554 = vadd.f32 %v6526, %v6552
        %v6555 = vld [vmem:[#allocation5 + $0xc] sm:$0x1]
        %s6556 = scalar_lea.vmem %s5, 192
        %v6557 = vld [vmem:[%s6556] sm:$0xff]
        %v6558 = vld [vmem:[%s6556 + $0x8] sm:$0xff]
        %v6560 = vsel %vm1348, %v6555, 0
        %6562 = vmatpush.msra.mxu0 0.0
        %6563 = vmatpush.msra.mxu0 0.0
        %6564 = vmatpush.msra.mxu0 0.0
        %6565 = vmatpush.msra.mxu0 0.0
        %6566 = vmatpush.msra.mxu0 0.0
        %6567 = vmatpush.msra.mxu0 0.0
        %6568 = vmatpush.msra.mxu0 0.0
        %6569 = vmatpush.msra.mxu0 0.0
        %6570 = vmatpush.msra.mxu0 0.0
        %6571 = vmatpush.msra.mxu0 0.0
        %6572 = vmatpush.msra.mxu0 0.0
        %6573 = vmatpush.msra.mxu0 0.0
        %6574 = vmatpush.msra.mxu0 0.0
        %6575 = vmatpush.msra.mxu0 0.0
        %6576 = vmatpush.msra.mxu0 %v6558
        %6577 = vmatpush.msra.mxu0 %v6557
        %6578 = vmatmul.f32.gmra.mxu0 %v6560
        %v6579 = vpop.f32.mrf.mxu0
        %v6580 = vadd.f32 0.0, %v6579
        %6581 = vdwg.mxu0
        %v6582 = vadd.f32 %v6554, %v6580
        %v6583 = vld [vmem:[#allocation5 + $0xd] sm:$0x1]
        %s6584 = scalar_lea.vmem %s5, 208
        %v6585 = vld [vmem:[%s6584] sm:$0xff]
        %v6586 = vld [vmem:[%s6584 + $0x8] sm:$0xff]
        %v6588 = vsel %vm1348, %v6583, 0
        %6590 = vmatpush.msra.mxu0 0.0
        %6591 = vmatpush.msra.mxu0 0.0
        %6592 = vmatpush.msra.mxu0 0.0
        %6593 = vmatpush.msra.mxu0 0.0
        %6594 = vmatpush.msra.mxu0 0.0
        %6595 = vmatpush.msra.mxu0 0.0
        %6596 = vmatpush.msra.mxu0 0.0
        %6597 = vmatpush.msra.mxu0 0.0
        %6598 = vmatpush.msra.mxu0 0.0
        %6599 = vmatpush.msra.mxu0 0.0
        %6600 = vmatpush.msra.mxu0 0.0
        %6601 = vmatpush.msra.mxu0 0.0
        %6602 = vmatpush.msra.mxu0 0.0
        %6603 = vmatpush.msra.mxu0 0.0
        %6604 = vmatpush.msra.mxu0 %v6586
        %6605 = vmatpush.msra.mxu0 %v6585
        %6606 = vmatmul.f32.gmra.mxu0 %v6588
        %v6607 = vpop.f32.mrf.mxu0
        %v6608 = vadd.f32 0.0, %v6607
        %6609 = vdwg.mxu0
        %v6610 = vadd.f32 %v6582, %v6608
        %v6611 = vld [vmem:[#allocation5 + $0xe] sm:$0x1]
        %s6612 = scalar_lea.vmem %s5, 224
        %v6613 = vld [vmem:[%s6612] sm:$0xff]
        %v6614 = vld [vmem:[%s6612 + $0x8] sm:$0xff]
        %v6616 = vsel %vm1348, %v6611, 0
        %6618 = vmatpush.msra.mxu0 0.0
        %6619 = vmatpush.msra.mxu0 0.0
        %6620 = vmatpush.msra.mxu0 0.0
        %6621 = vmatpush.msra.mxu0 0.0
        %6622 = vmatpush.msra.mxu0 0.0
        %6623 = vmatpush.msra.mxu0 0.0
        %6624 = vmatpush.msra.mxu0 0.0
        %6625 = vmatpush.msra.mxu0 0.0
        %6626 = vmatpush.msra.mxu0 0.0
        %6627 = vmatpush.msra.mxu0 0.0
        %6628 = vmatpush.msra.mxu0 0.0
        %6629 = vmatpush.msra.mxu0 0.0
        %6630 = vmatpush.msra.mxu0 0.0
        %6631 = vmatpush.msra.mxu0 0.0
        %6632 = vmatpush.msra.mxu0 %v6614
        %6633 = vmatpush.msra.mxu0 %v6613
        %6634 = vmatmul.f32.gmra.mxu0 %v6616
        %v6635 = vpop.f32.mrf.mxu0
        %v6636 = vadd.f32 0.0, %v6635
        %6637 = vdwg.mxu0
        %v6638 = vadd.f32 %v6610, %v6636
        %v6639 = vld [vmem:[#allocation5 + $0xf] sm:$0x1]
        %s6640 = scalar_lea.vmem %s5, 240
        %v6641 = vld [vmem:[%s6640] sm:$0xff]
        %v6642 = vld [vmem:[%s6640 + $0x8] sm:$0xff]
        %v6644 = vsel %vm1348, %v6639, 0
        %6646 = vmatpush.msra.mxu0 0.0
        %6647 = vmatpush.msra.mxu0 0.0
        %6648 = vmatpush.msra.mxu0 0.0
        %6649 = vmatpush.msra.mxu0 0.0
        %6650 = vmatpush.msra.mxu0 0.0
        %6651 = vmatpush.msra.mxu0 0.0
        %6652 = vmatpush.msra.mxu0 0.0
        %6653 = vmatpush.msra.mxu0 0.0
        %6654 = vmatpush.msra.mxu0 0.0
        %6655 = vmatpush.msra.mxu0 0.0
        %6656 = vmatpush.msra.mxu0 0.0
        %6657 = vmatpush.msra.mxu0 0.0
        %6658 = vmatpush.msra.mxu0 0.0
        %6659 = vmatpush.msra.mxu0 0.0
        %6660 = vmatpush.msra.mxu0 %v6642
        %6661 = vmatpush.msra.mxu0 %v6641
        %6662 = vmatmul.f32.gmra.mxu0 %v6644
        %v6663 = vpop.f32.mrf.mxu0
        %v6664 = vadd.f32 0.0, %v6663
        %6665 = vdwg.mxu0
        %v6666 = vadd.f32 %v6638, %v6664
        %v6667 = vld [vmem:[#allocation5 + $0x10] sm:$0x1]
        %s6668 = scalar_lea.vmem %s5, 256
        %v6669 = vld [vmem:[%s6668] sm:$0xff]
        %v6670 = vld [vmem:[%s6668 + $0x8] sm:$0xff]
        %v6672 = vsel %vm1348, %v6667, 0
        %6674 = vmatpush.msra.mxu0 0.0
        %6675 = vmatpush.msra.mxu0 0.0
        %6676 = vmatpush.msra.mxu0 0.0
        %6677 = vmatpush.msra.mxu0 0.0
        %6678 = vmatpush.msra.mxu0 0.0
        %6679 = vmatpush.msra.mxu0 0.0
        %6680 = vmatpush.msra.mxu0 0.0
        %6681 = vmatpush.msra.mxu0 0.0
        %6682 = vmatpush.msra.mxu0 0.0
        %6683 = vmatpush.msra.mxu0 0.0
        %6684 = vmatpush.msra.mxu0 0.0
        %6685 = vmatpush.msra.mxu0 0.0
        %6686 = vmatpush.msra.mxu0 0.0
        %6687 = vmatpush.msra.mxu0 0.0
        %6688 = vmatpush.msra.mxu0 %v6670
        %6689 = vmatpush.msra.mxu0 %v6669
        %6690 = vmatmul.f32.gmra.mxu0 %v6672
        %v6691 = vpop.f32.mrf.mxu0
        %v6692 = vadd.f32 0.0, %v6691
        %6693 = vdwg.mxu0
        %v6694 = vadd.f32 %v6666, %v6692
        %v6695 = vld [vmem:[#allocation5 + $0x11] sm:$0x1]
        %s6696 = scalar_lea.vmem %s5, 272
        %v6697 = vld [vmem:[%s6696] sm:$0xff]
        %v6698 = vld [vmem:[%s6696 + $0x8] sm:$0xff]
        %v6700 = vsel %vm1348, %v6695, 0
        %6702 = vmatpush.msra.mxu0 0.0
        %6703 = vmatpush.msra.mxu0 0.0
        %6704 = vmatpush.msra.mxu0 0.0
        %6705 = vmatpush.msra.mxu0 0.0
        %6706 = vmatpush.msra.mxu0 0.0
        %6707 = vmatpush.msra.mxu0 0.0
        %6708 = vmatpush.msra.mxu0 0.0
        %6709 = vmatpush.msra.mxu0 0.0
        %6710 = vmatpush.msra.mxu0 0.0
        %6711 = vmatpush.msra.mxu0 0.0
        %6712 = vmatpush.msra.mxu0 0.0
        %6713 = vmatpush.msra.mxu0 0.0
        %6714 = vmatpush.msra.mxu0 0.0
        %6715 = vmatpush.msra.mxu0 0.0
        %6716 = vmatpush.msra.mxu0 %v6698
        %6717 = vmatpush.msra.mxu0 %v6697
        %6718 = vmatmul.f32.gmra.mxu0 %v6700
        %v6719 = vpop.f32.mrf.mxu0
        %v6720 = vadd.f32 0.0, %v6719
        %6721 = vdwg.mxu0
        %v6722 = vadd.f32 %v6694, %v6720
        %v6723 = vld [vmem:[#allocation5 + $0x12] sm:$0x1]
        %s6724 = scalar_lea.vmem %s5, 288
        %v6725 = vld [vmem:[%s6724] sm:$0xff]
        %v6726 = vld [vmem:[%s6724 + $0x8] sm:$0xff]
        %v6728 = vsel %vm1348, %v6723, 0
        %6730 = vmatpush.msra.mxu0 0.0
        %6731 = vmatpush.msra.mxu0 0.0
        %6732 = vmatpush.msra.mxu0 0.0
        %6733 = vmatpush.msra.mxu0 0.0
        %6734 = vmatpush.msra.mxu0 0.0
        %6735 = vmatpush.msra.mxu0 0.0
        %6736 = vmatpush.msra.mxu0 0.0
        %6737 = vmatpush.msra.mxu0 0.0
        %6738 = vmatpush.msra.mxu0 0.0
        %6739 = vmatpush.msra.mxu0 0.0
        %6740 = vmatpush.msra.mxu0 0.0
        %6741 = vmatpush.msra.mxu0 0.0
        %6742 = vmatpush.msra.mxu0 0.0
        %6743 = vmatpush.msra.mxu0 0.0
        %6744 = vmatpush.msra.mxu0 %v6726
        %6745 = vmatpush.msra.mxu0 %v6725
        %6746 = vmatmul.f32.gmra.mxu0 %v6728
        %v6747 = vpop.f32.mrf.mxu0
        %v6748 = vadd.f32 0.0, %v6747
        %6749 = vdwg.mxu0
        %v6750 = vadd.f32 %v6722, %v6748
        %v6751 = vld [vmem:[#allocation5 + $0x13] sm:$0x1]
        %s6752 = scalar_lea.vmem %s5, 304
        %v6753 = vld [vmem:[%s6752] sm:$0xff]
        %v6754 = vld [vmem:[%s6752 + $0x8] sm:$0xff]
        %v6756 = vsel %vm1348, %v6751, 0
        %6758 = vmatpush.msra.mxu0 0.0
        %6759 = vmatpush.msra.mxu0 0.0
        %6760 = vmatpush.msra.mxu0 0.0
        %6761 = vmatpush.msra.mxu0 0.0
        %6762 = vmatpush.msra.mxu0 0.0
        %6763 = vmatpush.msra.mxu0 0.0
        %6764 = vmatpush.msra.mxu0 0.0
        %6765 = vmatpush.msra.mxu0 0.0
        %6766 = vmatpush.msra.mxu0 0.0
        %6767 = vmatpush.msra.mxu0 0.0
        %6768 = vmatpush.msra.mxu0 0.0
        %6769 = vmatpush.msra.mxu0 0.0
        %6770 = vmatpush.msra.mxu0 0.0
        %6771 = vmatpush.msra.mxu0 0.0
        %6772 = vmatpush.msra.mxu0 %v6754
        %6773 = vmatpush.msra.mxu0 %v6753
        %6774 = vmatmul.f32.gmra.mxu0 %v6756
        %v6775 = vpop.f32.mrf.mxu0
        %v6776 = vadd.f32 0.0, %v6775
        %6777 = vdwg.mxu0
        %v6778 = vadd.f32 %v6750, %v6776
        %v6779 = vld [vmem:[#allocation5 + $0x14] sm:$0x1]
        %s6780 = scalar_lea.vmem %s5, 320
        %v6781 = vld [vmem:[%s6780] sm:$0xff]
        %v6782 = vld [vmem:[%s6780 + $0x8] sm:$0xff]
        %v6784 = vsel %vm1348, %v6779, 0
        %6786 = vmatpush.msra.mxu0 0.0
        %6787 = vmatpush.msra.mxu0 0.0
        %6788 = vmatpush.msra.mxu0 0.0
        %6789 = vmatpush.msra.mxu0 0.0
        %6790 = vmatpush.msra.mxu0 0.0
        %6791 = vmatpush.msra.mxu0 0.0
        %6792 = vmatpush.msra.mxu0 0.0
        %6793 = vmatpush.msra.mxu0 0.0
        %6794 = vmatpush.msra.mxu0 0.0
        %6795 = vmatpush.msra.mxu0 0.0
        %6796 = vmatpush.msra.mxu0 0.0
        %6797 = vmatpush.msra.mxu0 0.0
        %6798 = vmatpush.msra.mxu0 0.0
        %6799 = vmatpush.msra.mxu0 0.0
        %6800 = vmatpush.msra.mxu0 %v6782
        %6801 = vmatpush.msra.mxu0 %v6781
        %6802 = vmatmul.f32.gmra.mxu0 %v6784
        %v6803 = vpop.f32.mrf.mxu0
        %v6804 = vadd.f32 0.0, %v6803
        %6805 = vdwg.mxu0
        %v6806 = vadd.f32 %v6778, %v6804
        %v6807 = vld [vmem:[#allocation5 + $0x15] sm:$0x1]
        %s6808 = scalar_lea.vmem %s5, 336
        %v6809 = vld [vmem:[%s6808] sm:$0xff]
        %v6810 = vld [vmem:[%s6808 + $0x8] sm:$0xff]
        %v6812 = vsel %vm1348, %v6807, 0
        %6814 = vmatpush.msra.mxu0 0.0
        %6815 = vmatpush.msra.mxu0 0.0
        %6816 = vmatpush.msra.mxu0 0.0
        %6817 = vmatpush.msra.mxu0 0.0
        %6818 = vmatpush.msra.mxu0 0.0
        %6819 = vmatpush.msra.mxu0 0.0
        %6820 = vmatpush.msra.mxu0 0.0
        %6821 = vmatpush.msra.mxu0 0.0
        %6822 = vmatpush.msra.mxu0 0.0
        %6823 = vmatpush.msra.mxu0 0.0
        %6824 = vmatpush.msra.mxu0 0.0
        %6825 = vmatpush.msra.mxu0 0.0
        %6826 = vmatpush.msra.mxu0 0.0
        %6827 = vmatpush.msra.mxu0 0.0
        %6828 = vmatpush.msra.mxu0 %v6810
        %6829 = vmatpush.msra.mxu0 %v6809
        %6830 = vmatmul.f32.gmra.mxu0 %v6812
        %v6831 = vpop.f32.mrf.mxu0
        %v6832 = vadd.f32 0.0, %v6831
        %6833 = vdwg.mxu0
        %v6834 = vadd.f32 %v6806, %v6832
        %v6835 = vld [vmem:[#allocation5 + $0x16] sm:$0x1]
        %s6836 = scalar_lea.vmem %s5, 352
        %v6837 = vld [vmem:[%s6836] sm:$0xff]
        %v6838 = vld [vmem:[%s6836 + $0x8] sm:$0xff]
        %v6840 = vsel %vm1348, %v6835, 0
        %6842 = vmatpush.msra.mxu0 0.0
        %6843 = vmatpush.msra.mxu0 0.0
        %6844 = vmatpush.msra.mxu0 0.0
        %6845 = vmatpush.msra.mxu0 0.0
        %6846 = vmatpush.msra.mxu0 0.0
        %6847 = vmatpush.msra.mxu0 0.0
        %6848 = vmatpush.msra.mxu0 0.0
        %6849 = vmatpush.msra.mxu0 0.0
        %6850 = vmatpush.msra.mxu0 0.0
        %6851 = vmatpush.msra.mxu0 0.0
        %6852 = vmatpush.msra.mxu0 0.0
        %6853 = vmatpush.msra.mxu0 0.0
        %6854 = vmatpush.msra.mxu0 0.0
        %6855 = vmatpush.msra.mxu0 0.0
        %6856 = vmatpush.msra.mxu0 %v6838
        %6857 = vmatpush.msra.mxu0 %v6837
        %6858 = vmatmul.f32.gmra.mxu0 %v6840
        %v6859 = vpop.f32.mrf.mxu0
        %v6860 = vadd.f32 0.0, %v6859
        %6861 = vdwg.mxu0
        %v6862 = vadd.f32 %v6834, %v6860
        %v6863 = vld [vmem:[#allocation5 + $0x17] sm:$0x1]
        %s6864 = scalar_lea.vmem %s5, 368
        %v6865 = vld [vmem:[%s6864] sm:$0xff]
        %v6866 = vld [vmem:[%s6864 + $0x8] sm:$0xff]
        %v6868 = vsel %vm1348, %v6863, 0
        %6870 = vmatpush.msra.mxu0 0.0
        %6871 = vmatpush.msra.mxu0 0.0
        %6872 = vmatpush.msra.mxu0 0.0
        %6873 = vmatpush.msra.mxu0 0.0
        %6874 = vmatpush.msra.mxu0 0.0
        %6875 = vmatpush.msra.mxu0 0.0
        %6876 = vmatpush.msra.mxu0 0.0
        %6877 = vmatpush.msra.mxu0 0.0
        %6878 = vmatpush.msra.mxu0 0.0
        %6879 = vmatpush.msra.mxu0 0.0
        %6880 = vmatpush.msra.mxu0 0.0
        %6881 = vmatpush.msra.mxu0 0.0
        %6882 = vmatpush.msra.mxu0 0.0
        %6883 = vmatpush.msra.mxu0 0.0
        %6884 = vmatpush.msra.mxu0 %v6866
        %6885 = vmatpush.msra.mxu0 %v6865
        %6886 = vmatmul.f32.gmra.mxu0 %v6868
        %v6887 = vpop.f32.mrf.mxu0
        %v6888 = vadd.f32 0.0, %v6887
        %6889 = vdwg.mxu0
        %v6890 = vadd.f32 %v6862, %v6888
        %v6891 = vld [vmem:[#allocation5 + $0x18] sm:$0x1]
        %s6892 = scalar_lea.vmem %s5, 384
        %v6893 = vld [vmem:[%s6892] sm:$0xff]
        %v6894 = vld [vmem:[%s6892 + $0x8] sm:$0xff]
        %v6896 = vsel %vm1348, %v6891, 0
        %6898 = vmatpush.msra.mxu0 0.0
        %6899 = vmatpush.msra.mxu0 0.0
        %6900 = vmatpush.msra.mxu0 0.0
        %6901 = vmatpush.msra.mxu0 0.0
        %6902 = vmatpush.msra.mxu0 0.0
        %6903 = vmatpush.msra.mxu0 0.0
        %6904 = vmatpush.msra.mxu0 0.0
        %6905 = vmatpush.msra.mxu0 0.0
        %6906 = vmatpush.msra.mxu0 0.0
        %6907 = vmatpush.msra.mxu0 0.0
        %6908 = vmatpush.msra.mxu0 0.0
        %6909 = vmatpush.msra.mxu0 0.0
        %6910 = vmatpush.msra.mxu0 0.0
        %6911 = vmatpush.msra.mxu0 0.0
        %6912 = vmatpush.msra.mxu0 %v6894
        %6913 = vmatpush.msra.mxu0 %v6893
        %6914 = vmatmul.f32.gmra.mxu0 %v6896
        %v6915 = vpop.f32.mrf.mxu0
        %v6916 = vadd.f32 0.0, %v6915
        %6917 = vdwg.mxu0
        %v6918 = vadd.f32 %v6890, %v6916
        %6919 = vst [vmem:[#allocation6] sm:$0x1] %v6918
        %v6920 = vld [vmem:[#allocation6] sm:$0x1]
        %v6921 = vld [vmem:[%s6] sm:$0x1]
        %v6922 = vadd.f32 %v6920, %v6921
        %v6923 = vmax.f32 %v6922, 0.0
        %v6924 = vld [vmem:[%s7] sm:$0xff]
        %v6925 = vld [vmem:[%s7 + $0x8] sm:$0xff]
        %v6926 = vld [vmem:[%s7 + $0x10] sm:$0xff]
        %v6927 = vld [vmem:[%s7 + $0x18] sm:$0xff]
        %v6928 = vld [vmem:[%s7 + $0x20] sm:$0xff]
        %v6929 = vld [vmem:[%s7 + $0x28] sm:$0xff]
        %v6930 = vld [vmem:[%s7 + $0x30] sm:$0xff]
        %v6931 = vld [vmem:[%s7 + $0x38] sm:$0xff]
        %v6932 = vld [vmem:[%s7 + $0x40] sm:$0xff]
        %v6933 = vld [vmem:[%s7 + $0x48] sm:$0xff]
        %v6934 = vld [vmem:[%s7 + $0x50] sm:$0xff]
        %v6935 = vld [vmem:[%s7 + $0x58] sm:$0xff]
        %v6936 = vld [vmem:[%s7 + $0x60] sm:$0xff]
        %v6937 = vld [vmem:[%s7 + $0x68] sm:$0xff]
        %v6938 = vld [vmem:[%s7 + $0x70] sm:$0xff]
        %v6939 = vld [vmem:[%s7 + $0x78] sm:$0xff]
        %v6940 = vld [vmem:[%s8] sm:$0x1]
        %6941 = vmatpush.msra.mxu0 %v6939
        %6942 = vmatpush.msra.mxu0 %v6938
        %6943 = vmatpush.msra.mxu0 %v6937
        %6944 = vmatpush.msra.mxu0 %v6936
        %6945 = vmatpush.msra.mxu0 %v6935
        %6946 = vmatpush.msra.mxu0 %v6934
        %6947 = vmatpush.msra.mxu0 %v6933
        %6948 = vmatpush.msra.mxu0 %v6932
        %6949 = vmatpush.msra.mxu0 %v6931
        %6950 = vmatpush.msra.mxu0 %v6930
        %6951 = vmatpush.msra.mxu0 %v6929
        %6952 = vmatpush.msra.mxu0 %v6928
        %6953 = vmatpush.msra.mxu0 %v6927
        %6954 = vmatpush.msra.mxu0 %v6926
        %6955 = vmatpush.msra.mxu0 %v6925
        %6956 = vmatpush.msra.mxu0 %v6924
        %6957 = vmatmul.f32.gmra.mxu0 %v6923
        %v6958 = vpop.f32.mrf.mxu0
        %v6959 = vadd.f32 %v6940, %v6958
        %6960 = vdwg.mxu0
        %v6961 = vmax.f32 %v6959, 0.0
        %v6962 = vld [vmem:[%s9] sm:$0xff]
        %v6963 = vld [vmem:[%s9 + $0x8] sm:$0xff]
        %v6964 = vld [vmem:[%s9 + $0x10] sm:$0xff]
        %v6965 = vld [vmem:[%s9 + $0x18] sm:$0xff]
        %v6966 = vld [vmem:[%s9 + $0x20] sm:$0xff]
        %v6967 = vld [vmem:[%s9 + $0x28] sm:$0xff]
        %v6968 = vld [vmem:[%s9 + $0x30] sm:$0xff]
        %v6969 = vld [vmem:[%s9 + $0x38] sm:$0xff]
        %v6970 = vld [vmem:[%s9 + $0x40] sm:$0xff]
        %v6971 = vld [vmem:[%s9 + $0x48] sm:$0xff]
        %v6972 = vld [vmem:[%s9 + $0x50] sm:$0xff]
        %v6973 = vld [vmem:[%s9 + $0x58] sm:$0xff]
        %v6974 = vld [vmem:[%s9 + $0x60] sm:$0xff]
        %v6975 = vld [vmem:[%s9 + $0x68] sm:$0xff]
        %v6976 = vld [vmem:[%s9 + $0x70] sm:$0xff]
        %v6977 = vld [vmem:[%s9 + $0x78] sm:$0xff]
        %v6978 = vld [vmem:[%s10] sm:$0x1]
        %6979 = vmatpush.msra.mxu0 %v6977
        %6980 = vmatpush.msra.mxu0 %v6976
        %6981 = vmatpush.msra.mxu0 %v6975
        %6982 = vmatpush.msra.mxu0 %v6974
        %6983 = vmatpush.msra.mxu0 %v6973
        %6984 = vmatpush.msra.mxu0 %v6972
        %6985 = vmatpush.msra.mxu0 %v6971
        %6986 = vmatpush.msra.mxu0 %v6970
        %6987 = vmatpush.msra.mxu0 %v6969
        %6988 = vmatpush.msra.mxu0 %v6968
        %6989 = vmatpush.msra.mxu0 %v6967
        %6990 = vmatpush.msra.mxu0 %v6966
        %6991 = vmatpush.msra.mxu0 %v6965
        %6992 = vmatpush.msra.mxu0 %v6964
        %6993 = vmatpush.msra.mxu0 %v6963
        %6994 = vmatpush.msra.mxu0 %v6962
        %6995 = vmatmul.f32.gmra.mxu0 %v6961
        %v6996 = vpop.f32.mrf.mxu0
        %v6997 = vadd.f32 %v6978, %v6996
        %6998 = vdwg.mxu0
        %6999 = vst [vmem:[%s379] sm:$0x1] %v6997
        %s7000 = sand.u32 %s269, 1
        %s7001 = scalar_lea.sflag [#allocation8], %s7000
        %s7002 = sand.u32 %s269, 1
        %s7003 = scalar_lea.vmem [#allocation7], %s7002
        // Predicated region
        $region65: #{net_forward.1} parent=63 // pred_check
          %p7004 = pneg %p279
        $region66: #{net_forward.1} parent=63 // pred_check_branch
          %7006 = sbr.rel (%p7004) target = $region68
        $region67: #{net_forward.1} parent=63 // pred_region
          %7008 = vsyncadd %s7001, 0
          %s7009 = scalar_lea.hbm %s11, %s25
          %s7011 = sshll.u32 %s7003, 4
          %s7012 = int_to_ptr.vmem [resolvable:$true] %s7011
          %s7013 = sshll.u32 %s7009, 4
          %s7014 = int_to_ptr.hbm [resolvable:$true] %s7013
          %7016 = dma.vmem_to_hbm [thread:$0]  %s7012, 16, %s7014, %s7001
        $region68: #{net_forward.1} parent=63 // pred_fallthru
          _
      $region64: #{net_forward.1} parent=5 // pred_fallthru
        _
      %p7017 = scmp.le.s32.totalorder 2, %s20
      // Predicated region
      $region69: #{net_forward.1} parent=5 // pred_check
        %p7018 = pneg %p7017
      $region70: #{net_forward.1} parent=5 // pred_check_branch
        %7020 = sbr.rel (%p7018) target = $region72
      $region71: #{net_forward.1} parent=5 // pred_region
        %s7021 = ssub.s32 %s20, 2
        // Predicated region
        $region73: #{net_forward.1} parent=71 // pred_check
          %p7022 = pneg %p285
        $region74: #{net_forward.1} parent=71 // pred_check_branch
          %7024 = sbr.rel (%p7022) target = $region76
        $region75: #{net_forward.1} parent=71 // pred_region
          %s7025 = sand.u32 %s270, 1
          %s7026 = scalar_lea.sflag [#allocation8], %s7025
          %s7027 = sand.u32 %s270, 1
          %s7028 = scalar_lea.vmem [#allocation7], %s7027
          %7030 = dma.done %s7026, 16
        $region76: #{net_forward.1} parent=71 // pred_fallthru
          _
      $region72: #{net_forward.1} parent=5 // pred_fallthru
        _
    $region6: #{net_forward.1} parent=1 // loop_footer
      %s24 = sadd.s32 1, %s20
    $region7: #{net_forward.1} parent=1 // loop_footer_branch
      %19 = sbr.rel target = $region3
    $region8: #{net_forward.1} parent=1 // loop_exit
      _
    %7031 = vsyncpa [#allocation8], 1
    %s7032 = scalar_lea.sflag [#allocation8], 1
    %7033 = vsyncpa %s7032, 1

</llo_original>
